<compile_context>
chip_gen: v6e
topology: v6e:2x2x1
jax: 0.10.0
libtpu: 0.0.40
codegen_flags: <defaults>
</compile_context>

<pallas_src>
import functools

import numpy as np

import jax
import jax.numpy as jnp
from jax.experimental import pallas as pl
from jax.experimental.pallas import tpu as pltpu

H, W = 6, 7          # Connect-4 board
S = H * W            # 42 spatial positions


# ----------------------------------------------------------------------------
# In-kernel helpers
# ----------------------------------------------------------------------------
def _shift_rows(a, off):
    """result[r] = a[r + off] for rows where r + off is in range; zeros elsewhere.

    Implemented with static slices + zero fill (unambiguous semantics, cheap at
    these sizes); invalid rows are zeroed again by the tap mask anyway.
    """
    if off == 0:
        return a
    rows, cols = a.shape
    pad = jnp.zeros((abs(off), cols), a.dtype)
    if off > 0:
        return jnp.concatenate([a[off:, :], pad], axis=0)
    return jnp.concatenate([pad, a[:rows + off, :]], axis=0)


def _conv3x3(act, wt_ref, b_ref, masks_ref, batch):
    """3x3 same-padding conv + bias + relu.

    act:     (S*batch, Cin) rows in (y, x, b) order, channels last.
    wt_ref:  (9, Cin, Cout) per-tap weights, tap t = dy*3 + dx.
    b_ref:   (1, Cout).
    masks_ref: (9, S*batch, 1) precomputed boundary masks (1.0 where the tap
               reads inside the board, 0.0 where the conv zero-padding applies).
    """
    rows = act.shape[0]
    n_out = wt_ref.shape[2]
    acc = jnp.zeros((rows, n_out), jnp.float32)
    for dy in range(3):
        for dx in range(3):
            t = dy * 3 + dx
            off = ((dy - 1) * W + (dx - 1)) * batch      # row offset of this tap
            tap = _shift_rows(act, off) * masks_ref[t]
            acc = acc + jnp.dot(tap, wt_ref[t], preferred_element_type=jnp.float32)
    return jnp.maximum(acc + b_ref[...], 0.0)


def _connect4_kernel(x_ref, masks_ref, w1_ref, b1_ref, w2_ref, b2_ref,
                     fw1_ref, fb1_ref, fw2_ref, fb2_ref, fw3_ref, fb3_ref,
                     o_ref, *, batch):
    # conv1 (2 -> 32) + relu, conv2 (32 -> 64) + relu, all in VMEM/registers.
    h1 = _conv3x3(x_ref[...], w1_ref, b1_ref, masks_ref, batch)     # (S*B, 32)
    h2 = _conv3x3(h1, w2_ref, b2_ref, masks_ref, batch)             # (S*B, 64)

    # fc1 == torch flatten + Linear.  The NCHW flatten permutation is folded
    # into fw1 (see prepare_params): out1 = sum_s h2[rows of s] @ fw1[s].
    acc = jnp.zeros((batch, fw1_ref.shape[2]), jnp.float32)
    for s in range(S):
        blk = h2[s * batch:(s + 1) * batch, :]                      # (B, 64)
        acc = acc + jnp.dot(blk, fw1_ref[s], preferred_element_type=jnp.float32)
    f1 = jnp.maximum(acc + fb1_ref[...], 0.0)                       # (B, 128)

    f2 = jnp.maximum(
        jnp.dot(f1, fw2_ref[...], preferred_element_type=jnp.float32) + fb2_ref[...],
        0.0)                                                        # (B, 64)
    out = jnp.dot(f2, fw3_ref[...], preferred_element_type=jnp.float32) + fb3_ref[...]
    o_ref[...] = out.astype(o_ref.dtype)                            # only HBM store


# ----------------------------------------------------------------------------
# One-time parameter preprocessing (hoisted out of the jitted forward)
# ----------------------------------------------------------------------------
def prepare_params(params):
    (w1, b1, w2, b2, fw1, fb1, fw2, fb2, fw3, fb3) = params
    # conv weights OIHW -> (tap, Cin, Cout)
    w1t = jnp.transpose(w1, (2, 3, 1, 0)).reshape(9, w1.shape[1], w1.shape[0])
    w2t = jnp.transpose(w2, (2, 3, 1, 0)).reshape(9, w2.shape[1], w2.shape[0])
    # fc1 weight rows are in torch NCHW-flatten order (c*S + s).  Regroup to a
    # per-spatial-position (s, Cin, Nout) tensor so channels-last activations
    # can be contracted without any runtime transpose.
    c2 = w2.shape[0]
    fw1t = fw1.reshape(c2, S, fw1.shape[1]).transpose(1, 0, 2)       # (42, 64, 128)
    return (w1t, b1.reshape(1, -1), w2t, b2.reshape(1, -1),
            fw1t, fb1.reshape(1, -1), fw2, fb2.reshape(1, -1),
            fw3, fb3.reshape(1, -1))


def _tap_masks(batch):
    """(9, S*batch, 1) f32 masks: 1.0 where tap (dy,dx) stays on the board."""
    m = np.zeros((9, S * batch, 1), np.float32)
    for dy in range(3):
        for dx in range(3):
            t = dy * 3 + dx
            for s in range(S):
                y, x = divmod(s, W)
                if 0 <= y + dy - 1 < H and 0 <= x + dx - 1 < W:
                    m[t, s * batch:(s + 1) * batch, 0] = 1.0
    return jnp.asarray(m)


def _full_spec(shape):
    nd = len(shape)
    return pl.BlockSpec(tuple(shape), lambda i, _nd=nd: (0,) * _nd)


# ----------------------------------------------------------------------------
# Forward pass (matches Connect4CNN.forward)
# ----------------------------------------------------------------------------
def connect4_cnn_forward(x, kparams):
    (w1t, b1, w2t, b2, fw1t, fb1, fw2, fb2, fw3, fb3) = kparams
    bsz, cin = x.shape[0], x.shape[1]

    # Input adaptation only: NCHW -> rows in (y, x, b) order, channels last.
    x_rows = jnp.transpose(x, (2, 3, 0, 1)).reshape(S * bsz, cin)    # (S*B, 2)
    masks = _tap_masks(bsz)                                          # trace-time const

    args = (x_rows, masks, w1t, b1, w2t, b2, fw1t, fb1, fw2, fb2, fw3, fb3)
    kern = functools.partial(_connect4_kernel, batch=bsz)
    return pl.pallas_call(
        kern,
        out_shape=jax.ShapeDtypeStruct((bsz, fw3.shape[1]), jnp.float32),
        grid=(1,),
        in_specs=[_full_spec(a.shape) for a in args],
        out_specs=_full_spec((bsz, fw3.shape[1])),
        compiler_params=pltpu.CompilerParams(dimension_semantics=("arbitrary",)),
    )(*args)


# ----------------------------------------------------------------------------
# Deterministic parameter init (PyTorch-style uniform(-1/sqrt(fan_in), ...))
# ----------------------------------------------------------------------------
def init_params(key):
    ks = jax.random.split(key, 10)

    def u(k, shape, fan_in):
        bound = 1.0 / (fan_in ** 0.5)
        return jax.random.uniform(k, shape, jnp.float32, -bound, bound)

    w1 = u(ks[0], (32, 2, 3, 3), 2 * 9)            # conv1 weight (OIHW)
    b1 = u(ks[1], (32,), 2 * 9)
    w2 = u(ks[2], (64, 32, 3, 3), 32 * 9)          # conv2 weight (OIHW)
    b2 = u(ks[3], (64,), 32 * 9)
    fw1 = u(ks[4], (64 * H * W, 128), 64 * H * W)  # stored as (in, out)
    fb1 = u(ks[5], (128,), 64 * H * W)
    fw2 = u(ks[6], (128, 64), 128)
    fb2 = u(ks[7], (64,), 128)
    fw3 = u(ks[8], (64, 7), 64)
    fb3 = u(ks[9], (7,), 64)
    return (w1, b1, w2, b2, fw1, fb1, fw2, fb2, fw3, fb3)


# ----------------------------------------------------------------------------
# Pure-JAX reference (lax conv, highest precision) for the correctness check
# ----------------------------------------------------------------------------
def reference_forward(x, params):
    (w1, b1, w2, b2, fw1, fb1, fw2, fb2, fw3, fb3) = params
    hp = jax.lax.Precision.HIGHEST

    def conv(h, w, b):
        y = jax.lax.conv_general_dilated(
            h, w, window_strides=(1, 1), padding=((1, 1), (1, 1)),
            dimension_numbers=("NCHW", "OIHW", "NCHW"), precision=hp)
        return jax.nn.relu(y + b.reshape(1, -1, 1, 1))

    h = conv(x, w1, b1)
    h = conv(h, w2, b2)
    h = h.reshape(h.shape[0], -1)                    # torch-style NCHW flatten
    h = jax.nn.relu(jnp.dot(h, fw1, precision=hp) + fb1)
    h = jax.nn.relu(jnp.dot(h, fw2, precision=hp) + fb2)
    return jnp.dot(h, fw3, precision=hp) + fb3


if __name__ == "__main__":
    key = jax.random.PRNGKey(0)
    pkey, xkey = jax.random.split(key)
    params = init_params(pkey)
    kparams = prepare_params(params)                 # one-time weight layout prep

    # Connect-4 board planes: (batch=2, channels=2, height=6, width=7)
    x = jax.random.uniform(xkey, (2, 2, H, W), jnp.float32)

    fwd = jax.jit(connect4_cnn_forward)
    out = jax.block_until_ready(fwd(x, kparams))
    assert out.shape == (2, 7) and out.dtype == jnp.float32

    ref = jax.block_until_ready(reference_forward(x, params))
    # Tolerance bounded by f32 accumulation-order differences (tap-sum vs conv,
    # per-position fc1 sum vs one big dot); layout bugs would be O(1) errors.
    assert jnp.allclose(out, ref, rtol=1e-4, atol=1e-4), (out, ref)

    print("KERNEL_OK")
</pallas_src>

<mosaic_0001>
module attributes {stable_mosaic.version = 11 : i64} {
  func.func @_connect4_kernel(%arg0: i32, %arg1: memref<84x2xf32, #tpu.memory_space<vmem>>, %arg2: memref<9x84x1xf32, #tpu.memory_space<vmem>>, %arg3: memref<9x2x32xf32, #tpu.memory_space<vmem>>, %arg4: memref<1x32xf32, #tpu.memory_space<vmem>>, %arg5: memref<9x32x64xf32, #tpu.memory_space<vmem>>, %arg6: memref<1x64xf32, #tpu.memory_space<vmem>>, %arg7: memref<42x64x128xf32, #tpu.memory_space<vmem>>, %arg8: memref<1x128xf32, #tpu.memory_space<vmem>>, %arg9: memref<128x64xf32, #tpu.memory_space<vmem>>, %arg10: memref<1x64xf32, #tpu.memory_space<vmem>>, %arg11: memref<64x7xf32, #tpu.memory_space<vmem>>, %arg12: memref<1x7xf32, #tpu.memory_space<vmem>>, %arg13: memref<2x7xf32, #tpu.memory_space<vmem>>) attributes {dimension_semantics = [#tpu.dimension_semantics<arbitrary>], iteration_bounds = array<i64: 1>, scalar_prefetch = 0 : i64, scratch_operands = 0 : i64, tpu.core_type = #tpu.core_type<tc>, window_params = [{pipeline_mode = #tpu.pipeline_mode<synchronous>, transform_indices = @transform_0, window_bounds = array<i64: 84, 2>}, {pipeline_mode = #tpu.pipeline_mode<synchronous>, transform_indices = @transform_1, window_bounds = array<i64: 9, 84, 1>}, {pipeline_mode = #tpu.pipeline_mode<synchronous>, transform_indices = @transform_2, window_bounds = array<i64: 9, 2, 32>}, {pipeline_mode = #tpu.pipeline_mode<synchronous>, transform_indices = @transform_3, window_bounds = array<i64: 1, 32>}, {pipeline_mode = #tpu.pipeline_mode<synchronous>, transform_indices = @transform_4, window_bounds = array<i64: 9, 32, 64>}, {pipeline_mode = #tpu.pipeline_mode<synchronous>, transform_indices = @transform_5, window_bounds = array<i64: 1, 64>}, {pipeline_mode = #tpu.pipeline_mode<synchronous>, transform_indices = @transform_6, window_bounds = array<i64: 42, 64, 128>}, {pipeline_mode = #tpu.pipeline_mode<synchronous>, transform_indices = @transform_7, window_bounds = array<i64: 1, 128>}, {pipeline_mode = #tpu.pipeline_mode<synchronous>, transform_indices = @transform_8, window_bounds = array<i64: 128, 64>}, {pipeline_mode = #tpu.pipeline_mode<synchronous>, transform_indices = @transform_9, window_bounds = array<i64: 1, 64>}, {pipeline_mode = #tpu.pipeline_mode<synchronous>, transform_indices = @transform_10, window_bounds = array<i64: 64, 7>}, {pipeline_mode = #tpu.pipeline_mode<synchronous>, transform_indices = @transform_11, window_bounds = array<i64: 1, 7>}, {pipeline_mode = #tpu.pipeline_mode<synchronous>, transform_indices = @transform_12, window_bounds = array<i64: 2, 7>}]} {
    %c0 = arith.constant 0 : index
    %c0_0 = arith.constant 0 : index
    %0 = vector.load %arg1[%c0, %c0_0] : memref<84x2xf32, #tpu.memory_space<vmem>>, vector<84x2xf32>
    %cst = arith.constant 0.000000e+00 : f32
    %1 = vector.broadcast %cst : f32 to vector<84x32xf32>
    %cst_1 = arith.constant 0.000000e+00 : f32
    %2 = vector.broadcast %cst_1 : f32 to vector<16x2xf32>
    %3 = vector.extract_strided_slice %0 {offsets = [0, 0], sizes = [68, 2], strides = [1, 1]} : vector<84x2xf32> to vector<68x2xf32>
    %4 = tpu.concatenate %2, %3 in 0 : vector<16x2xf32>, vector<68x2xf32> -> vector<84x2xf32>
    %c0_2 = arith.constant 0 : index
    %c0_3 = arith.constant 0 : index
    %c0_4 = arith.constant 0 : index
    %5 = vector.load %arg2[%c0_2, %c0_3, %c0_4] : memref<9x84x1xf32, #tpu.memory_space<vmem>>, vector<1x84x1xf32>
    %6 = vector.shape_cast %5 : vector<1x84x1xf32> to vector<84x1xf32>
    %7 = vector.broadcast %6 : vector<84x1xf32> to vector<84x2xf32>
    %8 = arith.mulf %4, %7 : vector<84x2xf32>
    %c0_5 = arith.constant 0 : index
    %c0_6 = arith.constant 0 : index
    %c0_7 = arith.constant 0 : index
    %9 = vector.load %arg3[%c0_5, %c0_6, %c0_7] : memref<9x2x32xf32, #tpu.memory_space<vmem>>, vector<1x2x32xf32>
    %10 = vector.shape_cast %9 : vector<1x2x32xf32> to vector<2x32xf32>
    %cst_8 = arith.constant dense<0.000000e+00> : vector<84x32xf32>
    %11 = tpu.matmul %8, %10, %cst_8 {dimension_numbers = #tpu.dot_dimension_numbers<[1], [0], [0], [1], [0, 0, 1, 1], [], []>} : vector<84x2xf32>, vector<2x32xf32>, vector<84x32xf32> -> vector<84x32xf32>
    %12 = arith.addf %1, %11 : vector<84x32xf32>
    %cst_9 = arith.constant 0.000000e+00 : f32
    %13 = vector.broadcast %cst_9 : f32 to vector<14x2xf32>
    %14 = vector.extract_strided_slice %0 {offsets = [0, 0], sizes = [70, 2], strides = [1, 1]} : vector<84x2xf32> to vector<70x2xf32>
    %15 = tpu.concatenate %13, %14 in 0 : vector<14x2xf32>, vector<70x2xf32> -> vector<84x2xf32>
    %c1 = arith.constant 1 : index
    %c0_10 = arith.constant 0 : index
    %c0_11 = arith.constant 0 : index
    %16 = vector.load %arg2[%c1, %c0_10, %c0_11] : memref<9x84x1xf32, #tpu.memory_space<vmem>>, vector<1x84x1xf32>
    %17 = vector.shape_cast %16 : vector<1x84x1xf32> to vector<84x1xf32>
    %18 = vector.broadcast %17 : vector<84x1xf32> to vector<84x2xf32>
    %19 = arith.mulf %15, %18 : vector<84x2xf32>
    %c1_12 = arith.constant 1 : index
    %c0_13 = arith.constant 0 : index
    %c0_14 = arith.constant 0 : index
    %20 = vector.load %arg3[%c1_12, %c0_13, %c0_14] : memref<9x2x32xf32, #tpu.memory_space<vmem>>, vector<1x2x32xf32>
    %21 = vector.shape_cast %20 : vector<1x2x32xf32> to vector<2x32xf32>
    %cst_15 = arith.constant dense<0.000000e+00> : vector<84x32xf32>
    %22 = tpu.matmul %19, %21, %cst_15 {dimension_numbers = #tpu.dot_dimension_numbers<[1], [0], [0], [1], [0, 0, 1, 1], [], []>} : vector<84x2xf32>, vector<2x32xf32>, vector<84x32xf32> -> vector<84x32xf32>
    %23 = arith.addf %12, %22 : vector<84x32xf32>
    %cst_16 = arith.constant 0.000000e+00 : f32
    %24 = vector.broadcast %cst_16 : f32 to vector<12x2xf32>
    %25 = vector.extract_strided_slice %0 {offsets = [0, 0], sizes = [72, 2], strides = [1, 1]} : vector<84x2xf32> to vector<72x2xf32>
    %26 = tpu.concatenate %24, %25 in 0 : vector<12x2xf32>, vector<72x2xf32> -> vector<84x2xf32>
    %c2 = arith.constant 2 : index
    %c0_17 = arith.constant 0 : index
    %c0_18 = arith.constant 0 : index
    %27 = vector.load %arg2[%c2, %c0_17, %c0_18] : memref<9x84x1xf32, #tpu.memory_space<vmem>>, vector<1x84x1xf32>
    %28 = vector.shape_cast %27 : vector<1x84x1xf32> to vector<84x1xf32>
    %29 = vector.broadcast %28 : vector<84x1xf32> to vector<84x2xf32>
    %30 = arith.mulf %26, %29 : vector<84x2xf32>
    %c2_19 = arith.constant 2 : index
    %c0_20 = arith.constant 0 : index
    %c0_21 = arith.constant 0 : index
    %31 = vector.load %arg3[%c2_19, %c0_20, %c0_21] : memref<9x2x32xf32, #tpu.memory_space<vmem>>, vector<1x2x32xf32>
    %32 = vector.shape_cast %31 : vector<1x2x32xf32> to vector<2x32xf32>
    %cst_22 = arith.constant dense<0.000000e+00> : vector<84x32xf32>
    %33 = tpu.matmul %30, %32, %cst_22 {dimension_numbers = #tpu.dot_dimension_numbers<[1], [0], [0], [1], [0, 0, 1, 1], [], []>} : vector<84x2xf32>, vector<2x32xf32>, vector<84x32xf32> -> vector<84x32xf32>
    %34 = arith.addf %23, %33 : vector<84x32xf32>
    %cst_23 = arith.constant 0.000000e+00 : f32
    %35 = vector.broadcast %cst_23 : f32 to vector<2x2xf32>
    %36 = vector.extract_strided_slice %0 {offsets = [0, 0], sizes = [82, 2], strides = [1, 1]} : vector<84x2xf32> to vector<82x2xf32>
    %37 = tpu.concatenate %35, %36 in 0 : vector<2x2xf32>, vector<82x2xf32> -> vector<84x2xf32>
    %c3 = arith.constant 3 : index
    %c0_24 = arith.constant 0 : index
    %c0_25 = arith.constant 0 : index
    %38 = vector.load %arg2[%c3, %c0_24, %c0_25] : memref<9x84x1xf32, #tpu.memory_space<vmem>>, vector<1x84x1xf32>
    %39 = vector.shape_cast %38 : vector<1x84x1xf32> to vector<84x1xf32>
    %40 = vector.broadcast %39 : vector<84x1xf32> to vector<84x2xf32>
    %41 = arith.mulf %37, %40 : vector<84x2xf32>
    %c3_26 = arith.constant 3 : index
    %c0_27 = arith.constant 0 : index
    %c0_28 = arith.constant 0 : index
    %42 = vector.load %arg3[%c3_26, %c0_27, %c0_28] : memref<9x2x32xf32, #tpu.memory_space<vmem>>, vector<1x2x32xf32>
    %43 = vector.shape_cast %42 : vector<1x2x32xf32> to vector<2x32xf32>
    %cst_29 = arith.constant dense<0.000000e+00> : vector<84x32xf32>
    %44 = tpu.matmul %41, %43, %cst_29 {dimension_numbers = #tpu.dot_dimension_numbers<[1], [0], [0], [1], [0, 0, 1, 1], [], []>} : vector<84x2xf32>, vector<2x32xf32>, vector<84x32xf32> -> vector<84x32xf32>
    %45 = arith.addf %34, %44 : vector<84x32xf32>
    %c4 = arith.constant 4 : index
    %c0_30 = arith.constant 0 : index
    %c0_31 = arith.constant 0 : index
    %46 = vector.load %arg2[%c4, %c0_30, %c0_31] : memref<9x84x1xf32, #tpu.memory_space<vmem>>, vector<1x84x1xf32>
    %47 = vector.shape_cast %46 : vector<1x84x1xf32> to vector<84x1xf32>
    %48 = vector.broadcast %47 : vector<84x1xf32> to vector<84x2xf32>
    %49 = arith.mulf %0, %48 : vector<84x2xf32>
    %c4_32 = arith.constant 4 : index
    %c0_33 = arith.constant 0 : index
    %c0_34 = arith.constant 0 : index
    %50 = vector.load %arg3[%c4_32, %c0_33, %c0_34] : memref<9x2x32xf32, #tpu.memory_space<vmem>>, vector<1x2x32xf32>
    %51 = vector.shape_cast %50 : vector<1x2x32xf32> to vector<2x32xf32>
    %cst_35 = arith.constant dense<0.000000e+00> : vector<84x32xf32>
    %52 = tpu.matmul %49, %51, %cst_35 {dimension_numbers = #tpu.dot_dimension_numbers<[1], [0], [0], [1], [0, 0, 1, 1], [], []>} : vector<84x2xf32>, vector<2x32xf32>, vector<84x32xf32> -> vector<84x32xf32>
    %53 = arith.addf %45, %52 : vector<84x32xf32>
    %cst_36 = arith.constant 0.000000e+00 : f32
    %54 = vector.broadcast %cst_36 : f32 to vector<2x2xf32>
    %55 = vector.extract_strided_slice %0 {offsets = [2, 0], sizes = [82, 2], strides = [1, 1]} : vector<84x2xf32> to vector<82x2xf32>
    %56 = tpu.concatenate %55, %54 in 0 : vector<82x2xf32>, vector<2x2xf32> -> vector<84x2xf32>
    %c5 = arith.constant 5 : index
    %c0_37 = arith.constant 0 : index
    %c0_38 = arith.constant 0 : index
    %57 = vector.load %arg2[%c5, %c0_37, %c0_38] : memref<9x84x1xf32, #tpu.memory_space<vmem>>, vector<1x84x1xf32>
    %58 = vector.shape_cast %57 : vector<1x84x1xf32> to vector<84x1xf32>
    %59 = vector.broadcast %58 : vector<84x1xf32> to vector<84x2xf32>
    %60 = arith.mulf %56, %59 : vector<84x2xf32>
    %c5_39 = arith.constant 5 : index
    %c0_40 = arith.constant 0 : index
    %c0_41 = arith.constant 0 : index
    %61 = vector.load %arg3[%c5_39, %c0_40, %c0_41] : memref<9x2x32xf32, #tpu.memory_space<vmem>>, vector<1x2x32xf32>
    %62 = vector.shape_cast %61 : vector<1x2x32xf32> to vector<2x32xf32>
    %cst_42 = arith.constant dense<0.000000e+00> : vector<84x32xf32>
    %63 = tpu.matmul %60, %62, %cst_42 {dimension_numbers = #tpu.dot_dimension_numbers<[1], [0], [0], [1], [0, 0, 1, 1], [], []>} : vector<84x2xf32>, vector<2x32xf32>, vector<84x32xf32> -> vector<84x32xf32>
    %64 = arith.addf %53, %63 : vector<84x32xf32>
    %cst_43 = arith.constant 0.000000e+00 : f32
    %65 = vector.broadcast %cst_43 : f32 to vector<12x2xf32>
    %66 = vector.extract_strided_slice %0 {offsets = [12, 0], sizes = [72, 2], strides = [1, 1]} : vector<84x2xf32> to vector<72x2xf32>
    %67 = tpu.concatenate %66, %65 in 0 : vector<72x2xf32>, vector<12x2xf32> -> vector<84x2xf32>
    %c6 = arith.constant 6 : index
    %c0_44 = arith.constant 0 : index
    %c0_45 = arith.constant 0 : index
    %68 = vector.load %arg2[%c6, %c0_44, %c0_45] : memref<9x84x1xf32, #tpu.memory_space<vmem>>, vector<1x84x1xf32>
    %69 = vector.shape_cast %68 : vector<1x84x1xf32> to vector<84x1xf32>
    %70 = vector.broadcast %69 : vector<84x1xf32> to vector<84x2xf32>
    %71 = arith.mulf %67, %70 : vector<84x2xf32>
    %c6_46 = arith.constant 6 : index
    %c0_47 = arith.constant 0 : index
    %c0_48 = arith.constant 0 : index
    %72 = vector.load %arg3[%c6_46, %c0_47, %c0_48] : memref<9x2x32xf32, #tpu.memory_space<vmem>>, vector<1x2x32xf32>
    %73 = vector.shape_cast %72 : vector<1x2x32xf32> to vector<2x32xf32>
    %cst_49 = arith.constant dense<0.000000e+00> : vector<84x32xf32>
    %74 = tpu.matmul %71, %73, %cst_49 {dimension_numbers = #tpu.dot_dimension_numbers<[1], [0], [0], [1], [0, 0, 1, 1], [], []>} : vector<84x2xf32>, vector<2x32xf32>, vector<84x32xf32> -> vector<84x32xf32>
    %75 = arith.addf %64, %74 : vector<84x32xf32>
    %cst_50 = arith.constant 0.000000e+00 : f32
    %76 = vector.broadcast %cst_50 : f32 to vector<14x2xf32>
    %77 = vector.extract_strided_slice %0 {offsets = [14, 0], sizes = [70, 2], strides = [1, 1]} : vector<84x2xf32> to vector<70x2xf32>
    %78 = tpu.concatenate %77, %76 in 0 : vector<70x2xf32>, vector<14x2xf32> -> vector<84x2xf32>
    %c7 = arith.constant 7 : index
    %c0_51 = arith.constant 0 : index
    %c0_52 = arith.constant 0 : index
    %79 = vector.load %arg2[%c7, %c0_51, %c0_52] : memref<9x84x1xf32, #tpu.memory_space<vmem>>, vector<1x84x1xf32>
    %80 = vector.shape_cast %79 : vector<1x84x1xf32> to vector<84x1xf32>
    %81 = vector.broadcast %80 : vector<84x1xf32> to vector<84x2xf32>
    %82 = arith.mulf %78, %81 : vector<84x2xf32>
    %c7_53 = arith.constant 7 : index
    %c0_54 = arith.constant 0 : index
    %c0_55 = arith.constant 0 : index
    %83 = vector.load %arg3[%c7_53, %c0_54, %c0_55] : memref<9x2x32xf32, #tpu.memory_space<vmem>>, vector<1x2x32xf32>
    %84 = vector.shape_cast %83 : vector<1x2x32xf32> to vector<2x32xf32>
    %cst_56 = arith.constant dense<0.000000e+00> : vector<84x32xf32>
    %85 = tpu.matmul %82, %84, %cst_56 {dimension_numbers = #tpu.dot_dimension_numbers<[1], [0], [0], [1], [0, 0, 1, 1], [], []>} : vector<84x2xf32>, vector<2x32xf32>, vector<84x32xf32> -> vector<84x32xf32>
    %86 = arith.addf %75, %85 : vector<84x32xf32>
    %cst_57 = arith.constant 0.000000e+00 : f32
    %87 = vector.broadcast %cst_57 : f32 to vector<16x2xf32>
    %88 = vector.extract_strided_slice %0 {offsets = [16, 0], sizes = [68, 2], strides = [1, 1]} : vector<84x2xf32> to vector<68x2xf32>
    %89 = tpu.concatenate %88, %87 in 0 : vector<68x2xf32>, vector<16x2xf32> -> vector<84x2xf32>
    %c8 = arith.constant 8 : index
    %c0_58 = arith.constant 0 : index
    %c0_59 = arith.constant 0 : index
    %90 = vector.load %arg2[%c8, %c0_58, %c0_59] : memref<9x84x1xf32, #tpu.memory_space<vmem>>, vector<1x84x1xf32>
    %91 = vector.shape_cast %90 : vector<1x84x1xf32> to vector<84x1xf32>
    %92 = vector.broadcast %91 : vector<84x1xf32> to vector<84x2xf32>
    %93 = arith.mulf %89, %92 : vector<84x2xf32>
    %c8_60 = arith.constant 8 : index
    %c0_61 = arith.constant 0 : index
    %c0_62 = arith.constant 0 : index
    %94 = vector.load %arg3[%c8_60, %c0_61, %c0_62] : memref<9x2x32xf32, #tpu.memory_space<vmem>>, vector<1x2x32xf32>
    %95 = vector.shape_cast %94 : vector<1x2x32xf32> to vector<2x32xf32>
    %cst_63 = arith.constant dense<0.000000e+00> : vector<84x32xf32>
    %96 = tpu.matmul %93, %95, %cst_63 {dimension_numbers = #tpu.dot_dimension_numbers<[1], [0], [0], [1], [0, 0, 1, 1], [], []>} : vector<84x2xf32>, vector<2x32xf32>, vector<84x32xf32> -> vector<84x32xf32>
    %97 = arith.addf %86, %96 : vector<84x32xf32>
    %c0_64 = arith.constant 0 : index
    %c0_65 = arith.constant 0 : index
    %98 = vector.load %arg4[%c0_64, %c0_65] : memref<1x32xf32, #tpu.memory_space<vmem>>, vector<1x32xf32>
    %99 = vector.broadcast %98 : vector<1x32xf32> to vector<84x32xf32>
    %100 = arith.addf %97, %99 : vector<84x32xf32>
    %cst_66 = arith.constant 0.000000e+00 : f32
    %101 = vector.broadcast %cst_66 : f32 to vector<84x32xf32>
    %102 = arith.maximumf %100, %101 : vector<84x32xf32>
    %cst_67 = arith.constant 0.000000e+00 : f32
    %103 = vector.broadcast %cst_67 : f32 to vector<84x64xf32>
    %cst_68 = arith.constant 0.000000e+00 : f32
    %104 = vector.broadcast %cst_68 : f32 to vector<16x32xf32>
    %105 = vector.extract_strided_slice %102 {offsets = [0, 0], sizes = [68, 32], strides = [1, 1]} : vector<84x32xf32> to vector<68x32xf32>
    %106 = tpu.concatenate %104, %105 in 0 : vector<16x32xf32>, vector<68x32xf32> -> vector<84x32xf32>
    %c0_69 = arith.constant 0 : index
    %c0_70 = arith.constant 0 : index
    %c0_71 = arith.constant 0 : index
    %107 = vector.load %arg2[%c0_69, %c0_70, %c0_71] : memref<9x84x1xf32, #tpu.memory_space<vmem>>, vector<1x84x1xf32>
    %108 = vector.shape_cast %107 : vector<1x84x1xf32> to vector<84x1xf32>
    %109 = vector.broadcast %108 : vector<84x1xf32> to vector<84x32xf32>
    %110 = arith.mulf %106, %109 : vector<84x32xf32>
    %c0_72 = arith.constant 0 : index
    %c0_73 = arith.constant 0 : index
    %c0_74 = arith.constant 0 : index
    %111 = vector.load %arg5[%c0_72, %c0_73, %c0_74] : memref<9x32x64xf32, #tpu.memory_space<vmem>>, vector<1x32x64xf32>
    %112 = vector.shape_cast %111 : vector<1x32x64xf32> to vector<32x64xf32>
    %cst_75 = arith.constant dense<0.000000e+00> : vector<84x64xf32>
    %113 = tpu.matmul %110, %112, %cst_75 {dimension_numbers = #tpu.dot_dimension_numbers<[1], [0], [0], [1], [0, 0, 1, 1], [], []>} : vector<84x32xf32>, vector<32x64xf32>, vector<84x64xf32> -> vector<84x64xf32>
    %114 = arith.addf %103, %113 : vector<84x64xf32>
    %cst_76 = arith.constant 0.000000e+00 : f32
    %115 = vector.broadcast %cst_76 : f32 to vector<14x32xf32>
    %116 = vector.extract_strided_slice %102 {offsets = [0, 0], sizes = [70, 32], strides = [1, 1]} : vector<84x32xf32> to vector<70x32xf32>
    %117 = tpu.concatenate %115, %116 in 0 : vector<14x32xf32>, vector<70x32xf32> -> vector<84x32xf32>
    %c1_77 = arith.constant 1 : index
    %c0_78 = arith.constant 0 : index
    %c0_79 = arith.constant 0 : index
    %118 = vector.load %arg2[%c1_77, %c0_78, %c0_79] : memref<9x84x1xf32, #tpu.memory_space<vmem>>, vector<1x84x1xf32>
    %119 = vector.shape_cast %118 : vector<1x84x1xf32> to vector<84x1xf32>
    %120 = vector.broadcast %119 : vector<84x1xf32> to vector<84x32xf32>
    %121 = arith.mulf %117, %120 : vector<84x32xf32>
    %c1_80 = arith.constant 1 : index
    %c0_81 = arith.constant 0 : index
    %c0_82 = arith.constant 0 : index
    %122 = vector.load %arg5[%c1_80, %c0_81, %c0_82] : memref<9x32x64xf32, #tpu.memory_space<vmem>>, vector<1x32x64xf32>
    %123 = vector.shape_cast %122 : vector<1x32x64xf32> to vector<32x64xf32>
    %cst_83 = arith.constant dense<0.000000e+00> : vector<84x64xf32>
    %124 = tpu.matmul %121, %123, %cst_83 {dimension_numbers = #tpu.dot_dimension_numbers<[1], [0], [0], [1], [0, 0, 1, 1], [], []>} : vector<84x32xf32>, vector<32x64xf32>, vector<84x64xf32> -> vector<84x64xf32>
    %125 = arith.addf %114, %124 : vector<84x64xf32>
    %cst_84 = arith.constant 0.000000e+00 : f32
    %126 = vector.broadcast %cst_84 : f32 to vector<12x32xf32>
    %127 = vector.extract_strided_slice %102 {offsets = [0, 0], sizes = [72, 32], strides = [1, 1]} : vector<84x32xf32> to vector<72x32xf32>
    %128 = tpu.concatenate %126, %127 in 0 : vector<12x32xf32>, vector<72x32xf32> -> vector<84x32xf32>
    %c2_85 = arith.constant 2 : index
    %c0_86 = arith.constant 0 : index
    %c0_87 = arith.constant 0 : index
    %129 = vector.load %arg2[%c2_85, %c0_86, %c0_87] : memref<9x84x1xf32, #tpu.memory_space<vmem>>, vector<1x84x1xf32>
    %130 = vector.shape_cast %129 : vector<1x84x1xf32> to vector<84x1xf32>
    %131 = vector.broadcast %130 : vector<84x1xf32> to vector<84x32xf32>
    %132 = arith.mulf %128, %131 : vector<84x32xf32>
    %c2_88 = arith.constant 2 : index
    %c0_89 = arith.constant 0 : index
    %c0_90 = arith.constant 0 : index
    %133 = vector.load %arg5[%c2_88, %c0_89, %c0_90] : memref<9x32x64xf32, #tpu.memory_space<vmem>>, vector<1x32x64xf32>
    %134 = vector.shape_cast %133 : vector<1x32x64xf32> to vector<32x64xf32>
    %cst_91 = arith.constant dense<0.000000e+00> : vector<84x64xf32>
    %135 = tpu.matmul %132, %134, %cst_91 {dimension_numbers = #tpu.dot_dimension_numbers<[1], [0], [0], [1], [0, 0, 1, 1], [], []>} : vector<84x32xf32>, vector<32x64xf32>, vector<84x64xf32> -> vector<84x64xf32>
    %136 = arith.addf %125, %135 : vector<84x64xf32>
    %cst_92 = arith.constant 0.000000e+00 : f32
    %137 = vector.broadcast %cst_92 : f32 to vector<2x32xf32>
    %138 = vector.extract_strided_slice %102 {offsets = [0, 0], sizes = [82, 32], strides = [1, 1]} : vector<84x32xf32> to vector<82x32xf32>
    %139 = tpu.concatenate %137, %138 in 0 : vector<2x32xf32>, vector<82x32xf32> -> vector<84x32xf32>
    %c3_93 = arith.constant 3 : index
    %c0_94 = arith.constant 0 : index
    %c0_95 = arith.constant 0 : index
    %140 = vector.load %arg2[%c3_93, %c0_94, %c0_95] : memref<9x84x1xf32, #tpu.memory_space<vmem>>, vector<1x84x1xf32>
    %141 = vector.shape_cast %140 : vector<1x84x1xf32> to vector<84x1xf32>
    %142 = vector.broadcast %141 : vector<84x1xf32> to vector<84x32xf32>
    %143 = arith.mulf %139, %142 : vector<84x32xf32>
    %c3_96 = arith.constant 3 : index
    %c0_97 = arith.constant 0 : index
    %c0_98 = arith.constant 0 : index
    %144 = vector.load %arg5[%c3_96, %c0_97, %c0_98] : memref<9x32x64xf32, #tpu.memory_space<vmem>>, vector<1x32x64xf32>
    %145 = vector.shape_cast %144 : vector<1x32x64xf32> to vector<32x64xf32>
    %cst_99 = arith.constant dense<0.000000e+00> : vector<84x64xf32>
    %146 = tpu.matmul %143, %145, %cst_99 {dimension_numbers = #tpu.dot_dimension_numbers<[1], [0], [0], [1], [0, 0, 1, 1], [], []>} : vector<84x32xf32>, vector<32x64xf32>, vector<84x64xf32> -> vector<84x64xf32>
    %147 = arith.addf %136, %146 : vector<84x64xf32>
    %c4_100 = arith.constant 4 : index
    %c0_101 = arith.constant 0 : index
    %c0_102 = arith.constant 0 : index
    %148 = vector.load %arg2[%c4_100, %c0_101, %c0_102] : memref<9x84x1xf32, #tpu.memory_space<vmem>>, vector<1x84x1xf32>
    %149 = vector.shape_cast %148 : vector<1x84x1xf32> to vector<84x1xf32>
    %150 = vector.broadcast %149 : vector<84x1xf32> to vector<84x32xf32>
    %151 = arith.mulf %102, %150 : vector<84x32xf32>
    %c4_103 = arith.constant 4 : index
    %c0_104 = arith.constant 0 : index
    %c0_105 = arith.constant 0 : index
    %152 = vector.load %arg5[%c4_103, %c0_104, %c0_105] : memref<9x32x64xf32, #tpu.memory_space<vmem>>, vector<1x32x64xf32>
    %153 = vector.shape_cast %152 : vector<1x32x64xf32> to vector<32x64xf32>
    %cst_106 = arith.constant dense<0.000000e+00> : vector<84x64xf32>
    %154 = tpu.matmul %151, %153, %cst_106 {dimension_numbers = #tpu.dot_dimension_numbers<[1], [0], [0], [1], [0, 0, 1, 1], [], []>} : vector<84x32xf32>, vector<32x64xf32>, vector<84x64xf32> -> vector<84x64xf32>
    %155 = arith.addf %147, %154 : vector<84x64xf32>
    %cst_107 = arith.constant 0.000000e+00 : f32
    %156 = vector.broadcast %cst_107 : f32 to vector<2x32xf32>
    %157 = vector.extract_strided_slice %102 {offsets = [2, 0], sizes = [82, 32], strides = [1, 1]} : vector<84x32xf32> to vector<82x32xf32>
    %158 = tpu.concatenate %157, %156 in 0 : vector<82x32xf32>, vector<2x32xf32> -> vector<84x32xf32>
    %c5_108 = arith.constant 5 : index
    %c0_109 = arith.constant 0 : index
    %c0_110 = arith.constant 0 : index
    %159 = vector.load %arg2[%c5_108, %c0_109, %c0_110] : memref<9x84x1xf32, #tpu.memory_space<vmem>>, vector<1x84x1xf32>
    %160 = vector.shape_cast %159 : vector<1x84x1xf32> to vector<84x1xf32>
    %161 = vector.broadcast %160 : vector<84x1xf32> to vector<84x32xf32>
    %162 = arith.mulf %158, %161 : vector<84x32xf32>
    %c5_111 = arith.constant 5 : index
    %c0_112 = arith.constant 0 : index
    %c0_113 = arith.constant 0 : index
    %163 = vector.load %arg5[%c5_111, %c0_112, %c0_113] : memref<9x32x64xf32, #tpu.memory_space<vmem>>, vector<1x32x64xf32>
    %164 = vector.shape_cast %163 : vector<1x32x64xf32> to vector<32x64xf32>
    %cst_114 = arith.constant dense<0.000000e+00> : vector<84x64xf32>
    %165 = tpu.matmul %162, %164, %cst_114 {dimension_numbers = #tpu.dot_dimension_numbers<[1], [0], [0], [1], [0, 0, 1, 1], [], []>} : vector<84x32xf32>, vector<32x64xf32>, vector<84x64xf32> -> vector<84x64xf32>
    %166 = arith.addf %155, %165 : vector<84x64xf32>
    %cst_115 = arith.constant 0.000000e+00 : f32
    %167 = vector.broadcast %cst_115 : f32 to vector<12x32xf32>
    %168 = vector.extract_strided_slice %102 {offsets = [12, 0], sizes = [72, 32], strides = [1, 1]} : vector<84x32xf32> to vector<72x32xf32>
    %169 = tpu.concatenate %168, %167 in 0 : vector<72x32xf32>, vector<12x32xf32> -> vector<84x32xf32>
    %c6_116 = arith.constant 6 : index
    %c0_117 = arith.constant 0 : index
    %c0_118 = arith.constant 0 : index
    %170 = vector.load %arg2[%c6_116, %c0_117, %c0_118] : memref<9x84x1xf32, #tpu.memory_space<vmem>>, vector<1x84x1xf32>
    %171 = vector.shape_cast %170 : vector<1x84x1xf32> to vector<84x1xf32>
    %172 = vector.broadcast %171 : vector<84x1xf32> to vector<84x32xf32>
    %173 = arith.mulf %169, %172 : vector<84x32xf32>
    %c6_119 = arith.constant 6 : index
    %c0_120 = arith.constant 0 : index
    %c0_121 = arith.constant 0 : index
    %174 = vector.load %arg5[%c6_119, %c0_120, %c0_121] : memref<9x32x64xf32, #tpu.memory_space<vmem>>, vector<1x32x64xf32>
    %175 = vector.shape_cast %174 : vector<1x32x64xf32> to vector<32x64xf32>
    %cst_122 = arith.constant dense<0.000000e+00> : vector<84x64xf32>
    %176 = tpu.matmul %173, %175, %cst_122 {dimension_numbers = #tpu.dot_dimension_numbers<[1], [0], [0], [1], [0, 0, 1, 1], [], []>} : vector<84x32xf32>, vector<32x64xf32>, vector<84x64xf32> -> vector<84x64xf32>
    %177 = arith.addf %166, %176 : vector<84x64xf32>
    %cst_123 = arith.constant 0.000000e+00 : f32
    %178 = vector.broadcast %cst_123 : f32 to vector<14x32xf32>
    %179 = vector.extract_strided_slice %102 {offsets = [14, 0], sizes = [70, 32], strides = [1, 1]} : vector<84x32xf32> to vector<70x32xf32>
    %180 = tpu.concatenate %179, %178 in 0 : vector<70x32xf32>, vector<14x32xf32> -> vector<84x32xf32>
    %c7_124 = arith.constant 7 : index
    %c0_125 = arith.constant 0 : index
    %c0_126 = arith.constant 0 : index
    %181 = vector.load %arg2[%c7_124, %c0_125, %c0_126] : memref<9x84x1xf32, #tpu.memory_space<vmem>>, vector<1x84x1xf32>
    %182 = vector.shape_cast %181 : vector<1x84x1xf32> to vector<84x1xf32>
    %183 = vector.broadcast %182 : vector<84x1xf32> to vector<84x32xf32>
    %184 = arith.mulf %180, %183 : vector<84x32xf32>
    %c7_127 = arith.constant 7 : index
    %c0_128 = arith.constant 0 : index
    %c0_129 = arith.constant 0 : index
    %185 = vector.load %arg5[%c7_127, %c0_128, %c0_129] : memref<9x32x64xf32, #tpu.memory_space<vmem>>, vector<1x32x64xf32>
    %186 = vector.shape_cast %185 : vector<1x32x64xf32> to vector<32x64xf32>
    %cst_130 = arith.constant dense<0.000000e+00> : vector<84x64xf32>
    %187 = tpu.matmul %184, %186, %cst_130 {dimension_numbers = #tpu.dot_dimension_numbers<[1], [0], [0], [1], [0, 0, 1, 1], [], []>} : vector<84x32xf32>, vector<32x64xf32>, vector<84x64xf32> -> vector<84x64xf32>
    %188 = arith.addf %177, %187 : vector<84x64xf32>
    %cst_131 = arith.constant 0.000000e+00 : f32
    %189 = vector.broadcast %cst_131 : f32 to vector<16x32xf32>
    %190 = vector.extract_strided_slice %102 {offsets = [16, 0], sizes = [68, 32], strides = [1, 1]} : vector<84x32xf32> to vector<68x32xf32>
    %191 = tpu.concatenate %190, %189 in 0 : vector<68x32xf32>, vector<16x32xf32> -> vector<84x32xf32>
    %c8_132 = arith.constant 8 : index
    %c0_133 = arith.constant 0 : index
    %c0_134 = arith.constant 0 : index
    %192 = vector.load %arg2[%c8_132, %c0_133, %c0_134] : memref<9x84x1xf32, #tpu.memory_space<vmem>>, vector<1x84x1xf32>
    %193 = vector.shape_cast %192 : vector<1x84x1xf32> to vector<84x1xf32>
    %194 = vector.broadcast %193 : vector<84x1xf32> to vector<84x32xf32>
    %195 = arith.mulf %191, %194 : vector<84x32xf32>
    %c8_135 = arith.constant 8 : index
    %c0_136 = arith.constant 0 : index
    %c0_137 = arith.constant 0 : index
    %196 = vector.load %arg5[%c8_135, %c0_136, %c0_137] : memref<9x32x64xf32, #tpu.memory_space<vmem>>, vector<1x32x64xf32>
    %197 = vector.shape_cast %196 : vector<1x32x64xf32> to vector<32x64xf32>
    %cst_138 = arith.constant dense<0.000000e+00> : vector<84x64xf32>
    %198 = tpu.matmul %195, %197, %cst_138 {dimension_numbers = #tpu.dot_dimension_numbers<[1], [0], [0], [1], [0, 0, 1, 1], [], []>} : vector<84x32xf32>, vector<32x64xf32>, vector<84x64xf32> -> vector<84x64xf32>
    %199 = arith.addf %188, %198 : vector<84x64xf32>
    %c0_139 = arith.constant 0 : index
    %c0_140 = arith.constant 0 : index
    %200 = vector.load %arg6[%c0_139, %c0_140] : memref<1x64xf32, #tpu.memory_space<vmem>>, vector<1x64xf32>
    %201 = vector.broadcast %200 : vector<1x64xf32> to vector<84x64xf32>
    %202 = arith.addf %199, %201 : vector<84x64xf32>
    %cst_141 = arith.constant 0.000000e+00 : f32
    %203 = vector.broadcast %cst_141 : f32 to vector<84x64xf32>
    %204 = arith.maximumf %202, %203 : vector<84x64xf32>
    %cst_142 = arith.constant 0.000000e+00 : f32
    %205 = vector.broadcast %cst_142 : f32 to vector<2x128xf32>
    %206 = vector.extract_strided_slice %204 {offsets = [0, 0], sizes = [2, 64], strides = [1, 1]} : vector<84x64xf32> to vector<2x64xf32>
    %c0_143 = arith.constant 0 : index
    %c0_144 = arith.constant 0 : index
    %c0_145 = arith.constant 0 : index
    %207 = vector.load %arg7[%c0_143, %c0_144, %c0_145] : memref<42x64x128xf32, #tpu.memory_space<vmem>>, vector<1x64x128xf32>
    %208 = vector.shape_cast %207 : vector<1x64x128xf32> to vector<64x128xf32>
    %cst_146 = arith.constant dense<0.000000e+00> : vector<2x128xf32>
    %209 = tpu.matmul %206, %208, %cst_146 {dimension_numbers = #tpu.dot_dimension_numbers<[1], [0], [0], [1], [0, 0, 1, 1], [], []>} : vector<2x64xf32>, vector<64x128xf32>, vector<2x128xf32> -> vector<2x128xf32>
    %210 = arith.addf %205, %209 : vector<2x128xf32>
    %211 = vector.extract_strided_slice %204 {offsets = [2, 0], sizes = [2, 64], strides = [1, 1]} : vector<84x64xf32> to vector<2x64xf32>
    %c1_147 = arith.constant 1 : index
    %c0_148 = arith.constant 0 : index
    %c0_149 = arith.constant 0 : index
    %212 = vector.load %arg7[%c1_147, %c0_148, %c0_149] : memref<42x64x128xf32, #tpu.memory_space<vmem>>, vector<1x64x128xf32>
    %213 = vector.shape_cast %212 : vector<1x64x128xf32> to vector<64x128xf32>
    %cst_150 = arith.constant dense<0.000000e+00> : vector<2x128xf32>
    %214 = tpu.matmul %211, %213, %cst_150 {dimension_numbers = #tpu.dot_dimension_numbers<[1], [0], [0], [1], [0, 0, 1, 1], [], []>} : vector<2x64xf32>, vector<64x128xf32>, vector<2x128xf32> -> vector<2x128xf32>
    %215 = arith.addf %210, %214 : vector<2x128xf32>
    %216 = vector.extract_strided_slice %204 {offsets = [4, 0], sizes = [2, 64], strides = [1, 1]} : vector<84x64xf32> to vector<2x64xf32>
    %c2_151 = arith.constant 2 : index
    %c0_152 = arith.constant 0 : index
    %c0_153 = arith.constant 0 : index
    %217 = vector.load %arg7[%c2_151, %c0_152, %c0_153] : memref<42x64x128xf32, #tpu.memory_space<vmem>>, vector<1x64x128xf32>
    %218 = vector.shape_cast %217 : vector<1x64x128xf32> to vector<64x128xf32>
    %cst_154 = arith.constant dense<0.000000e+00> : vector<2x128xf32>
    %219 = tpu.matmul %216, %218, %cst_154 {dimension_numbers = #tpu.dot_dimension_numbers<[1], [0], [0], [1], [0, 0, 1, 1], [], []>} : vector<2x64xf32>, vector<64x128xf32>, vector<2x128xf32> -> vector<2x128xf32>
    %220 = arith.addf %215, %219 : vector<2x128xf32>
    %221 = vector.extract_strided_slice %204 {offsets = [6, 0], sizes = [2, 64], strides = [1, 1]} : vector<84x64xf32> to vector<2x64xf32>
    %c3_155 = arith.constant 3 : index
    %c0_156 = arith.constant 0 : index
    %c0_157 = arith.constant 0 : index
    %222 = vector.load %arg7[%c3_155, %c0_156, %c0_157] : memref<42x64x128xf32, #tpu.memory_space<vmem>>, vector<1x64x128xf32>
    %223 = vector.shape_cast %222 : vector<1x64x128xf32> to vector<64x128xf32>
    %cst_158 = arith.constant dense<0.000000e+00> : vector<2x128xf32>
    %224 = tpu.matmul %221, %223, %cst_158 {dimension_numbers = #tpu.dot_dimension_numbers<[1], [0], [0], [1], [0, 0, 1, 1], [], []>} : vector<2x64xf32>, vector<64x128xf32>, vector<2x128xf32> -> vector<2x128xf32>
    %225 = arith.addf %220, %224 : vector<2x128xf32>
    %226 = vector.extract_strided_slice %204 {offsets = [8, 0], sizes = [2, 64], strides = [1, 1]} : vector<84x64xf32> to vector<2x64xf32>
    %c4_159 = arith.constant 4 : index
    %c0_160 = arith.constant 0 : index
    %c0_161 = arith.constant 0 : index
    %227 = vector.load %arg7[%c4_159, %c0_160, %c0_161] : memref<42x64x128xf32, #tpu.memory_space<vmem>>, vector<1x64x128xf32>
    %228 = vector.shape_cast %227 : vector<1x64x128xf32> to vector<64x128xf32>
    %cst_162 = arith.constant dense<0.000000e+00> : vector<2x128xf32>
    %229 = tpu.matmul %226, %228, %cst_162 {dimension_numbers = #tpu.dot_dimension_numbers<[1], [0], [0], [1], [0, 0, 1, 1], [], []>} : vector<2x64xf32>, vector<64x128xf32>, vector<2x128xf32> -> vector<2x128xf32>
    %230 = arith.addf %225, %229 : vector<2x128xf32>
    %231 = vector.extract_strided_slice %204 {offsets = [10, 0], sizes = [2, 64], strides = [1, 1]} : vector<84x64xf32> to vector<2x64xf32>
    %c5_163 = arith.constant 5 : index
    %c0_164 = arith.constant 0 : index
    %c0_165 = arith.constant 0 : index
    %232 = vector.load %arg7[%c5_163, %c0_164, %c0_165] : memref<42x64x128xf32, #tpu.memory_space<vmem>>, vector<1x64x128xf32>
    %233 = vector.shape_cast %232 : vector<1x64x128xf32> to vector<64x128xf32>
    %cst_166 = arith.constant dense<0.000000e+00> : vector<2x128xf32>
    %234 = tpu.matmul %231, %233, %cst_166 {dimension_numbers = #tpu.dot_dimension_numbers<[1], [0], [0], [1], [0, 0, 1, 1], [], []>} : vector<2x64xf32>, vector<64x128xf32>, vector<2x128xf32> -> vector<2x128xf32>
    %235 = arith.addf %230, %234 : vector<2x128xf32>
    %236 = vector.extract_strided_slice %204 {offsets = [12, 0], sizes = [2, 64], strides = [1, 1]} : vector<84x64xf32> to vector<2x64xf32>
    %c6_167 = arith.constant 6 : index
    %c0_168 = arith.constant 0 : index
    %c0_169 = arith.constant 0 : index
    %237 = vector.load %arg7[%c6_167, %c0_168, %c0_169] : memref<42x64x128xf32, #tpu.memory_space<vmem>>, vector<1x64x128xf32>
    %238 = vector.shape_cast %237 : vector<1x64x128xf32> to vector<64x128xf32>
    %cst_170 = arith.constant dense<0.000000e+00> : vector<2x128xf32>
    %239 = tpu.matmul %236, %238, %cst_170 {dimension_numbers = #tpu.dot_dimension_numbers<[1], [0], [0], [1], [0, 0, 1, 1], [], []>} : vector<2x64xf32>, vector<64x128xf32>, vector<2x128xf32> -> vector<2x128xf32>
    %240 = arith.addf %235, %239 : vector<2x128xf32>
    %241 = vector.extract_strided_slice %204 {offsets = [14, 0], sizes = [2, 64], strides = [1, 1]} : vector<84x64xf32> to vector<2x64xf32>
    %c7_171 = arith.constant 7 : index
    %c0_172 = arith.constant 0 : index
    %c0_173 = arith.constant 0 : index
    %242 = vector.load %arg7[%c7_171, %c0_172, %c0_173] : memref<42x64x128xf32, #tpu.memory_space<vmem>>, vector<1x64x128xf32>
    %243 = vector.shape_cast %242 : vector<1x64x128xf32> to vector<64x128xf32>
    %cst_174 = arith.constant dense<0.000000e+00> : vector<2x128xf32>
    %244 = tpu.matmul %241, %243, %cst_174 {dimension_numbers = #tpu.dot_dimension_numbers<[1], [0], [0], [1], [0, 0, 1, 1], [], []>} : vector<2x64xf32>, vector<64x128xf32>, vector<2x128xf32> -> vector<2x128xf32>
    %245 = arith.addf %240, %244 : vector<2x128xf32>
    %246 = vector.extract_strided_slice %204 {offsets = [16, 0], sizes = [2, 64], strides = [1, 1]} : vector<84x64xf32> to vector<2x64xf32>
    %c8_175 = arith.constant 8 : index
    %c0_176 = arith.constant 0 : index
    %c0_177 = arith.constant 0 : index
    %247 = vector.load %arg7[%c8_175, %c0_176, %c0_177] : memref<42x64x128xf32, #tpu.memory_space<vmem>>, vector<1x64x128xf32>
    %248 = vector.shape_cast %247 : vector<1x64x128xf32> to vector<64x128xf32>
    %cst_178 = arith.constant dense<0.000000e+00> : vector<2x128xf32>
    %249 = tpu.matmul %246, %248, %cst_178 {dimension_numbers = #tpu.dot_dimension_numbers<[1], [0], [0], [1], [0, 0, 1, 1], [], []>} : vector<2x64xf32>, vector<64x128xf32>, vector<2x128xf32> -> vector<2x128xf32>
    %250 = arith.addf %245, %249 : vector<2x128xf32>
    %251 = vector.extract_strided_slice %204 {offsets = [18, 0], sizes = [2, 64], strides = [1, 1]} : vector<84x64xf32> to vector<2x64xf32>
    %c9 = arith.constant 9 : index
    %c0_179 = arith.constant 0 : index
    %c0_180 = arith.constant 0 : index
    %252 = vector.load %arg7[%c9, %c0_179, %c0_180] : memref<42x64x128xf32, #tpu.memory_space<vmem>>, vector<1x64x128xf32>
    %253 = vector.shape_cast %252 : vector<1x64x128xf32> to vector<64x128xf32>
    %cst_181 = arith.constant dense<0.000000e+00> : vector<2x128xf32>
    %254 = tpu.matmul %251, %253, %cst_181 {dimension_numbers = #tpu.dot_dimension_numbers<[1], [0], [0], [1], [0, 0, 1, 1], [], []>} : vector<2x64xf32>, vector<64x128xf32>, vector<2x128xf32> -> vector<2x128xf32>
    %255 = arith.addf %250, %254 : vector<2x128xf32>
    %256 = vector.extract_strided_slice %204 {offsets = [20, 0], sizes = [2, 64], strides = [1, 1]} : vector<84x64xf32> to vector<2x64xf32>
    %c10 = arith.constant 10 : index
    %c0_182 = arith.constant 0 : index
    %c0_183 = arith.constant 0 : index
    %257 = vector.load %arg7[%c10, %c0_182, %c0_183] : memref<42x64x128xf32, #tpu.memory_space<vmem>>, vector<1x64x128xf32>
    %258 = vector.shape_cast %257 : vector<1x64x128xf32> to vector<64x128xf32>
    %cst_184 = arith.constant dense<0.000000e+00> : vector<2x128xf32>
    %259 = tpu.matmul %256, %258, %cst_184 {dimension_numbers = #tpu.dot_dimension_numbers<[1], [0], [0], [1], [0, 0, 1, 1], [], []>} : vector<2x64xf32>, vector<64x128xf32>, vector<2x128xf32> -> vector<2x128xf32>
    %260 = arith.addf %255, %259 : vector<2x128xf32>
    %261 = vector.extract_strided_slice %204 {offsets = [22, 0], sizes = [2, 64], strides = [1, 1]} : vector<84x64xf32> to vector<2x64xf32>
    %c11 = arith.constant 11 : index
    %c0_185 = arith.constant 0 : index
    %c0_186 = arith.constant 0 : index
    %262 = vector.load %arg7[%c11, %c0_185, %c0_186] : memref<42x64x128xf32, #tpu.memory_space<vmem>>, vector<1x64x128xf32>
    %263 = vector.shape_cast %262 : vector<1x64x128xf32> to vector<64x128xf32>
    %cst_187 = arith.constant dense<0.000000e+00> : vector<2x128xf32>
    %264 = tpu.matmul %261, %263, %cst_187 {dimension_numbers = #tpu.dot_dimension_numbers<[1], [0], [0], [1], [0, 0, 1, 1], [], []>} : vector<2x64xf32>, vector<64x128xf32>, vector<2x128xf32> -> vector<2x128xf32>
    %265 = arith.addf %260, %264 : vector<2x128xf32>
    %266 = vector.extract_strided_slice %204 {offsets = [24, 0], sizes = [2, 64], strides = [1, 1]} : vector<84x64xf32> to vector<2x64xf32>
    %c12 = arith.constant 12 : index
    %c0_188 = arith.constant 0 : index
    %c0_189 = arith.constant 0 : index
    %267 = vector.load %arg7[%c12, %c0_188, %c0_189] : memref<42x64x128xf32, #tpu.memory_space<vmem>>, vector<1x64x128xf32>
    %268 = vector.shape_cast %267 : vector<1x64x128xf32> to vector<64x128xf32>
    %cst_190 = arith.constant dense<0.000000e+00> : vector<2x128xf32>
    %269 = tpu.matmul %266, %268, %cst_190 {dimension_numbers = #tpu.dot_dimension_numbers<[1], [0], [0], [1], [0, 0, 1, 1], [], []>} : vector<2x64xf32>, vector<64x128xf32>, vector<2x128xf32> -> vector<2x128xf32>
    %270 = arith.addf %265, %269 : vector<2x128xf32>
    %271 = vector.extract_strided_slice %204 {offsets = [26, 0], sizes = [2, 64], strides = [1, 1]} : vector<84x64xf32> to vector<2x64xf32>
    %c13 = arith.constant 13 : index
    %c0_191 = arith.constant 0 : index
    %c0_192 = arith.constant 0 : index
    %272 = vector.load %arg7[%c13, %c0_191, %c0_192] : memref<42x64x128xf32, #tpu.memory_space<vmem>>, vector<1x64x128xf32>
    %273 = vector.shape_cast %272 : vector<1x64x128xf32> to vector<64x128xf32>
    %cst_193 = arith.constant dense<0.000000e+00> : vector<2x128xf32>
    %274 = tpu.matmul %271, %273, %cst_193 {dimension_numbers = #tpu.dot_dimension_numbers<[1], [0], [0], [1], [0, 0, 1, 1], [], []>} : vector<2x64xf32>, vector<64x128xf32>, vector<2x128xf32> -> vector<2x128xf32>
    %275 = arith.addf %270, %274 : vector<2x128xf32>
    %276 = vector.extract_strided_slice %204 {offsets = [28, 0], sizes = [2, 64], strides = [1, 1]} : vector<84x64xf32> to vector<2x64xf32>
    %c14 = arith.constant 14 : index
    %c0_194 = arith.constant 0 : index
    %c0_195 = arith.constant 0 : index
    %277 = vector.load %arg7[%c14, %c0_194, %c0_195] : memref<42x64x128xf32, #tpu.memory_space<vmem>>, vector<1x64x128xf32>
    %278 = vector.shape_cast %277 : vector<1x64x128xf32> to vector<64x128xf32>
    %cst_196 = arith.constant dense<0.000000e+00> : vector<2x128xf32>
    %279 = tpu.matmul %276, %278, %cst_196 {dimension_numbers = #tpu.dot_dimension_numbers<[1], [0], [0], [1], [0, 0, 1, 1], [], []>} : vector<2x64xf32>, vector<64x128xf32>, vector<2x128xf32> -> vector<2x128xf32>
    %280 = arith.addf %275, %279 : vector<2x128xf32>
    %281 = vector.extract_strided_slice %204 {offsets = [30, 0], sizes = [2, 64], strides = [1, 1]} : vector<84x64xf32> to vector<2x64xf32>
    %c15 = arith.constant 15 : index
    %c0_197 = arith.constant 0 : index
    %c0_198 = arith.constant 0 : index
    %282 = vector.load %arg7[%c15, %c0_197, %c0_198] : memref<42x64x128xf32, #tpu.memory_space<vmem>>, vector<1x64x128xf32>
    %283 = vector.shape_cast %282 : vector<1x64x128xf32> to vector<64x128xf32>
    %cst_199 = arith.constant dense<0.000000e+00> : vector<2x128xf32>
    %284 = tpu.matmul %281, %283, %cst_199 {dimension_numbers = #tpu.dot_dimension_numbers<[1], [0], [0], [1], [0, 0, 1, 1], [], []>} : vector<2x64xf32>, vector<64x128xf32>, vector<2x128xf32> -> vector<2x128xf32>
    %285 = arith.addf %280, %284 : vector<2x128xf32>
    %286 = vector.extract_strided_slice %204 {offsets = [32, 0], sizes = [2, 64], strides = [1, 1]} : vector<84x64xf32> to vector<2x64xf32>
    %c16 = arith.constant 16 : index
    %c0_200 = arith.constant 0 : index
    %c0_201 = arith.constant 0 : index
    %287 = vector.load %arg7[%c16, %c0_200, %c0_201] : memref<42x64x128xf32, #tpu.memory_space<vmem>>, vector<1x64x128xf32>
    %288 = vector.shape_cast %287 : vector<1x64x128xf32> to vector<64x128xf32>
    %cst_202 = arith.constant dense<0.000000e+00> : vector<2x128xf32>
    %289 = tpu.matmul %286, %288, %cst_202 {dimension_numbers = #tpu.dot_dimension_numbers<[1], [0], [0], [1], [0, 0, 1, 1], [], []>} : vector<2x64xf32>, vector<64x128xf32>, vector<2x128xf32> -> vector<2x128xf32>
    %290 = arith.addf %285, %289 : vector<2x128xf32>
    %291 = vector.extract_strided_slice %204 {offsets = [34, 0], sizes = [2, 64], strides = [1, 1]} : vector<84x64xf32> to vector<2x64xf32>
    %c17 = arith.constant 17 : index
    %c0_203 = arith.constant 0 : index
    %c0_204 = arith.constant 0 : index
    %292 = vector.load %arg7[%c17, %c0_203, %c0_204] : memref<42x64x128xf32, #tpu.memory_space<vmem>>, vector<1x64x128xf32>
    %293 = vector.shape_cast %292 : vector<1x64x128xf32> to vector<64x128xf32>
    %cst_205 = arith.constant dense<0.000000e+00> : vector<2x128xf32>
    %294 = tpu.matmul %291, %293, %cst_205 {dimension_numbers = #tpu.dot_dimension_numbers<[1], [0], [0], [1], [0, 0, 1, 1], [], []>} : vector<2x64xf32>, vector<64x128xf32>, vector<2x128xf32> -> vector<2x128xf32>
    %295 = arith.addf %290, %294 : vector<2x128xf32>
    %296 = vector.extract_strided_slice %204 {offsets = [36, 0], sizes = [2, 64], strides = [1, 1]} : vector<84x64xf32> to vector<2x64xf32>
    %c18 = arith.constant 18 : index
    %c0_206 = arith.constant 0 : index
    %c0_207 = arith.constant 0 : index
    %297 = vector.load %arg7[%c18, %c0_206, %c0_207] : memref<42x64x128xf32, #tpu.memory_space<vmem>>, vector<1x64x128xf32>
    %298 = vector.shape_cast %297 : vector<1x64x128xf32> to vector<64x128xf32>
    %cst_208 = arith.constant dense<0.000000e+00> : vector<2x128xf32>
    %299 = tpu.matmul %296, %298, %cst_208 {dimension_numbers = #tpu.dot_dimension_numbers<[1], [0], [0], [1], [0, 0, 1, 1], [], []>} : vector<2x64xf32>, vector<64x128xf32>, vector<2x128xf32> -> vector<2x128xf32>
    %300 = arith.addf %295, %299 : vector<2x128xf32>
    %301 = vector.extract_strided_slice %204 {offsets = [38, 0], sizes = [2, 64], strides = [1, 1]} : vector<84x64xf32> to vector<2x64xf32>
    %c19 = arith.constant 19 : index
    %c0_209 = arith.constant 0 : index
    %c0_210 = arith.constant 0 : index
    %302 = vector.load %arg7[%c19, %c0_209, %c0_210] : memref<42x64x128xf32, #tpu.memory_space<vmem>>, vector<1x64x128xf32>
    %303 = vector.shape_cast %302 : vector<1x64x128xf32> to vector<64x128xf32>
    %cst_211 = arith.constant dense<0.000000e+00> : vector<2x128xf32>
    %304 = tpu.matmul %301, %303, %cst_211 {dimension_numbers = #tpu.dot_dimension_numbers<[1], [0], [0], [1], [0, 0, 1, 1], [], []>} : vector<2x64xf32>, vector<64x128xf32>, vector<2x128xf32> -> vector<2x128xf32>
    %305 = arith.addf %300, %304 : vector<2x128xf32>
    %306 = vector.extract_strided_slice %204 {offsets = [40, 0], sizes = [2, 64], strides = [1, 1]} : vector<84x64xf32> to vector<2x64xf32>
    %c20 = arith.constant 20 : index
    %c0_212 = arith.constant 0 : index
    %c0_213 = arith.constant 0 : index
    %307 = vector.load %arg7[%c20, %c0_212, %c0_213] : memref<42x64x128xf32, #tpu.memory_space<vmem>>, vector<1x64x128xf32>
    %308 = vector.shape_cast %307 : vector<1x64x128xf32> to vector<64x128xf32>
    %cst_214 = arith.constant dense<0.000000e+00> : vector<2x128xf32>
    %309 = tpu.matmul %306, %308, %cst_214 {dimension_numbers = #tpu.dot_dimension_numbers<[1], [0], [0], [1], [0, 0, 1, 1], [], []>} : vector<2x64xf32>, vector<64x128xf32>, vector<2x128xf32> -> vector<2x128xf32>
    %310 = arith.addf %305, %309 : vector<2x128xf32>
    %311 = vector.extract_strided_slice %204 {offsets = [42, 0], sizes = [2, 64], strides = [1, 1]} : vector<84x64xf32> to vector<2x64xf32>
    %c21 = arith.constant 21 : index
    %c0_215 = arith.constant 0 : index
    %c0_216 = arith.constant 0 : index
    %312 = vector.load %arg7[%c21, %c0_215, %c0_216] : memref<42x64x128xf32, #tpu.memory_space<vmem>>, vector<1x64x128xf32>
    %313 = vector.shape_cast %312 : vector<1x64x128xf32> to vector<64x128xf32>
    %cst_217 = arith.constant dense<0.000000e+00> : vector<2x128xf32>
    %314 = tpu.matmul %311, %313, %cst_217 {dimension_numbers = #tpu.dot_dimension_numbers<[1], [0], [0], [1], [0, 0, 1, 1], [], []>} : vector<2x64xf32>, vector<64x128xf32>, vector<2x128xf32> -> vector<2x128xf32>
    %315 = arith.addf %310, %314 : vector<2x128xf32>
    %316 = vector.extract_strided_slice %204 {offsets = [44, 0], sizes = [2, 64], strides = [1, 1]} : vector<84x64xf32> to vector<2x64xf32>
    %c22 = arith.constant 22 : index
    %c0_218 = arith.constant 0 : index
    %c0_219 = arith.constant 0 : index
    %317 = vector.load %arg7[%c22, %c0_218, %c0_219] : memref<42x64x128xf32, #tpu.memory_space<vmem>>, vector<1x64x128xf32>
    %318 = vector.shape_cast %317 : vector<1x64x128xf32> to vector<64x128xf32>
    %cst_220 = arith.constant dense<0.000000e+00> : vector<2x128xf32>
    %319 = tpu.matmul %316, %318, %cst_220 {dimension_numbers = #tpu.dot_dimension_numbers<[1], [0], [0], [1], [0, 0, 1, 1], [], []>} : vector<2x64xf32>, vector<64x128xf32>, vector<2x128xf32> -> vector<2x128xf32>
    %320 = arith.addf %315, %319 : vector<2x128xf32>
    %321 = vector.extract_strided_slice %204 {offsets = [46, 0], sizes = [2, 64], strides = [1, 1]} : vector<84x64xf32> to vector<2x64xf32>
    %c23 = arith.constant 23 : index
    %c0_221 = arith.constant 0 : index
    %c0_222 = arith.constant 0 : index
    %322 = vector.load %arg7[%c23, %c0_221, %c0_222] : memref<42x64x128xf32, #tpu.memory_space<vmem>>, vector<1x64x128xf32>
    %323 = vector.shape_cast %322 : vector<1x64x128xf32> to vector<64x128xf32>
    %cst_223 = arith.constant dense<0.000000e+00> : vector<2x128xf32>
    %324 = tpu.matmul %321, %323, %cst_223 {dimension_numbers = #tpu.dot_dimension_numbers<[1], [0], [0], [1], [0, 0, 1, 1], [], []>} : vector<2x64xf32>, vector<64x128xf32>, vector<2x128xf32> -> vector<2x128xf32>
    %325 = arith.addf %320, %324 : vector<2x128xf32>
    %326 = vector.extract_strided_slice %204 {offsets = [48, 0], sizes = [2, 64], strides = [1, 1]} : vector<84x64xf32> to vector<2x64xf32>
    %c24 = arith.constant 24 : index
    %c0_224 = arith.constant 0 : index
    %c0_225 = arith.constant 0 : index
    %327 = vector.load %arg7[%c24, %c0_224, %c0_225] : memref<42x64x128xf32, #tpu.memory_space<vmem>>, vector<1x64x128xf32>
    %328 = vector.shape_cast %327 : vector<1x64x128xf32> to vector<64x128xf32>
    %cst_226 = arith.constant dense<0.000000e+00> : vector<2x128xf32>
    %329 = tpu.matmul %326, %328, %cst_226 {dimension_numbers = #tpu.dot_dimension_numbers<[1], [0], [0], [1], [0, 0, 1, 1], [], []>} : vector<2x64xf32>, vector<64x128xf32>, vector<2x128xf32> -> vector<2x128xf32>
    %330 = arith.addf %325, %329 : vector<2x128xf32>
    %331 = vector.extract_strided_slice %204 {offsets = [50, 0], sizes = [2, 64], strides = [1, 1]} : vector<84x64xf32> to vector<2x64xf32>
    %c25 = arith.constant 25 : index
    %c0_227 = arith.constant 0 : index
    %c0_228 = arith.constant 0 : index
    %332 = vector.load %arg7[%c25, %c0_227, %c0_228] : memref<42x64x128xf32, #tpu.memory_space<vmem>>, vector<1x64x128xf32>
    %333 = vector.shape_cast %332 : vector<1x64x128xf32> to vector<64x128xf32>
    %cst_229 = arith.constant dense<0.000000e+00> : vector<2x128xf32>
    %334 = tpu.matmul %331, %333, %cst_229 {dimension_numbers = #tpu.dot_dimension_numbers<[1], [0], [0], [1], [0, 0, 1, 1], [], []>} : vector<2x64xf32>, vector<64x128xf32>, vector<2x128xf32> -> vector<2x128xf32>
    %335 = arith.addf %330, %334 : vector<2x128xf32>
    %336 = vector.extract_strided_slice %204 {offsets = [52, 0], sizes = [2, 64], strides = [1, 1]} : vector<84x64xf32> to vector<2x64xf32>
    %c26 = arith.constant 26 : index
    %c0_230 = arith.constant 0 : index
    %c0_231 = arith.constant 0 : index
    %337 = vector.load %arg7[%c26, %c0_230, %c0_231] : memref<42x64x128xf32, #tpu.memory_space<vmem>>, vector<1x64x128xf32>
    %338 = vector.shape_cast %337 : vector<1x64x128xf32> to vector<64x128xf32>
    %cst_232 = arith.constant dense<0.000000e+00> : vector<2x128xf32>
    %339 = tpu.matmul %336, %338, %cst_232 {dimension_numbers = #tpu.dot_dimension_numbers<[1], [0], [0], [1], [0, 0, 1, 1], [], []>} : vector<2x64xf32>, vector<64x128xf32>, vector<2x128xf32> -> vector<2x128xf32>
    %340 = arith.addf %335, %339 : vector<2x128xf32>
    %341 = vector.extract_strided_slice %204 {offsets = [54, 0], sizes = [2, 64], strides = [1, 1]} : vector<84x64xf32> to vector<2x64xf32>
    %c27 = arith.constant 27 : index
    %c0_233 = arith.constant 0 : index
    %c0_234 = arith.constant 0 : index
    %342 = vector.load %arg7[%c27, %c0_233, %c0_234] : memref<42x64x128xf32, #tpu.memory_space<vmem>>, vector<1x64x128xf32>
    %343 = vector.shape_cast %342 : vector<1x64x128xf32> to vector<64x128xf32>
    %cst_235 = arith.constant dense<0.000000e+00> : vector<2x128xf32>
    %344 = tpu.matmul %341, %343, %cst_235 {dimension_numbers = #tpu.dot_dimension_numbers<[1], [0], [0], [1], [0, 0, 1, 1], [], []>} : vector<2x64xf32>, vector<64x128xf32>, vector<2x128xf32> -> vector<2x128xf32>
    %345 = arith.addf %340, %344 : vector<2x128xf32>
    %346 = vector.extract_strided_slice %204 {offsets = [56, 0], sizes = [2, 64], strides = [1, 1]} : vector<84x64xf32> to vector<2x64xf32>
    %c28 = arith.constant 28 : index
    %c0_236 = arith.constant 0 : index
    %c0_237 = arith.constant 0 : index
    %347 = vector.load %arg7[%c28, %c0_236, %c0_237] : memref<42x64x128xf32, #tpu.memory_space<vmem>>, vector<1x64x128xf32>
    %348 = vector.shape_cast %347 : vector<1x64x128xf32> to vector<64x128xf32>
    %cst_238 = arith.constant dense<0.000000e+00> : vector<2x128xf32>
    %349 = tpu.matmul %346, %348, %cst_238 {dimension_numbers = #tpu.dot_dimension_numbers<[1], [0], [0], [1], [0, 0, 1, 1], [], []>} : vector<2x64xf32>, vector<64x128xf32>, vector<2x128xf32> -> vector<2x128xf32>
    %350 = arith.addf %345, %349 : vector<2x128xf32>
    %351 = vector.extract_strided_slice %204 {offsets = [58, 0], sizes = [2, 64], strides = [1, 1]} : vector<84x64xf32> to vector<2x64xf32>
    %c29 = arith.constant 29 : index
    %c0_239 = arith.constant 0 : index
    %c0_240 = arith.constant 0 : index
    %352 = vector.load %arg7[%c29, %c0_239, %c0_240] : memref<42x64x128xf32, #tpu.memory_space<vmem>>, vector<1x64x128xf32>
    %353 = vector.shape_cast %352 : vector<1x64x128xf32> to vector<64x128xf32>
    %cst_241 = arith.constant dense<0.000000e+00> : vector<2x128xf32>
    %354 = tpu.matmul %351, %353, %cst_241 {dimension_numbers = #tpu.dot_dimension_numbers<[1], [0], [0], [1], [0, 0, 1, 1], [], []>} : vector<2x64xf32>, vector<64x128xf32>, vector<2x128xf32> -> vector<2x128xf32>
    %355 = arith.addf %350, %354 : vector<2x128xf32>
    %356 = vector.extract_strided_slice %204 {offsets = [60, 0], sizes = [2, 64], strides = [1, 1]} : vector<84x64xf32> to vector<2x64xf32>
    %c30 = arith.constant 30 : index
    %c0_242 = arith.constant 0 : index
    %c0_243 = arith.constant 0 : index
    %357 = vector.load %arg7[%c30, %c0_242, %c0_243] : memref<42x64x128xf32, #tpu.memory_space<vmem>>, vector<1x64x128xf32>
    %358 = vector.shape_cast %357 : vector<1x64x128xf32> to vector<64x128xf32>
    %cst_244 = arith.constant dense<0.000000e+00> : vector<2x128xf32>
    %359 = tpu.matmul %356, %358, %cst_244 {dimension_numbers = #tpu.dot_dimension_numbers<[1], [0], [0], [1], [0, 0, 1, 1], [], []>} : vector<2x64xf32>, vector<64x128xf32>, vector<2x128xf32> -> vector<2x128xf32>
    %360 = arith.addf %355, %359 : vector<2x128xf32>
    %361 = vector.extract_strided_slice %204 {offsets = [62, 0], sizes = [2, 64], strides = [1, 1]} : vector<84x64xf32> to vector<2x64xf32>
    %c31 = arith.constant 31 : index
    %c0_245 = arith.constant 0 : index
    %c0_246 = arith.constant 0 : index
    %362 = vector.load %arg7[%c31, %c0_245, %c0_246] : memref<42x64x128xf32, #tpu.memory_space<vmem>>, vector<1x64x128xf32>
    %363 = vector.shape_cast %362 : vector<1x64x128xf32> to vector<64x128xf32>
    %cst_247 = arith.constant dense<0.000000e+00> : vector<2x128xf32>
    %364 = tpu.matmul %361, %363, %cst_247 {dimension_numbers = #tpu.dot_dimension_numbers<[1], [0], [0], [1], [0, 0, 1, 1], [], []>} : vector<2x64xf32>, vector<64x128xf32>, vector<2x128xf32> -> vector<2x128xf32>
    %365 = arith.addf %360, %364 : vector<2x128xf32>
    %366 = vector.extract_strided_slice %204 {offsets = [64, 0], sizes = [2, 64], strides = [1, 1]} : vector<84x64xf32> to vector<2x64xf32>
    %c32 = arith.constant 32 : index
    %c0_248 = arith.constant 0 : index
    %c0_249 = arith.constant 0 : index
    %367 = vector.load %arg7[%c32, %c0_248, %c0_249] : memref<42x64x128xf32, #tpu.memory_space<vmem>>, vector<1x64x128xf32>
    %368 = vector.shape_cast %367 : vector<1x64x128xf32> to vector<64x128xf32>
    %cst_250 = arith.constant dense<0.000000e+00> : vector<2x128xf32>
    %369 = tpu.matmul %366, %368, %cst_250 {dimension_numbers = #tpu.dot_dimension_numbers<[1], [0], [0], [1], [0, 0, 1, 1], [], []>} : vector<2x64xf32>, vector<64x128xf32>, vector<2x128xf32> -> vector<2x128xf32>
    %370 = arith.addf %365, %369 : vector<2x128xf32>
    %371 = vector.extract_strided_slice %204 {offsets = [66, 0], sizes = [2, 64], strides = [1, 1]} : vector<84x64xf32> to vector<2x64xf32>
    %c33 = arith.constant 33 : index
    %c0_251 = arith.constant 0 : index
    %c0_252 = arith.constant 0 : index
    %372 = vector.load %arg7[%c33, %c0_251, %c0_252] : memref<42x64x128xf32, #tpu.memory_space<vmem>>, vector<1x64x128xf32>
    %373 = vector.shape_cast %372 : vector<1x64x128xf32> to vector<64x128xf32>
    %cst_253 = arith.constant dense<0.000000e+00> : vector<2x128xf32>
    %374 = tpu.matmul %371, %373, %cst_253 {dimension_numbers = #tpu.dot_dimension_numbers<[1], [0], [0], [1], [0, 0, 1, 1], [], []>} : vector<2x64xf32>, vector<64x128xf32>, vector<2x128xf32> -> vector<2x128xf32>
    %375 = arith.addf %370, %374 : vector<2x128xf32>
    %376 = vector.extract_strided_slice %204 {offsets = [68, 0], sizes = [2, 64], strides = [1, 1]} : vector<84x64xf32> to vector<2x64xf32>
    %c34 = arith.constant 34 : index
    %c0_254 = arith.constant 0 : index
    %c0_255 = arith.constant 0 : index
    %377 = vector.load %arg7[%c34, %c0_254, %c0_255] : memref<42x64x128xf32, #tpu.memory_space<vmem>>, vector<1x64x128xf32>
    %378 = vector.shape_cast %377 : vector<1x64x128xf32> to vector<64x128xf32>
    %cst_256 = arith.constant dense<0.000000e+00> : vector<2x128xf32>
    %379 = tpu.matmul %376, %378, %cst_256 {dimension_numbers = #tpu.dot_dimension_numbers<[1], [0], [0], [1], [0, 0, 1, 1], [], []>} : vector<2x64xf32>, vector<64x128xf32>, vector<2x128xf32> -> vector<2x128xf32>
    %380 = arith.addf %375, %379 : vector<2x128xf32>
    %381 = vector.extract_strided_slice %204 {offsets = [70, 0], sizes = [2, 64], strides = [1, 1]} : vector<84x64xf32> to vector<2x64xf32>
    %c35 = arith.constant 35 : index
    %c0_257 = arith.constant 0 : index
    %c0_258 = arith.constant 0 : index
    %382 = vector.load %arg7[%c35, %c0_257, %c0_258] : memref<42x64x128xf32, #tpu.memory_space<vmem>>, vector<1x64x128xf32>
    %383 = vector.shape_cast %382 : vector<1x64x128xf32> to vector<64x128xf32>
    %cst_259 = arith.constant dense<0.000000e+00> : vector<2x128xf32>
    %384 = tpu.matmul %381, %383, %cst_259 {dimension_numbers = #tpu.dot_dimension_numbers<[1], [0], [0], [1], [0, 0, 1, 1], [], []>} : vector<2x64xf32>, vector<64x128xf32>, vector<2x128xf32> -> vector<2x128xf32>
    %385 = arith.addf %380, %384 : vector<2x128xf32>
    %386 = vector.extract_strided_slice %204 {offsets = [72, 0], sizes = [2, 64], strides = [1, 1]} : vector<84x64xf32> to vector<2x64xf32>
    %c36 = arith.constant 36 : index
    %c0_260 = arith.constant 0 : index
    %c0_261 = arith.constant 0 : index
    %387 = vector.load %arg7[%c36, %c0_260, %c0_261] : memref<42x64x128xf32, #tpu.memory_space<vmem>>, vector<1x64x128xf32>
    %388 = vector.shape_cast %387 : vector<1x64x128xf32> to vector<64x128xf32>
    %cst_262 = arith.constant dense<0.000000e+00> : vector<2x128xf32>
    %389 = tpu.matmul %386, %388, %cst_262 {dimension_numbers = #tpu.dot_dimension_numbers<[1], [0], [0], [1], [0, 0, 1, 1], [], []>} : vector<2x64xf32>, vector<64x128xf32>, vector<2x128xf32> -> vector<2x128xf32>
    %390 = arith.addf %385, %389 : vector<2x128xf32>
    %391 = vector.extract_strided_slice %204 {offsets = [74, 0], sizes = [2, 64], strides = [1, 1]} : vector<84x64xf32> to vector<2x64xf32>
    %c37 = arith.constant 37 : index
    %c0_263 = arith.constant 0 : index
    %c0_264 = arith.constant 0 : index
    %392 = vector.load %arg7[%c37, %c0_263, %c0_264] : memref<42x64x128xf32, #tpu.memory_space<vmem>>, vector<1x64x128xf32>
    %393 = vector.shape_cast %392 : vector<1x64x128xf32> to vector<64x128xf32>
    %cst_265 = arith.constant dense<0.000000e+00> : vector<2x128xf32>
    %394 = tpu.matmul %391, %393, %cst_265 {dimension_numbers = #tpu.dot_dimension_numbers<[1], [0], [0], [1], [0, 0, 1, 1], [], []>} : vector<2x64xf32>, vector<64x128xf32>, vector<2x128xf32> -> vector<2x128xf32>
    %395 = arith.addf %390, %394 : vector<2x128xf32>
    %396 = vector.extract_strided_slice %204 {offsets = [76, 0], sizes = [2, 64], strides = [1, 1]} : vector<84x64xf32> to vector<2x64xf32>
    %c38 = arith.constant 38 : index
    %c0_266 = arith.constant 0 : index
    %c0_267 = arith.constant 0 : index
    %397 = vector.load %arg7[%c38, %c0_266, %c0_267] : memref<42x64x128xf32, #tpu.memory_space<vmem>>, vector<1x64x128xf32>
    %398 = vector.shape_cast %397 : vector<1x64x128xf32> to vector<64x128xf32>
    %cst_268 = arith.constant dense<0.000000e+00> : vector<2x128xf32>
    %399 = tpu.matmul %396, %398, %cst_268 {dimension_numbers = #tpu.dot_dimension_numbers<[1], [0], [0], [1], [0, 0, 1, 1], [], []>} : vector<2x64xf32>, vector<64x128xf32>, vector<2x128xf32> -> vector<2x128xf32>
    %400 = arith.addf %395, %399 : vector<2x128xf32>
    %401 = vector.extract_strided_slice %204 {offsets = [78, 0], sizes = [2, 64], strides = [1, 1]} : vector<84x64xf32> to vector<2x64xf32>
    %c39 = arith.constant 39 : index
    %c0_269 = arith.constant 0 : index
    %c0_270 = arith.constant 0 : index
    %402 = vector.load %arg7[%c39, %c0_269, %c0_270] : memref<42x64x128xf32, #tpu.memory_space<vmem>>, vector<1x64x128xf32>
    %403 = vector.shape_cast %402 : vector<1x64x128xf32> to vector<64x128xf32>
    %cst_271 = arith.constant dense<0.000000e+00> : vector<2x128xf32>
    %404 = tpu.matmul %401, %403, %cst_271 {dimension_numbers = #tpu.dot_dimension_numbers<[1], [0], [0], [1], [0, 0, 1, 1], [], []>} : vector<2x64xf32>, vector<64x128xf32>, vector<2x128xf32> -> vector<2x128xf32>
    %405 = arith.addf %400, %404 : vector<2x128xf32>
    %406 = vector.extract_strided_slice %204 {offsets = [80, 0], sizes = [2, 64], strides = [1, 1]} : vector<84x64xf32> to vector<2x64xf32>
    %c40 = arith.constant 40 : index
    %c0_272 = arith.constant 0 : index
    %c0_273 = arith.constant 0 : index
    %407 = vector.load %arg7[%c40, %c0_272, %c0_273] : memref<42x64x128xf32, #tpu.memory_space<vmem>>, vector<1x64x128xf32>
    %408 = vector.shape_cast %407 : vector<1x64x128xf32> to vector<64x128xf32>
    %cst_274 = arith.constant dense<0.000000e+00> : vector<2x128xf32>
    %409 = tpu.matmul %406, %408, %cst_274 {dimension_numbers = #tpu.dot_dimension_numbers<[1], [0], [0], [1], [0, 0, 1, 1], [], []>} : vector<2x64xf32>, vector<64x128xf32>, vector<2x128xf32> -> vector<2x128xf32>
    %410 = arith.addf %405, %409 : vector<2x128xf32>
    %411 = vector.extract_strided_slice %204 {offsets = [82, 0], sizes = [2, 64], strides = [1, 1]} : vector<84x64xf32> to vector<2x64xf32>
    %c41 = arith.constant 41 : index
    %c0_275 = arith.constant 0 : index
    %c0_276 = arith.constant 0 : index
    %412 = vector.load %arg7[%c41, %c0_275, %c0_276] : memref<42x64x128xf32, #tpu.memory_space<vmem>>, vector<1x64x128xf32>
    %413 = vector.shape_cast %412 : vector<1x64x128xf32> to vector<64x128xf32>
    %cst_277 = arith.constant dense<0.000000e+00> : vector<2x128xf32>
    %414 = tpu.matmul %411, %413, %cst_277 {dimension_numbers = #tpu.dot_dimension_numbers<[1], [0], [0], [1], [0, 0, 1, 1], [], []>} : vector<2x64xf32>, vector<64x128xf32>, vector<2x128xf32> -> vector<2x128xf32>
    %415 = arith.addf %410, %414 : vector<2x128xf32>
    %c0_278 = arith.constant 0 : index
    %c0_279 = arith.constant 0 : index
    %416 = vector.load %arg8[%c0_278, %c0_279] : memref<1x128xf32, #tpu.memory_space<vmem>>, vector<1x128xf32>
    %417 = vector.broadcast %416 : vector<1x128xf32> to vector<2x128xf32>
    %418 = arith.addf %415, %417 : vector<2x128xf32>
    %cst_280 = arith.constant 0.000000e+00 : f32
    %419 = vector.broadcast %cst_280 : f32 to vector<2x128xf32>
    %420 = arith.maximumf %418, %419 : vector<2x128xf32>
    %c0_281 = arith.constant 0 : index
    %c0_282 = arith.constant 0 : index
    %421 = vector.load %arg9[%c0_281, %c0_282] : memref<128x64xf32, #tpu.memory_space<vmem>>, vector<128x64xf32>
    %cst_283 = arith.constant dense<0.000000e+00> : vector<2x64xf32>
    %422 = tpu.matmul %420, %421, %cst_283 {dimension_numbers = #tpu.dot_dimension_numbers<[1], [0], [0], [1], [0, 0, 1, 1], [], []>} : vector<2x128xf32>, vector<128x64xf32>, vector<2x64xf32> -> vector<2x64xf32>
    %c0_284 = arith.constant 0 : index
    %c0_285 = arith.constant 0 : index
    %423 = vector.load %arg10[%c0_284, %c0_285] : memref<1x64xf32, #tpu.memory_space<vmem>>, vector<1x64xf32>
    %424 = vector.broadcast %423 : vector<1x64xf32> to vector<2x64xf32>
    %425 = arith.addf %422, %424 : vector<2x64xf32>
    %cst_286 = arith.constant 0.000000e+00 : f32
    %426 = vector.broadcast %cst_286 : f32 to vector<2x64xf32>
    %427 = arith.maximumf %425, %426 : vector<2x64xf32>
    %c0_287 = arith.constant 0 : index
    %c0_288 = arith.constant 0 : index
    %428 = vector.load %arg11[%c0_287, %c0_288] : memref<64x7xf32, #tpu.memory_space<vmem>>, vector<64x7xf32>
    %cst_289 = arith.constant dense<0.000000e+00> : vector<2x7xf32>
    %429 = tpu.matmul %427, %428, %cst_289 {dimension_numbers = #tpu.dot_dimension_numbers<[1], [0], [0], [1], [0, 0, 1, 1], [], []>} : vector<2x64xf32>, vector<64x7xf32>, vector<2x7xf32> -> vector<2x7xf32>
    %c0_290 = arith.constant 0 : index
    %c0_291 = arith.constant 0 : index
    %430 = vector.load %arg12[%c0_290, %c0_291] : memref<1x7xf32, #tpu.memory_space<vmem>>, vector<1x7xf32>
    %431 = vector.broadcast %430 : vector<1x7xf32> to vector<2x7xf32>
    %432 = arith.addf %429, %431 : vector<2x7xf32>
    %c0_292 = arith.constant 0 : index
    %c0_293 = arith.constant 0 : index
    %433 = vector.load %arg13[%c0_292, %c0_293] : memref<2x7xf32, #tpu.memory_space<vmem>>, vector<2x7xf32>
    tpu.vector_store %arg13[%c0_292, %c0_293], %432 {strides = array<i32>} : memref<2x7xf32, #tpu.memory_space<vmem>>, vector<2x7xf32>,
    return
  }
  func.func @transform_0(%arg0: i32) -> (i32, i32) {
    %c0_i32 = arith.constant 0 : i32
    %c0_i32_0 = arith.constant 0 : i32
    %c0_i32_1 = arith.constant 0 : i32
    return %c0_i32, %c0_i32_0 : i32, i32
  }
  func.func @transform_1(%arg0: i32) -> (i32, i32, i32) {
    %c0_i32 = arith.constant 0 : i32
    %c0_i32_0 = arith.constant 0 : i32
    %c0_i32_1 = arith.constant 0 : i32
    %c0_i32_2 = arith.constant 0 : i32
    return %c0_i32, %c0_i32_0, %c0_i32_1 : i32, i32, i32
  }
  func.func @transform_2(%arg0: i32) -> (i32, i32, i32) {
    %c0_i32 = arith.constant 0 : i32
    %c0_i32_0 = arith.constant 0 : i32
    %c0_i32_1 = arith.constant 0 : i32
    %c0_i32_2 = arith.constant 0 : i32
    return %c0_i32, %c0_i32_0, %c0_i32_1 : i32, i32, i32
  }
  func.func @transform_3(%arg0: i32) -> (i32, i32) {
    %c0_i32 = arith.constant 0 : i32
    %c0_i32_0 = arith.constant 0 : i32
    %c0_i32_1 = arith.constant 0 : i32
    return %c0_i32, %c0_i32_0 : i32, i32
  }
  func.func @transform_4(%arg0: i32) -> (i32, i32, i32) {
    %c0_i32 = arith.constant 0 : i32
    %c0_i32_0 = arith.constant 0 : i32
    %c0_i32_1 = arith.constant 0 : i32
    %c0_i32_2 = arith.constant 0 : i32
    return %c0_i32, %c0_i32_0, %c0_i32_1 : i32, i32, i32
  }
  func.func @transform_5(%arg0: i32) -> (i32, i32) {
    %c0_i32 = arith.constant 0 : i32
    %c0_i32_0 = arith.constant 0 : i32
    %c0_i32_1 = arith.constant 0 : i32
    return %c0_i32, %c0_i32_0 : i32, i32
  }
  func.func @transform_6(%arg0: i32) -> (i32, i32, i32) {
    %c0_i32 = arith.constant 0 : i32
    %c0_i32_0 = arith.constant 0 : i32
    %c0_i32_1 = arith.constant 0 : i32
    %c0_i32_2 = arith.constant 0 : i32
    return %c0_i32, %c0_i32_0, %c0_i32_1 : i32, i32, i32
  }
  func.func @transform_7(%arg0: i32) -> (i32, i32) {
    %c0_i32 = arith.constant 0 : i32
    %c0_i32_0 = arith.constant 0 : i32
    %c0_i32_1 = arith.constant 0 : i32
    return %c0_i32, %c0_i32_0 : i32, i32
  }
  func.func @transform_8(%arg0: i32) -> (i32, i32) {
    %c0_i32 = arith.constant 0 : i32
    %c0_i32_0 = arith.constant 0 : i32
    %c0_i32_1 = arith.constant 0 : i32
    return %c0_i32, %c0_i32_0 : i32, i32
  }
  func.func @transform_9(%arg0: i32) -> (i32, i32) {
    %c0_i32 = arith.constant 0 : i32
    %c0_i32_0 = arith.constant 0 : i32
    %c0_i32_1 = arith.constant 0 : i32
    return %c0_i32, %c0_i32_0 : i32, i32
  }
  func.func @transform_10(%arg0: i32) -> (i32, i32) {
    %c0_i32 = arith.constant 0 : i32
    %c0_i32_0 = arith.constant 0 : i32
    %c0_i32_1 = arith.constant 0 : i32
    return %c0_i32, %c0_i32_0 : i32, i32
  }
  func.func @transform_11(%arg0: i32) -> (i32, i32) {
    %c0_i32 = arith.constant 0 : i32
    %c0_i32_0 = arith.constant 0 : i32
    %c0_i32_1 = arith.constant 0 : i32
    return %c0_i32, %c0_i32_0 : i32, i32
  }
  func.func @transform_12(%arg0: i32) -> (i32, i32) {
    %c0_i32 = arith.constant 0 : i32
    %c0_i32_0 = arith.constant 0 : i32
    %c0_i32_1 = arith.constant 0 : i32
    return %c0_i32, %c0_i32_0 : i32, i32
  }
}

</mosaic_0001>

<llo_original>
// kernel: connect4_cnn_forward.1
$region0: #{connect4_cnn_forward.1}
  #allocation0 [shape = 'u32[]', space=smem, size = 0x4, offset = 0x4, fixed_abs, tag = 'smem constant byte address 0x4 - core index']
  #allocation1 [shape = 'u32[144,128]{1,0:T(1,128)}', space=vmem, size = 0x12000, scoped, tag = 'internal scratch']
  %s0 = inlined_call_operand.vmem [shape: f32[84,2], index: 0, kind: input, shape index: {}]
  %s1 = inlined_call_operand.hbm [shape: f32[9,84,1], index: 1, kind: input, shape index: {}]
  %s2 = inlined_call_operand.hbm [shape: f32[9,2,32], index: 2, kind: input, shape index: {}]
  %s3 = inlined_call_operand.hbm [shape: f32[1,32], index: 3, kind: input, shape index: {}]
  %s4 = inlined_call_operand.hbm [shape: f32[9,32,64], index: 4, kind: input, shape index: {}]
  %s5 = inlined_call_operand.hbm [shape: f32[1,64], index: 5, kind: input, shape index: {}]
  %s6 = inlined_call_operand.hbm [shape: f32[42,64,128], index: 6, kind: input, shape index: {}]
  %s7 = inlined_call_operand.hbm [shape: f32[1,128], index: 7, kind: input, shape index: {}]
  %s8 = inlined_call_operand.vmem [shape: f32[128,64], index: 8, kind: input, shape index: {}]
  %s9 = inlined_call_operand.hbm [shape: f32[1,64], index: 9, kind: input, shape index: {}]
  %s10 = inlined_call_operand.vmem [shape: f32[64,7], index: 10, kind: input, shape index: {}]
  %s11 = inlined_call_operand.hbm [shape: f32[1,7], index: 11, kind: input, shape index: {}]
  %s12 = inlined_call_operand.hbm [shape: f32[2,7], index: 12, kind: output, shape index: {}]
  %s13 = sld [smem:[#allocation0]]
  $region94: #{connect4_cnn_forward.1} parent=0
    _
  %s15 = ssub.s32 1, %s13
  %s16 = scalar_select 0, %s15, %s13
  $region1: #{connect4_cnn_forward.1} parent=0
    #allocation2 [shape = 'u8[405504]{0}', space=vmem, size = 0x63000, scoped, tag = 'input window, operand 1, single buffered']
    #allocation3 [shape = 's32[1]{0}', space=sflag, size = 0x4, scoped, tag = 'scoped memory for connect4_cnn_forward.1']
    #allocation4 [shape = 's32[1]{0}', space=sflag, size = 0x4, scoped, tag = 'scoped memory for connect4_cnn_forward.1']
    #allocation5 [shape = 'u8[9216]{0}', space=vmem, size = 0x2400, scoped, tag = 'input window, operand 2, single buffered']
    #allocation6 [shape = 's32[1]{0}', space=sflag, size = 0x4, scoped, tag = 'scoped memory for connect4_cnn_forward.1']
    #allocation7 [shape = 'u8[512]{0}', space=vmem, size = 0x400, scoped, tag = 'input window, operand 3, single buffered']
    #allocation8 [shape = 'u8[147456]{0}', space=vmem, size = 0x24000, scoped, tag = 'input window, operand 4, single buffered']
    #allocation9 [shape = 's32[1]{0}', space=sflag, size = 0x4, scoped, tag = 'scoped memory for connect4_cnn_forward.1']
    #allocation10 [shape = 'u8[512]{0}', space=vmem, size = 0x400, scoped, tag = 'input window, operand 5, single buffered']
    #allocation11 [shape = 'u8[1376256]{0}', space=vmem, size = 0x150000, scoped, tag = 'input window, operand 6, single buffered']
    #allocation12 [shape = 's32[1]{0}', space=sflag, size = 0x4, scoped, tag = 'scoped memory for connect4_cnn_forward.1']
    #allocation13 [shape = 'u8[512]{0}', space=vmem, size = 0x400, scoped, tag = 'input window, operand 7, single buffered']
    #allocation14 [shape = 'u8[512]{0}', space=vmem, size = 0x400, scoped, tag = 'input window, operand 9, single buffered']
    #allocation15 [shape = 's32[1]{0}', space=sflag, size = 0x4, scoped, tag = 'scoped memory for connect4_cnn_forward.1']
    #allocation16 [shape = 'u8[512]{0}', space=vmem, size = 0x400, scoped, tag = 'input window, operand 11, single buffered']
    #allocation17 [shape = 'u8[1024]{0}', space=vmem, size = 0x400, scoped, tag = 'output window, operand 0, single buffered']
    %17 = vsyncpa [#allocation3], 0
    %18 = vsyncpa [#allocation6], 0
    %19 = vsyncpa [#allocation9], 0
    %20 = vsyncpa [#allocation12], 0
    %21 = vsyncpa [#allocation15], 0
    %22 = vsyncpa [#allocation4], 0
    // Predicated region
    $region2: #{connect4_cnn_forward.1} parent=1 // pred_check
      _
    $region3: #{connect4_cnn_forward.1} parent=1 // pred_check_branch
      %24 = sbr.rel (0) target = $region5
    $region4: #{connect4_cnn_forward.1} parent=1 // pred_region
      _
    $region5: #{connect4_cnn_forward.1} parent=1 // pred_fallthru
      _
    // Predicated region
    $region6: #{connect4_cnn_forward.1} parent=1 // pred_check
      _
    $region7: #{connect4_cnn_forward.1} parent=1 // pred_check_branch
      %26 = sbr.rel (0) target = $region9
    $region8: #{connect4_cnn_forward.1} parent=1 // pred_region
      %s28 = ssub.s32 12672, 12672
      %29 = vsyncadd [#allocation3], %s28
      %s30 = sshll.u32 [#allocation2], 4
      %s31 = int_to_ptr.vmem [resolvable:$true] %s30
      %36 = dma.hbm_to_vmem [thread:$0]  %s1, 12672, %s31, [#allocation3], 128, 128, 8
    $region9: #{connect4_cnn_forward.1} parent=1 // pred_fallthru
      _
    // Predicated region
    $region10: #{connect4_cnn_forward.1} parent=1 // pred_check
      _
    $region11: #{connect4_cnn_forward.1} parent=1 // pred_check_branch
      %38 = sbr.rel (0) target = $region13
    $region12: #{connect4_cnn_forward.1} parent=1 // pred_region
      %s40 = ssub.s32 288, 288
      %41 = vsyncadd [#allocation6], %s40
      %s42 = sshll.u32 [#allocation5], 4
      %s43 = int_to_ptr.vmem [resolvable:$true] %s42
      %48 = dma.hbm_to_vmem [thread:$0]  %s2, 288, %s43, [#allocation6], 32, 32, 2
    $region13: #{connect4_cnn_forward.1} parent=1 // pred_fallthru
      _
    // Predicated region
    $region14: #{connect4_cnn_forward.1} parent=1 // pred_check
      _
    $region15: #{connect4_cnn_forward.1} parent=1 // pred_check_branch
      %50 = sbr.rel (0) target = $region17
    $region16: #{connect4_cnn_forward.1} parent=1 // pred_region
      %s52 = ssub.s32 16, 16
      %53 = vsyncadd [#allocation6], %s52
      %s55 = sshll.u32 [#allocation7], 4
      %s56 = int_to_ptr.vmem [resolvable:$true] %s55
      %58 = dma.hbm_to_vmem [thread:$0]  %s3, 16, %s56, [#allocation6]
    $region17: #{connect4_cnn_forward.1} parent=1 // pred_fallthru
      _
    // Predicated region
    $region18: #{connect4_cnn_forward.1} parent=1 // pred_check
      _
    $region19: #{connect4_cnn_forward.1} parent=1 // pred_check_branch
      %60 = sbr.rel (0) target = $region21
    $region20: #{connect4_cnn_forward.1} parent=1 // pred_region
      %s62 = ssub.s32 4608, 4608
      %63 = vsyncadd [#allocation9], %s62
      %s64 = sshll.u32 [#allocation8], 4
      %s65 = int_to_ptr.vmem [resolvable:$true] %s64
      %70 = dma.hbm_to_vmem [thread:$0]  %s4, 4608, %s65, [#allocation9], 128, 128, 8
    $region21: #{connect4_cnn_forward.1} parent=1 // pred_fallthru
      _
    // Predicated region
    $region22: #{connect4_cnn_forward.1} parent=1 // pred_check
      _
    $region23: #{connect4_cnn_forward.1} parent=1 // pred_check_branch
      %72 = sbr.rel (0) target = $region25
    $region24: #{connect4_cnn_forward.1} parent=1 // pred_region
      %s74 = ssub.s32 16, 16
      %75 = vsyncadd [#allocation9], %s74
      %s77 = sshll.u32 [#allocation10], 4
      %s78 = int_to_ptr.vmem [resolvable:$true] %s77
      %80 = dma.hbm_to_vmem [thread:$0]  %s5, 16, %s78, [#allocation9]
    $region25: #{connect4_cnn_forward.1} parent=1 // pred_fallthru
      _
    // Predicated region
    $region26: #{connect4_cnn_forward.1} parent=1 // pred_check
      _
    $region27: #{connect4_cnn_forward.1} parent=1 // pred_check_branch
      %82 = sbr.rel (0) target = $region29
    $region28: #{connect4_cnn_forward.1} parent=1 // pred_region
      %s84 = ssub.s32 43008, 43008
      %85 = vsyncadd [#allocation12], %s84
      %s86 = sshll.u32 [#allocation11], 4
      %s87 = int_to_ptr.vmem [resolvable:$true] %s86
      %92 = dma.hbm_to_vmem [thread:$0]  %s6, 43008, %s87, [#allocation12], 128, 128, 8
    $region29: #{connect4_cnn_forward.1} parent=1 // pred_fallthru
      _
    // Predicated region
    $region30: #{connect4_cnn_forward.1} parent=1 // pred_check
      _
    $region31: #{connect4_cnn_forward.1} parent=1 // pred_check_branch
      %94 = sbr.rel (0) target = $region33
    $region32: #{connect4_cnn_forward.1} parent=1 // pred_region
      %s96 = ssub.s32 16, 16
      %97 = vsyncadd [#allocation12], %s96
      %s99 = sshll.u32 [#allocation13], 4
      %s100 = int_to_ptr.vmem [resolvable:$true] %s99
      %102 = dma.hbm_to_vmem [thread:$0]  %s7, 16, %s100, [#allocation12]
    $region33: #{connect4_cnn_forward.1} parent=1 // pred_fallthru
      _
    // Predicated region
    $region34: #{connect4_cnn_forward.1} parent=1 // pred_check
      _
    $region35: #{connect4_cnn_forward.1} parent=1 // pred_check_branch
      %104 = sbr.rel (0) target = $region37
    $region36: #{connect4_cnn_forward.1} parent=1 // pred_region
      _
    $region37: #{connect4_cnn_forward.1} parent=1 // pred_fallthru
      _
    // Predicated region
    $region38: #{connect4_cnn_forward.1} parent=1 // pred_check
      _
    $region39: #{connect4_cnn_forward.1} parent=1 // pred_check_branch
      %106 = sbr.rel (0) target = $region41
    $region40: #{connect4_cnn_forward.1} parent=1 // pred_region
      %s108 = ssub.s32 16, 16
      %109 = vsyncadd [#allocation15], %s108
      %s111 = sshll.u32 [#allocation14], 4
      %s112 = int_to_ptr.vmem [resolvable:$true] %s111
      %114 = dma.hbm_to_vmem [thread:$0]  %s9, 16, %s112, [#allocation15]
    $region41: #{connect4_cnn_forward.1} parent=1 // pred_fallthru
      _
    // Predicated region
    $region42: #{connect4_cnn_forward.1} parent=1 // pred_check
      _
    $region43: #{connect4_cnn_forward.1} parent=1 // pred_check_branch
      %116 = sbr.rel (0) target = $region45
    $region44: #{connect4_cnn_forward.1} parent=1 // pred_region
      _
    $region45: #{connect4_cnn_forward.1} parent=1 // pred_fallthru
      _
    // Predicated region
    $region46: #{connect4_cnn_forward.1} parent=1 // pred_check
      _
    $region47: #{connect4_cnn_forward.1} parent=1 // pred_check_branch
      %118 = sbr.rel (0) target = $region49
    $region48: #{connect4_cnn_forward.1} parent=1 // pred_region
      %s120 = ssub.s32 16, 16
      %121 = vsyncadd [#allocation15], %s120
      %s123 = sshll.u32 [#allocation16], 4
      %s124 = int_to_ptr.vmem [resolvable:$true] %s123
      %126 = dma.hbm_to_vmem [thread:$0]  %s11, 16, %s124, [#allocation15]
    $region49: #{connect4_cnn_forward.1} parent=1 // pred_fallthru
      _
    // Predicated region
    $region50: #{connect4_cnn_forward.1} parent=1 // pred_check
      _
    $region51: #{connect4_cnn_forward.1} parent=1 // pred_check_branch
      %128 = sbr.rel (0) target = $region53
    $region52: #{connect4_cnn_forward.1} parent=1 // pred_region
      %129 = dma.done [#allocation3], 12672
    $region53: #{connect4_cnn_forward.1} parent=1 // pred_fallthru
      _
    // Predicated region
    $region54: #{connect4_cnn_forward.1} parent=1 // pred_check
      _
    $region55: #{connect4_cnn_forward.1} parent=1 // pred_check_branch
      %131 = sbr.rel (0) target = $region57
    $region56: #{connect4_cnn_forward.1} parent=1 // pred_region
      %132 = dma.done [#allocation6], 288
    $region57: #{connect4_cnn_forward.1} parent=1 // pred_fallthru
      _
    // Predicated region
    $region58: #{connect4_cnn_forward.1} parent=1 // pred_check
      _
    $region59: #{connect4_cnn_forward.1} parent=1 // pred_check_branch
      %134 = sbr.rel (0) target = $region61
    $region60: #{connect4_cnn_forward.1} parent=1 // pred_region
      %135 = dma.done [#allocation6], 16
    $region61: #{connect4_cnn_forward.1} parent=1 // pred_fallthru
      _
    // Predicated region
    $region62: #{connect4_cnn_forward.1} parent=1 // pred_check
      _
    $region63: #{connect4_cnn_forward.1} parent=1 // pred_check_branch
      %137 = sbr.rel (0) target = $region65
    $region64: #{connect4_cnn_forward.1} parent=1 // pred_region
      %138 = dma.done [#allocation9], 4608
    $region65: #{connect4_cnn_forward.1} parent=1 // pred_fallthru
      _
    // Predicated region
    $region66: #{connect4_cnn_forward.1} parent=1 // pred_check
      _
    $region67: #{connect4_cnn_forward.1} parent=1 // pred_check_branch
      %140 = sbr.rel (0) target = $region69
    $region68: #{connect4_cnn_forward.1} parent=1 // pred_region
      %141 = dma.done [#allocation9], 16
    $region69: #{connect4_cnn_forward.1} parent=1 // pred_fallthru
      _
    // Predicated region
    $region70: #{connect4_cnn_forward.1} parent=1 // pred_check
      _
    $region71: #{connect4_cnn_forward.1} parent=1 // pred_check_branch
      %143 = sbr.rel (0) target = $region73
    $region72: #{connect4_cnn_forward.1} parent=1 // pred_region
      %144 = dma.done [#allocation12], 43008
    $region73: #{connect4_cnn_forward.1} parent=1 // pred_fallthru
      _
    // Predicated region
    $region74: #{connect4_cnn_forward.1} parent=1 // pred_check
      _
    $region75: #{connect4_cnn_forward.1} parent=1 // pred_check_branch
      %146 = sbr.rel (0) target = $region77
    $region76: #{connect4_cnn_forward.1} parent=1 // pred_region
      %147 = dma.done [#allocation12], 16
    $region77: #{connect4_cnn_forward.1} parent=1 // pred_fallthru
      _
    // Predicated region
    $region78: #{connect4_cnn_forward.1} parent=1 // pred_check
      _
    $region79: #{connect4_cnn_forward.1} parent=1 // pred_check_branch
      %149 = sbr.rel (0) target = $region81
    $region80: #{connect4_cnn_forward.1} parent=1 // pred_region
      %150 = dma.done [#allocation15], 16
    $region81: #{connect4_cnn_forward.1} parent=1 // pred_fallthru
      _
    // Predicated region
    $region82: #{connect4_cnn_forward.1} parent=1 // pred_check
      _
    $region83: #{connect4_cnn_forward.1} parent=1 // pred_check_branch
      %152 = sbr.rel (0) target = $region85
    $region84: #{connect4_cnn_forward.1} parent=1 // pred_region
      %153 = dma.done [#allocation15], 16
    $region85: #{connect4_cnn_forward.1} parent=1 // pred_fallthru
      _
    %v154 = vld [vmem:[%s0] sm:$0xff]
    %v155 = vld [vmem:[%s0 + $0x8] sm:$0xff]
    %v156 = vld [vmem:[%s0 + $0x10] sm:$0xff]
    %v157 = vld [vmem:[%s0 + $0x18] sm:$0xff]
    %v158 = vld [vmem:[%s0 + $0x20] sm:$0xff]
    %v159 = vld [vmem:[%s0 + $0x28] sm:$0xff]
    %v160 = vld [vmem:[%s0 + $0x30] sm:$0xff]
    %v161 = vld [vmem:[%s0 + $0x38] sm:$0xff]
    %v162 = vld [vmem:[%s0 + $0x40] sm:$0xff]
    %v163 = vld [vmem:[%s0 + $0x48] sm:$0xff]
    %v164 = vld [vmem:[%s0 + $0x50] sm:$0xf]
    %v165 = vld [vmem:[#allocation2] sm:$0xff]
    %v166 = vld [vmem:[#allocation2 + $0x8] sm:$0xff]
    %v167 = vld [vmem:[#allocation2 + $0x10] sm:$0xff]
    %v168 = vld [vmem:[#allocation2 + $0x18] sm:$0xff]
    %v169 = vld [vmem:[#allocation2 + $0x20] sm:$0xff]
    %v170 = vld [vmem:[#allocation2 + $0x28] sm:$0xff]
    %v171 = vld [vmem:[#allocation2 + $0x30] sm:$0xff]
    %v172 = vld [vmem:[#allocation2 + $0x38] sm:$0xff]
    %v173 = vld [vmem:[#allocation2 + $0x40] sm:$0xff]
    %v174 = vld [vmem:[#allocation2 + $0x48] sm:$0xff]
    %v175 = vld [vmem:[#allocation2 + $0x50] sm:$0xf]
    %177 = vset.pattern.permute.xlu0 0
    %178 = vperm.xlu0 %177, %v165
    %v179 = vpop.permute.xlu0 %178
    %182 = vset.pattern.permute.xlu0 0
    %183 = vperm.xlu0 %182, %v166
    %v184 = vpop.permute.xlu0 %183
    %187 = vset.pattern.permute.xlu0 0
    %188 = vperm.xlu0 %187, %v167
    %v189 = vpop.permute.xlu0 %188
    %192 = vset.pattern.permute.xlu0 0
    %193 = vperm.xlu0 %192, %v168
    %v194 = vpop.permute.xlu0 %193
    %197 = vset.pattern.permute.xlu0 0
    %198 = vperm.xlu0 %197, %v169
    %v199 = vpop.permute.xlu0 %198
    %202 = vset.pattern.permute.xlu0 0
    %203 = vperm.xlu0 %202, %v170
    %v204 = vpop.permute.xlu0 %203
    %207 = vset.pattern.permute.xlu0 0
    %208 = vperm.xlu0 %207, %v171
    %v209 = vpop.permute.xlu0 %208
    %212 = vset.pattern.permute.xlu0 0
    %213 = vperm.xlu0 %212, %v172
    %v214 = vpop.permute.xlu0 %213
    %217 = vset.pattern.permute.xlu0 0
    %218 = vperm.xlu0 %217, %v173
    %v219 = vpop.permute.xlu0 %218
    %222 = vset.pattern.permute.xlu0 0
    %223 = vperm.xlu0 %222, %v174
    %v224 = vpop.permute.xlu0 %223
    %227 = vset.pattern.permute.xlu0 0
    %228 = vperm.xlu0 %227, %v175
    %v229 = vpop.permute.xlu0 %228
    %v231 = vmul.f32 %v179, 0.0
    %v232 = vmul.f32 %v184, 0.0
    %v233 = vmul.f32 %v154, %v189
    %v234 = vmul.f32 %v155, %v194
    %v235 = vmul.f32 %v156, %v199
    %v236 = vmul.f32 %v157, %v204
    %v237 = vmul.f32 %v158, %v209
    %v238 = vmul.f32 %v159, %v214
    %v239 = vmul.f32 %v160, %v219
    %v240 = vmul.f32 %v161, %v224
    %v241 = vmul.f32 %v162, %v229
    %v242 = vld [vmem:[#allocation5] sm:$0x3]
    %vm252 = vcmask 1045504
    %v253 = vrot.slane %v154, 2
    %v254 = vrot.slane %v155, 2
    %v255 = vsel %vm252, %v253, %v254
    %v256 = vrot.slane %v156, 2
    %v257 = vsel %vm252, %v254, %v256
    %v258 = vrot.slane %v157, 2
    %v259 = vsel %vm252, %v256, %v258
    %v260 = vrot.slane %v158, 2
    %v261 = vsel %vm252, %v258, %v260
    %v262 = vrot.slane %v159, 2
    %v263 = vsel %vm252, %v260, %v262
    %v264 = vrot.slane %v160, 2
    %v265 = vsel %vm252, %v262, %v264
    %v266 = vrot.slane %v161, 2
    %v267 = vsel %vm252, %v264, %v266
    %v268 = vrot.slane %v162, 2
    %v269 = vsel %vm252, %v266, %v268
    %v280 = vsel %vm252, 0.0, %v253
    %s281 = scalar_lea.vmem [#allocation2], 88
    %v282 = vld [vmem:[%s281] sm:$0xff]
    %v283 = vld [vmem:[%s281 + $0x8] sm:$0xff]
    %v284 = vld [vmem:[%s281 + $0x10] sm:$0xff]
    %v285 = vld [vmem:[%s281 + $0x18] sm:$0xff]
    %v286 = vld [vmem:[%s281 + $0x20] sm:$0xff]
    %v287 = vld [vmem:[%s281 + $0x28] sm:$0xff]
    %v288 = vld [vmem:[%s281 + $0x30] sm:$0xff]
    %v289 = vld [vmem:[%s281 + $0x38] sm:$0xff]
    %v290 = vld [vmem:[%s281 + $0x40] sm:$0xff]
    %v291 = vld [vmem:[%s281 + $0x48] sm:$0xff]
    %v292 = vld [vmem:[%s281 + $0x50] sm:$0xf]
    %294 = vset.pattern.permute.xlu0 0
    %295 = vperm.xlu0 %294, %v282
    %v296 = vpop.permute.xlu0 %295
    %299 = vset.pattern.permute.xlu0 0
    %300 = vperm.xlu0 %299, %v283
    %v301 = vpop.permute.xlu0 %300
    %304 = vset.pattern.permute.xlu0 0
    %305 = vperm.xlu0 %304, %v284
    %v306 = vpop.permute.xlu0 %305
    %309 = vset.pattern.permute.xlu0 0
    %310 = vperm.xlu0 %309, %v285
    %v311 = vpop.permute.xlu0 %310
    %314 = vset.pattern.permute.xlu0 0
    %315 = vperm.xlu0 %314, %v286
    %v316 = vpop.permute.xlu0 %315
    %319 = vset.pattern.permute.xlu0 0
    %320 = vperm.xlu0 %319, %v287
    %v321 = vpop.permute.xlu0 %320
    %324 = vset.pattern.permute.xlu0 0
    %325 = vperm.xlu0 %324, %v288
    %v326 = vpop.permute.xlu0 %325
    %329 = vset.pattern.permute.xlu0 0
    %330 = vperm.xlu0 %329, %v289
    %v331 = vpop.permute.xlu0 %330
    %334 = vset.pattern.permute.xlu0 0
    %335 = vperm.xlu0 %334, %v290
    %v336 = vpop.permute.xlu0 %335
    %339 = vset.pattern.permute.xlu0 0
    %340 = vperm.xlu0 %339, %v291
    %v341 = vpop.permute.xlu0 %340
    %344 = vset.pattern.permute.xlu0 0
    %345 = vperm.xlu0 %344, %v292
    %v346 = vpop.permute.xlu0 %345
    %v348 = vmul.f32 %v296, 0.0
    %v349 = vmul.f32 %v280, %v301
    %v350 = vmul.f32 %v255, %v306
    %v351 = vmul.f32 %v257, %v311
    %v352 = vmul.f32 %v259, %v316
    %v353 = vmul.f32 %v261, %v321
    %v354 = vmul.f32 %v263, %v326
    %v355 = vmul.f32 %v265, %v331
    %v356 = vmul.f32 %v267, %v336
    %v357 = vmul.f32 %v269, %v341
    %v358 = vmul.f32 %v268, %v346
    %s359 = scalar_lea.vmem [#allocation5], 2
    %v360 = vld [vmem:[%s359] sm:$0x3]
    %vm361 = vcmask 15360
    %v363 = vsel %vm361, %v348, 0
    %v366 = vsel %vm361, %v349, 0
    %v369 = vsel %vm361, %v350, 0
    %v372 = vsel %vm361, %v351, 0
    %v375 = vsel %vm361, %v352, 0
    %v378 = vsel %vm361, %v353, 0
    %v381 = vsel %vm361, %v354, 0
    %v384 = vsel %vm361, %v355, 0
    %v387 = vsel %vm361, %v356, 0
    %v390 = vsel %vm361, %v357, 0
    %v393 = vsel %vm361, %v358, 0
    %vm395 = vcmask 1041408
    %v397 = vsel %vm395, %v360, 0
    %399 = vmatprep.subr.mxu0 0.0
    %400 = vmatpush1.msra.mxu0 0.0
    %401 = vmatprep.subr.mxu0 0.0
    %402 = vmatpush1.msra.mxu0 0.0
    %403 = vmatprep.subr.mxu0 0.0
    %404 = vmatpush1.msra.mxu0 0.0
    %405 = vmatprep.subr.mxu0 0.0
    %406 = vmatpush1.msra.mxu0 0.0
    %407 = vmatprep.subr.mxu0 0.0
    %408 = vmatpush1.msra.mxu0 0.0
    %409 = vmatprep.subr.mxu0 0.0
    %410 = vmatpush1.msra.mxu0 0.0
    %411 = vmatprep.subr.mxu0 0.0
    %412 = vmatpush1.msra.mxu0 0.0
    %413 = vmatprep.subr.mxu0 0.0
    %414 = vmatpush1.msra.mxu0 0.0
    %415 = vmatprep.subr.mxu0 0.0
    %416 = vmatpush1.msra.mxu0 0.0
    %417 = vmatprep.subr.mxu0 0.0
    %418 = vmatpush1.msra.mxu0 0.0
    %419 = vmatprep.subr.mxu0 0.0
    %420 = vmatpush1.msra.mxu0 0.0
    %421 = vmatprep.subr.mxu0 0.0
    %422 = vmatpush1.msra.mxu0 0.0
    %423 = vmatprep.subr.mxu0 0.0
    %424 = vmatpush1.msra.mxu0 0.0
    %425 = vmatprep.subr.mxu0 0.0
    %426 = vmatpush1.msra.mxu0 0.0
    %427 = vmatprep.subr.mxu0 0.0
    %428 = vmatpush1.msra.mxu0 0.0
    %429 = vmatprep.subr.mxu0 0.0
    %430 = vmatpush1.msra.mxu0 %v397
    %431 = vmatprep.subr.mxu0 0.0
    %432 = vmatpush2.msra.mxu0 0.0
    %433 = vmatprep.subr.mxu0 0.0
    %434 = vmatpush2.msra.mxu0 0.0
    %435 = vmatprep.subr.mxu0 0.0
    %436 = vmatpush2.msra.mxu0 0.0
    %437 = vmatprep.subr.mxu0 0.0
    %438 = vmatpush2.msra.mxu0 0.0
    %439 = vmatprep.subr.mxu0 0.0
    %440 = vmatpush2.msra.mxu0 0.0
    %441 = vmatprep.subr.mxu0 0.0
    %442 = vmatpush2.msra.mxu0 0.0
    %443 = vmatprep.subr.mxu0 0.0
    %444 = vmatpush2.msra.mxu0 0.0
    %445 = vmatprep.subr.mxu0 0.0
    %446 = vmatpush2.msra.mxu0 0.0
    %447 = vmatprep.subr.mxu0 0.0
    %448 = vmatpush2.msra.mxu0 0.0
    %449 = vmatprep.subr.mxu0 0.0
    %450 = vmatpush2.msra.mxu0 0.0
    %451 = vmatprep.subr.mxu0 0.0
    %452 = vmatpush2.msra.mxu0 0.0
    %453 = vmatprep.subr.mxu0 0.0
    %454 = vmatpush2.msra.mxu0 0.0
    %455 = vmatprep.subr.mxu0 0.0
    %456 = vmatpush2.msra.mxu0 0.0
    %457 = vmatprep.subr.mxu0 0.0
    %458 = vmatpush2.msra.mxu0 0.0
    %459 = vmatprep.subr.mxu0 0.0
    %460 = vmatpush2.msra.mxu0 0.0
    %461 = vmatprep.subr.mxu0 0.0
    %462 = vmatpush2.msra.mxu0 0.0
    %463 = vmatprep.mubr.f32.mxu0 0.0
    %464 = vmatmul.mubr.f32.gmra.mxu0 %v363
    %v465 = vpop.f32.mrf.mxu0
    %v466 = vadd.f32 0.0, %v465
    %v467 = vpop.f32.mrf.mxu0
    %468 = vmatprep.mubr.f32.mxu0 0.0
    %469 = vmatmul.mubr.f32.gmra.mxu0 %v366
    %v470 = vpop.f32.mrf.mxu0
    %v471 = vadd.f32 0.0, %v470
    %v472 = vpop.f32.mrf.mxu0
    %473 = vmatprep.mubr.f32.mxu0 0.0
    %474 = vmatmul.mubr.f32.gmra.mxu0 %v369
    %v475 = vpop.f32.mrf.mxu0
    %v476 = vadd.f32 0.0, %v475
    %v477 = vpop.f32.mrf.mxu0
    %478 = vmatprep.mubr.f32.mxu0 0.0
    %479 = vmatmul.mubr.f32.gmra.mxu0 %v372
    %v480 = vpop.f32.mrf.mxu0
    %v481 = vadd.f32 0.0, %v480
    %v482 = vpop.f32.mrf.mxu0
    %483 = vmatprep.mubr.f32.mxu0 0.0
    %484 = vmatmul.mubr.f32.gmra.mxu0 %v375
    %v485 = vpop.f32.mrf.mxu0
    %v486 = vadd.f32 0.0, %v485
    %v487 = vpop.f32.mrf.mxu0
    %488 = vmatprep.mubr.f32.mxu0 0.0
    %489 = vmatmul.mubr.f32.gmra.mxu0 %v378
    %v490 = vpop.f32.mrf.mxu0
    %v491 = vadd.f32 0.0, %v490
    %v492 = vpop.f32.mrf.mxu0
    %493 = vmatprep.mubr.f32.mxu0 0.0
    %494 = vmatmul.mubr.f32.gmra.mxu0 %v381
    %v495 = vpop.f32.mrf.mxu0
    %v496 = vadd.f32 0.0, %v495
    %v497 = vpop.f32.mrf.mxu0
    %498 = vmatprep.mubr.f32.mxu0 0.0
    %499 = vmatmul.mubr.f32.gmra.mxu0 %v384
    %v500 = vpop.f32.mrf.mxu0
    %v501 = vadd.f32 0.0, %v500
    %v502 = vpop.f32.mrf.mxu0
    %503 = vmatprep.mubr.f32.mxu0 0.0
    %504 = vmatmul.mubr.f32.gmra.mxu0 %v387
    %v505 = vpop.f32.mrf.mxu0
    %v506 = vadd.f32 0.0, %v505
    %v507 = vpop.f32.mrf.mxu0
    %508 = vmatprep.mubr.f32.mxu0 0.0
    %509 = vmatmul.mubr.f32.gmra.mxu0 %v390
    %v510 = vpop.f32.mrf.mxu0
    %v511 = vadd.f32 0.0, %v510
    %v512 = vpop.f32.mrf.mxu0
    %513 = vmatprep.mubr.f32.mxu0 0.0
    %514 = vmatmul.mubr.f32.gmra.mxu0 %v393
    %v515 = vpop.f32.mrf.mxu0
    %v516 = vadd.f32 0.0, %v515
    %v517 = vpop.f32.mrf.mxu0
    %518 = vdwg.mxu0
    %v520 = vsel %vm361, %v231, 0
    %v523 = vsel %vm361, %v232, 0
    %v526 = vsel %vm361, %v233, 0
    %v529 = vsel %vm361, %v234, 0
    %v532 = vsel %vm361, %v235, 0
    %v535 = vsel %vm361, %v236, 0
    %v538 = vsel %vm361, %v237, 0
    %v541 = vsel %vm361, %v238, 0
    %v544 = vsel %vm361, %v239, 0
    %v547 = vsel %vm361, %v240, 0
    %v550 = vsel %vm361, %v241, 0
    %v553 = vsel %vm395, %v242, 0
    %555 = vmatprep.subr.mxu0 0.0
    %556 = vmatpush1.msra.mxu0 0.0
    %557 = vmatprep.subr.mxu0 0.0
    %558 = vmatpush1.msra.mxu0 0.0
    %559 = vmatprep.subr.mxu0 0.0
    %560 = vmatpush1.msra.mxu0 0.0
    %561 = vmatprep.subr.mxu0 0.0
    %562 = vmatpush1.msra.mxu0 0.0
    %563 = vmatprep.subr.mxu0 0.0
    %564 = vmatpush1.msra.mxu0 0.0
    %565 = vmatprep.subr.mxu0 0.0
    %566 = vmatpush1.msra.mxu0 0.0
    %567 = vmatprep.subr.mxu0 0.0
    %568 = vmatpush1.msra.mxu0 0.0
    %569 = vmatprep.subr.mxu0 0.0
    %570 = vmatpush1.msra.mxu0 0.0
    %571 = vmatprep.subr.mxu0 0.0
    %572 = vmatpush1.msra.mxu0 0.0
    %573 = vmatprep.subr.mxu0 0.0
    %574 = vmatpush1.msra.mxu0 0.0
    %575 = vmatprep.subr.mxu0 0.0
    %576 = vmatpush1.msra.mxu0 0.0
    %577 = vmatprep.subr.mxu0 0.0
    %578 = vmatpush1.msra.mxu0 0.0
    %579 = vmatprep.subr.mxu0 0.0
    %580 = vmatpush1.msra.mxu0 0.0
    %581 = vmatprep.subr.mxu0 0.0
    %582 = vmatpush1.msra.mxu0 0.0
    %583 = vmatprep.subr.mxu0 0.0
    %584 = vmatpush1.msra.mxu0 0.0
    %585 = vmatprep.subr.mxu0 0.0
    %586 = vmatpush1.msra.mxu0 %v553
    %587 = vmatprep.subr.mxu0 0.0
    %588 = vmatpush2.msra.mxu0 0.0
    %589 = vmatprep.subr.mxu0 0.0
    %590 = vmatpush2.msra.mxu0 0.0
    %591 = vmatprep.subr.mxu0 0.0
    %592 = vmatpush2.msra.mxu0 0.0
    %593 = vmatprep.subr.mxu0 0.0
    %594 = vmatpush2.msra.mxu0 0.0
    %595 = vmatprep.subr.mxu0 0.0
    %596 = vmatpush2.msra.mxu0 0.0
    %597 = vmatprep.subr.mxu0 0.0
    %598 = vmatpush2.msra.mxu0 0.0
    %599 = vmatprep.subr.mxu0 0.0
    %600 = vmatpush2.msra.mxu0 0.0
    %601 = vmatprep.subr.mxu0 0.0
    %602 = vmatpush2.msra.mxu0 0.0
    %603 = vmatprep.subr.mxu0 0.0
    %604 = vmatpush2.msra.mxu0 0.0
    %605 = vmatprep.subr.mxu0 0.0
    %606 = vmatpush2.msra.mxu0 0.0
    %607 = vmatprep.subr.mxu0 0.0
    %608 = vmatpush2.msra.mxu0 0.0
    %609 = vmatprep.subr.mxu0 0.0
    %610 = vmatpush2.msra.mxu0 0.0
    %611 = vmatprep.subr.mxu0 0.0
    %612 = vmatpush2.msra.mxu0 0.0
    %613 = vmatprep.subr.mxu0 0.0
    %614 = vmatpush2.msra.mxu0 0.0
    %615 = vmatprep.subr.mxu0 0.0
    %616 = vmatpush2.msra.mxu0 0.0
    %617 = vmatprep.subr.mxu0 0.0
    %618 = vmatpush2.msra.mxu0 0.0
    %619 = vmatprep.mubr.f32.mxu0 0.0
    %620 = vmatmul.mubr.f32.gmra.mxu0 %v520
    %v621 = vpop.f32.mrf.mxu0
    %v622 = vadd.f32 %v466, %v621
    %v623 = vpop.f32.mrf.mxu0
    %624 = vmatprep.mubr.f32.mxu0 0.0
    %625 = vmatmul.mubr.f32.gmra.mxu0 %v523
    %v626 = vpop.f32.mrf.mxu0
    %v627 = vadd.f32 %v471, %v626
    %v628 = vpop.f32.mrf.mxu0
    %629 = vmatprep.mubr.f32.mxu0 0.0
    %630 = vmatmul.mubr.f32.gmra.mxu0 %v526
    %v631 = vpop.f32.mrf.mxu0
    %v632 = vadd.f32 %v476, %v631
    %v633 = vpop.f32.mrf.mxu0
    %634 = vmatprep.mubr.f32.mxu0 0.0
    %635 = vmatmul.mubr.f32.gmra.mxu0 %v529
    %v636 = vpop.f32.mrf.mxu0
    %v637 = vadd.f32 %v481, %v636
    %v638 = vpop.f32.mrf.mxu0
    %639 = vmatprep.mubr.f32.mxu0 0.0
    %640 = vmatmul.mubr.f32.gmra.mxu0 %v532
    %v641 = vpop.f32.mrf.mxu0
    %v642 = vadd.f32 %v486, %v641
    %v643 = vpop.f32.mrf.mxu0
    %644 = vmatprep.mubr.f32.mxu0 0.0
    %645 = vmatmul.mubr.f32.gmra.mxu0 %v535
    %v646 = vpop.f32.mrf.mxu0
    %v647 = vadd.f32 %v491, %v646
    %v648 = vpop.f32.mrf.mxu0
    %649 = vmatprep.mubr.f32.mxu0 0.0
    %650 = vmatmul.mubr.f32.gmra.mxu0 %v538
    %v651 = vpop.f32.mrf.mxu0
    %v652 = vadd.f32 %v496, %v651
    %v653 = vpop.f32.mrf.mxu0
    %654 = vmatprep.mubr.f32.mxu0 0.0
    %655 = vmatmul.mubr.f32.gmra.mxu0 %v541
    %v656 = vpop.f32.mrf.mxu0
    %v657 = vadd.f32 %v501, %v656
    %v658 = vpop.f32.mrf.mxu0
    %659 = vmatprep.mubr.f32.mxu0 0.0
    %660 = vmatmul.mubr.f32.gmra.mxu0 %v544
    %v661 = vpop.f32.mrf.mxu0
    %v662 = vadd.f32 %v506, %v661
    %v663 = vpop.f32.mrf.mxu0
    %664 = vmatprep.mubr.f32.mxu0 0.0
    %665 = vmatmul.mubr.f32.gmra.mxu0 %v547
    %v666 = vpop.f32.mrf.mxu0
    %v667 = vadd.f32 %v511, %v666
    %v668 = vpop.f32.mrf.mxu0
    %669 = vmatprep.mubr.f32.mxu0 0.0
    %670 = vmatmul.mubr.f32.gmra.mxu0 %v550
    %v671 = vpop.f32.mrf.mxu0
    %v672 = vadd.f32 %v516, %v671
    %v673 = vpop.f32.mrf.mxu0
    %674 = vdwg.mxu0
    %vm675 = vcmask 1043456
    %v676 = vrot.slane %v154, 4
    %v677 = vrot.slane %v155, 4
    %v678 = vsel %vm675, %v676, %v677
    %v679 = vrot.slane %v156, 4
    %v680 = vsel %vm675, %v677, %v679
    %v681 = vrot.slane %v157, 4
    %v682 = vsel %vm675, %v679, %v681
    %v683 = vrot.slane %v158, 4
    %v684 = vsel %vm675, %v681, %v683
    %v685 = vrot.slane %v159, 4
    %v686 = vsel %vm675, %v683, %v685
    %v687 = vrot.slane %v160, 4
    %v688 = vsel %vm675, %v685, %v687
    %v689 = vrot.slane %v161, 4
    %v690 = vsel %vm675, %v687, %v689
    %v691 = vrot.slane %v162, 4
    %v692 = vsel %vm675, %v689, %v691
    %v703 = vsel %vm675, 0.0, %v676
    %s704 = scalar_lea.vmem [#allocation2], 176
    %v705 = vld [vmem:[%s704] sm:$0xff]
    %v706 = vld [vmem:[%s704 + $0x8] sm:$0xff]
    %v707 = vld [vmem:[%s704 + $0x10] sm:$0xff]
    %v708 = vld [vmem:[%s704 + $0x18] sm:$0xff]
    %v709 = vld [vmem:[%s704 + $0x20] sm:$0xff]
    %v710 = vld [vmem:[%s704 + $0x28] sm:$0xff]
    %v711 = vld [vmem:[%s704 + $0x30] sm:$0xff]
    %v712 = vld [vmem:[%s704 + $0x38] sm:$0xff]
    %v713 = vld [vmem:[%s704 + $0x40] sm:$0xff]
    %v714 = vld [vmem:[%s704 + $0x48] sm:$0xff]
    %v715 = vld [vmem:[%s704 + $0x50] sm:$0xf]
    %717 = vset.pattern.permute.xlu0 0
    %718 = vperm.xlu0 %717, %v705
    %v719 = vpop.permute.xlu0 %718
    %722 = vset.pattern.permute.xlu0 0
    %723 = vperm.xlu0 %722, %v706
    %v724 = vpop.permute.xlu0 %723
    %727 = vset.pattern.permute.xlu0 0
    %728 = vperm.xlu0 %727, %v707
    %v729 = vpop.permute.xlu0 %728
    %732 = vset.pattern.permute.xlu0 0
    %733 = vperm.xlu0 %732, %v708
    %v734 = vpop.permute.xlu0 %733
    %737 = vset.pattern.permute.xlu0 0
    %738 = vperm.xlu0 %737, %v709
    %v739 = vpop.permute.xlu0 %738
    %742 = vset.pattern.permute.xlu0 0
    %743 = vperm.xlu0 %742, %v710
    %v744 = vpop.permute.xlu0 %743
    %747 = vset.pattern.permute.xlu0 0
    %748 = vperm.xlu0 %747, %v711
    %v749 = vpop.permute.xlu0 %748
    %752 = vset.pattern.permute.xlu0 0
    %753 = vperm.xlu0 %752, %v712
    %v754 = vpop.permute.xlu0 %753
    %757 = vset.pattern.permute.xlu0 0
    %758 = vperm.xlu0 %757, %v713
    %v759 = vpop.permute.xlu0 %758
    %762 = vset.pattern.permute.xlu0 0
    %763 = vperm.xlu0 %762, %v714
    %v764 = vpop.permute.xlu0 %763
    %767 = vset.pattern.permute.xlu0 0
    %768 = vperm.xlu0 %767, %v715
    %v769 = vpop.permute.xlu0 %768
    %v771 = vmul.f32 %v719, 0.0
    %v772 = vmul.f32 %v703, %v724
    %v773 = vmul.f32 %v678, %v729
    %v774 = vmul.f32 %v680, %v734
    %v775 = vmul.f32 %v682, %v739
    %v776 = vmul.f32 %v684, %v744
    %v777 = vmul.f32 %v686, %v749
    %v778 = vmul.f32 %v688, %v754
    %v779 = vmul.f32 %v690, %v759
    %v780 = vmul.f32 %v692, %v764
    %v781 = vmul.f32 %v691, %v769
    %s782 = scalar_lea.vmem [#allocation5], 4
    %v783 = vld [vmem:[%s782] sm:$0x3]
    %v785 = vsel %vm361, %v771, 0
    %v788 = vsel %vm361, %v772, 0
    %v791 = vsel %vm361, %v773, 0
    %v794 = vsel %vm361, %v774, 0
    %v797 = vsel %vm361, %v775, 0
    %v800 = vsel %vm361, %v776, 0
    %v803 = vsel %vm361, %v777, 0
    %v806 = vsel %vm361, %v778, 0
    %v809 = vsel %vm361, %v779, 0
    %v812 = vsel %vm361, %v780, 0
    %v815 = vsel %vm361, %v781, 0
    %v818 = vsel %vm395, %v783, 0
    %820 = vmatprep.subr.mxu0 0.0
    %821 = vmatpush1.msra.mxu0 0.0
    %822 = vmatprep.subr.mxu0 0.0
    %823 = vmatpush1.msra.mxu0 0.0
    %824 = vmatprep.subr.mxu0 0.0
    %825 = vmatpush1.msra.mxu0 0.0
    %826 = vmatprep.subr.mxu0 0.0
    %827 = vmatpush1.msra.mxu0 0.0
    %828 = vmatprep.subr.mxu0 0.0
    %829 = vmatpush1.msra.mxu0 0.0
    %830 = vmatprep.subr.mxu0 0.0
    %831 = vmatpush1.msra.mxu0 0.0
    %832 = vmatprep.subr.mxu0 0.0
    %833 = vmatpush1.msra.mxu0 0.0
    %834 = vmatprep.subr.mxu0 0.0
    %835 = vmatpush1.msra.mxu0 0.0
    %836 = vmatprep.subr.mxu0 0.0
    %837 = vmatpush1.msra.mxu0 0.0
    %838 = vmatprep.subr.mxu0 0.0
    %839 = vmatpush1.msra.mxu0 0.0
    %840 = vmatprep.subr.mxu0 0.0
    %841 = vmatpush1.msra.mxu0 0.0
    %842 = vmatprep.subr.mxu0 0.0
    %843 = vmatpush1.msra.mxu0 0.0
    %844 = vmatprep.subr.mxu0 0.0
    %845 = vmatpush1.msra.mxu0 0.0
    %846 = vmatprep.subr.mxu0 0.0
    %847 = vmatpush1.msra.mxu0 0.0
    %848 = vmatprep.subr.mxu0 0.0
    %849 = vmatpush1.msra.mxu0 0.0
    %850 = vmatprep.subr.mxu0 0.0
    %851 = vmatpush1.msra.mxu0 %v818
    %852 = vmatprep.subr.mxu0 0.0
    %853 = vmatpush2.msra.mxu0 0.0
    %854 = vmatprep.subr.mxu0 0.0
    %855 = vmatpush2.msra.mxu0 0.0
    %856 = vmatprep.subr.mxu0 0.0
    %857 = vmatpush2.msra.mxu0 0.0
    %858 = vmatprep.subr.mxu0 0.0
    %859 = vmatpush2.msra.mxu0 0.0
    %860 = vmatprep.subr.mxu0 0.0
    %861 = vmatpush2.msra.mxu0 0.0
    %862 = vmatprep.subr.mxu0 0.0
    %863 = vmatpush2.msra.mxu0 0.0
    %864 = vmatprep.subr.mxu0 0.0
    %865 = vmatpush2.msra.mxu0 0.0
    %866 = vmatprep.subr.mxu0 0.0
    %867 = vmatpush2.msra.mxu0 0.0
    %868 = vmatprep.subr.mxu0 0.0
    %869 = vmatpush2.msra.mxu0 0.0
    %870 = vmatprep.subr.mxu0 0.0
    %871 = vmatpush2.msra.mxu0 0.0
    %872 = vmatprep.subr.mxu0 0.0
    %873 = vmatpush2.msra.mxu0 0.0
    %874 = vmatprep.subr.mxu0 0.0
    %875 = vmatpush2.msra.mxu0 0.0
    %876 = vmatprep.subr.mxu0 0.0
    %877 = vmatpush2.msra.mxu0 0.0
    %878 = vmatprep.subr.mxu0 0.0
    %879 = vmatpush2.msra.mxu0 0.0
    %880 = vmatprep.subr.mxu0 0.0
    %881 = vmatpush2.msra.mxu0 0.0
    %882 = vmatprep.subr.mxu0 0.0
    %883 = vmatpush2.msra.mxu0 0.0
    %884 = vmatprep.mubr.f32.mxu0 0.0
    %885 = vmatmul.mubr.f32.gmra.mxu0 %v785
    %v886 = vpop.f32.mrf.mxu0
    %v887 = vadd.f32 0.0, %v886
    %v888 = vpop.f32.mrf.mxu0
    %889 = vmatprep.mubr.f32.mxu0 0.0
    %890 = vmatmul.mubr.f32.gmra.mxu0 %v788
    %v891 = vpop.f32.mrf.mxu0
    %v892 = vadd.f32 0.0, %v891
    %v893 = vpop.f32.mrf.mxu0
    %894 = vmatprep.mubr.f32.mxu0 0.0
    %895 = vmatmul.mubr.f32.gmra.mxu0 %v791
    %v896 = vpop.f32.mrf.mxu0
    %v897 = vadd.f32 0.0, %v896
    %v898 = vpop.f32.mrf.mxu0
    %899 = vmatprep.mubr.f32.mxu0 0.0
    %900 = vmatmul.mubr.f32.gmra.mxu0 %v794
    %v901 = vpop.f32.mrf.mxu0
    %v902 = vadd.f32 0.0, %v901
    %v903 = vpop.f32.mrf.mxu0
    %904 = vmatprep.mubr.f32.mxu0 0.0
    %905 = vmatmul.mubr.f32.gmra.mxu0 %v797
    %v906 = vpop.f32.mrf.mxu0
    %v907 = vadd.f32 0.0, %v906
    %v908 = vpop.f32.mrf.mxu0
    %909 = vmatprep.mubr.f32.mxu0 0.0
    %910 = vmatmul.mubr.f32.gmra.mxu0 %v800
    %v911 = vpop.f32.mrf.mxu0
    %v912 = vadd.f32 0.0, %v911
    %v913 = vpop.f32.mrf.mxu0
    %914 = vmatprep.mubr.f32.mxu0 0.0
    %915 = vmatmul.mubr.f32.gmra.mxu0 %v803
    %v916 = vpop.f32.mrf.mxu0
    %v917 = vadd.f32 0.0, %v916
    %v918 = vpop.f32.mrf.mxu0
    %919 = vmatprep.mubr.f32.mxu0 0.0
    %920 = vmatmul.mubr.f32.gmra.mxu0 %v806
    %v921 = vpop.f32.mrf.mxu0
    %v922 = vadd.f32 0.0, %v921
    %v923 = vpop.f32.mrf.mxu0
    %924 = vmatprep.mubr.f32.mxu0 0.0
    %925 = vmatmul.mubr.f32.gmra.mxu0 %v809
    %v926 = vpop.f32.mrf.mxu0
    %v927 = vadd.f32 0.0, %v926
    %v928 = vpop.f32.mrf.mxu0
    %929 = vmatprep.mubr.f32.mxu0 0.0
    %930 = vmatmul.mubr.f32.gmra.mxu0 %v812
    %v931 = vpop.f32.mrf.mxu0
    %v932 = vadd.f32 0.0, %v931
    %v933 = vpop.f32.mrf.mxu0
    %934 = vmatprep.mubr.f32.mxu0 0.0
    %935 = vmatmul.mubr.f32.gmra.mxu0 %v815
    %v936 = vpop.f32.mrf.mxu0
    %v937 = vadd.f32 0.0, %v936
    %v938 = vpop.f32.mrf.mxu0
    %939 = vdwg.mxu0
    %v940 = vadd.f32 %v622, %v887
    %v941 = vadd.f32 %v627, %v892
    %v942 = vadd.f32 %v632, %v897
    %v943 = vadd.f32 %v637, %v902
    %v944 = vadd.f32 %v642, %v907
    %v945 = vadd.f32 %v647, %v912
    %v946 = vadd.f32 %v652, %v917
    %v947 = vadd.f32 %v657, %v922
    %v948 = vadd.f32 %v662, %v927
    %v949 = vadd.f32 %v667, %v932
    %v950 = vadd.f32 %v672, %v937
    %v953 = vrot.slane %v154, 6
    %v954 = vrot.slane %v155, 6
    %v955 = vsel %vm395, %v953, %v954
    %v956 = vrot.slane %v156, 6
    %v957 = vsel %vm395, %v954, %v956
    %v958 = vrot.slane %v157, 6
    %v959 = vsel %vm395, %v956, %v958
    %v960 = vrot.slane %v158, 6
    %v961 = vsel %vm395, %v958, %v960
    %v962 = vrot.slane %v159, 6
    %v963 = vsel %vm395, %v960, %v962
    %v964 = vrot.slane %v160, 6
    %v965 = vsel %vm395, %v962, %v964
    %v966 = vrot.slane %v161, 6
    %v967 = vsel %vm395, %v964, %v966
    %v968 = vrot.slane %v162, 6
    %v969 = vsel %vm395, %v966, %v968
    %v970 = vrot.slane %v163, 6
    %v971 = vsel %vm395, %v968, %v970
    %v972 = vrot.slane %v164, 6
    %v973 = vsel %vm395, %v970, %v972
    %v985 = vsel %vm395, 0.0, %v953
    %s986 = scalar_lea.vmem [#allocation2], 264
    %v987 = vld [vmem:[%s986] sm:$0xff]
    %v988 = vld [vmem:[%s986 + $0x8] sm:$0xff]
    %v989 = vld [vmem:[%s986 + $0x10] sm:$0xff]
    %v990 = vld [vmem:[%s986 + $0x18] sm:$0xff]
    %v991 = vld [vmem:[%s986 + $0x20] sm:$0xff]
    %v992 = vld [vmem:[%s986 + $0x28] sm:$0xff]
    %v993 = vld [vmem:[%s986 + $0x30] sm:$0xff]
    %v994 = vld [vmem:[%s986 + $0x38] sm:$0xff]
    %v995 = vld [vmem:[%s986 + $0x40] sm:$0xff]
    %v996 = vld [vmem:[%s986 + $0x48] sm:$0xff]
    %v997 = vld [vmem:[%s986 + $0x50] sm:$0xf]
    %999 = vset.pattern.permute.xlu0 0
    %1000 = vperm.xlu0 %999, %v987
    %v1001 = vpop.permute.xlu0 %1000
    %1004 = vset.pattern.permute.xlu0 0
    %1005 = vperm.xlu0 %1004, %v988
    %v1006 = vpop.permute.xlu0 %1005
    %1009 = vset.pattern.permute.xlu0 0
    %1010 = vperm.xlu0 %1009, %v989
    %v1011 = vpop.permute.xlu0 %1010
    %1014 = vset.pattern.permute.xlu0 0
    %1015 = vperm.xlu0 %1014, %v990
    %v1016 = vpop.permute.xlu0 %1015
    %1019 = vset.pattern.permute.xlu0 0
    %1020 = vperm.xlu0 %1019, %v991
    %v1021 = vpop.permute.xlu0 %1020
    %1024 = vset.pattern.permute.xlu0 0
    %1025 = vperm.xlu0 %1024, %v992
    %v1026 = vpop.permute.xlu0 %1025
    %1029 = vset.pattern.permute.xlu0 0
    %1030 = vperm.xlu0 %1029, %v993
    %v1031 = vpop.permute.xlu0 %1030
    %1034 = vset.pattern.permute.xlu0 0
    %1035 = vperm.xlu0 %1034, %v994
    %v1036 = vpop.permute.xlu0 %1035
    %1039 = vset.pattern.permute.xlu0 0
    %1040 = vperm.xlu0 %1039, %v995
    %v1041 = vpop.permute.xlu0 %1040
    %1044 = vset.pattern.permute.xlu0 0
    %1045 = vperm.xlu0 %1044, %v996
    %v1046 = vpop.permute.xlu0 %1045
    %1049 = vset.pattern.permute.xlu0 0
    %1050 = vperm.xlu0 %1049, %v997
    %v1051 = vpop.permute.xlu0 %1050
    %v1053 = vmul.f32 %v985, %v1001
    %v1054 = vmul.f32 %v955, %v1006
    %v1055 = vmul.f32 %v957, %v1011
    %v1056 = vmul.f32 %v959, %v1016
    %v1057 = vmul.f32 %v961, %v1021
    %v1058 = vmul.f32 %v963, %v1026
    %v1059 = vmul.f32 %v965, %v1031
    %v1060 = vmul.f32 %v967, %v1036
    %v1061 = vmul.f32 %v969, %v1041
    %v1062 = vmul.f32 %v971, %v1046
    %v1063 = vmul.f32 %v973, %v1051
    %s1064 = scalar_lea.vmem [#allocation5], 6
    %v1065 = vld [vmem:[%s1064] sm:$0x3]
    %v1067 = vsel %vm361, %v1053, 0
    %v1070 = vsel %vm361, %v1054, 0
    %v1073 = vsel %vm361, %v1055, 0
    %v1076 = vsel %vm361, %v1056, 0
    %v1079 = vsel %vm361, %v1057, 0
    %v1082 = vsel %vm361, %v1058, 0
    %v1085 = vsel %vm361, %v1059, 0
    %v1088 = vsel %vm361, %v1060, 0
    %v1091 = vsel %vm361, %v1061, 0
    %v1094 = vsel %vm361, %v1062, 0
    %v1097 = vsel %vm361, %v1063, 0
    %v1100 = vsel %vm395, %v1065, 0
    %1102 = vmatprep.subr.mxu0 0.0
    %1103 = vmatpush1.msra.mxu0 0.0
    %1104 = vmatprep.subr.mxu0 0.0
    %1105 = vmatpush1.msra.mxu0 0.0
    %1106 = vmatprep.subr.mxu0 0.0
    %1107 = vmatpush1.msra.mxu0 0.0
    %1108 = vmatprep.subr.mxu0 0.0
    %1109 = vmatpush1.msra.mxu0 0.0
    %1110 = vmatprep.subr.mxu0 0.0
    %1111 = vmatpush1.msra.mxu0 0.0
    %1112 = vmatprep.subr.mxu0 0.0
    %1113 = vmatpush1.msra.mxu0 0.0
    %1114 = vmatprep.subr.mxu0 0.0
    %1115 = vmatpush1.msra.mxu0 0.0
    %1116 = vmatprep.subr.mxu0 0.0
    %1117 = vmatpush1.msra.mxu0 0.0
    %1118 = vmatprep.subr.mxu0 0.0
    %1119 = vmatpush1.msra.mxu0 0.0
    %1120 = vmatprep.subr.mxu0 0.0
    %1121 = vmatpush1.msra.mxu0 0.0
    %1122 = vmatprep.subr.mxu0 0.0
    %1123 = vmatpush1.msra.mxu0 0.0
    %1124 = vmatprep.subr.mxu0 0.0
    %1125 = vmatpush1.msra.mxu0 0.0
    %1126 = vmatprep.subr.mxu0 0.0
    %1127 = vmatpush1.msra.mxu0 0.0
    %1128 = vmatprep.subr.mxu0 0.0
    %1129 = vmatpush1.msra.mxu0 0.0
    %1130 = vmatprep.subr.mxu0 0.0
    %1131 = vmatpush1.msra.mxu0 0.0
    %1132 = vmatprep.subr.mxu0 0.0
    %1133 = vmatpush1.msra.mxu0 %v1100
    %1134 = vmatprep.subr.mxu0 0.0
    %1135 = vmatpush2.msra.mxu0 0.0
    %1136 = vmatprep.subr.mxu0 0.0
    %1137 = vmatpush2.msra.mxu0 0.0
    %1138 = vmatprep.subr.mxu0 0.0
    %1139 = vmatpush2.msra.mxu0 0.0
    %1140 = vmatprep.subr.mxu0 0.0
    %1141 = vmatpush2.msra.mxu0 0.0
    %1142 = vmatprep.subr.mxu0 0.0
    %1143 = vmatpush2.msra.mxu0 0.0
    %1144 = vmatprep.subr.mxu0 0.0
    %1145 = vmatpush2.msra.mxu0 0.0
    %1146 = vmatprep.subr.mxu0 0.0
    %1147 = vmatpush2.msra.mxu0 0.0
    %1148 = vmatprep.subr.mxu0 0.0
    %1149 = vmatpush2.msra.mxu0 0.0
    %1150 = vmatprep.subr.mxu0 0.0
    %1151 = vmatpush2.msra.mxu0 0.0
    %1152 = vmatprep.subr.mxu0 0.0
    %1153 = vmatpush2.msra.mxu0 0.0
    %1154 = vmatprep.subr.mxu0 0.0
    %1155 = vmatpush2.msra.mxu0 0.0
    %1156 = vmatprep.subr.mxu0 0.0
    %1157 = vmatpush2.msra.mxu0 0.0
    %1158 = vmatprep.subr.mxu0 0.0
    %1159 = vmatpush2.msra.mxu0 0.0
    %1160 = vmatprep.subr.mxu0 0.0
    %1161 = vmatpush2.msra.mxu0 0.0
    %1162 = vmatprep.subr.mxu0 0.0
    %1163 = vmatpush2.msra.mxu0 0.0
    %1164 = vmatprep.subr.mxu0 0.0
    %1165 = vmatpush2.msra.mxu0 0.0
    %1166 = vmatprep.mubr.f32.mxu0 0.0
    %1167 = vmatmul.mubr.f32.gmra.mxu0 %v1067
    %v1168 = vpop.f32.mrf.mxu0
    %v1169 = vadd.f32 0.0, %v1168
    %v1170 = vpop.f32.mrf.mxu0
    %1171 = vmatprep.mubr.f32.mxu0 0.0
    %1172 = vmatmul.mubr.f32.gmra.mxu0 %v1070
    %v1173 = vpop.f32.mrf.mxu0
    %v1174 = vadd.f32 0.0, %v1173
    %v1175 = vpop.f32.mrf.mxu0
    %1176 = vmatprep.mubr.f32.mxu0 0.0
    %1177 = vmatmul.mubr.f32.gmra.mxu0 %v1073
    %v1178 = vpop.f32.mrf.mxu0
    %v1179 = vadd.f32 0.0, %v1178
    %v1180 = vpop.f32.mrf.mxu0
    %1181 = vmatprep.mubr.f32.mxu0 0.0
    %1182 = vmatmul.mubr.f32.gmra.mxu0 %v1076
    %v1183 = vpop.f32.mrf.mxu0
    %v1184 = vadd.f32 0.0, %v1183
    %v1185 = vpop.f32.mrf.mxu0
    %1186 = vmatprep.mubr.f32.mxu0 0.0
    %1187 = vmatmul.mubr.f32.gmra.mxu0 %v1079
    %v1188 = vpop.f32.mrf.mxu0
    %v1189 = vadd.f32 0.0, %v1188
    %v1190 = vpop.f32.mrf.mxu0
    %1191 = vmatprep.mubr.f32.mxu0 0.0
    %1192 = vmatmul.mubr.f32.gmra.mxu0 %v1082
    %v1193 = vpop.f32.mrf.mxu0
    %v1194 = vadd.f32 0.0, %v1193
    %v1195 = vpop.f32.mrf.mxu0
    %1196 = vmatprep.mubr.f32.mxu0 0.0
    %1197 = vmatmul.mubr.f32.gmra.mxu0 %v1085
    %v1198 = vpop.f32.mrf.mxu0
    %v1199 = vadd.f32 0.0, %v1198
    %v1200 = vpop.f32.mrf.mxu0
    %1201 = vmatprep.mubr.f32.mxu0 0.0
    %1202 = vmatmul.mubr.f32.gmra.mxu0 %v1088
    %v1203 = vpop.f32.mrf.mxu0
    %v1204 = vadd.f32 0.0, %v1203
    %v1205 = vpop.f32.mrf.mxu0
    %1206 = vmatprep.mubr.f32.mxu0 0.0
    %1207 = vmatmul.mubr.f32.gmra.mxu0 %v1091
    %v1208 = vpop.f32.mrf.mxu0
    %v1209 = vadd.f32 0.0, %v1208
    %v1210 = vpop.f32.mrf.mxu0
    %1211 = vmatprep.mubr.f32.mxu0 0.0
    %1212 = vmatmul.mubr.f32.gmra.mxu0 %v1094
    %v1213 = vpop.f32.mrf.mxu0
    %v1214 = vadd.f32 0.0, %v1213
    %v1215 = vpop.f32.mrf.mxu0
    %1216 = vmatprep.mubr.f32.mxu0 0.0
    %1217 = vmatmul.mubr.f32.gmra.mxu0 %v1097
    %v1218 = vpop.f32.mrf.mxu0
    %v1219 = vadd.f32 0.0, %v1218
    %v1220 = vpop.f32.mrf.mxu0
    %1221 = vdwg.mxu0
    %v1222 = vadd.f32 %v940, %v1169
    %v1223 = vadd.f32 %v941, %v1174
    %v1224 = vadd.f32 %v942, %v1179
    %v1225 = vadd.f32 %v943, %v1184
    %v1226 = vadd.f32 %v944, %v1189
    %v1227 = vadd.f32 %v945, %v1194
    %v1228 = vadd.f32 %v946, %v1199
    %v1229 = vadd.f32 %v947, %v1204
    %v1230 = vadd.f32 %v948, %v1209
    %v1231 = vadd.f32 %v949, %v1214
    %v1232 = vadd.f32 %v950, %v1219
    %s1233 = scalar_lea.vmem [#allocation2], 352
    %v1234 = vld [vmem:[%s1233] sm:$0xff]
    %v1235 = vld [vmem:[%s1233 + $0x8] sm:$0xff]
    %v1236 = vld [vmem:[%s1233 + $0x10] sm:$0xff]
    %v1237 = vld [vmem:[%s1233 + $0x18] sm:$0xff]
    %v1238 = vld [vmem:[%s1233 + $0x20] sm:$0xff]
    %v1239 = vld [vmem:[%s1233 + $0x28] sm:$0xff]
    %v1240 = vld [vmem:[%s1233 + $0x30] sm:$0xff]
    %v1241 = vld [vmem:[%s1233 + $0x38] sm:$0xff]
    %v1242 = vld [vmem:[%s1233 + $0x40] sm:$0xff]
    %v1243 = vld [vmem:[%s1233 + $0x48] sm:$0xff]
    %v1244 = vld [vmem:[%s1233 + $0x50] sm:$0xf]
    %1246 = vset.pattern.permute.xlu0 0
    %1247 = vperm.xlu0 %1246, %v1234
    %v1248 = vpop.permute.xlu0 %1247
    %1251 = vset.pattern.permute.xlu0 0
    %1252 = vperm.xlu0 %1251, %v1235
    %v1253 = vpop.permute.xlu0 %1252
    %1256 = vset.pattern.permute.xlu0 0
    %1257 = vperm.xlu0 %1256, %v1236
    %v1258 = vpop.permute.xlu0 %1257
    %1261 = vset.pattern.permute.xlu0 0
    %1262 = vperm.xlu0 %1261, %v1237
    %v1263 = vpop.permute.xlu0 %1262
    %1266 = vset.pattern.permute.xlu0 0
    %1267 = vperm.xlu0 %1266, %v1238
    %v1268 = vpop.permute.xlu0 %1267
    %1271 = vset.pattern.permute.xlu0 0
    %1272 = vperm.xlu0 %1271, %v1239
    %v1273 = vpop.permute.xlu0 %1272
    %1276 = vset.pattern.permute.xlu0 0
    %1277 = vperm.xlu0 %1276, %v1240
    %v1278 = vpop.permute.xlu0 %1277
    %1281 = vset.pattern.permute.xlu0 0
    %1282 = vperm.xlu0 %1281, %v1241
    %v1283 = vpop.permute.xlu0 %1282
    %1286 = vset.pattern.permute.xlu0 0
    %1287 = vperm.xlu0 %1286, %v1242
    %v1288 = vpop.permute.xlu0 %1287
    %1291 = vset.pattern.permute.xlu0 0
    %1292 = vperm.xlu0 %1291, %v1243
    %v1293 = vpop.permute.xlu0 %1292
    %1296 = vset.pattern.permute.xlu0 0
    %1297 = vperm.xlu0 %1296, %v1244
    %v1298 = vpop.permute.xlu0 %1297
    %v1300 = vmul.f32 %v154, %v1248
    %v1301 = vmul.f32 %v155, %v1253
    %v1302 = vmul.f32 %v156, %v1258
    %v1303 = vmul.f32 %v157, %v1263
    %v1304 = vmul.f32 %v158, %v1268
    %v1305 = vmul.f32 %v159, %v1273
    %v1306 = vmul.f32 %v160, %v1278
    %v1307 = vmul.f32 %v161, %v1283
    %v1308 = vmul.f32 %v162, %v1288
    %v1309 = vmul.f32 %v163, %v1293
    %v1310 = vmul.f32 %v164, %v1298
    %s1311 = scalar_lea.vmem [#allocation5], 8
    %v1312 = vld [vmem:[%s1311] sm:$0x3]
    %v1314 = vsel %vm361, %v1300, 0
    %v1317 = vsel %vm361, %v1301, 0
    %v1320 = vsel %vm361, %v1302, 0
    %v1323 = vsel %vm361, %v1303, 0
    %v1326 = vsel %vm361, %v1304, 0
    %v1329 = vsel %vm361, %v1305, 0
    %v1332 = vsel %vm361, %v1306, 0
    %v1335 = vsel %vm361, %v1307, 0
    %v1338 = vsel %vm361, %v1308, 0
    %v1341 = vsel %vm361, %v1309, 0
    %v1344 = vsel %vm361, %v1310, 0
    %v1347 = vsel %vm395, %v1312, 0
    %1349 = vmatprep.subr.mxu0 0.0
    %1350 = vmatpush1.msra.mxu0 0.0
    %1351 = vmatprep.subr.mxu0 0.0
    %1352 = vmatpush1.msra.mxu0 0.0
    %1353 = vmatprep.subr.mxu0 0.0
    %1354 = vmatpush1.msra.mxu0 0.0
    %1355 = vmatprep.subr.mxu0 0.0
    %1356 = vmatpush1.msra.mxu0 0.0
    %1357 = vmatprep.subr.mxu0 0.0
    %1358 = vmatpush1.msra.mxu0 0.0
    %1359 = vmatprep.subr.mxu0 0.0
    %1360 = vmatpush1.msra.mxu0 0.0
    %1361 = vmatprep.subr.mxu0 0.0
    %1362 = vmatpush1.msra.mxu0 0.0
    %1363 = vmatprep.subr.mxu0 0.0
    %1364 = vmatpush1.msra.mxu0 0.0
    %1365 = vmatprep.subr.mxu0 0.0
    %1366 = vmatpush1.msra.mxu0 0.0
    %1367 = vmatprep.subr.mxu0 0.0
    %1368 = vmatpush1.msra.mxu0 0.0
    %1369 = vmatprep.subr.mxu0 0.0
    %1370 = vmatpush1.msra.mxu0 0.0
    %1371 = vmatprep.subr.mxu0 0.0
    %1372 = vmatpush1.msra.mxu0 0.0
    %1373 = vmatprep.subr.mxu0 0.0
    %1374 = vmatpush1.msra.mxu0 0.0
    %1375 = vmatprep.subr.mxu0 0.0
    %1376 = vmatpush1.msra.mxu0 0.0
    %1377 = vmatprep.subr.mxu0 0.0
    %1378 = vmatpush1.msra.mxu0 0.0
    %1379 = vmatprep.subr.mxu0 0.0
    %1380 = vmatpush1.msra.mxu0 %v1347
    %1381 = vmatprep.subr.mxu0 0.0
    %1382 = vmatpush2.msra.mxu0 0.0
    %1383 = vmatprep.subr.mxu0 0.0
    %1384 = vmatpush2.msra.mxu0 0.0
    %1385 = vmatprep.subr.mxu0 0.0
    %1386 = vmatpush2.msra.mxu0 0.0
    %1387 = vmatprep.subr.mxu0 0.0
    %1388 = vmatpush2.msra.mxu0 0.0
    %1389 = vmatprep.subr.mxu0 0.0
    %1390 = vmatpush2.msra.mxu0 0.0
    %1391 = vmatprep.subr.mxu0 0.0
    %1392 = vmatpush2.msra.mxu0 0.0
    %1393 = vmatprep.subr.mxu0 0.0
    %1394 = vmatpush2.msra.mxu0 0.0
    %1395 = vmatprep.subr.mxu0 0.0
    %1396 = vmatpush2.msra.mxu0 0.0
    %1397 = vmatprep.subr.mxu0 0.0
    %1398 = vmatpush2.msra.mxu0 0.0
    %1399 = vmatprep.subr.mxu0 0.0
    %1400 = vmatpush2.msra.mxu0 0.0
    %1401 = vmatprep.subr.mxu0 0.0
    %1402 = vmatpush2.msra.mxu0 0.0
    %1403 = vmatprep.subr.mxu0 0.0
    %1404 = vmatpush2.msra.mxu0 0.0
    %1405 = vmatprep.subr.mxu0 0.0
    %1406 = vmatpush2.msra.mxu0 0.0
    %1407 = vmatprep.subr.mxu0 0.0
    %1408 = vmatpush2.msra.mxu0 0.0
    %1409 = vmatprep.subr.mxu0 0.0
    %1410 = vmatpush2.msra.mxu0 0.0
    %1411 = vmatprep.subr.mxu0 0.0
    %1412 = vmatpush2.msra.mxu0 0.0
    %1413 = vmatprep.mubr.f32.mxu0 0.0
    %1414 = vmatmul.mubr.f32.gmra.mxu0 %v1314
    %v1415 = vpop.f32.mrf.mxu0
    %v1416 = vadd.f32 0.0, %v1415
    %v1417 = vpop.f32.mrf.mxu0
    %1418 = vmatprep.mubr.f32.mxu0 0.0
    %1419 = vmatmul.mubr.f32.gmra.mxu0 %v1317
    %v1420 = vpop.f32.mrf.mxu0
    %v1421 = vadd.f32 0.0, %v1420
    %v1422 = vpop.f32.mrf.mxu0
    %1423 = vmatprep.mubr.f32.mxu0 0.0
    %1424 = vmatmul.mubr.f32.gmra.mxu0 %v1320
    %v1425 = vpop.f32.mrf.mxu0
    %v1426 = vadd.f32 0.0, %v1425
    %v1427 = vpop.f32.mrf.mxu0
    %1428 = vmatprep.mubr.f32.mxu0 0.0
    %1429 = vmatmul.mubr.f32.gmra.mxu0 %v1323
    %v1430 = vpop.f32.mrf.mxu0
    %v1431 = vadd.f32 0.0, %v1430
    %v1432 = vpop.f32.mrf.mxu0
    %1433 = vmatprep.mubr.f32.mxu0 0.0
    %1434 = vmatmul.mubr.f32.gmra.mxu0 %v1326
    %v1435 = vpop.f32.mrf.mxu0
    %v1436 = vadd.f32 0.0, %v1435
    %v1437 = vpop.f32.mrf.mxu0
    %1438 = vmatprep.mubr.f32.mxu0 0.0
    %1439 = vmatmul.mubr.f32.gmra.mxu0 %v1329
    %v1440 = vpop.f32.mrf.mxu0
    %v1441 = vadd.f32 0.0, %v1440
    %v1442 = vpop.f32.mrf.mxu0
    %1443 = vmatprep.mubr.f32.mxu0 0.0
    %1444 = vmatmul.mubr.f32.gmra.mxu0 %v1332
    %v1445 = vpop.f32.mrf.mxu0
    %v1446 = vadd.f32 0.0, %v1445
    %v1447 = vpop.f32.mrf.mxu0
    %1448 = vmatprep.mubr.f32.mxu0 0.0
    %1449 = vmatmul.mubr.f32.gmra.mxu0 %v1335
    %v1450 = vpop.f32.mrf.mxu0
    %v1451 = vadd.f32 0.0, %v1450
    %v1452 = vpop.f32.mrf.mxu0
    %1453 = vmatprep.mubr.f32.mxu0 0.0
    %1454 = vmatmul.mubr.f32.gmra.mxu0 %v1338
    %v1455 = vpop.f32.mrf.mxu0
    %v1456 = vadd.f32 0.0, %v1455
    %v1457 = vpop.f32.mrf.mxu0
    %1458 = vmatprep.mubr.f32.mxu0 0.0
    %1459 = vmatmul.mubr.f32.gmra.mxu0 %v1341
    %v1460 = vpop.f32.mrf.mxu0
    %v1461 = vadd.f32 0.0, %v1460
    %v1462 = vpop.f32.mrf.mxu0
    %1463 = vmatprep.mubr.f32.mxu0 0.0
    %1464 = vmatmul.mubr.f32.gmra.mxu0 %v1344
    %v1465 = vpop.f32.mrf.mxu0
    %v1466 = vadd.f32 0.0, %v1465
    %v1467 = vpop.f32.mrf.mxu0
    %1468 = vdwg.mxu0
    %v1469 = vadd.f32 %v1222, %v1416
    %v1470 = vadd.f32 %v1223, %v1421
    %v1471 = vadd.f32 %v1224, %v1426
    %v1472 = vadd.f32 %v1225, %v1431
    %v1473 = vadd.f32 %v1226, %v1436
    %v1474 = vadd.f32 %v1227, %v1441
    %v1475 = vadd.f32 %v1228, %v1446
    %v1476 = vadd.f32 %v1229, %v1451
    %v1477 = vadd.f32 %v1230, %v1456
    %v1478 = vadd.f32 %v1231, %v1461
    %v1479 = vadd.f32 %v1232, %v1466
    %v1480 = vrot.slane %v163, 2
    %v1481 = vsel %vm252, %v268, %v1480
    %v1482 = vrot.slane %v164, 2
    %v1483 = vsel %vm252, %v1480, %v1482
    %v1487 = vsel %vm395, %v1482, 0.0
    %s1488 = scalar_lea.vmem [#allocation2], 440
    %v1489 = vld [vmem:[%s1488] sm:$0xff]
    %v1490 = vld [vmem:[%s1488 + $0x8] sm:$0xff]
    %v1491 = vld [vmem:[%s1488 + $0x10] sm:$0xff]
    %v1492 = vld [vmem:[%s1488 + $0x18] sm:$0xff]
    %v1493 = vld [vmem:[%s1488 + $0x20] sm:$0xff]
    %v1494 = vld [vmem:[%s1488 + $0x28] sm:$0xff]
    %v1495 = vld [vmem:[%s1488 + $0x30] sm:$0xff]
    %v1496 = vld [vmem:[%s1488 + $0x38] sm:$0xff]
    %v1497 = vld [vmem:[%s1488 + $0x40] sm:$0xff]
    %v1498 = vld [vmem:[%s1488 + $0x48] sm:$0xff]
    %v1499 = vld [vmem:[%s1488 + $0x50] sm:$0xf]
    %1501 = vset.pattern.permute.xlu0 0
    %1502 = vperm.xlu0 %1501, %v1489
    %v1503 = vpop.permute.xlu0 %1502
    %1506 = vset.pattern.permute.xlu0 0
    %1507 = vperm.xlu0 %1506, %v1490
    %v1508 = vpop.permute.xlu0 %1507
    %1511 = vset.pattern.permute.xlu0 0
    %1512 = vperm.xlu0 %1511, %v1491
    %v1513 = vpop.permute.xlu0 %1512
    %1516 = vset.pattern.permute.xlu0 0
    %1517 = vperm.xlu0 %1516, %v1492
    %v1518 = vpop.permute.xlu0 %1517
    %1521 = vset.pattern.permute.xlu0 0
    %1522 = vperm.xlu0 %1521, %v1493
    %v1523 = vpop.permute.xlu0 %1522
    %1526 = vset.pattern.permute.xlu0 0
    %1527 = vperm.xlu0 %1526, %v1494
    %v1528 = vpop.permute.xlu0 %1527
    %1531 = vset.pattern.permute.xlu0 0
    %1532 = vperm.xlu0 %1531, %v1495
    %v1533 = vpop.permute.xlu0 %1532
    %1536 = vset.pattern.permute.xlu0 0
    %1537 = vperm.xlu0 %1536, %v1496
    %v1538 = vpop.permute.xlu0 %1537
    %1541 = vset.pattern.permute.xlu0 0
    %1542 = vperm.xlu0 %1541, %v1497
    %v1543 = vpop.permute.xlu0 %1542
    %1546 = vset.pattern.permute.xlu0 0
    %1547 = vperm.xlu0 %1546, %v1498
    %v1548 = vpop.permute.xlu0 %1547
    %1551 = vset.pattern.permute.xlu0 0
    %1552 = vperm.xlu0 %1551, %v1499
    %v1553 = vpop.permute.xlu0 %1552
    %v1555 = vmul.f32 %v255, %v1503
    %v1556 = vmul.f32 %v257, %v1508
    %v1557 = vmul.f32 %v259, %v1513
    %v1558 = vmul.f32 %v261, %v1518
    %v1559 = vmul.f32 %v263, %v1523
    %v1560 = vmul.f32 %v265, %v1528
    %v1561 = vmul.f32 %v267, %v1533
    %v1562 = vmul.f32 %v269, %v1538
    %v1563 = vmul.f32 %v1481, %v1543
    %v1564 = vmul.f32 %v1483, %v1548
    %v1565 = vmul.f32 %v1487, %v1553
    %s1566 = scalar_lea.vmem [#allocation5], 10
    %v1567 = vld [vmem:[%s1566] sm:$0x3]
    %v1569 = vsel %vm361, %v1555, 0
    %v1572 = vsel %vm361, %v1556, 0
    %v1575 = vsel %vm361, %v1557, 0
    %v1578 = vsel %vm361, %v1558, 0
    %v1581 = vsel %vm361, %v1559, 0
    %v1584 = vsel %vm361, %v1560, 0
    %v1587 = vsel %vm361, %v1561, 0
    %v1590 = vsel %vm361, %v1562, 0
    %v1593 = vsel %vm361, %v1563, 0
    %v1596 = vsel %vm361, %v1564, 0
    %v1599 = vsel %vm361, %v1565, 0
    %v1602 = vsel %vm395, %v1567, 0
    %1604 = vmatprep.subr.mxu0 0.0
    %1605 = vmatpush1.msra.mxu0 0.0
    %1606 = vmatprep.subr.mxu0 0.0
    %1607 = vmatpush1.msra.mxu0 0.0
    %1608 = vmatprep.subr.mxu0 0.0
    %1609 = vmatpush1.msra.mxu0 0.0
    %1610 = vmatprep.subr.mxu0 0.0
    %1611 = vmatpush1.msra.mxu0 0.0
    %1612 = vmatprep.subr.mxu0 0.0
    %1613 = vmatpush1.msra.mxu0 0.0
    %1614 = vmatprep.subr.mxu0 0.0
    %1615 = vmatpush1.msra.mxu0 0.0
    %1616 = vmatprep.subr.mxu0 0.0
    %1617 = vmatpush1.msra.mxu0 0.0
    %1618 = vmatprep.subr.mxu0 0.0
    %1619 = vmatpush1.msra.mxu0 0.0
    %1620 = vmatprep.subr.mxu0 0.0
    %1621 = vmatpush1.msra.mxu0 0.0
    %1622 = vmatprep.subr.mxu0 0.0
    %1623 = vmatpush1.msra.mxu0 0.0
    %1624 = vmatprep.subr.mxu0 0.0
    %1625 = vmatpush1.msra.mxu0 0.0
    %1626 = vmatprep.subr.mxu0 0.0
    %1627 = vmatpush1.msra.mxu0 0.0
    %1628 = vmatprep.subr.mxu0 0.0
    %1629 = vmatpush1.msra.mxu0 0.0
    %1630 = vmatprep.subr.mxu0 0.0
    %1631 = vmatpush1.msra.mxu0 0.0
    %1632 = vmatprep.subr.mxu0 0.0
    %1633 = vmatpush1.msra.mxu0 0.0
    %1634 = vmatprep.subr.mxu0 0.0
    %1635 = vmatpush1.msra.mxu0 %v1602
    %1636 = vmatprep.subr.mxu0 0.0
    %1637 = vmatpush2.msra.mxu0 0.0
    %1638 = vmatprep.subr.mxu0 0.0
    %1639 = vmatpush2.msra.mxu0 0.0
    %1640 = vmatprep.subr.mxu0 0.0
    %1641 = vmatpush2.msra.mxu0 0.0
    %1642 = vmatprep.subr.mxu0 0.0
    %1643 = vmatpush2.msra.mxu0 0.0
    %1644 = vmatprep.subr.mxu0 0.0
    %1645 = vmatpush2.msra.mxu0 0.0
    %1646 = vmatprep.subr.mxu0 0.0
    %1647 = vmatpush2.msra.mxu0 0.0
    %1648 = vmatprep.subr.mxu0 0.0
    %1649 = vmatpush2.msra.mxu0 0.0
    %1650 = vmatprep.subr.mxu0 0.0
    %1651 = vmatpush2.msra.mxu0 0.0
    %1652 = vmatprep.subr.mxu0 0.0
    %1653 = vmatpush2.msra.mxu0 0.0
    %1654 = vmatprep.subr.mxu0 0.0
    %1655 = vmatpush2.msra.mxu0 0.0
    %1656 = vmatprep.subr.mxu0 0.0
    %1657 = vmatpush2.msra.mxu0 0.0
    %1658 = vmatprep.subr.mxu0 0.0
    %1659 = vmatpush2.msra.mxu0 0.0
    %1660 = vmatprep.subr.mxu0 0.0
    %1661 = vmatpush2.msra.mxu0 0.0
    %1662 = vmatprep.subr.mxu0 0.0
    %1663 = vmatpush2.msra.mxu0 0.0
    %1664 = vmatprep.subr.mxu0 0.0
    %1665 = vmatpush2.msra.mxu0 0.0
    %1666 = vmatprep.subr.mxu0 0.0
    %1667 = vmatpush2.msra.mxu0 0.0
    %1668 = vmatprep.mubr.f32.mxu0 0.0
    %1669 = vmatmul.mubr.f32.gmra.mxu0 %v1569
    %v1670 = vpop.f32.mrf.mxu0
    %v1671 = vadd.f32 0.0, %v1670
    %v1672 = vpop.f32.mrf.mxu0
    %1673 = vmatprep.mubr.f32.mxu0 0.0
    %1674 = vmatmul.mubr.f32.gmra.mxu0 %v1572
    %v1675 = vpop.f32.mrf.mxu0
    %v1676 = vadd.f32 0.0, %v1675
    %v1677 = vpop.f32.mrf.mxu0
    %1678 = vmatprep.mubr.f32.mxu0 0.0
    %1679 = vmatmul.mubr.f32.gmra.mxu0 %v1575
    %v1680 = vpop.f32.mrf.mxu0
    %v1681 = vadd.f32 0.0, %v1680
    %v1682 = vpop.f32.mrf.mxu0
    %1683 = vmatprep.mubr.f32.mxu0 0.0
    %1684 = vmatmul.mubr.f32.gmra.mxu0 %v1578
    %v1685 = vpop.f32.mrf.mxu0
    %v1686 = vadd.f32 0.0, %v1685
    %v1687 = vpop.f32.mrf.mxu0
    %1688 = vmatprep.mubr.f32.mxu0 0.0
    %1689 = vmatmul.mubr.f32.gmra.mxu0 %v1581
    %v1690 = vpop.f32.mrf.mxu0
    %v1691 = vadd.f32 0.0, %v1690
    %v1692 = vpop.f32.mrf.mxu0
    %1693 = vmatprep.mubr.f32.mxu0 0.0
    %1694 = vmatmul.mubr.f32.gmra.mxu0 %v1584
    %v1695 = vpop.f32.mrf.mxu0
    %v1696 = vadd.f32 0.0, %v1695
    %v1697 = vpop.f32.mrf.mxu0
    %1698 = vmatprep.mubr.f32.mxu0 0.0
    %1699 = vmatmul.mubr.f32.gmra.mxu0 %v1587
    %v1700 = vpop.f32.mrf.mxu0
    %v1701 = vadd.f32 0.0, %v1700
    %v1702 = vpop.f32.mrf.mxu0
    %1703 = vmatprep.mubr.f32.mxu0 0.0
    %1704 = vmatmul.mubr.f32.gmra.mxu0 %v1590
    %v1705 = vpop.f32.mrf.mxu0
    %v1706 = vadd.f32 0.0, %v1705
    %v1707 = vpop.f32.mrf.mxu0
    %1708 = vmatprep.mubr.f32.mxu0 0.0
    %1709 = vmatmul.mubr.f32.gmra.mxu0 %v1593
    %v1710 = vpop.f32.mrf.mxu0
    %v1711 = vadd.f32 0.0, %v1710
    %v1712 = vpop.f32.mrf.mxu0
    %1713 = vmatprep.mubr.f32.mxu0 0.0
    %1714 = vmatmul.mubr.f32.gmra.mxu0 %v1596
    %v1715 = vpop.f32.mrf.mxu0
    %v1716 = vadd.f32 0.0, %v1715
    %v1717 = vpop.f32.mrf.mxu0
    %1718 = vmatprep.mubr.f32.mxu0 0.0
    %1719 = vmatmul.mubr.f32.gmra.mxu0 %v1599
    %v1720 = vpop.f32.mrf.mxu0
    %v1721 = vadd.f32 0.0, %v1720
    %v1722 = vpop.f32.mrf.mxu0
    %1723 = vdwg.mxu0
    %v1724 = vadd.f32 %v1469, %v1671
    %v1725 = vadd.f32 %v1470, %v1676
    %v1726 = vadd.f32 %v1471, %v1681
    %v1727 = vadd.f32 %v1472, %v1686
    %v1728 = vadd.f32 %v1473, %v1691
    %v1729 = vadd.f32 %v1474, %v1696
    %v1730 = vadd.f32 %v1475, %v1701
    %v1731 = vadd.f32 %v1476, %v1706
    %v1732 = vadd.f32 %v1477, %v1711
    %v1733 = vadd.f32 %v1478, %v1716
    %v1734 = vadd.f32 %v1479, %v1721
    %v1735 = vrot.slane %v163, 4
    %v1736 = vsel %vm675, %v691, %v1735
    %v1737 = vrot.slane %v164, 4
    %v1738 = vsel %vm675, %v1735, %v1737
    %s1741 = scalar_lea.vmem [#allocation2], 528
    %v1742 = vld [vmem:[%s1741] sm:$0xff]
    %v1743 = vld [vmem:[%s1741 + $0x8] sm:$0xff]
    %v1744 = vld [vmem:[%s1741 + $0x10] sm:$0xff]
    %v1745 = vld [vmem:[%s1741 + $0x18] sm:$0xff]
    %v1746 = vld [vmem:[%s1741 + $0x20] sm:$0xff]
    %v1747 = vld [vmem:[%s1741 + $0x28] sm:$0xff]
    %v1748 = vld [vmem:[%s1741 + $0x30] sm:$0xff]
    %v1749 = vld [vmem:[%s1741 + $0x38] sm:$0xff]
    %v1750 = vld [vmem:[%s1741 + $0x40] sm:$0xff]
    %v1751 = vld [vmem:[%s1741 + $0x48] sm:$0xff]
    %v1752 = vld [vmem:[%s1741 + $0x50] sm:$0xf]
    %1754 = vset.pattern.permute.xlu0 0
    %1755 = vperm.xlu0 %1754, %v1742
    %v1756 = vpop.permute.xlu0 %1755
    %1759 = vset.pattern.permute.xlu0 0
    %1760 = vperm.xlu0 %1759, %v1743
    %v1761 = vpop.permute.xlu0 %1760
    %1764 = vset.pattern.permute.xlu0 0
    %1765 = vperm.xlu0 %1764, %v1744
    %v1766 = vpop.permute.xlu0 %1765
    %1769 = vset.pattern.permute.xlu0 0
    %1770 = vperm.xlu0 %1769, %v1745
    %v1771 = vpop.permute.xlu0 %1770
    %1774 = vset.pattern.permute.xlu0 0
    %1775 = vperm.xlu0 %1774, %v1746
    %v1776 = vpop.permute.xlu0 %1775
    %1779 = vset.pattern.permute.xlu0 0
    %1780 = vperm.xlu0 %1779, %v1747
    %v1781 = vpop.permute.xlu0 %1780
    %1784 = vset.pattern.permute.xlu0 0
    %1785 = vperm.xlu0 %1784, %v1748
    %v1786 = vpop.permute.xlu0 %1785
    %1789 = vset.pattern.permute.xlu0 0
    %1790 = vperm.xlu0 %1789, %v1749
    %v1791 = vpop.permute.xlu0 %1790
    %1794 = vset.pattern.permute.xlu0 0
    %1795 = vperm.xlu0 %1794, %v1750
    %v1796 = vpop.permute.xlu0 %1795
    %1799 = vset.pattern.permute.xlu0 0
    %1800 = vperm.xlu0 %1799, %v1751
    %v1801 = vpop.permute.xlu0 %1800
    %1804 = vset.pattern.permute.xlu0 0
    %1805 = vperm.xlu0 %1804, %v1752
    %v1806 = vpop.permute.xlu0 %1805
    %v1808 = vmul.f32 %v680, %v1756
    %v1809 = vmul.f32 %v682, %v1761
    %v1810 = vmul.f32 %v684, %v1766
    %v1811 = vmul.f32 %v686, %v1771
    %v1812 = vmul.f32 %v688, %v1776
    %v1813 = vmul.f32 %v690, %v1781
    %v1814 = vmul.f32 %v692, %v1786
    %v1815 = vmul.f32 %v1736, %v1791
    %v1816 = vmul.f32 %v1738, %v1796
    %v1817 = vmul.f32 %v1801, 0.0
    %v1818 = vmul.f32 %v1806, 0.0
    %s1819 = scalar_lea.vmem [#allocation5], 12
    %v1820 = vld [vmem:[%s1819] sm:$0x3]
    %v1822 = vsel %vm361, %v1808, 0
    %v1825 = vsel %vm361, %v1809, 0
    %v1828 = vsel %vm361, %v1810, 0
    %v1831 = vsel %vm361, %v1811, 0
    %v1834 = vsel %vm361, %v1812, 0
    %v1837 = vsel %vm361, %v1813, 0
    %v1840 = vsel %vm361, %v1814, 0
    %v1843 = vsel %vm361, %v1815, 0
    %v1846 = vsel %vm361, %v1816, 0
    %v1849 = vsel %vm361, %v1817, 0
    %v1852 = vsel %vm361, %v1818, 0
    %v1855 = vsel %vm395, %v1820, 0
    %1857 = vmatprep.subr.mxu0 0.0
    %1858 = vmatpush1.msra.mxu0 0.0
    %1859 = vmatprep.subr.mxu0 0.0
    %1860 = vmatpush1.msra.mxu0 0.0
    %1861 = vmatprep.subr.mxu0 0.0
    %1862 = vmatpush1.msra.mxu0 0.0
    %1863 = vmatprep.subr.mxu0 0.0
    %1864 = vmatpush1.msra.mxu0 0.0
    %1865 = vmatprep.subr.mxu0 0.0
    %1866 = vmatpush1.msra.mxu0 0.0
    %1867 = vmatprep.subr.mxu0 0.0
    %1868 = vmatpush1.msra.mxu0 0.0
    %1869 = vmatprep.subr.mxu0 0.0
    %1870 = vmatpush1.msra.mxu0 0.0
    %1871 = vmatprep.subr.mxu0 0.0
    %1872 = vmatpush1.msra.mxu0 0.0
    %1873 = vmatprep.subr.mxu0 0.0
    %1874 = vmatpush1.msra.mxu0 0.0
    %1875 = vmatprep.subr.mxu0 0.0
    %1876 = vmatpush1.msra.mxu0 0.0
    %1877 = vmatprep.subr.mxu0 0.0
    %1878 = vmatpush1.msra.mxu0 0.0
    %1879 = vmatprep.subr.mxu0 0.0
    %1880 = vmatpush1.msra.mxu0 0.0
    %1881 = vmatprep.subr.mxu0 0.0
    %1882 = vmatpush1.msra.mxu0 0.0
    %1883 = vmatprep.subr.mxu0 0.0
    %1884 = vmatpush1.msra.mxu0 0.0
    %1885 = vmatprep.subr.mxu0 0.0
    %1886 = vmatpush1.msra.mxu0 0.0
    %1887 = vmatprep.subr.mxu0 0.0
    %1888 = vmatpush1.msra.mxu0 %v1855
    %1889 = vmatprep.subr.mxu0 0.0
    %1890 = vmatpush2.msra.mxu0 0.0
    %1891 = vmatprep.subr.mxu0 0.0
    %1892 = vmatpush2.msra.mxu0 0.0
    %1893 = vmatprep.subr.mxu0 0.0
    %1894 = vmatpush2.msra.mxu0 0.0
    %1895 = vmatprep.subr.mxu0 0.0
    %1896 = vmatpush2.msra.mxu0 0.0
    %1897 = vmatprep.subr.mxu0 0.0
    %1898 = vmatpush2.msra.mxu0 0.0
    %1899 = vmatprep.subr.mxu0 0.0
    %1900 = vmatpush2.msra.mxu0 0.0
    %1901 = vmatprep.subr.mxu0 0.0
    %1902 = vmatpush2.msra.mxu0 0.0
    %1903 = vmatprep.subr.mxu0 0.0
    %1904 = vmatpush2.msra.mxu0 0.0
    %1905 = vmatprep.subr.mxu0 0.0
    %1906 = vmatpush2.msra.mxu0 0.0
    %1907 = vmatprep.subr.mxu0 0.0
    %1908 = vmatpush2.msra.mxu0 0.0
    %1909 = vmatprep.subr.mxu0 0.0
    %1910 = vmatpush2.msra.mxu0 0.0
    %1911 = vmatprep.subr.mxu0 0.0
    %1912 = vmatpush2.msra.mxu0 0.0
    %1913 = vmatprep.subr.mxu0 0.0
    %1914 = vmatpush2.msra.mxu0 0.0
    %1915 = vmatprep.subr.mxu0 0.0
    %1916 = vmatpush2.msra.mxu0 0.0
    %1917 = vmatprep.subr.mxu0 0.0
    %1918 = vmatpush2.msra.mxu0 0.0
    %1919 = vmatprep.subr.mxu0 0.0
    %1920 = vmatpush2.msra.mxu0 0.0
    %1921 = vmatprep.mubr.f32.mxu0 0.0
    %1922 = vmatmul.mubr.f32.gmra.mxu0 %v1822
    %v1923 = vpop.f32.mrf.mxu0
    %v1924 = vadd.f32 0.0, %v1923
    %v1925 = vpop.f32.mrf.mxu0
    %1926 = vmatprep.mubr.f32.mxu0 0.0
    %1927 = vmatmul.mubr.f32.gmra.mxu0 %v1825
    %v1928 = vpop.f32.mrf.mxu0
    %v1929 = vadd.f32 0.0, %v1928
    %v1930 = vpop.f32.mrf.mxu0
    %1931 = vmatprep.mubr.f32.mxu0 0.0
    %1932 = vmatmul.mubr.f32.gmra.mxu0 %v1828
    %v1933 = vpop.f32.mrf.mxu0
    %v1934 = vadd.f32 0.0, %v1933
    %v1935 = vpop.f32.mrf.mxu0
    %1936 = vmatprep.mubr.f32.mxu0 0.0
    %1937 = vmatmul.mubr.f32.gmra.mxu0 %v1831
    %v1938 = vpop.f32.mrf.mxu0
    %v1939 = vadd.f32 0.0, %v1938
    %v1940 = vpop.f32.mrf.mxu0
    %1941 = vmatprep.mubr.f32.mxu0 0.0
    %1942 = vmatmul.mubr.f32.gmra.mxu0 %v1834
    %v1943 = vpop.f32.mrf.mxu0
    %v1944 = vadd.f32 0.0, %v1943
    %v1945 = vpop.f32.mrf.mxu0
    %1946 = vmatprep.mubr.f32.mxu0 0.0
    %1947 = vmatmul.mubr.f32.gmra.mxu0 %v1837
    %v1948 = vpop.f32.mrf.mxu0
    %v1949 = vadd.f32 0.0, %v1948
    %v1950 = vpop.f32.mrf.mxu0
    %1951 = vmatprep.mubr.f32.mxu0 0.0
    %1952 = vmatmul.mubr.f32.gmra.mxu0 %v1840
    %v1953 = vpop.f32.mrf.mxu0
    %v1954 = vadd.f32 0.0, %v1953
    %v1955 = vpop.f32.mrf.mxu0
    %1956 = vmatprep.mubr.f32.mxu0 0.0
    %1957 = vmatmul.mubr.f32.gmra.mxu0 %v1843
    %v1958 = vpop.f32.mrf.mxu0
    %v1959 = vadd.f32 0.0, %v1958
    %v1960 = vpop.f32.mrf.mxu0
    %1961 = vmatprep.mubr.f32.mxu0 0.0
    %1962 = vmatmul.mubr.f32.gmra.mxu0 %v1846
    %v1963 = vpop.f32.mrf.mxu0
    %v1964 = vadd.f32 0.0, %v1963
    %v1965 = vpop.f32.mrf.mxu0
    %1966 = vmatprep.mubr.f32.mxu0 0.0
    %1967 = vmatmul.mubr.f32.gmra.mxu0 %v1849
    %v1968 = vpop.f32.mrf.mxu0
    %v1969 = vadd.f32 0.0, %v1968
    %v1970 = vpop.f32.mrf.mxu0
    %1971 = vmatprep.mubr.f32.mxu0 0.0
    %1972 = vmatmul.mubr.f32.gmra.mxu0 %v1852
    %v1973 = vpop.f32.mrf.mxu0
    %v1974 = vadd.f32 0.0, %v1973
    %v1975 = vpop.f32.mrf.mxu0
    %1976 = vdwg.mxu0
    %v1977 = vadd.f32 %v1724, %v1924
    %v1978 = vadd.f32 %v1725, %v1929
    %v1979 = vadd.f32 %v1726, %v1934
    %v1980 = vadd.f32 %v1727, %v1939
    %v1981 = vadd.f32 %v1728, %v1944
    %v1982 = vadd.f32 %v1729, %v1949
    %v1983 = vadd.f32 %v1730, %v1954
    %v1984 = vadd.f32 %v1731, %v1959
    %v1985 = vadd.f32 %v1732, %v1964
    %v1986 = vadd.f32 %v1733, %v1969
    %v1987 = vadd.f32 %v1734, %v1974
    %v1988 = vsel %vm252, %v973, 0.0
    %s1989 = scalar_lea.vmem [#allocation2], 616
    %v1990 = vld [vmem:[%s1989] sm:$0xff]
    %v1991 = vld [vmem:[%s1989 + $0x8] sm:$0xff]
    %v1992 = vld [vmem:[%s1989 + $0x10] sm:$0xff]
    %v1993 = vld [vmem:[%s1989 + $0x18] sm:$0xff]
    %v1994 = vld [vmem:[%s1989 + $0x20] sm:$0xff]
    %v1995 = vld [vmem:[%s1989 + $0x28] sm:$0xff]
    %v1996 = vld [vmem:[%s1989 + $0x30] sm:$0xff]
    %v1997 = vld [vmem:[%s1989 + $0x38] sm:$0xff]
    %v1998 = vld [vmem:[%s1989 + $0x40] sm:$0xff]
    %v1999 = vld [vmem:[%s1989 + $0x48] sm:$0xff]
    %v2000 = vld [vmem:[%s1989 + $0x50] sm:$0xf]
    %2002 = vset.pattern.permute.xlu0 0
    %2003 = vperm.xlu0 %2002, %v1990
    %v2004 = vpop.permute.xlu0 %2003
    %2007 = vset.pattern.permute.xlu0 0
    %2008 = vperm.xlu0 %2007, %v1991
    %v2009 = vpop.permute.xlu0 %2008
    %2012 = vset.pattern.permute.xlu0 0
    %2013 = vperm.xlu0 %2012, %v1992
    %v2014 = vpop.permute.xlu0 %2013
    %2017 = vset.pattern.permute.xlu0 0
    %2018 = vperm.xlu0 %2017, %v1993
    %v2019 = vpop.permute.xlu0 %2018
    %2022 = vset.pattern.permute.xlu0 0
    %2023 = vperm.xlu0 %2022, %v1994
    %v2024 = vpop.permute.xlu0 %2023
    %2027 = vset.pattern.permute.xlu0 0
    %2028 = vperm.xlu0 %2027, %v1995
    %v2029 = vpop.permute.xlu0 %2028
    %2032 = vset.pattern.permute.xlu0 0
    %2033 = vperm.xlu0 %2032, %v1996
    %v2034 = vpop.permute.xlu0 %2033
    %2037 = vset.pattern.permute.xlu0 0
    %2038 = vperm.xlu0 %2037, %v1997
    %v2039 = vpop.permute.xlu0 %2038
    %2042 = vset.pattern.permute.xlu0 0
    %2043 = vperm.xlu0 %2042, %v1998
    %v2044 = vpop.permute.xlu0 %2043
    %2047 = vset.pattern.permute.xlu0 0
    %2048 = vperm.xlu0 %2047, %v1999
    %v2049 = vpop.permute.xlu0 %2048
    %2052 = vset.pattern.permute.xlu0 0
    %2053 = vperm.xlu0 %2052, %v2000
    %v2054 = vpop.permute.xlu0 %2053
    %v2056 = vmul.f32 %v957, %v2004
    %v2057 = vmul.f32 %v959, %v2009
    %v2058 = vmul.f32 %v961, %v2014
    %v2059 = vmul.f32 %v963, %v2019
    %v2060 = vmul.f32 %v965, %v2024
    %v2061 = vmul.f32 %v967, %v2029
    %v2062 = vmul.f32 %v969, %v2034
    %v2063 = vmul.f32 %v971, %v2039
    %v2064 = vmul.f32 %v1988, %v2044
    %v2065 = vmul.f32 %v2049, 0.0
    %v2066 = vmul.f32 %v2054, 0.0
    %s2067 = scalar_lea.vmem [#allocation5], 14
    %v2068 = vld [vmem:[%s2067] sm:$0x3]
    %v2070 = vsel %vm361, %v2056, 0
    %v2073 = vsel %vm361, %v2057, 0
    %v2076 = vsel %vm361, %v2058, 0
    %v2079 = vsel %vm361, %v2059, 0
    %v2082 = vsel %vm361, %v2060, 0
    %v2085 = vsel %vm361, %v2061, 0
    %v2088 = vsel %vm361, %v2062, 0
    %v2091 = vsel %vm361, %v2063, 0
    %v2094 = vsel %vm361, %v2064, 0
    %v2097 = vsel %vm361, %v2065, 0
    %v2100 = vsel %vm361, %v2066, 0
    %v2103 = vsel %vm395, %v2068, 0
    %2105 = vmatprep.subr.mxu0 0.0
    %2106 = vmatpush1.msra.mxu0 0.0
    %2107 = vmatprep.subr.mxu0 0.0
    %2108 = vmatpush1.msra.mxu0 0.0
    %2109 = vmatprep.subr.mxu0 0.0
    %2110 = vmatpush1.msra.mxu0 0.0
    %2111 = vmatprep.subr.mxu0 0.0
    %2112 = vmatpush1.msra.mxu0 0.0
    %2113 = vmatprep.subr.mxu0 0.0
    %2114 = vmatpush1.msra.mxu0 0.0
    %2115 = vmatprep.subr.mxu0 0.0
    %2116 = vmatpush1.msra.mxu0 0.0
    %2117 = vmatprep.subr.mxu0 0.0
    %2118 = vmatpush1.msra.mxu0 0.0
    %2119 = vmatprep.subr.mxu0 0.0
    %2120 = vmatpush1.msra.mxu0 0.0
    %2121 = vmatprep.subr.mxu0 0.0
    %2122 = vmatpush1.msra.mxu0 0.0
    %2123 = vmatprep.subr.mxu0 0.0
    %2124 = vmatpush1.msra.mxu0 0.0
    %2125 = vmatprep.subr.mxu0 0.0
    %2126 = vmatpush1.msra.mxu0 0.0
    %2127 = vmatprep.subr.mxu0 0.0
    %2128 = vmatpush1.msra.mxu0 0.0
    %2129 = vmatprep.subr.mxu0 0.0
    %2130 = vmatpush1.msra.mxu0 0.0
    %2131 = vmatprep.subr.mxu0 0.0
    %2132 = vmatpush1.msra.mxu0 0.0
    %2133 = vmatprep.subr.mxu0 0.0
    %2134 = vmatpush1.msra.mxu0 0.0
    %2135 = vmatprep.subr.mxu0 0.0
    %2136 = vmatpush1.msra.mxu0 %v2103
    %2137 = vmatprep.subr.mxu0 0.0
    %2138 = vmatpush2.msra.mxu0 0.0
    %2139 = vmatprep.subr.mxu0 0.0
    %2140 = vmatpush2.msra.mxu0 0.0
    %2141 = vmatprep.subr.mxu0 0.0
    %2142 = vmatpush2.msra.mxu0 0.0
    %2143 = vmatprep.subr.mxu0 0.0
    %2144 = vmatpush2.msra.mxu0 0.0
    %2145 = vmatprep.subr.mxu0 0.0
    %2146 = vmatpush2.msra.mxu0 0.0
    %2147 = vmatprep.subr.mxu0 0.0
    %2148 = vmatpush2.msra.mxu0 0.0
    %2149 = vmatprep.subr.mxu0 0.0
    %2150 = vmatpush2.msra.mxu0 0.0
    %2151 = vmatprep.subr.mxu0 0.0
    %2152 = vmatpush2.msra.mxu0 0.0
    %2153 = vmatprep.subr.mxu0 0.0
    %2154 = vmatpush2.msra.mxu0 0.0
    %2155 = vmatprep.subr.mxu0 0.0
    %2156 = vmatpush2.msra.mxu0 0.0
    %2157 = vmatprep.subr.mxu0 0.0
    %2158 = vmatpush2.msra.mxu0 0.0
    %2159 = vmatprep.subr.mxu0 0.0
    %2160 = vmatpush2.msra.mxu0 0.0
    %2161 = vmatprep.subr.mxu0 0.0
    %2162 = vmatpush2.msra.mxu0 0.0
    %2163 = vmatprep.subr.mxu0 0.0
    %2164 = vmatpush2.msra.mxu0 0.0
    %2165 = vmatprep.subr.mxu0 0.0
    %2166 = vmatpush2.msra.mxu0 0.0
    %2167 = vmatprep.subr.mxu0 0.0
    %2168 = vmatpush2.msra.mxu0 0.0
    %2169 = vmatprep.mubr.f32.mxu0 0.0
    %2170 = vmatmul.mubr.f32.gmra.mxu0 %v2070
    %v2171 = vpop.f32.mrf.mxu0
    %v2172 = vadd.f32 0.0, %v2171
    %v2173 = vpop.f32.mrf.mxu0
    %2174 = vmatprep.mubr.f32.mxu0 0.0
    %2175 = vmatmul.mubr.f32.gmra.mxu0 %v2073
    %v2176 = vpop.f32.mrf.mxu0
    %v2177 = vadd.f32 0.0, %v2176
    %v2178 = vpop.f32.mrf.mxu0
    %2179 = vmatprep.mubr.f32.mxu0 0.0
    %2180 = vmatmul.mubr.f32.gmra.mxu0 %v2076
    %v2181 = vpop.f32.mrf.mxu0
    %v2182 = vadd.f32 0.0, %v2181
    %v2183 = vpop.f32.mrf.mxu0
    %2184 = vmatprep.mubr.f32.mxu0 0.0
    %2185 = vmatmul.mubr.f32.gmra.mxu0 %v2079
    %v2186 = vpop.f32.mrf.mxu0
    %v2187 = vadd.f32 0.0, %v2186
    %v2188 = vpop.f32.mrf.mxu0
    %2189 = vmatprep.mubr.f32.mxu0 0.0
    %2190 = vmatmul.mubr.f32.gmra.mxu0 %v2082
    %v2191 = vpop.f32.mrf.mxu0
    %v2192 = vadd.f32 0.0, %v2191
    %v2193 = vpop.f32.mrf.mxu0
    %2194 = vmatprep.mubr.f32.mxu0 0.0
    %2195 = vmatmul.mubr.f32.gmra.mxu0 %v2085
    %v2196 = vpop.f32.mrf.mxu0
    %v2197 = vadd.f32 0.0, %v2196
    %v2198 = vpop.f32.mrf.mxu0
    %2199 = vmatprep.mubr.f32.mxu0 0.0
    %2200 = vmatmul.mubr.f32.gmra.mxu0 %v2088
    %v2201 = vpop.f32.mrf.mxu0
    %v2202 = vadd.f32 0.0, %v2201
    %v2203 = vpop.f32.mrf.mxu0
    %2204 = vmatprep.mubr.f32.mxu0 0.0
    %2205 = vmatmul.mubr.f32.gmra.mxu0 %v2091
    %v2206 = vpop.f32.mrf.mxu0
    %v2207 = vadd.f32 0.0, %v2206
    %v2208 = vpop.f32.mrf.mxu0
    %2209 = vmatprep.mubr.f32.mxu0 0.0
    %2210 = vmatmul.mubr.f32.gmra.mxu0 %v2094
    %v2211 = vpop.f32.mrf.mxu0
    %v2212 = vadd.f32 0.0, %v2211
    %v2213 = vpop.f32.mrf.mxu0
    %2214 = vmatprep.mubr.f32.mxu0 0.0
    %2215 = vmatmul.mubr.f32.gmra.mxu0 %v2097
    %v2216 = vpop.f32.mrf.mxu0
    %v2217 = vadd.f32 0.0, %v2216
    %v2218 = vpop.f32.mrf.mxu0
    %2219 = vmatprep.mubr.f32.mxu0 0.0
    %2220 = vmatmul.mubr.f32.gmra.mxu0 %v2100
    %v2221 = vpop.f32.mrf.mxu0
    %v2222 = vadd.f32 0.0, %v2221
    %v2223 = vpop.f32.mrf.mxu0
    %2224 = vdwg.mxu0
    %v2225 = vadd.f32 %v1977, %v2172
    %v2226 = vadd.f32 %v1978, %v2177
    %v2227 = vadd.f32 %v1979, %v2182
    %v2228 = vadd.f32 %v1980, %v2187
    %v2229 = vadd.f32 %v1981, %v2192
    %v2230 = vadd.f32 %v1982, %v2197
    %v2231 = vadd.f32 %v1983, %v2202
    %v2232 = vadd.f32 %v1984, %v2207
    %v2233 = vadd.f32 %v1985, %v2212
    %v2234 = vadd.f32 %v1986, %v2217
    %v2235 = vadd.f32 %v1987, %v2222
    %v2236 = vsel %vm675, %v164, 0.0
    %s2237 = scalar_lea.vmem [#allocation2], 704
    %v2238 = vld [vmem:[%s2237] sm:$0xff]
    %v2239 = vld [vmem:[%s2237 + $0x8] sm:$0xff]
    %v2240 = vld [vmem:[%s2237 + $0x10] sm:$0xff]
    %v2241 = vld [vmem:[%s2237 + $0x18] sm:$0xff]
    %v2242 = vld [vmem:[%s2237 + $0x20] sm:$0xff]
    %v2243 = vld [vmem:[%s2237 + $0x28] sm:$0xff]
    %v2244 = vld [vmem:[%s2237 + $0x30] sm:$0xff]
    %v2245 = vld [vmem:[%s2237 + $0x38] sm:$0xff]
    %v2246 = vld [vmem:[%s2237 + $0x40] sm:$0xff]
    %v2247 = vld [vmem:[%s2237 + $0x48] sm:$0xff]
    %v2248 = vld [vmem:[%s2237 + $0x50] sm:$0xf]
    %2250 = vset.pattern.permute.xlu0 0
    %2251 = vperm.xlu0 %2250, %v2238
    %v2252 = vpop.permute.xlu0 %2251
    %2255 = vset.pattern.permute.xlu0 0
    %2256 = vperm.xlu0 %2255, %v2239
    %v2257 = vpop.permute.xlu0 %2256
    %2260 = vset.pattern.permute.xlu0 0
    %2261 = vperm.xlu0 %2260, %v2240
    %v2262 = vpop.permute.xlu0 %2261
    %2265 = vset.pattern.permute.xlu0 0
    %2266 = vperm.xlu0 %2265, %v2241
    %v2267 = vpop.permute.xlu0 %2266
    %2270 = vset.pattern.permute.xlu0 0
    %2271 = vperm.xlu0 %2270, %v2242
    %v2272 = vpop.permute.xlu0 %2271
    %2275 = vset.pattern.permute.xlu0 0
    %2276 = vperm.xlu0 %2275, %v2243
    %v2277 = vpop.permute.xlu0 %2276
    %2280 = vset.pattern.permute.xlu0 0
    %2281 = vperm.xlu0 %2280, %v2244
    %v2282 = vpop.permute.xlu0 %2281
    %2285 = vset.pattern.permute.xlu0 0
    %2286 = vperm.xlu0 %2285, %v2245
    %v2287 = vpop.permute.xlu0 %2286
    %2290 = vset.pattern.permute.xlu0 0
    %2291 = vperm.xlu0 %2290, %v2246
    %v2292 = vpop.permute.xlu0 %2291
    %2295 = vset.pattern.permute.xlu0 0
    %2296 = vperm.xlu0 %2295, %v2247
    %v2297 = vpop.permute.xlu0 %2296
    %2300 = vset.pattern.permute.xlu0 0
    %2301 = vperm.xlu0 %2300, %v2248
    %v2302 = vpop.permute.xlu0 %2301
    %v2304 = vmul.f32 %v156, %v2252
    %v2305 = vmul.f32 %v157, %v2257
    %v2306 = vmul.f32 %v158, %v2262
    %v2307 = vmul.f32 %v159, %v2267
    %v2308 = vmul.f32 %v160, %v2272
    %v2309 = vmul.f32 %v161, %v2277
    %v2310 = vmul.f32 %v162, %v2282
    %v2311 = vmul.f32 %v163, %v2287
    %v2312 = vmul.f32 %v2236, %v2292
    %v2313 = vmul.f32 %v2297, 0.0
    %v2314 = vmul.f32 %v2302, 0.0
    %s2315 = scalar_lea.vmem [#allocation5], 16
    %v2316 = vld [vmem:[%s2315] sm:$0x3]
    %v2318 = vsel %vm361, %v2304, 0
    %v2321 = vsel %vm361, %v2305, 0
    %v2324 = vsel %vm361, %v2306, 0
    %v2327 = vsel %vm361, %v2307, 0
    %v2330 = vsel %vm361, %v2308, 0
    %v2333 = vsel %vm361, %v2309, 0
    %v2336 = vsel %vm361, %v2310, 0
    %v2339 = vsel %vm361, %v2311, 0
    %v2342 = vsel %vm361, %v2312, 0
    %v2345 = vsel %vm361, %v2313, 0
    %v2348 = vsel %vm361, %v2314, 0
    %v2351 = vsel %vm395, %v2316, 0
    %2353 = vmatprep.subr.mxu0 0.0
    %2354 = vmatpush1.msra.mxu0 0.0
    %2355 = vmatprep.subr.mxu0 0.0
    %2356 = vmatpush1.msra.mxu0 0.0
    %2357 = vmatprep.subr.mxu0 0.0
    %2358 = vmatpush1.msra.mxu0 0.0
    %2359 = vmatprep.subr.mxu0 0.0
    %2360 = vmatpush1.msra.mxu0 0.0
    %2361 = vmatprep.subr.mxu0 0.0
    %2362 = vmatpush1.msra.mxu0 0.0
    %2363 = vmatprep.subr.mxu0 0.0
    %2364 = vmatpush1.msra.mxu0 0.0
    %2365 = vmatprep.subr.mxu0 0.0
    %2366 = vmatpush1.msra.mxu0 0.0
    %2367 = vmatprep.subr.mxu0 0.0
    %2368 = vmatpush1.msra.mxu0 0.0
    %2369 = vmatprep.subr.mxu0 0.0
    %2370 = vmatpush1.msra.mxu0 0.0
    %2371 = vmatprep.subr.mxu0 0.0
    %2372 = vmatpush1.msra.mxu0 0.0
    %2373 = vmatprep.subr.mxu0 0.0
    %2374 = vmatpush1.msra.mxu0 0.0
    %2375 = vmatprep.subr.mxu0 0.0
    %2376 = vmatpush1.msra.mxu0 0.0
    %2377 = vmatprep.subr.mxu0 0.0
    %2378 = vmatpush1.msra.mxu0 0.0
    %2379 = vmatprep.subr.mxu0 0.0
    %2380 = vmatpush1.msra.mxu0 0.0
    %2381 = vmatprep.subr.mxu0 0.0
    %2382 = vmatpush1.msra.mxu0 0.0
    %2383 = vmatprep.subr.mxu0 0.0
    %2384 = vmatpush1.msra.mxu0 %v2351
    %2385 = vmatprep.subr.mxu0 0.0
    %2386 = vmatpush2.msra.mxu0 0.0
    %2387 = vmatprep.subr.mxu0 0.0
    %2388 = vmatpush2.msra.mxu0 0.0
    %2389 = vmatprep.subr.mxu0 0.0
    %2390 = vmatpush2.msra.mxu0 0.0
    %2391 = vmatprep.subr.mxu0 0.0
    %2392 = vmatpush2.msra.mxu0 0.0
    %2393 = vmatprep.subr.mxu0 0.0
    %2394 = vmatpush2.msra.mxu0 0.0
    %2395 = vmatprep.subr.mxu0 0.0
    %2396 = vmatpush2.msra.mxu0 0.0
    %2397 = vmatprep.subr.mxu0 0.0
    %2398 = vmatpush2.msra.mxu0 0.0
    %2399 = vmatprep.subr.mxu0 0.0
    %2400 = vmatpush2.msra.mxu0 0.0
    %2401 = vmatprep.subr.mxu0 0.0
    %2402 = vmatpush2.msra.mxu0 0.0
    %2403 = vmatprep.subr.mxu0 0.0
    %2404 = vmatpush2.msra.mxu0 0.0
    %2405 = vmatprep.subr.mxu0 0.0
    %2406 = vmatpush2.msra.mxu0 0.0
    %2407 = vmatprep.subr.mxu0 0.0
    %2408 = vmatpush2.msra.mxu0 0.0
    %2409 = vmatprep.subr.mxu0 0.0
    %2410 = vmatpush2.msra.mxu0 0.0
    %2411 = vmatprep.subr.mxu0 0.0
    %2412 = vmatpush2.msra.mxu0 0.0
    %2413 = vmatprep.subr.mxu0 0.0
    %2414 = vmatpush2.msra.mxu0 0.0
    %2415 = vmatprep.subr.mxu0 0.0
    %2416 = vmatpush2.msra.mxu0 0.0
    %2417 = vmatprep.mubr.f32.mxu0 0.0
    %2418 = vmatmul.mubr.f32.gmra.mxu0 %v2318
    %v2419 = vpop.f32.mrf.mxu0
    %v2420 = vadd.f32 0.0, %v2419
    %v2421 = vpop.f32.mrf.mxu0
    %2422 = vmatprep.mubr.f32.mxu0 0.0
    %2423 = vmatmul.mubr.f32.gmra.mxu0 %v2321
    %v2424 = vpop.f32.mrf.mxu0
    %v2425 = vadd.f32 0.0, %v2424
    %v2426 = vpop.f32.mrf.mxu0
    %2427 = vmatprep.mubr.f32.mxu0 0.0
    %2428 = vmatmul.mubr.f32.gmra.mxu0 %v2324
    %v2429 = vpop.f32.mrf.mxu0
    %v2430 = vadd.f32 0.0, %v2429
    %v2431 = vpop.f32.mrf.mxu0
    %2432 = vmatprep.mubr.f32.mxu0 0.0
    %2433 = vmatmul.mubr.f32.gmra.mxu0 %v2327
    %v2434 = vpop.f32.mrf.mxu0
    %v2435 = vadd.f32 0.0, %v2434
    %v2436 = vpop.f32.mrf.mxu0
    %2437 = vmatprep.mubr.f32.mxu0 0.0
    %2438 = vmatmul.mubr.f32.gmra.mxu0 %v2330
    %v2439 = vpop.f32.mrf.mxu0
    %v2440 = vadd.f32 0.0, %v2439
    %v2441 = vpop.f32.mrf.mxu0
    %2442 = vmatprep.mubr.f32.mxu0 0.0
    %2443 = vmatmul.mubr.f32.gmra.mxu0 %v2333
    %v2444 = vpop.f32.mrf.mxu0
    %v2445 = vadd.f32 0.0, %v2444
    %v2446 = vpop.f32.mrf.mxu0
    %2447 = vmatprep.mubr.f32.mxu0 0.0
    %2448 = vmatmul.mubr.f32.gmra.mxu0 %v2336
    %v2449 = vpop.f32.mrf.mxu0
    %v2450 = vadd.f32 0.0, %v2449
    %v2451 = vpop.f32.mrf.mxu0
    %2452 = vmatprep.mubr.f32.mxu0 0.0
    %2453 = vmatmul.mubr.f32.gmra.mxu0 %v2339
    %v2454 = vpop.f32.mrf.mxu0
    %v2455 = vadd.f32 0.0, %v2454
    %v2456 = vpop.f32.mrf.mxu0
    %2457 = vmatprep.mubr.f32.mxu0 0.0
    %2458 = vmatmul.mubr.f32.gmra.mxu0 %v2342
    %v2459 = vpop.f32.mrf.mxu0
    %v2460 = vadd.f32 0.0, %v2459
    %v2461 = vpop.f32.mrf.mxu0
    %2462 = vmatprep.mubr.f32.mxu0 0.0
    %2463 = vmatmul.mubr.f32.gmra.mxu0 %v2345
    %v2464 = vpop.f32.mrf.mxu0
    %v2465 = vadd.f32 0.0, %v2464
    %v2466 = vpop.f32.mrf.mxu0
    %2467 = vmatprep.mubr.f32.mxu0 0.0
    %2468 = vmatmul.mubr.f32.gmra.mxu0 %v2348
    %v2469 = vpop.f32.mrf.mxu0
    %v2470 = vadd.f32 0.0, %v2469
    %v2471 = vpop.f32.mrf.mxu0
    %2472 = vdwg.mxu0
    %v2473 = vadd.f32 %v2225, %v2420
    %v2474 = vadd.f32 %v2226, %v2425
    %v2475 = vadd.f32 %v2227, %v2430
    %v2476 = vadd.f32 %v2228, %v2435
    %v2477 = vadd.f32 %v2229, %v2440
    %v2478 = vadd.f32 %v2230, %v2445
    %v2479 = vadd.f32 %v2231, %v2450
    %v2480 = vadd.f32 %v2232, %v2455
    %v2481 = vadd.f32 %v2233, %v2460
    %v2482 = vadd.f32 %v2234, %v2465
    %v2483 = vadd.f32 %v2235, %v2470
    %v2484 = vld [vmem:[#allocation7] sm:$0x1]
    %v2486 = vlaneseq
    %v2487 = vshrl.u32 %v2486, 7
    %v2488 = vsub.s32 0, %v2487
    %v2489 = vrot.slane %v2484, %v2488
    %v2491 = vadd.f32 %v2473, %v2489
    %v2492 = vadd.f32 %v2474, %v2489
    %v2493 = vadd.f32 %v2475, %v2489
    %v2494 = vadd.f32 %v2476, %v2489
    %v2495 = vadd.f32 %v2477, %v2489
    %v2496 = vadd.f32 %v2478, %v2489
    %v2497 = vadd.f32 %v2479, %v2489
    %v2498 = vadd.f32 %v2480, %v2489
    %v2499 = vadd.f32 %v2481, %v2489
    %v2500 = vadd.f32 %v2482, %v2489
    %v2501 = vadd.f32 %v2483, %v2489
    %v2502 = vmax.f32 %v2491, 0.0
    %v2503 = vmax.f32 %v2492, 0.0
    %v2504 = vmax.f32 %v2493, 0.0
    %v2505 = vmax.f32 %v2494, 0.0
    %v2506 = vmax.f32 %v2495, 0.0
    %v2507 = vmax.f32 %v2496, 0.0
    %v2508 = vmax.f32 %v2497, 0.0
    %v2509 = vmax.f32 %v2498, 0.0
    %v2510 = vmax.f32 %v2499, 0.0
    %v2511 = vmax.f32 %v2500, 0.0
    %v2512 = vmax.f32 %v2501, 0.0
    %v2513 = vmul.f32 %v2502, %v189
    %v2514 = vmul.f32 %v2503, %v194
    %v2515 = vmul.f32 %v2504, %v199
    %v2516 = vmul.f32 %v2505, %v204
    %v2517 = vmul.f32 %v2506, %v209
    %v2518 = vmul.f32 %v2507, %v214
    %v2519 = vmul.f32 %v2508, %v219
    %v2520 = vmul.f32 %v2509, %v224
    %v2521 = vmul.f32 %v2510, %v229
    %v2522 = vld [vmem:[#allocation8] sm:$0xff]
    %v2523 = vld [vmem:[#allocation8 + $0x8] sm:$0xff]
    %v2524 = vld [vmem:[#allocation8 + $0x10] sm:$0xff]
    %v2525 = vld [vmem:[#allocation8 + $0x18] sm:$0xff]
    %v2535 = vrot.slane %v2502, 2
    %v2536 = vrot.slane %v2503, 2
    %v2537 = vsel %vm252, %v2535, %v2536
    %v2538 = vrot.slane %v2504, 2
    %v2539 = vsel %vm252, %v2536, %v2538
    %v2540 = vrot.slane %v2505, 2
    %v2541 = vsel %vm252, %v2538, %v2540
    %v2542 = vrot.slane %v2506, 2
    %v2543 = vsel %vm252, %v2540, %v2542
    %v2544 = vrot.slane %v2507, 2
    %v2545 = vsel %vm252, %v2542, %v2544
    %v2546 = vrot.slane %v2508, 2
    %v2547 = vsel %vm252, %v2544, %v2546
    %v2548 = vrot.slane %v2509, 2
    %v2549 = vsel %vm252, %v2546, %v2548
    %v2550 = vrot.slane %v2510, 2
    %v2551 = vsel %vm252, %v2548, %v2550
    %v2562 = vsel %vm252, 0.0, %v2535
    %v2563 = vmul.f32 %v2562, %v301
    %v2564 = vmul.f32 %v2537, %v306
    %v2565 = vmul.f32 %v2539, %v311
    %v2566 = vmul.f32 %v2541, %v316
    %v2567 = vmul.f32 %v2543, %v321
    %v2568 = vmul.f32 %v2545, %v326
    %v2569 = vmul.f32 %v2547, %v331
    %v2570 = vmul.f32 %v2549, %v336
    %v2571 = vmul.f32 %v2551, %v341
    %v2572 = vmul.f32 %v2550, %v346
    %s2573 = scalar_lea.vmem [#allocation8], 32
    %v2574 = vld [vmem:[%s2573] sm:$0xff]
    %v2575 = vld [vmem:[%s2573 + $0x8] sm:$0xff]
    %v2576 = vld [vmem:[%s2573 + $0x10] sm:$0xff]
    %v2577 = vld [vmem:[%s2573 + $0x18] sm:$0xff]
    %vm2578 = vcmask 261120
    %v2579 = vsel %vm2578, %v348, 0
    %v2582 = vsel %vm2578, %v2563, 0
    %v2585 = vsel %vm2578, %v2564, 0
    %v2588 = vsel %vm2578, %v2565, 0
    %v2591 = vsel %vm2578, %v2566, 0
    %v2594 = vsel %vm2578, %v2567, 0
    %v2597 = vsel %vm2578, %v2568, 0
    %v2600 = vsel %vm2578, %v2569, 0
    %v2603 = vsel %vm2578, %v2570, 0
    %v2606 = vsel %vm2578, %v2571, 0
    %v2609 = vsel %vm2578, %v2572, 0
    %2611 = vmatprep.subr.mxu0 0.0
    %2612 = vmatpush1.msra.mxu0 0.0
    %2613 = vmatprep.subr.mxu0 0.0
    %2614 = vmatpush1.msra.mxu0 0.0
    %2615 = vmatprep.subr.mxu0 0.0
    %2616 = vmatpush1.msra.mxu0 0.0
    %2617 = vmatprep.subr.mxu0 0.0
    %2618 = vmatpush1.msra.mxu0 0.0
    %2619 = vmatprep.subr.mxu0 0.0
    %2620 = vmatpush1.msra.mxu0 0.0
    %2621 = vmatprep.subr.mxu0 0.0
    %2622 = vmatpush1.msra.mxu0 0.0
    %2623 = vmatprep.subr.mxu0 0.0
    %2624 = vmatpush1.msra.mxu0 0.0
    %2625 = vmatprep.subr.mxu0 0.0
    %2626 = vmatpush1.msra.mxu0 0.0
    %2627 = vmatprep.subr.mxu0 0.0
    %2628 = vmatpush1.msra.mxu0 0.0
    %2629 = vmatprep.subr.mxu0 0.0
    %2630 = vmatpush1.msra.mxu0 0.0
    %2631 = vmatprep.subr.mxu0 0.0
    %2632 = vmatpush1.msra.mxu0 0.0
    %2633 = vmatprep.subr.mxu0 0.0
    %2634 = vmatpush1.msra.mxu0 0.0
    %2635 = vmatprep.subr.mxu0 0.0
    %2636 = vmatpush1.msra.mxu0 %v2577
    %2637 = vmatprep.subr.mxu0 0.0
    %2638 = vmatpush1.msra.mxu0 %v2576
    %2639 = vmatprep.subr.mxu0 0.0
    %2640 = vmatpush1.msra.mxu0 %v2575
    %2641 = vmatprep.subr.mxu0 0.0
    %2642 = vmatpush1.msra.mxu0 %v2574
    %2643 = vmatprep.subr.mxu0 0.0
    %2644 = vmatpush2.msra.mxu0 0.0
    %2645 = vmatprep.subr.mxu0 0.0
    %2646 = vmatpush2.msra.mxu0 0.0
    %2647 = vmatprep.subr.mxu0 0.0
    %2648 = vmatpush2.msra.mxu0 0.0
    %2649 = vmatprep.subr.mxu0 0.0
    %2650 = vmatpush2.msra.mxu0 0.0
    %2651 = vmatprep.subr.mxu0 0.0
    %2652 = vmatpush2.msra.mxu0 0.0
    %2653 = vmatprep.subr.mxu0 0.0
    %2654 = vmatpush2.msra.mxu0 0.0
    %2655 = vmatprep.subr.mxu0 0.0
    %2656 = vmatpush2.msra.mxu0 0.0
    %2657 = vmatprep.subr.mxu0 0.0
    %2658 = vmatpush2.msra.mxu0 0.0
    %2659 = vmatprep.subr.mxu0 0.0
    %2660 = vmatpush2.msra.mxu0 0.0
    %2661 = vmatprep.subr.mxu0 0.0
    %2662 = vmatpush2.msra.mxu0 0.0
    %2663 = vmatprep.subr.mxu0 0.0
    %2664 = vmatpush2.msra.mxu0 0.0
    %2665 = vmatprep.subr.mxu0 0.0
    %2666 = vmatpush2.msra.mxu0 0.0
    %2667 = vmatprep.subr.mxu0 0.0
    %2668 = vmatpush2.msra.mxu0 0.0
    %2669 = vmatprep.subr.mxu0 0.0
    %2670 = vmatpush2.msra.mxu0 0.0
    %2671 = vmatprep.subr.mxu0 0.0
    %2672 = vmatpush2.msra.mxu0 0.0
    %2673 = vmatprep.subr.mxu0 0.0
    %2674 = vmatpush2.msra.mxu0 0.0
    %2675 = vmatprep.mubr.f32.mxu0 0.0
    %2676 = vmatmul.mubr.f32.gmra.mxu0 %v2579
    %v2677 = vpop.f32.mrf.mxu0
    %v2678 = vadd.f32 0.0, %v2677
    %v2679 = vpop.f32.mrf.mxu0
    %2680 = vmatprep.mubr.f32.mxu0 0.0
    %2681 = vmatmul.mubr.f32.gmra.mxu0 %v2582
    %v2682 = vpop.f32.mrf.mxu0
    %v2683 = vadd.f32 0.0, %v2682
    %v2684 = vpop.f32.mrf.mxu0
    %2685 = vmatprep.mubr.f32.mxu0 0.0
    %2686 = vmatmul.mubr.f32.gmra.mxu0 %v2585
    %v2687 = vpop.f32.mrf.mxu0
    %v2688 = vadd.f32 0.0, %v2687
    %v2689 = vpop.f32.mrf.mxu0
    %2690 = vmatprep.mubr.f32.mxu0 0.0
    %2691 = vmatmul.mubr.f32.gmra.mxu0 %v2588
    %v2692 = vpop.f32.mrf.mxu0
    %v2693 = vadd.f32 0.0, %v2692
    %v2694 = vpop.f32.mrf.mxu0
    %2695 = vmatprep.mubr.f32.mxu0 0.0
    %2696 = vmatmul.mubr.f32.gmra.mxu0 %v2591
    %v2697 = vpop.f32.mrf.mxu0
    %v2698 = vadd.f32 0.0, %v2697
    %v2699 = vpop.f32.mrf.mxu0
    %2700 = vmatprep.mubr.f32.mxu0 0.0
    %2701 = vmatmul.mubr.f32.gmra.mxu0 %v2594
    %v2702 = vpop.f32.mrf.mxu0
    %v2703 = vadd.f32 0.0, %v2702
    %v2704 = vpop.f32.mrf.mxu0
    %2705 = vmatprep.mubr.f32.mxu0 0.0
    %2706 = vmatmul.mubr.f32.gmra.mxu0 %v2597
    %v2707 = vpop.f32.mrf.mxu0
    %v2708 = vadd.f32 0.0, %v2707
    %v2709 = vpop.f32.mrf.mxu0
    %2710 = vmatprep.mubr.f32.mxu0 0.0
    %2711 = vmatmul.mubr.f32.gmra.mxu0 %v2600
    %v2712 = vpop.f32.mrf.mxu0
    %v2713 = vadd.f32 0.0, %v2712
    %v2714 = vpop.f32.mrf.mxu0
    %2715 = vmatprep.mubr.f32.mxu0 0.0
    %2716 = vmatmul.mubr.f32.gmra.mxu0 %v2603
    %v2717 = vpop.f32.mrf.mxu0
    %v2718 = vadd.f32 0.0, %v2717
    %v2719 = vpop.f32.mrf.mxu0
    %2720 = vmatprep.mubr.f32.mxu0 0.0
    %2721 = vmatmul.mubr.f32.gmra.mxu0 %v2606
    %v2722 = vpop.f32.mrf.mxu0
    %v2723 = vadd.f32 0.0, %v2722
    %v2724 = vpop.f32.mrf.mxu0
    %2725 = vmatprep.mubr.f32.mxu0 0.0
    %2726 = vmatmul.mubr.f32.gmra.mxu0 %v2609
    %v2727 = vpop.f32.mrf.mxu0
    %v2728 = vadd.f32 0.0, %v2727
    %v2729 = vpop.f32.mrf.mxu0
    %2730 = vdwg.mxu0
    %v2731 = vsel %vm2578, %v231, 0
    %v2733 = vsel %vm2578, %v232, 0
    %v2736 = vsel %vm2578, %v2513, 0
    %v2739 = vsel %vm2578, %v2514, 0
    %v2742 = vsel %vm2578, %v2515, 0
    %v2745 = vsel %vm2578, %v2516, 0
    %v2748 = vsel %vm2578, %v2517, 0
    %v2751 = vsel %vm2578, %v2518, 0
    %v2754 = vsel %vm2578, %v2519, 0
    %v2757 = vsel %vm2578, %v2520, 0
    %v2760 = vsel %vm2578, %v2521, 0
    %2762 = vmatprep.subr.mxu0 0.0
    %2763 = vmatpush1.msra.mxu0 0.0
    %2764 = vmatprep.subr.mxu0 0.0
    %2765 = vmatpush1.msra.mxu0 0.0
    %2766 = vmatprep.subr.mxu0 0.0
    %2767 = vmatpush1.msra.mxu0 0.0
    %2768 = vmatprep.subr.mxu0 0.0
    %2769 = vmatpush1.msra.mxu0 0.0
    %2770 = vmatprep.subr.mxu0 0.0
    %2771 = vmatpush1.msra.mxu0 0.0
    %2772 = vmatprep.subr.mxu0 0.0
    %2773 = vmatpush1.msra.mxu0 0.0
    %2774 = vmatprep.subr.mxu0 0.0
    %2775 = vmatpush1.msra.mxu0 0.0
    %2776 = vmatprep.subr.mxu0 0.0
    %2777 = vmatpush1.msra.mxu0 0.0
    %2778 = vmatprep.subr.mxu0 0.0
    %2779 = vmatpush1.msra.mxu0 0.0
    %2780 = vmatprep.subr.mxu0 0.0
    %2781 = vmatpush1.msra.mxu0 0.0
    %2782 = vmatprep.subr.mxu0 0.0
    %2783 = vmatpush1.msra.mxu0 0.0
    %2784 = vmatprep.subr.mxu0 0.0
    %2785 = vmatpush1.msra.mxu0 0.0
    %2786 = vmatprep.subr.mxu0 0.0
    %2787 = vmatpush1.msra.mxu0 %v2525
    %2788 = vmatprep.subr.mxu0 0.0
    %2789 = vmatpush1.msra.mxu0 %v2524
    %2790 = vmatprep.subr.mxu0 0.0
    %2791 = vmatpush1.msra.mxu0 %v2523
    %2792 = vmatprep.subr.mxu0 0.0
    %2793 = vmatpush1.msra.mxu0 %v2522
    %2794 = vmatprep.subr.mxu0 0.0
    %2795 = vmatpush2.msra.mxu0 0.0
    %2796 = vmatprep.subr.mxu0 0.0
    %2797 = vmatpush2.msra.mxu0 0.0
    %2798 = vmatprep.subr.mxu0 0.0
    %2799 = vmatpush2.msra.mxu0 0.0
    %2800 = vmatprep.subr.mxu0 0.0
    %2801 = vmatpush2.msra.mxu0 0.0
    %2802 = vmatprep.subr.mxu0 0.0
    %2803 = vmatpush2.msra.mxu0 0.0
    %2804 = vmatprep.subr.mxu0 0.0
    %2805 = vmatpush2.msra.mxu0 0.0
    %2806 = vmatprep.subr.mxu0 0.0
    %2807 = vmatpush2.msra.mxu0 0.0
    %2808 = vmatprep.subr.mxu0 0.0
    %2809 = vmatpush2.msra.mxu0 0.0
    %2810 = vmatprep.subr.mxu0 0.0
    %2811 = vmatpush2.msra.mxu0 0.0
    %2812 = vmatprep.subr.mxu0 0.0
    %2813 = vmatpush2.msra.mxu0 0.0
    %2814 = vmatprep.subr.mxu0 0.0
    %2815 = vmatpush2.msra.mxu0 0.0
    %2816 = vmatprep.subr.mxu0 0.0
    %2817 = vmatpush2.msra.mxu0 0.0
    %2818 = vmatprep.subr.mxu0 0.0
    %2819 = vmatpush2.msra.mxu0 0.0
    %2820 = vmatprep.subr.mxu0 0.0
    %2821 = vmatpush2.msra.mxu0 0.0
    %2822 = vmatprep.subr.mxu0 0.0
    %2823 = vmatpush2.msra.mxu0 0.0
    %2824 = vmatprep.subr.mxu0 0.0
    %2825 = vmatpush2.msra.mxu0 0.0
    %2826 = vmatprep.mubr.f32.mxu0 0.0
    %2827 = vmatmul.mubr.f32.gmra.mxu0 %v2731
    %v2828 = vpop.f32.mrf.mxu0
    %v2829 = vadd.f32 %v2678, %v2828
    %v2830 = vpop.f32.mrf.mxu0
    %2831 = vmatprep.mubr.f32.mxu0 0.0
    %2832 = vmatmul.mubr.f32.gmra.mxu0 %v2733
    %v2833 = vpop.f32.mrf.mxu0
    %v2834 = vadd.f32 %v2683, %v2833
    %v2835 = vpop.f32.mrf.mxu0
    %2836 = vmatprep.mubr.f32.mxu0 0.0
    %2837 = vmatmul.mubr.f32.gmra.mxu0 %v2736
    %v2838 = vpop.f32.mrf.mxu0
    %v2839 = vadd.f32 %v2688, %v2838
    %v2840 = vpop.f32.mrf.mxu0
    %2841 = vmatprep.mubr.f32.mxu0 0.0
    %2842 = vmatmul.mubr.f32.gmra.mxu0 %v2739
    %v2843 = vpop.f32.mrf.mxu0
    %v2844 = vadd.f32 %v2693, %v2843
    %v2845 = vpop.f32.mrf.mxu0
    %2846 = vmatprep.mubr.f32.mxu0 0.0
    %2847 = vmatmul.mubr.f32.gmra.mxu0 %v2742
    %v2848 = vpop.f32.mrf.mxu0
    %v2849 = vadd.f32 %v2698, %v2848
    %v2850 = vpop.f32.mrf.mxu0
    %2851 = vmatprep.mubr.f32.mxu0 0.0
    %2852 = vmatmul.mubr.f32.gmra.mxu0 %v2745
    %v2853 = vpop.f32.mrf.mxu0
    %v2854 = vadd.f32 %v2703, %v2853
    %v2855 = vpop.f32.mrf.mxu0
    %2856 = vmatprep.mubr.f32.mxu0 0.0
    %2857 = vmatmul.mubr.f32.gmra.mxu0 %v2748
    %v2858 = vpop.f32.mrf.mxu0
    %v2859 = vadd.f32 %v2708, %v2858
    %v2860 = vpop.f32.mrf.mxu0
    %2861 = vmatprep.mubr.f32.mxu0 0.0
    %2862 = vmatmul.mubr.f32.gmra.mxu0 %v2751
    %v2863 = vpop.f32.mrf.mxu0
    %v2864 = vadd.f32 %v2713, %v2863
    %v2865 = vpop.f32.mrf.mxu0
    %2866 = vmatprep.mubr.f32.mxu0 0.0
    %2867 = vmatmul.mubr.f32.gmra.mxu0 %v2754
    %v2868 = vpop.f32.mrf.mxu0
    %v2869 = vadd.f32 %v2718, %v2868
    %v2870 = vpop.f32.mrf.mxu0
    %2871 = vmatprep.mubr.f32.mxu0 0.0
    %2872 = vmatmul.mubr.f32.gmra.mxu0 %v2757
    %v2873 = vpop.f32.mrf.mxu0
    %v2874 = vadd.f32 %v2723, %v2873
    %v2875 = vpop.f32.mrf.mxu0
    %2876 = vmatprep.mubr.f32.mxu0 0.0
    %2877 = vmatmul.mubr.f32.gmra.mxu0 %v2760
    %v2878 = vpop.f32.mrf.mxu0
    %v2879 = vadd.f32 %v2728, %v2878
    %v2880 = vpop.f32.mrf.mxu0
    %2881 = vdwg.mxu0
    %v2882 = vrot.slane %v2502, 4
    %v2883 = vrot.slane %v2503, 4
    %v2884 = vsel %vm675, %v2882, %v2883
    %v2885 = vrot.slane %v2504, 4
    %v2886 = vsel %vm675, %v2883, %v2885
    %v2887 = vrot.slane %v2505, 4
    %v2888 = vsel %vm675, %v2885, %v2887
    %v2889 = vrot.slane %v2506, 4
    %v2890 = vsel %vm675, %v2887, %v2889
    %v2891 = vrot.slane %v2507, 4
    %v2892 = vsel %vm675, %v2889, %v2891
    %v2893 = vrot.slane %v2508, 4
    %v2894 = vsel %vm675, %v2891, %v2893
    %v2895 = vrot.slane %v2509, 4
    %v2896 = vsel %vm675, %v2893, %v2895
    %v2897 = vrot.slane %v2510, 4
    %v2898 = vsel %vm675, %v2895, %v2897
    %v2909 = vsel %vm675, 0.0, %v2882
    %v2910 = vmul.f32 %v2909, %v724
    %v2911 = vmul.f32 %v2884, %v729
    %v2912 = vmul.f32 %v2886, %v734
    %v2913 = vmul.f32 %v2888, %v739
    %v2914 = vmul.f32 %v2890, %v744
    %v2915 = vmul.f32 %v2892, %v749
    %v2916 = vmul.f32 %v2894, %v754
    %v2917 = vmul.f32 %v2896, %v759
    %v2918 = vmul.f32 %v2898, %v764
    %v2919 = vmul.f32 %v2897, %v769
    %s2920 = scalar_lea.vmem [#allocation8], 64
    %v2921 = vld [vmem:[%s2920] sm:$0xff]
    %v2922 = vld [vmem:[%s2920 + $0x8] sm:$0xff]
    %v2923 = vld [vmem:[%s2920 + $0x10] sm:$0xff]
    %v2924 = vld [vmem:[%s2920 + $0x18] sm:$0xff]
    %v2925 = vsel %vm2578, %v771, 0
    %v2928 = vsel %vm2578, %v2910, 0
    %v2931 = vsel %vm2578, %v2911, 0
    %v2934 = vsel %vm2578, %v2912, 0
    %v2937 = vsel %vm2578, %v2913, 0
    %v2940 = vsel %vm2578, %v2914, 0
    %v2943 = vsel %vm2578, %v2915, 0
    %v2946 = vsel %vm2578, %v2916, 0
    %v2949 = vsel %vm2578, %v2917, 0
    %v2952 = vsel %vm2578, %v2918, 0
    %v2955 = vsel %vm2578, %v2919, 0
    %2957 = vmatprep.subr.mxu0 0.0
    %2958 = vmatpush1.msra.mxu0 0.0
    %2959 = vmatprep.subr.mxu0 0.0
    %2960 = vmatpush1.msra.mxu0 0.0
    %2961 = vmatprep.subr.mxu0 0.0
    %2962 = vmatpush1.msra.mxu0 0.0
    %2963 = vmatprep.subr.mxu0 0.0
    %2964 = vmatpush1.msra.mxu0 0.0
    %2965 = vmatprep.subr.mxu0 0.0
    %2966 = vmatpush1.msra.mxu0 0.0
    %2967 = vmatprep.subr.mxu0 0.0
    %2968 = vmatpush1.msra.mxu0 0.0
    %2969 = vmatprep.subr.mxu0 0.0
    %2970 = vmatpush1.msra.mxu0 0.0
    %2971 = vmatprep.subr.mxu0 0.0
    %2972 = vmatpush1.msra.mxu0 0.0
    %2973 = vmatprep.subr.mxu0 0.0
    %2974 = vmatpush1.msra.mxu0 0.0
    %2975 = vmatprep.subr.mxu0 0.0
    %2976 = vmatpush1.msra.mxu0 0.0
    %2977 = vmatprep.subr.mxu0 0.0
    %2978 = vmatpush1.msra.mxu0 0.0
    %2979 = vmatprep.subr.mxu0 0.0
    %2980 = vmatpush1.msra.mxu0 0.0
    %2981 = vmatprep.subr.mxu0 0.0
    %2982 = vmatpush1.msra.mxu0 %v2924
    %2983 = vmatprep.subr.mxu0 0.0
    %2984 = vmatpush1.msra.mxu0 %v2923
    %2985 = vmatprep.subr.mxu0 0.0
    %2986 = vmatpush1.msra.mxu0 %v2922
    %2987 = vmatprep.subr.mxu0 0.0
    %2988 = vmatpush1.msra.mxu0 %v2921
    %2989 = vmatprep.subr.mxu0 0.0
    %2990 = vmatpush2.msra.mxu0 0.0
    %2991 = vmatprep.subr.mxu0 0.0
    %2992 = vmatpush2.msra.mxu0 0.0
    %2993 = vmatprep.subr.mxu0 0.0
    %2994 = vmatpush2.msra.mxu0 0.0
    %2995 = vmatprep.subr.mxu0 0.0
    %2996 = vmatpush2.msra.mxu0 0.0
    %2997 = vmatprep.subr.mxu0 0.0
    %2998 = vmatpush2.msra.mxu0 0.0
    %2999 = vmatprep.subr.mxu0 0.0
    %3000 = vmatpush2.msra.mxu0 0.0
    %3001 = vmatprep.subr.mxu0 0.0
    %3002 = vmatpush2.msra.mxu0 0.0
    %3003 = vmatprep.subr.mxu0 0.0
    %3004 = vmatpush2.msra.mxu0 0.0
    %3005 = vmatprep.subr.mxu0 0.0
    %3006 = vmatpush2.msra.mxu0 0.0
    %3007 = vmatprep.subr.mxu0 0.0
    %3008 = vmatpush2.msra.mxu0 0.0
    %3009 = vmatprep.subr.mxu0 0.0
    %3010 = vmatpush2.msra.mxu0 0.0
    %3011 = vmatprep.subr.mxu0 0.0
    %3012 = vmatpush2.msra.mxu0 0.0
    %3013 = vmatprep.subr.mxu0 0.0
    %3014 = vmatpush2.msra.mxu0 0.0
    %3015 = vmatprep.subr.mxu0 0.0
    %3016 = vmatpush2.msra.mxu0 0.0
    %3017 = vmatprep.subr.mxu0 0.0
    %3018 = vmatpush2.msra.mxu0 0.0
    %3019 = vmatprep.subr.mxu0 0.0
    %3020 = vmatpush2.msra.mxu0 0.0
    %3021 = vmatprep.mubr.f32.mxu0 0.0
    %3022 = vmatmul.mubr.f32.gmra.mxu0 %v2925
    %v3023 = vpop.f32.mrf.mxu0
    %v3024 = vadd.f32 0.0, %v3023
    %v3025 = vpop.f32.mrf.mxu0
    %3026 = vmatprep.mubr.f32.mxu0 0.0
    %3027 = vmatmul.mubr.f32.gmra.mxu0 %v2928
    %v3028 = vpop.f32.mrf.mxu0
    %v3029 = vadd.f32 0.0, %v3028
    %v3030 = vpop.f32.mrf.mxu0
    %3031 = vmatprep.mubr.f32.mxu0 0.0
    %3032 = vmatmul.mubr.f32.gmra.mxu0 %v2931
    %v3033 = vpop.f32.mrf.mxu0
    %v3034 = vadd.f32 0.0, %v3033
    %v3035 = vpop.f32.mrf.mxu0
    %3036 = vmatprep.mubr.f32.mxu0 0.0
    %3037 = vmatmul.mubr.f32.gmra.mxu0 %v2934
    %v3038 = vpop.f32.mrf.mxu0
    %v3039 = vadd.f32 0.0, %v3038
    %v3040 = vpop.f32.mrf.mxu0
    %3041 = vmatprep.mubr.f32.mxu0 0.0
    %3042 = vmatmul.mubr.f32.gmra.mxu0 %v2937
    %v3043 = vpop.f32.mrf.mxu0
    %v3044 = vadd.f32 0.0, %v3043
    %v3045 = vpop.f32.mrf.mxu0
    %3046 = vmatprep.mubr.f32.mxu0 0.0
    %3047 = vmatmul.mubr.f32.gmra.mxu0 %v2940
    %v3048 = vpop.f32.mrf.mxu0
    %v3049 = vadd.f32 0.0, %v3048
    %v3050 = vpop.f32.mrf.mxu0
    %3051 = vmatprep.mubr.f32.mxu0 0.0
    %3052 = vmatmul.mubr.f32.gmra.mxu0 %v2943
    %v3053 = vpop.f32.mrf.mxu0
    %v3054 = vadd.f32 0.0, %v3053
    %v3055 = vpop.f32.mrf.mxu0
    %3056 = vmatprep.mubr.f32.mxu0 0.0
    %3057 = vmatmul.mubr.f32.gmra.mxu0 %v2946
    %v3058 = vpop.f32.mrf.mxu0
    %v3059 = vadd.f32 0.0, %v3058
    %v3060 = vpop.f32.mrf.mxu0
    %3061 = vmatprep.mubr.f32.mxu0 0.0
    %3062 = vmatmul.mubr.f32.gmra.mxu0 %v2949
    %v3063 = vpop.f32.mrf.mxu0
    %v3064 = vadd.f32 0.0, %v3063
    %v3065 = vpop.f32.mrf.mxu0
    %3066 = vmatprep.mubr.f32.mxu0 0.0
    %3067 = vmatmul.mubr.f32.gmra.mxu0 %v2952
    %v3068 = vpop.f32.mrf.mxu0
    %v3069 = vadd.f32 0.0, %v3068
    %v3070 = vpop.f32.mrf.mxu0
    %3071 = vmatprep.mubr.f32.mxu0 0.0
    %3072 = vmatmul.mubr.f32.gmra.mxu0 %v2955
    %v3073 = vpop.f32.mrf.mxu0
    %v3074 = vadd.f32 0.0, %v3073
    %v3075 = vpop.f32.mrf.mxu0
    %3076 = vdwg.mxu0
    %v3077 = vadd.f32 %v2829, %v3024
    %v3078 = vadd.f32 %v2834, %v3029
    %v3079 = vadd.f32 %v2839, %v3034
    %v3080 = vadd.f32 %v2844, %v3039
    %v3081 = vadd.f32 %v2849, %v3044
    %v3082 = vadd.f32 %v2854, %v3049
    %v3083 = vadd.f32 %v2859, %v3054
    %v3084 = vadd.f32 %v2864, %v3059
    %v3085 = vadd.f32 %v2869, %v3064
    %v3086 = vadd.f32 %v2874, %v3069
    %v3087 = vadd.f32 %v2879, %v3074
    %v3090 = vrot.slane %v2502, 6
    %v3091 = vrot.slane %v2503, 6
    %v3092 = vsel %vm395, %v3090, %v3091
    %v3093 = vrot.slane %v2504, 6
    %v3094 = vsel %vm395, %v3091, %v3093
    %v3095 = vrot.slane %v2505, 6
    %v3096 = vsel %vm395, %v3093, %v3095
    %v3097 = vrot.slane %v2506, 6
    %v3098 = vsel %vm395, %v3095, %v3097
    %v3099 = vrot.slane %v2507, 6
    %v3100 = vsel %vm395, %v3097, %v3099
    %v3101 = vrot.slane %v2508, 6
    %v3102 = vsel %vm395, %v3099, %v3101
    %v3103 = vrot.slane %v2509, 6
    %v3104 = vsel %vm395, %v3101, %v3103
    %v3105 = vrot.slane %v2510, 6
    %v3106 = vsel %vm395, %v3103, %v3105
    %v3107 = vrot.slane %v2511, 6
    %v3108 = vsel %vm395, %v3105, %v3107
    %v3109 = vrot.slane %v2512, 6
    %v3110 = vsel %vm395, %v3107, %v3109
    %v3122 = vsel %vm395, 0.0, %v3090
    %v3123 = vmul.f32 %v3122, %v1001
    %v3124 = vmul.f32 %v3092, %v1006
    %v3125 = vmul.f32 %v3094, %v1011
    %v3126 = vmul.f32 %v3096, %v1016
    %v3127 = vmul.f32 %v3098, %v1021
    %v3128 = vmul.f32 %v3100, %v1026
    %v3129 = vmul.f32 %v3102, %v1031
    %v3130 = vmul.f32 %v3104, %v1036
    %v3131 = vmul.f32 %v3106, %v1041
    %v3132 = vmul.f32 %v3108, %v1046
    %v3133 = vmul.f32 %v3110, %v1051
    %s3134 = scalar_lea.vmem [#allocation8], 96
    %v3135 = vld [vmem:[%s3134] sm:$0xff]
    %v3136 = vld [vmem:[%s3134 + $0x8] sm:$0xff]
    %v3137 = vld [vmem:[%s3134 + $0x10] sm:$0xff]
    %v3138 = vld [vmem:[%s3134 + $0x18] sm:$0xff]
    %v3140 = vsel %vm2578, %v3123, 0
    %v3143 = vsel %vm2578, %v3124, 0
    %v3146 = vsel %vm2578, %v3125, 0
    %v3149 = vsel %vm2578, %v3126, 0
    %v3152 = vsel %vm2578, %v3127, 0
    %v3155 = vsel %vm2578, %v3128, 0
    %v3158 = vsel %vm2578, %v3129, 0
    %v3161 = vsel %vm2578, %v3130, 0
    %v3164 = vsel %vm2578, %v3131, 0
    %v3167 = vsel %vm2578, %v3132, 0
    %v3170 = vsel %vm2578, %v3133, 0
    %3172 = vmatprep.subr.mxu0 0.0
    %3173 = vmatpush1.msra.mxu0 0.0
    %3174 = vmatprep.subr.mxu0 0.0
    %3175 = vmatpush1.msra.mxu0 0.0
    %3176 = vmatprep.subr.mxu0 0.0
    %3177 = vmatpush1.msra.mxu0 0.0
    %3178 = vmatprep.subr.mxu0 0.0
    %3179 = vmatpush1.msra.mxu0 0.0
    %3180 = vmatprep.subr.mxu0 0.0
    %3181 = vmatpush1.msra.mxu0 0.0
    %3182 = vmatprep.subr.mxu0 0.0
    %3183 = vmatpush1.msra.mxu0 0.0
    %3184 = vmatprep.subr.mxu0 0.0
    %3185 = vmatpush1.msra.mxu0 0.0
    %3186 = vmatprep.subr.mxu0 0.0
    %3187 = vmatpush1.msra.mxu0 0.0
    %3188 = vmatprep.subr.mxu0 0.0
    %3189 = vmatpush1.msra.mxu0 0.0
    %3190 = vmatprep.subr.mxu0 0.0
    %3191 = vmatpush1.msra.mxu0 0.0
    %3192 = vmatprep.subr.mxu0 0.0
    %3193 = vmatpush1.msra.mxu0 0.0
    %3194 = vmatprep.subr.mxu0 0.0
    %3195 = vmatpush1.msra.mxu0 0.0
    %3196 = vmatprep.subr.mxu0 0.0
    %3197 = vmatpush1.msra.mxu0 %v3138
    %3198 = vmatprep.subr.mxu0 0.0
    %3199 = vmatpush1.msra.mxu0 %v3137
    %3200 = vmatprep.subr.mxu0 0.0
    %3201 = vmatpush1.msra.mxu0 %v3136
    %3202 = vmatprep.subr.mxu0 0.0
    %3203 = vmatpush1.msra.mxu0 %v3135
    %3204 = vmatprep.subr.mxu0 0.0
    %3205 = vmatpush2.msra.mxu0 0.0
    %3206 = vmatprep.subr.mxu0 0.0
    %3207 = vmatpush2.msra.mxu0 0.0
    %3208 = vmatprep.subr.mxu0 0.0
    %3209 = vmatpush2.msra.mxu0 0.0
    %3210 = vmatprep.subr.mxu0 0.0
    %3211 = vmatpush2.msra.mxu0 0.0
    %3212 = vmatprep.subr.mxu0 0.0
    %3213 = vmatpush2.msra.mxu0 0.0
    %3214 = vmatprep.subr.mxu0 0.0
    %3215 = vmatpush2.msra.mxu0 0.0
    %3216 = vmatprep.subr.mxu0 0.0
    %3217 = vmatpush2.msra.mxu0 0.0
    %3218 = vmatprep.subr.mxu0 0.0
    %3219 = vmatpush2.msra.mxu0 0.0
    %3220 = vmatprep.subr.mxu0 0.0
    %3221 = vmatpush2.msra.mxu0 0.0
    %3222 = vmatprep.subr.mxu0 0.0
    %3223 = vmatpush2.msra.mxu0 0.0
    %3224 = vmatprep.subr.mxu0 0.0
    %3225 = vmatpush2.msra.mxu0 0.0
    %3226 = vmatprep.subr.mxu0 0.0
    %3227 = vmatpush2.msra.mxu0 0.0
    %3228 = vmatprep.subr.mxu0 0.0
    %3229 = vmatpush2.msra.mxu0 0.0
    %3230 = vmatprep.subr.mxu0 0.0
    %3231 = vmatpush2.msra.mxu0 0.0
    %3232 = vmatprep.subr.mxu0 0.0
    %3233 = vmatpush2.msra.mxu0 0.0
    %3234 = vmatprep.subr.mxu0 0.0
    %3235 = vmatpush2.msra.mxu0 0.0
    %3236 = vmatprep.mubr.f32.mxu0 0.0
    %3237 = vmatmul.mubr.f32.gmra.mxu0 %v3140
    %v3238 = vpop.f32.mrf.mxu0
    %v3239 = vadd.f32 0.0, %v3238
    %v3240 = vpop.f32.mrf.mxu0
    %3241 = vmatprep.mubr.f32.mxu0 0.0
    %3242 = vmatmul.mubr.f32.gmra.mxu0 %v3143
    %v3243 = vpop.f32.mrf.mxu0
    %v3244 = vadd.f32 0.0, %v3243
    %v3245 = vpop.f32.mrf.mxu0
    %3246 = vmatprep.mubr.f32.mxu0 0.0
    %3247 = vmatmul.mubr.f32.gmra.mxu0 %v3146
    %v3248 = vpop.f32.mrf.mxu0
    %v3249 = vadd.f32 0.0, %v3248
    %v3250 = vpop.f32.mrf.mxu0
    %3251 = vmatprep.mubr.f32.mxu0 0.0
    %3252 = vmatmul.mubr.f32.gmra.mxu0 %v3149
    %v3253 = vpop.f32.mrf.mxu0
    %v3254 = vadd.f32 0.0, %v3253
    %v3255 = vpop.f32.mrf.mxu0
    %3256 = vmatprep.mubr.f32.mxu0 0.0
    %3257 = vmatmul.mubr.f32.gmra.mxu0 %v3152
    %v3258 = vpop.f32.mrf.mxu0
    %v3259 = vadd.f32 0.0, %v3258
    %v3260 = vpop.f32.mrf.mxu0
    %3261 = vmatprep.mubr.f32.mxu0 0.0
    %3262 = vmatmul.mubr.f32.gmra.mxu0 %v3155
    %v3263 = vpop.f32.mrf.mxu0
    %v3264 = vadd.f32 0.0, %v3263
    %v3265 = vpop.f32.mrf.mxu0
    %3266 = vmatprep.mubr.f32.mxu0 0.0
    %3267 = vmatmul.mubr.f32.gmra.mxu0 %v3158
    %v3268 = vpop.f32.mrf.mxu0
    %v3269 = vadd.f32 0.0, %v3268
    %v3270 = vpop.f32.mrf.mxu0
    %3271 = vmatprep.mubr.f32.mxu0 0.0
    %3272 = vmatmul.mubr.f32.gmra.mxu0 %v3161
    %v3273 = vpop.f32.mrf.mxu0
    %v3274 = vadd.f32 0.0, %v3273
    %v3275 = vpop.f32.mrf.mxu0
    %3276 = vmatprep.mubr.f32.mxu0 0.0
    %3277 = vmatmul.mubr.f32.gmra.mxu0 %v3164
    %v3278 = vpop.f32.mrf.mxu0
    %v3279 = vadd.f32 0.0, %v3278
    %v3280 = vpop.f32.mrf.mxu0
    %3281 = vmatprep.mubr.f32.mxu0 0.0
    %3282 = vmatmul.mubr.f32.gmra.mxu0 %v3167
    %v3283 = vpop.f32.mrf.mxu0
    %v3284 = vadd.f32 0.0, %v3283
    %v3285 = vpop.f32.mrf.mxu0
    %3286 = vmatprep.mubr.f32.mxu0 0.0
    %3287 = vmatmul.mubr.f32.gmra.mxu0 %v3170
    %v3288 = vpop.f32.mrf.mxu0
    %v3289 = vadd.f32 0.0, %v3288
    %v3290 = vpop.f32.mrf.mxu0
    %3291 = vdwg.mxu0
    %v3292 = vadd.f32 %v3077, %v3239
    %v3293 = vadd.f32 %v3078, %v3244
    %v3294 = vadd.f32 %v3079, %v3249
    %v3295 = vadd.f32 %v3080, %v3254
    %v3296 = vadd.f32 %v3081, %v3259
    %v3297 = vadd.f32 %v3082, %v3264
    %v3298 = vadd.f32 %v3083, %v3269
    %v3299 = vadd.f32 %v3084, %v3274
    %v3300 = vadd.f32 %v3085, %v3279
    %v3301 = vadd.f32 %v3086, %v3284
    %v3302 = vadd.f32 %v3087, %v3289
    %v3303 = vmul.f32 %v2502, %v1248
    %v3304 = vmul.f32 %v2503, %v1253
    %v3305 = vmul.f32 %v2504, %v1258
    %v3306 = vmul.f32 %v2505, %v1263
    %v3307 = vmul.f32 %v2506, %v1268
    %v3308 = vmul.f32 %v2507, %v1273
    %v3309 = vmul.f32 %v2508, %v1278
    %v3310 = vmul.f32 %v2509, %v1283
    %v3311 = vmul.f32 %v2510, %v1288
    %v3312 = vmul.f32 %v2511, %v1293
    %v3313 = vmul.f32 %v2512, %v1298
    %s3314 = scalar_lea.vmem [#allocation8], 128
    %v3315 = vld [vmem:[%s3314] sm:$0xff]
    %v3316 = vld [vmem:[%s3314 + $0x8] sm:$0xff]
    %v3317 = vld [vmem:[%s3314 + $0x10] sm:$0xff]
    %v3318 = vld [vmem:[%s3314 + $0x18] sm:$0xff]
    %v3320 = vsel %vm2578, %v3303, 0
    %v3323 = vsel %vm2578, %v3304, 0
    %v3326 = vsel %vm2578, %v3305, 0
    %v3329 = vsel %vm2578, %v3306, 0
    %v3332 = vsel %vm2578, %v3307, 0
    %v3335 = vsel %vm2578, %v3308, 0
    %v3338 = vsel %vm2578, %v3309, 0
    %v3341 = vsel %vm2578, %v3310, 0
    %v3344 = vsel %vm2578, %v3311, 0
    %v3347 = vsel %vm2578, %v3312, 0
    %v3350 = vsel %vm2578, %v3313, 0
    %3352 = vmatprep.subr.mxu0 0.0
    %3353 = vmatpush1.msra.mxu0 0.0
    %3354 = vmatprep.subr.mxu0 0.0
    %3355 = vmatpush1.msra.mxu0 0.0
    %3356 = vmatprep.subr.mxu0 0.0
    %3357 = vmatpush1.msra.mxu0 0.0
    %3358 = vmatprep.subr.mxu0 0.0
    %3359 = vmatpush1.msra.mxu0 0.0
    %3360 = vmatprep.subr.mxu0 0.0
    %3361 = vmatpush1.msra.mxu0 0.0
    %3362 = vmatprep.subr.mxu0 0.0
    %3363 = vmatpush1.msra.mxu0 0.0
    %3364 = vmatprep.subr.mxu0 0.0
    %3365 = vmatpush1.msra.mxu0 0.0
    %3366 = vmatprep.subr.mxu0 0.0
    %3367 = vmatpush1.msra.mxu0 0.0
    %3368 = vmatprep.subr.mxu0 0.0
    %3369 = vmatpush1.msra.mxu0 0.0
    %3370 = vmatprep.subr.mxu0 0.0
    %3371 = vmatpush1.msra.mxu0 0.0
    %3372 = vmatprep.subr.mxu0 0.0
    %3373 = vmatpush1.msra.mxu0 0.0
    %3374 = vmatprep.subr.mxu0 0.0
    %3375 = vmatpush1.msra.mxu0 0.0
    %3376 = vmatprep.subr.mxu0 0.0
    %3377 = vmatpush1.msra.mxu0 %v3318
    %3378 = vmatprep.subr.mxu0 0.0
    %3379 = vmatpush1.msra.mxu0 %v3317
    %3380 = vmatprep.subr.mxu0 0.0
    %3381 = vmatpush1.msra.mxu0 %v3316
    %3382 = vmatprep.subr.mxu0 0.0
    %3383 = vmatpush1.msra.mxu0 %v3315
    %3384 = vmatprep.subr.mxu0 0.0
    %3385 = vmatpush2.msra.mxu0 0.0
    %3386 = vmatprep.subr.mxu0 0.0
    %3387 = vmatpush2.msra.mxu0 0.0
    %3388 = vmatprep.subr.mxu0 0.0
    %3389 = vmatpush2.msra.mxu0 0.0
    %3390 = vmatprep.subr.mxu0 0.0
    %3391 = vmatpush2.msra.mxu0 0.0
    %3392 = vmatprep.subr.mxu0 0.0
    %3393 = vmatpush2.msra.mxu0 0.0
    %3394 = vmatprep.subr.mxu0 0.0
    %3395 = vmatpush2.msra.mxu0 0.0
    %3396 = vmatprep.subr.mxu0 0.0
    %3397 = vmatpush2.msra.mxu0 0.0
    %3398 = vmatprep.subr.mxu0 0.0
    %3399 = vmatpush2.msra.mxu0 0.0
    %3400 = vmatprep.subr.mxu0 0.0
    %3401 = vmatpush2.msra.mxu0 0.0
    %3402 = vmatprep.subr.mxu0 0.0
    %3403 = vmatpush2.msra.mxu0 0.0
    %3404 = vmatprep.subr.mxu0 0.0
    %3405 = vmatpush2.msra.mxu0 0.0
    %3406 = vmatprep.subr.mxu0 0.0
    %3407 = vmatpush2.msra.mxu0 0.0
    %3408 = vmatprep.subr.mxu0 0.0
    %3409 = vmatpush2.msra.mxu0 0.0
    %3410 = vmatprep.subr.mxu0 0.0
    %3411 = vmatpush2.msra.mxu0 0.0
    %3412 = vmatprep.subr.mxu0 0.0
    %3413 = vmatpush2.msra.mxu0 0.0
    %3414 = vmatprep.subr.mxu0 0.0
    %3415 = vmatpush2.msra.mxu0 0.0
    %3416 = vmatprep.mubr.f32.mxu0 0.0
    %3417 = vmatmul.mubr.f32.gmra.mxu0 %v3320
    %v3418 = vpop.f32.mrf.mxu0
    %v3419 = vadd.f32 0.0, %v3418
    %v3420 = vpop.f32.mrf.mxu0
    %3421 = vmatprep.mubr.f32.mxu0 0.0
    %3422 = vmatmul.mubr.f32.gmra.mxu0 %v3323
    %v3423 = vpop.f32.mrf.mxu0
    %v3424 = vadd.f32 0.0, %v3423
    %v3425 = vpop.f32.mrf.mxu0
    %3426 = vmatprep.mubr.f32.mxu0 0.0
    %3427 = vmatmul.mubr.f32.gmra.mxu0 %v3326
    %v3428 = vpop.f32.mrf.mxu0
    %v3429 = vadd.f32 0.0, %v3428
    %v3430 = vpop.f32.mrf.mxu0
    %3431 = vmatprep.mubr.f32.mxu0 0.0
    %3432 = vmatmul.mubr.f32.gmra.mxu0 %v3329
    %v3433 = vpop.f32.mrf.mxu0
    %v3434 = vadd.f32 0.0, %v3433
    %v3435 = vpop.f32.mrf.mxu0
    %3436 = vmatprep.mubr.f32.mxu0 0.0
    %3437 = vmatmul.mubr.f32.gmra.mxu0 %v3332
    %v3438 = vpop.f32.mrf.mxu0
    %v3439 = vadd.f32 0.0, %v3438
    %v3440 = vpop.f32.mrf.mxu0
    %3441 = vmatprep.mubr.f32.mxu0 0.0
    %3442 = vmatmul.mubr.f32.gmra.mxu0 %v3335
    %v3443 = vpop.f32.mrf.mxu0
    %v3444 = vadd.f32 0.0, %v3443
    %v3445 = vpop.f32.mrf.mxu0
    %3446 = vmatprep.mubr.f32.mxu0 0.0
    %3447 = vmatmul.mubr.f32.gmra.mxu0 %v3338
    %v3448 = vpop.f32.mrf.mxu0
    %v3449 = vadd.f32 0.0, %v3448
    %v3450 = vpop.f32.mrf.mxu0
    %3451 = vmatprep.mubr.f32.mxu0 0.0
    %3452 = vmatmul.mubr.f32.gmra.mxu0 %v3341
    %v3453 = vpop.f32.mrf.mxu0
    %v3454 = vadd.f32 0.0, %v3453
    %v3455 = vpop.f32.mrf.mxu0
    %3456 = vmatprep.mubr.f32.mxu0 0.0
    %3457 = vmatmul.mubr.f32.gmra.mxu0 %v3344
    %v3458 = vpop.f32.mrf.mxu0
    %v3459 = vadd.f32 0.0, %v3458
    %v3460 = vpop.f32.mrf.mxu0
    %3461 = vmatprep.mubr.f32.mxu0 0.0
    %3462 = vmatmul.mubr.f32.gmra.mxu0 %v3347
    %v3463 = vpop.f32.mrf.mxu0
    %v3464 = vadd.f32 0.0, %v3463
    %v3465 = vpop.f32.mrf.mxu0
    %3466 = vmatprep.mubr.f32.mxu0 0.0
    %3467 = vmatmul.mubr.f32.gmra.mxu0 %v3350
    %v3468 = vpop.f32.mrf.mxu0
    %v3469 = vadd.f32 0.0, %v3468
    %v3470 = vpop.f32.mrf.mxu0
    %3471 = vdwg.mxu0
    %v3472 = vadd.f32 %v3292, %v3419
    %v3473 = vadd.f32 %v3293, %v3424
    %v3474 = vadd.f32 %v3294, %v3429
    %v3475 = vadd.f32 %v3295, %v3434
    %v3476 = vadd.f32 %v3296, %v3439
    %v3477 = vadd.f32 %v3297, %v3444
    %v3478 = vadd.f32 %v3298, %v3449
    %v3479 = vadd.f32 %v3299, %v3454
    %v3480 = vadd.f32 %v3300, %v3459
    %v3481 = vadd.f32 %v3301, %v3464
    %v3482 = vadd.f32 %v3302, %v3469
    %v3483 = vrot.slane %v2511, 2
    %v3484 = vsel %vm252, %v2550, %v3483
    %v3485 = vrot.slane %v2512, 2
    %v3486 = vsel %vm252, %v3483, %v3485
    %v3490 = vsel %vm395, %v3485, 0.0
    %v3491 = vmul.f32 %v2537, %v1503
    %v3492 = vmul.f32 %v2539, %v1508
    %v3493 = vmul.f32 %v2541, %v1513
    %v3494 = vmul.f32 %v2543, %v1518
    %v3495 = vmul.f32 %v2545, %v1523
    %v3496 = vmul.f32 %v2547, %v1528
    %v3497 = vmul.f32 %v2549, %v1533
    %v3498 = vmul.f32 %v2551, %v1538
    %v3499 = vmul.f32 %v3484, %v1543
    %v3500 = vmul.f32 %v3486, %v1548
    %v3501 = vmul.f32 %v3490, %v1553
    %s3502 = scalar_lea.vmem [#allocation8], 160
    %v3503 = vld [vmem:[%s3502] sm:$0xff]
    %v3504 = vld [vmem:[%s3502 + $0x8] sm:$0xff]
    %v3505 = vld [vmem:[%s3502 + $0x10] sm:$0xff]
    %v3506 = vld [vmem:[%s3502 + $0x18] sm:$0xff]
    %v3508 = vsel %vm2578, %v3491, 0
    %v3511 = vsel %vm2578, %v3492, 0
    %v3514 = vsel %vm2578, %v3493, 0
    %v3517 = vsel %vm2578, %v3494, 0
    %v3520 = vsel %vm2578, %v3495, 0
    %v3523 = vsel %vm2578, %v3496, 0
    %v3526 = vsel %vm2578, %v3497, 0
    %v3529 = vsel %vm2578, %v3498, 0
    %v3532 = vsel %vm2578, %v3499, 0
    %v3535 = vsel %vm2578, %v3500, 0
    %v3538 = vsel %vm2578, %v3501, 0
    %3540 = vmatprep.subr.mxu0 0.0
    %3541 = vmatpush1.msra.mxu0 0.0
    %3542 = vmatprep.subr.mxu0 0.0
    %3543 = vmatpush1.msra.mxu0 0.0
    %3544 = vmatprep.subr.mxu0 0.0
    %3545 = vmatpush1.msra.mxu0 0.0
    %3546 = vmatprep.subr.mxu0 0.0
    %3547 = vmatpush1.msra.mxu0 0.0
    %3548 = vmatprep.subr.mxu0 0.0
    %3549 = vmatpush1.msra.mxu0 0.0
    %3550 = vmatprep.subr.mxu0 0.0
    %3551 = vmatpush1.msra.mxu0 0.0
    %3552 = vmatprep.subr.mxu0 0.0
    %3553 = vmatpush1.msra.mxu0 0.0
    %3554 = vmatprep.subr.mxu0 0.0
    %3555 = vmatpush1.msra.mxu0 0.0
    %3556 = vmatprep.subr.mxu0 0.0
    %3557 = vmatpush1.msra.mxu0 0.0
    %3558 = vmatprep.subr.mxu0 0.0
    %3559 = vmatpush1.msra.mxu0 0.0
    %3560 = vmatprep.subr.mxu0 0.0
    %3561 = vmatpush1.msra.mxu0 0.0
    %3562 = vmatprep.subr.mxu0 0.0
    %3563 = vmatpush1.msra.mxu0 0.0
    %3564 = vmatprep.subr.mxu0 0.0
    %3565 = vmatpush1.msra.mxu0 %v3506
    %3566 = vmatprep.subr.mxu0 0.0
    %3567 = vmatpush1.msra.mxu0 %v3505
    %3568 = vmatprep.subr.mxu0 0.0
    %3569 = vmatpush1.msra.mxu0 %v3504
    %3570 = vmatprep.subr.mxu0 0.0
    %3571 = vmatpush1.msra.mxu0 %v3503
    %3572 = vmatprep.subr.mxu0 0.0
    %3573 = vmatpush2.msra.mxu0 0.0
    %3574 = vmatprep.subr.mxu0 0.0
    %3575 = vmatpush2.msra.mxu0 0.0
    %3576 = vmatprep.subr.mxu0 0.0
    %3577 = vmatpush2.msra.mxu0 0.0
    %3578 = vmatprep.subr.mxu0 0.0
    %3579 = vmatpush2.msra.mxu0 0.0
    %3580 = vmatprep.subr.mxu0 0.0
    %3581 = vmatpush2.msra.mxu0 0.0
    %3582 = vmatprep.subr.mxu0 0.0
    %3583 = vmatpush2.msra.mxu0 0.0
    %3584 = vmatprep.subr.mxu0 0.0
    %3585 = vmatpush2.msra.mxu0 0.0
    %3586 = vmatprep.subr.mxu0 0.0
    %3587 = vmatpush2.msra.mxu0 0.0
    %3588 = vmatprep.subr.mxu0 0.0
    %3589 = vmatpush2.msra.mxu0 0.0
    %3590 = vmatprep.subr.mxu0 0.0
    %3591 = vmatpush2.msra.mxu0 0.0
    %3592 = vmatprep.subr.mxu0 0.0
    %3593 = vmatpush2.msra.mxu0 0.0
    %3594 = vmatprep.subr.mxu0 0.0
    %3595 = vmatpush2.msra.mxu0 0.0
    %3596 = vmatprep.subr.mxu0 0.0
    %3597 = vmatpush2.msra.mxu0 0.0
    %3598 = vmatprep.subr.mxu0 0.0
    %3599 = vmatpush2.msra.mxu0 0.0
    %3600 = vmatprep.subr.mxu0 0.0
    %3601 = vmatpush2.msra.mxu0 0.0
    %3602 = vmatprep.subr.mxu0 0.0
    %3603 = vmatpush2.msra.mxu0 0.0
    %3604 = vmatprep.mubr.f32.mxu0 0.0
    %3605 = vmatmul.mubr.f32.gmra.mxu0 %v3508
    %v3606 = vpop.f32.mrf.mxu0
    %v3607 = vadd.f32 0.0, %v3606
    %v3608 = vpop.f32.mrf.mxu0
    %3609 = vmatprep.mubr.f32.mxu0 0.0
    %3610 = vmatmul.mubr.f32.gmra.mxu0 %v3511
    %v3611 = vpop.f32.mrf.mxu0
    %v3612 = vadd.f32 0.0, %v3611
    %v3613 = vpop.f32.mrf.mxu0
    %3614 = vmatprep.mubr.f32.mxu0 0.0
    %3615 = vmatmul.mubr.f32.gmra.mxu0 %v3514
    %v3616 = vpop.f32.mrf.mxu0
    %v3617 = vadd.f32 0.0, %v3616
    %v3618 = vpop.f32.mrf.mxu0
    %3619 = vmatprep.mubr.f32.mxu0 0.0
    %3620 = vmatmul.mubr.f32.gmra.mxu0 %v3517
    %v3621 = vpop.f32.mrf.mxu0
    %v3622 = vadd.f32 0.0, %v3621
    %v3623 = vpop.f32.mrf.mxu0
    %3624 = vmatprep.mubr.f32.mxu0 0.0
    %3625 = vmatmul.mubr.f32.gmra.mxu0 %v3520
    %v3626 = vpop.f32.mrf.mxu0
    %v3627 = vadd.f32 0.0, %v3626
    %v3628 = vpop.f32.mrf.mxu0
    %3629 = vmatprep.mubr.f32.mxu0 0.0
    %3630 = vmatmul.mubr.f32.gmra.mxu0 %v3523
    %v3631 = vpop.f32.mrf.mxu0
    %v3632 = vadd.f32 0.0, %v3631
    %v3633 = vpop.f32.mrf.mxu0
    %3634 = vmatprep.mubr.f32.mxu0 0.0
    %3635 = vmatmul.mubr.f32.gmra.mxu0 %v3526
    %v3636 = vpop.f32.mrf.mxu0
    %v3637 = vadd.f32 0.0, %v3636
    %v3638 = vpop.f32.mrf.mxu0
    %3639 = vmatprep.mubr.f32.mxu0 0.0
    %3640 = vmatmul.mubr.f32.gmra.mxu0 %v3529
    %v3641 = vpop.f32.mrf.mxu0
    %v3642 = vadd.f32 0.0, %v3641
    %v3643 = vpop.f32.mrf.mxu0
    %3644 = vmatprep.mubr.f32.mxu0 0.0
    %3645 = vmatmul.mubr.f32.gmra.mxu0 %v3532
    %v3646 = vpop.f32.mrf.mxu0
    %v3647 = vadd.f32 0.0, %v3646
    %v3648 = vpop.f32.mrf.mxu0
    %3649 = vmatprep.mubr.f32.mxu0 0.0
    %3650 = vmatmul.mubr.f32.gmra.mxu0 %v3535
    %v3651 = vpop.f32.mrf.mxu0
    %v3652 = vadd.f32 0.0, %v3651
    %v3653 = vpop.f32.mrf.mxu0
    %3654 = vmatprep.mubr.f32.mxu0 0.0
    %3655 = vmatmul.mubr.f32.gmra.mxu0 %v3538
    %v3656 = vpop.f32.mrf.mxu0
    %v3657 = vadd.f32 0.0, %v3656
    %v3658 = vpop.f32.mrf.mxu0
    %3659 = vdwg.mxu0
    %v3660 = vadd.f32 %v3472, %v3607
    %v3661 = vadd.f32 %v3473, %v3612
    %v3662 = vadd.f32 %v3474, %v3617
    %v3663 = vadd.f32 %v3475, %v3622
    %v3664 = vadd.f32 %v3476, %v3627
    %v3665 = vadd.f32 %v3477, %v3632
    %v3666 = vadd.f32 %v3478, %v3637
    %v3667 = vadd.f32 %v3479, %v3642
    %v3668 = vadd.f32 %v3480, %v3647
    %v3669 = vadd.f32 %v3481, %v3652
    %v3670 = vadd.f32 %v3482, %v3657
    %v3671 = vrot.slane %v2511, 4
    %v3672 = vsel %vm675, %v2897, %v3671
    %v3673 = vrot.slane %v2512, 4
    %v3674 = vsel %vm675, %v3671, %v3673
    %v3677 = vmul.f32 %v2886, %v1756
    %v3678 = vmul.f32 %v2888, %v1761
    %v3679 = vmul.f32 %v2890, %v1766
    %v3680 = vmul.f32 %v2892, %v1771
    %v3681 = vmul.f32 %v2894, %v1776
    %v3682 = vmul.f32 %v2896, %v1781
    %v3683 = vmul.f32 %v2898, %v1786
    %v3684 = vmul.f32 %v3672, %v1791
    %v3685 = vmul.f32 %v3674, %v1796
    %s3686 = scalar_lea.vmem [#allocation8], 192
    %v3687 = vld [vmem:[%s3686] sm:$0xff]
    %v3688 = vld [vmem:[%s3686 + $0x8] sm:$0xff]
    %v3689 = vld [vmem:[%s3686 + $0x10] sm:$0xff]
    %v3690 = vld [vmem:[%s3686 + $0x18] sm:$0xff]
    %v3692 = vsel %vm2578, %v3677, 0
    %v3695 = vsel %vm2578, %v3678, 0
    %v3698 = vsel %vm2578, %v3679, 0
    %v3701 = vsel %vm2578, %v3680, 0
    %v3704 = vsel %vm2578, %v3681, 0
    %v3707 = vsel %vm2578, %v3682, 0
    %v3710 = vsel %vm2578, %v3683, 0
    %v3713 = vsel %vm2578, %v3684, 0
    %v3716 = vsel %vm2578, %v3685, 0
    %v3718 = vsel %vm2578, %v1817, 0
    %v3720 = vsel %vm2578, %v1818, 0
    %3722 = vmatprep.subr.mxu0 0.0
    %3723 = vmatpush1.msra.mxu0 0.0
    %3724 = vmatprep.subr.mxu0 0.0
    %3725 = vmatpush1.msra.mxu0 0.0
    %3726 = vmatprep.subr.mxu0 0.0
    %3727 = vmatpush1.msra.mxu0 0.0
    %3728 = vmatprep.subr.mxu0 0.0
    %3729 = vmatpush1.msra.mxu0 0.0
    %3730 = vmatprep.subr.mxu0 0.0
    %3731 = vmatpush1.msra.mxu0 0.0
    %3732 = vmatprep.subr.mxu0 0.0
    %3733 = vmatpush1.msra.mxu0 0.0
    %3734 = vmatprep.subr.mxu0 0.0
    %3735 = vmatpush1.msra.mxu0 0.0
    %3736 = vmatprep.subr.mxu0 0.0
    %3737 = vmatpush1.msra.mxu0 0.0
    %3738 = vmatprep.subr.mxu0 0.0
    %3739 = vmatpush1.msra.mxu0 0.0
    %3740 = vmatprep.subr.mxu0 0.0
    %3741 = vmatpush1.msra.mxu0 0.0
    %3742 = vmatprep.subr.mxu0 0.0
    %3743 = vmatpush1.msra.mxu0 0.0
    %3744 = vmatprep.subr.mxu0 0.0
    %3745 = vmatpush1.msra.mxu0 0.0
    %3746 = vmatprep.subr.mxu0 0.0
    %3747 = vmatpush1.msra.mxu0 %v3690
    %3748 = vmatprep.subr.mxu0 0.0
    %3749 = vmatpush1.msra.mxu0 %v3689
    %3750 = vmatprep.subr.mxu0 0.0
    %3751 = vmatpush1.msra.mxu0 %v3688
    %3752 = vmatprep.subr.mxu0 0.0
    %3753 = vmatpush1.msra.mxu0 %v3687
    %3754 = vmatprep.subr.mxu0 0.0
    %3755 = vmatpush2.msra.mxu0 0.0
    %3756 = vmatprep.subr.mxu0 0.0
    %3757 = vmatpush2.msra.mxu0 0.0
    %3758 = vmatprep.subr.mxu0 0.0
    %3759 = vmatpush2.msra.mxu0 0.0
    %3760 = vmatprep.subr.mxu0 0.0
    %3761 = vmatpush2.msra.mxu0 0.0
    %3762 = vmatprep.subr.mxu0 0.0
    %3763 = vmatpush2.msra.mxu0 0.0
    %3764 = vmatprep.subr.mxu0 0.0
    %3765 = vmatpush2.msra.mxu0 0.0
    %3766 = vmatprep.subr.mxu0 0.0
    %3767 = vmatpush2.msra.mxu0 0.0
    %3768 = vmatprep.subr.mxu0 0.0
    %3769 = vmatpush2.msra.mxu0 0.0
    %3770 = vmatprep.subr.mxu0 0.0
    %3771 = vmatpush2.msra.mxu0 0.0
    %3772 = vmatprep.subr.mxu0 0.0
    %3773 = vmatpush2.msra.mxu0 0.0
    %3774 = vmatprep.subr.mxu0 0.0
    %3775 = vmatpush2.msra.mxu0 0.0
    %3776 = vmatprep.subr.mxu0 0.0
    %3777 = vmatpush2.msra.mxu0 0.0
    %3778 = vmatprep.subr.mxu0 0.0
    %3779 = vmatpush2.msra.mxu0 0.0
    %3780 = vmatprep.subr.mxu0 0.0
    %3781 = vmatpush2.msra.mxu0 0.0
    %3782 = vmatprep.subr.mxu0 0.0
    %3783 = vmatpush2.msra.mxu0 0.0
    %3784 = vmatprep.subr.mxu0 0.0
    %3785 = vmatpush2.msra.mxu0 0.0
    %3786 = vmatprep.mubr.f32.mxu0 0.0
    %3787 = vmatmul.mubr.f32.gmra.mxu0 %v3692
    %v3788 = vpop.f32.mrf.mxu0
    %v3789 = vadd.f32 0.0, %v3788
    %v3790 = vpop.f32.mrf.mxu0
    %3791 = vmatprep.mubr.f32.mxu0 0.0
    %3792 = vmatmul.mubr.f32.gmra.mxu0 %v3695
    %v3793 = vpop.f32.mrf.mxu0
    %v3794 = vadd.f32 0.0, %v3793
    %v3795 = vpop.f32.mrf.mxu0
    %3796 = vmatprep.mubr.f32.mxu0 0.0
    %3797 = vmatmul.mubr.f32.gmra.mxu0 %v3698
    %v3798 = vpop.f32.mrf.mxu0
    %v3799 = vadd.f32 0.0, %v3798
    %v3800 = vpop.f32.mrf.mxu0
    %3801 = vmatprep.mubr.f32.mxu0 0.0
    %3802 = vmatmul.mubr.f32.gmra.mxu0 %v3701
    %v3803 = vpop.f32.mrf.mxu0
    %v3804 = vadd.f32 0.0, %v3803
    %v3805 = vpop.f32.mrf.mxu0
    %3806 = vmatprep.mubr.f32.mxu0 0.0
    %3807 = vmatmul.mubr.f32.gmra.mxu0 %v3704
    %v3808 = vpop.f32.mrf.mxu0
    %v3809 = vadd.f32 0.0, %v3808
    %v3810 = vpop.f32.mrf.mxu0
    %3811 = vmatprep.mubr.f32.mxu0 0.0
    %3812 = vmatmul.mubr.f32.gmra.mxu0 %v3707
    %v3813 = vpop.f32.mrf.mxu0
    %v3814 = vadd.f32 0.0, %v3813
    %v3815 = vpop.f32.mrf.mxu0
    %3816 = vmatprep.mubr.f32.mxu0 0.0
    %3817 = vmatmul.mubr.f32.gmra.mxu0 %v3710
    %v3818 = vpop.f32.mrf.mxu0
    %v3819 = vadd.f32 0.0, %v3818
    %v3820 = vpop.f32.mrf.mxu0
    %3821 = vmatprep.mubr.f32.mxu0 0.0
    %3822 = vmatmul.mubr.f32.gmra.mxu0 %v3713
    %v3823 = vpop.f32.mrf.mxu0
    %v3824 = vadd.f32 0.0, %v3823
    %v3825 = vpop.f32.mrf.mxu0
    %3826 = vmatprep.mubr.f32.mxu0 0.0
    %3827 = vmatmul.mubr.f32.gmra.mxu0 %v3716
    %v3828 = vpop.f32.mrf.mxu0
    %v3829 = vadd.f32 0.0, %v3828
    %v3830 = vpop.f32.mrf.mxu0
    %3831 = vmatprep.mubr.f32.mxu0 0.0
    %3832 = vmatmul.mubr.f32.gmra.mxu0 %v3718
    %v3833 = vpop.f32.mrf.mxu0
    %v3834 = vadd.f32 0.0, %v3833
    %v3835 = vpop.f32.mrf.mxu0
    %3836 = vmatprep.mubr.f32.mxu0 0.0
    %3837 = vmatmul.mubr.f32.gmra.mxu0 %v3720
    %v3838 = vpop.f32.mrf.mxu0
    %v3839 = vadd.f32 0.0, %v3838
    %v3840 = vpop.f32.mrf.mxu0
    %3841 = vdwg.mxu0
    %v3842 = vadd.f32 %v3660, %v3789
    %v3843 = vadd.f32 %v3661, %v3794
    %v3844 = vadd.f32 %v3662, %v3799
    %v3845 = vadd.f32 %v3663, %v3804
    %v3846 = vadd.f32 %v3664, %v3809
    %v3847 = vadd.f32 %v3665, %v3814
    %v3848 = vadd.f32 %v3666, %v3819
    %v3849 = vadd.f32 %v3667, %v3824
    %v3850 = vadd.f32 %v3668, %v3829
    %v3851 = vadd.f32 %v3669, %v3834
    %v3852 = vadd.f32 %v3670, %v3839
    %v3853 = vsel %vm252, %v3110, 0.0
    %v3854 = vmul.f32 %v3094, %v2004
    %v3855 = vmul.f32 %v3096, %v2009
    %v3856 = vmul.f32 %v3098, %v2014
    %v3857 = vmul.f32 %v3100, %v2019
    %v3858 = vmul.f32 %v3102, %v2024
    %v3859 = vmul.f32 %v3104, %v2029
    %v3860 = vmul.f32 %v3106, %v2034
    %v3861 = vmul.f32 %v3108, %v2039
    %v3862 = vmul.f32 %v3853, %v2044
    %s3863 = scalar_lea.vmem [#allocation8], 224
    %v3864 = vld [vmem:[%s3863] sm:$0xff]
    %v3865 = vld [vmem:[%s3863 + $0x8] sm:$0xff]
    %v3866 = vld [vmem:[%s3863 + $0x10] sm:$0xff]
    %v3867 = vld [vmem:[%s3863 + $0x18] sm:$0xff]
    %v3869 = vsel %vm2578, %v3854, 0
    %v3872 = vsel %vm2578, %v3855, 0
    %v3875 = vsel %vm2578, %v3856, 0
    %v3878 = vsel %vm2578, %v3857, 0
    %v3881 = vsel %vm2578, %v3858, 0
    %v3884 = vsel %vm2578, %v3859, 0
    %v3887 = vsel %vm2578, %v3860, 0
    %v3890 = vsel %vm2578, %v3861, 0
    %v3893 = vsel %vm2578, %v3862, 0
    %v3895 = vsel %vm2578, %v2065, 0
    %v3897 = vsel %vm2578, %v2066, 0
    %3899 = vmatprep.subr.mxu0 0.0
    %3900 = vmatpush1.msra.mxu0 0.0
    %3901 = vmatprep.subr.mxu0 0.0
    %3902 = vmatpush1.msra.mxu0 0.0
    %3903 = vmatprep.subr.mxu0 0.0
    %3904 = vmatpush1.msra.mxu0 0.0
    %3905 = vmatprep.subr.mxu0 0.0
    %3906 = vmatpush1.msra.mxu0 0.0
    %3907 = vmatprep.subr.mxu0 0.0
    %3908 = vmatpush1.msra.mxu0 0.0
    %3909 = vmatprep.subr.mxu0 0.0
    %3910 = vmatpush1.msra.mxu0 0.0
    %3911 = vmatprep.subr.mxu0 0.0
    %3912 = vmatpush1.msra.mxu0 0.0
    %3913 = vmatprep.subr.mxu0 0.0
    %3914 = vmatpush1.msra.mxu0 0.0
    %3915 = vmatprep.subr.mxu0 0.0
    %3916 = vmatpush1.msra.mxu0 0.0
    %3917 = vmatprep.subr.mxu0 0.0
    %3918 = vmatpush1.msra.mxu0 0.0
    %3919 = vmatprep.subr.mxu0 0.0
    %3920 = vmatpush1.msra.mxu0 0.0
    %3921 = vmatprep.subr.mxu0 0.0
    %3922 = vmatpush1.msra.mxu0 0.0
    %3923 = vmatprep.subr.mxu0 0.0
    %3924 = vmatpush1.msra.mxu0 %v3867
    %3925 = vmatprep.subr.mxu0 0.0
    %3926 = vmatpush1.msra.mxu0 %v3866
    %3927 = vmatprep.subr.mxu0 0.0
    %3928 = vmatpush1.msra.mxu0 %v3865
    %3929 = vmatprep.subr.mxu0 0.0
    %3930 = vmatpush1.msra.mxu0 %v3864
    %3931 = vmatprep.subr.mxu0 0.0
    %3932 = vmatpush2.msra.mxu0 0.0
    %3933 = vmatprep.subr.mxu0 0.0
    %3934 = vmatpush2.msra.mxu0 0.0
    %3935 = vmatprep.subr.mxu0 0.0
    %3936 = vmatpush2.msra.mxu0 0.0
    %3937 = vmatprep.subr.mxu0 0.0
    %3938 = vmatpush2.msra.mxu0 0.0
    %3939 = vmatprep.subr.mxu0 0.0
    %3940 = vmatpush2.msra.mxu0 0.0
    %3941 = vmatprep.subr.mxu0 0.0
    %3942 = vmatpush2.msra.mxu0 0.0
    %3943 = vmatprep.subr.mxu0 0.0
    %3944 = vmatpush2.msra.mxu0 0.0
    %3945 = vmatprep.subr.mxu0 0.0
    %3946 = vmatpush2.msra.mxu0 0.0
    %3947 = vmatprep.subr.mxu0 0.0
    %3948 = vmatpush2.msra.mxu0 0.0
    %3949 = vmatprep.subr.mxu0 0.0
    %3950 = vmatpush2.msra.mxu0 0.0
    %3951 = vmatprep.subr.mxu0 0.0
    %3952 = vmatpush2.msra.mxu0 0.0
    %3953 = vmatprep.subr.mxu0 0.0
    %3954 = vmatpush2.msra.mxu0 0.0
    %3955 = vmatprep.subr.mxu0 0.0
    %3956 = vmatpush2.msra.mxu0 0.0
    %3957 = vmatprep.subr.mxu0 0.0
    %3958 = vmatpush2.msra.mxu0 0.0
    %3959 = vmatprep.subr.mxu0 0.0
    %3960 = vmatpush2.msra.mxu0 0.0
    %3961 = vmatprep.subr.mxu0 0.0
    %3962 = vmatpush2.msra.mxu0 0.0
    %3963 = vmatprep.mubr.f32.mxu0 0.0
    %3964 = vmatmul.mubr.f32.gmra.mxu0 %v3869
    %v3965 = vpop.f32.mrf.mxu0
    %v3966 = vadd.f32 0.0, %v3965
    %v3967 = vpop.f32.mrf.mxu0
    %3968 = vmatprep.mubr.f32.mxu0 0.0
    %3969 = vmatmul.mubr.f32.gmra.mxu0 %v3872
    %v3970 = vpop.f32.mrf.mxu0
    %v3971 = vadd.f32 0.0, %v3970
    %v3972 = vpop.f32.mrf.mxu0
    %3973 = vmatprep.mubr.f32.mxu0 0.0
    %3974 = vmatmul.mubr.f32.gmra.mxu0 %v3875
    %v3975 = vpop.f32.mrf.mxu0
    %v3976 = vadd.f32 0.0, %v3975
    %v3977 = vpop.f32.mrf.mxu0
    %3978 = vmatprep.mubr.f32.mxu0 0.0
    %3979 = vmatmul.mubr.f32.gmra.mxu0 %v3878
    %v3980 = vpop.f32.mrf.mxu0
    %v3981 = vadd.f32 0.0, %v3980
    %v3982 = vpop.f32.mrf.mxu0
    %3983 = vmatprep.mubr.f32.mxu0 0.0
    %3984 = vmatmul.mubr.f32.gmra.mxu0 %v3881
    %v3985 = vpop.f32.mrf.mxu0
    %v3986 = vadd.f32 0.0, %v3985
    %v3987 = vpop.f32.mrf.mxu0
    %3988 = vmatprep.mubr.f32.mxu0 0.0
    %3989 = vmatmul.mubr.f32.gmra.mxu0 %v3884
    %v3990 = vpop.f32.mrf.mxu0
    %v3991 = vadd.f32 0.0, %v3990
    %v3992 = vpop.f32.mrf.mxu0
    %3993 = vmatprep.mubr.f32.mxu0 0.0
    %3994 = vmatmul.mubr.f32.gmra.mxu0 %v3887
    %v3995 = vpop.f32.mrf.mxu0
    %v3996 = vadd.f32 0.0, %v3995
    %v3997 = vpop.f32.mrf.mxu0
    %3998 = vmatprep.mubr.f32.mxu0 0.0
    %3999 = vmatmul.mubr.f32.gmra.mxu0 %v3890
    %v4000 = vpop.f32.mrf.mxu0
    %v4001 = vadd.f32 0.0, %v4000
    %v4002 = vpop.f32.mrf.mxu0
    %4003 = vmatprep.mubr.f32.mxu0 0.0
    %4004 = vmatmul.mubr.f32.gmra.mxu0 %v3893
    %v4005 = vpop.f32.mrf.mxu0
    %v4006 = vadd.f32 0.0, %v4005
    %v4007 = vpop.f32.mrf.mxu0
    %4008 = vmatprep.mubr.f32.mxu0 0.0
    %4009 = vmatmul.mubr.f32.gmra.mxu0 %v3895
    %v4010 = vpop.f32.mrf.mxu0
    %v4011 = vadd.f32 0.0, %v4010
    %v4012 = vpop.f32.mrf.mxu0
    %4013 = vmatprep.mubr.f32.mxu0 0.0
    %4014 = vmatmul.mubr.f32.gmra.mxu0 %v3897
    %v4015 = vpop.f32.mrf.mxu0
    %v4016 = vadd.f32 0.0, %v4015
    %v4017 = vpop.f32.mrf.mxu0
    %4018 = vdwg.mxu0
    %v4019 = vadd.f32 %v3842, %v3966
    %v4020 = vadd.f32 %v3843, %v3971
    %v4021 = vadd.f32 %v3844, %v3976
    %v4022 = vadd.f32 %v3845, %v3981
    %v4023 = vadd.f32 %v3846, %v3986
    %v4024 = vadd.f32 %v3847, %v3991
    %v4025 = vadd.f32 %v3848, %v3996
    %v4026 = vadd.f32 %v3849, %v4001
    %v4027 = vadd.f32 %v3850, %v4006
    %v4028 = vadd.f32 %v3851, %v4011
    %v4029 = vadd.f32 %v3852, %v4016
    %v4030 = vsel %vm675, %v2512, 0.0
    %v4031 = vmul.f32 %v2504, %v2252
    %v4032 = vmul.f32 %v2505, %v2257
    %v4033 = vmul.f32 %v2506, %v2262
    %v4034 = vmul.f32 %v2507, %v2267
    %v4035 = vmul.f32 %v2508, %v2272
    %v4036 = vmul.f32 %v2509, %v2277
    %v4037 = vmul.f32 %v2510, %v2282
    %v4038 = vmul.f32 %v2511, %v2287
    %v4039 = vmul.f32 %v4030, %v2292
    %s4040 = scalar_lea.vmem [#allocation8], 256
    %v4041 = vld [vmem:[%s4040] sm:$0xff]
    %v4042 = vld [vmem:[%s4040 + $0x8] sm:$0xff]
    %v4043 = vld [vmem:[%s4040 + $0x10] sm:$0xff]
    %v4044 = vld [vmem:[%s4040 + $0x18] sm:$0xff]
    %v4046 = vsel %vm2578, %v4031, 0
    %v4049 = vsel %vm2578, %v4032, 0
    %v4052 = vsel %vm2578, %v4033, 0
    %v4055 = vsel %vm2578, %v4034, 0
    %v4058 = vsel %vm2578, %v4035, 0
    %v4061 = vsel %vm2578, %v4036, 0
    %v4064 = vsel %vm2578, %v4037, 0
    %v4067 = vsel %vm2578, %v4038, 0
    %v4070 = vsel %vm2578, %v4039, 0
    %v4072 = vsel %vm2578, %v2313, 0
    %v4074 = vsel %vm2578, %v2314, 0
    %4076 = vmatprep.subr.mxu0 0.0
    %4077 = vmatpush1.msra.mxu0 0.0
    %4078 = vmatprep.subr.mxu0 0.0
    %4079 = vmatpush1.msra.mxu0 0.0
    %4080 = vmatprep.subr.mxu0 0.0
    %4081 = vmatpush1.msra.mxu0 0.0
    %4082 = vmatprep.subr.mxu0 0.0
    %4083 = vmatpush1.msra.mxu0 0.0
    %4084 = vmatprep.subr.mxu0 0.0
    %4085 = vmatpush1.msra.mxu0 0.0
    %4086 = vmatprep.subr.mxu0 0.0
    %4087 = vmatpush1.msra.mxu0 0.0
    %4088 = vmatprep.subr.mxu0 0.0
    %4089 = vmatpush1.msra.mxu0 0.0
    %4090 = vmatprep.subr.mxu0 0.0
    %4091 = vmatpush1.msra.mxu0 0.0
    %4092 = vmatprep.subr.mxu0 0.0
    %4093 = vmatpush1.msra.mxu0 0.0
    %4094 = vmatprep.subr.mxu0 0.0
    %4095 = vmatpush1.msra.mxu0 0.0
    %4096 = vmatprep.subr.mxu0 0.0
    %4097 = vmatpush1.msra.mxu0 0.0
    %4098 = vmatprep.subr.mxu0 0.0
    %4099 = vmatpush1.msra.mxu0 0.0
    %4100 = vmatprep.subr.mxu0 0.0
    %4101 = vmatpush1.msra.mxu0 %v4044
    %4102 = vmatprep.subr.mxu0 0.0
    %4103 = vmatpush1.msra.mxu0 %v4043
    %4104 = vmatprep.subr.mxu0 0.0
    %4105 = vmatpush1.msra.mxu0 %v4042
    %4106 = vmatprep.subr.mxu0 0.0
    %4107 = vmatpush1.msra.mxu0 %v4041
    %4108 = vmatprep.subr.mxu0 0.0
    %4109 = vmatpush2.msra.mxu0 0.0
    %4110 = vmatprep.subr.mxu0 0.0
    %4111 = vmatpush2.msra.mxu0 0.0
    %4112 = vmatprep.subr.mxu0 0.0
    %4113 = vmatpush2.msra.mxu0 0.0
    %4114 = vmatprep.subr.mxu0 0.0
    %4115 = vmatpush2.msra.mxu0 0.0
    %4116 = vmatprep.subr.mxu0 0.0
    %4117 = vmatpush2.msra.mxu0 0.0
    %4118 = vmatprep.subr.mxu0 0.0
    %4119 = vmatpush2.msra.mxu0 0.0
    %4120 = vmatprep.subr.mxu0 0.0
    %4121 = vmatpush2.msra.mxu0 0.0
    %4122 = vmatprep.subr.mxu0 0.0
    %4123 = vmatpush2.msra.mxu0 0.0
    %4124 = vmatprep.subr.mxu0 0.0
    %4125 = vmatpush2.msra.mxu0 0.0
    %4126 = vmatprep.subr.mxu0 0.0
    %4127 = vmatpush2.msra.mxu0 0.0
    %4128 = vmatprep.subr.mxu0 0.0
    %4129 = vmatpush2.msra.mxu0 0.0
    %4130 = vmatprep.subr.mxu0 0.0
    %4131 = vmatpush2.msra.mxu0 0.0
    %4132 = vmatprep.subr.mxu0 0.0
    %4133 = vmatpush2.msra.mxu0 0.0
    %4134 = vmatprep.subr.mxu0 0.0
    %4135 = vmatpush2.msra.mxu0 0.0
    %4136 = vmatprep.subr.mxu0 0.0
    %4137 = vmatpush2.msra.mxu0 0.0
    %4138 = vmatprep.subr.mxu0 0.0
    %4139 = vmatpush2.msra.mxu0 0.0
    %4140 = vmatprep.mubr.f32.mxu0 0.0
    %4141 = vmatmul.mubr.f32.gmra.mxu0 %v4046
    %v4142 = vpop.f32.mrf.mxu0
    %v4143 = vadd.f32 0.0, %v4142
    %v4144 = vpop.f32.mrf.mxu0
    %4145 = vmatprep.mubr.f32.mxu0 0.0
    %4146 = vmatmul.mubr.f32.gmra.mxu0 %v4049
    %v4147 = vpop.f32.mrf.mxu0
    %v4148 = vadd.f32 0.0, %v4147
    %v4149 = vpop.f32.mrf.mxu0
    %4150 = vmatprep.mubr.f32.mxu0 0.0
    %4151 = vmatmul.mubr.f32.gmra.mxu0 %v4052
    %v4152 = vpop.f32.mrf.mxu0
    %v4153 = vadd.f32 0.0, %v4152
    %v4154 = vpop.f32.mrf.mxu0
    %4155 = vmatprep.mubr.f32.mxu0 0.0
    %4156 = vmatmul.mubr.f32.gmra.mxu0 %v4055
    %v4157 = vpop.f32.mrf.mxu0
    %v4158 = vadd.f32 0.0, %v4157
    %v4159 = vpop.f32.mrf.mxu0
    %4160 = vmatprep.mubr.f32.mxu0 0.0
    %4161 = vmatmul.mubr.f32.gmra.mxu0 %v4058
    %v4162 = vpop.f32.mrf.mxu0
    %v4163 = vadd.f32 0.0, %v4162
    %v4164 = vpop.f32.mrf.mxu0
    %4165 = vmatprep.mubr.f32.mxu0 0.0
    %4166 = vmatmul.mubr.f32.gmra.mxu0 %v4061
    %v4167 = vpop.f32.mrf.mxu0
    %v4168 = vadd.f32 0.0, %v4167
    %v4169 = vpop.f32.mrf.mxu0
    %4170 = vmatprep.mubr.f32.mxu0 0.0
    %4171 = vmatmul.mubr.f32.gmra.mxu0 %v4064
    %v4172 = vpop.f32.mrf.mxu0
    %v4173 = vadd.f32 0.0, %v4172
    %v4174 = vpop.f32.mrf.mxu0
    %4175 = vmatprep.mubr.f32.mxu0 0.0
    %4176 = vmatmul.mubr.f32.gmra.mxu0 %v4067
    %v4177 = vpop.f32.mrf.mxu0
    %v4178 = vadd.f32 0.0, %v4177
    %v4179 = vpop.f32.mrf.mxu0
    %4180 = vmatprep.mubr.f32.mxu0 0.0
    %4181 = vmatmul.mubr.f32.gmra.mxu0 %v4070
    %v4182 = vpop.f32.mrf.mxu0
    %v4183 = vadd.f32 0.0, %v4182
    %v4184 = vpop.f32.mrf.mxu0
    %4185 = vmatprep.mubr.f32.mxu0 0.0
    %4186 = vmatmul.mubr.f32.gmra.mxu0 %v4072
    %v4187 = vpop.f32.mrf.mxu0
    %v4188 = vadd.f32 0.0, %v4187
    %v4189 = vpop.f32.mrf.mxu0
    %4190 = vmatprep.mubr.f32.mxu0 0.0
    %4191 = vmatmul.mubr.f32.gmra.mxu0 %v4074
    %v4192 = vpop.f32.mrf.mxu0
    %v4193 = vadd.f32 0.0, %v4192
    %v4194 = vpop.f32.mrf.mxu0
    %4195 = vdwg.mxu0
    %v4196 = vadd.f32 %v4019, %v4143
    %v4197 = vadd.f32 %v4020, %v4148
    %v4198 = vadd.f32 %v4021, %v4153
    %v4199 = vadd.f32 %v4022, %v4158
    %v4200 = vadd.f32 %v4023, %v4163
    %v4201 = vadd.f32 %v4024, %v4168
    %v4202 = vadd.f32 %v4025, %v4173
    %v4203 = vadd.f32 %v4026, %v4178
    %v4204 = vadd.f32 %v4027, %v4183
    %v4205 = vadd.f32 %v4028, %v4188
    %v4206 = vadd.f32 %v4029, %v4193
    %v4207 = vld [vmem:[#allocation10] sm:$0x1]
    %v4209 = vlaneseq
    %v4210 = vshrl.u32 %v4209, 7
    %v4211 = vsub.s32 0, %v4210
    %v4212 = vrot.slane %v4207, %v4211
    %v4214 = vadd.f32 %v4196, %v4212
    %v4215 = vadd.f32 %v4197, %v4212
    %v4216 = vadd.f32 %v4198, %v4212
    %v4217 = vadd.f32 %v4199, %v4212
    %v4218 = vadd.f32 %v4200, %v4212
    %v4219 = vadd.f32 %v4201, %v4212
    %v4220 = vadd.f32 %v4202, %v4212
    %v4221 = vadd.f32 %v4203, %v4212
    %v4222 = vadd.f32 %v4204, %v4212
    %v4223 = vadd.f32 %v4205, %v4212
    %v4224 = vadd.f32 %v4206, %v4212
    %v4225 = vmax.f32 %v4214, 0.0
    %v4226 = vmax.f32 %v4215, 0.0
    %v4227 = vmax.f32 %v4216, 0.0
    %v4228 = vmax.f32 %v4217, 0.0
    %v4229 = vmax.f32 %v4218, 0.0
    %v4230 = vmax.f32 %v4219, 0.0
    %v4231 = vmax.f32 %v4220, 0.0
    %v4232 = vmax.f32 %v4221, 0.0
    %v4233 = vmax.f32 %v4222, 0.0
    %v4234 = vmax.f32 %v4223, 0.0
    %v4235 = vmax.f32 %v4224, 0.0
    %v4236 = vld [vmem:[#allocation11] sm:$0xff]
    %v4237 = vld [vmem:[#allocation11 + $0x8] sm:$0xff]
    %v4238 = vld [vmem:[#allocation11 + $0x10] sm:$0xff]
    %v4239 = vld [vmem:[#allocation11 + $0x18] sm:$0xff]
    %v4240 = vld [vmem:[#allocation11 + $0x20] sm:$0xff]
    %v4241 = vld [vmem:[#allocation11 + $0x28] sm:$0xff]
    %v4242 = vld [vmem:[#allocation11 + $0x30] sm:$0xff]
    %v4243 = vld [vmem:[#allocation11 + $0x38] sm:$0xff]
    %s4244 = scalar_lea.vmem [#allocation11], 64
    %v4245 = vld [vmem:[%s4244] sm:$0xff]
    %v4246 = vld [vmem:[%s4244 + $0x8] sm:$0xff]
    %v4247 = vld [vmem:[%s4244 + $0x10] sm:$0xff]
    %v4248 = vld [vmem:[%s4244 + $0x18] sm:$0xff]
    %v4249 = vld [vmem:[%s4244 + $0x20] sm:$0xff]
    %v4250 = vld [vmem:[%s4244 + $0x28] sm:$0xff]
    %v4251 = vld [vmem:[%s4244 + $0x30] sm:$0xff]
    %v4252 = vld [vmem:[%s4244 + $0x38] sm:$0xff]
    %v4254 = vrot.slane %v4225, 2
    %vm4255 = vcmask 523264
    %v4256 = vsel %vm4255, %v4254, 0
    %4258 = vmatprep.subr.mxu0 0.0
    %4259 = vmatpush1.msra.mxu0 0.0
    %4260 = vmatprep.subr.mxu0 0.0
    %4261 = vmatpush1.msra.mxu0 0.0
    %4262 = vmatprep.subr.mxu0 0.0
    %4263 = vmatpush1.msra.mxu0 0.0
    %4264 = vmatprep.subr.mxu0 0.0
    %4265 = vmatpush1.msra.mxu0 0.0
    %4266 = vmatprep.subr.mxu0 0.0
    %4267 = vmatpush1.msra.mxu0 0.0
    %4268 = vmatprep.subr.mxu0 0.0
    %4269 = vmatpush1.msra.mxu0 0.0
    %4270 = vmatprep.subr.mxu0 0.0
    %4271 = vmatpush1.msra.mxu0 0.0
    %4272 = vmatprep.subr.mxu0 0.0
    %4273 = vmatpush1.msra.mxu0 0.0
    %4274 = vmatprep.subr.mxu0 0.0
    %4275 = vmatpush1.msra.mxu0 %v4252
    %4276 = vmatprep.subr.mxu0 0.0
    %4277 = vmatpush1.msra.mxu0 %v4251
    %4278 = vmatprep.subr.mxu0 0.0
    %4279 = vmatpush1.msra.mxu0 %v4250
    %4280 = vmatprep.subr.mxu0 0.0
    %4281 = vmatpush1.msra.mxu0 %v4249
    %4282 = vmatprep.subr.mxu0 0.0
    %4283 = vmatpush1.msra.mxu0 %v4248
    %4284 = vmatprep.subr.mxu0 0.0
    %4285 = vmatpush1.msra.mxu0 %v4247
    %4286 = vmatprep.subr.mxu0 0.0
    %4287 = vmatpush1.msra.mxu0 %v4246
    %4288 = vmatprep.subr.mxu0 0.0
    %4289 = vmatpush1.msra.mxu0 %v4245
    %4290 = vmatprep.subr.mxu0 0.0
    %4291 = vmatpush2.msra.mxu0 0.0
    %4292 = vmatprep.subr.mxu0 0.0
    %4293 = vmatpush2.msra.mxu0 0.0
    %4294 = vmatprep.subr.mxu0 0.0
    %4295 = vmatpush2.msra.mxu0 0.0
    %4296 = vmatprep.subr.mxu0 0.0
    %4297 = vmatpush2.msra.mxu0 0.0
    %4298 = vmatprep.subr.mxu0 0.0
    %4299 = vmatpush2.msra.mxu0 0.0
    %4300 = vmatprep.subr.mxu0 0.0
    %4301 = vmatpush2.msra.mxu0 0.0
    %4302 = vmatprep.subr.mxu0 0.0
    %4303 = vmatpush2.msra.mxu0 0.0
    %4304 = vmatprep.subr.mxu0 0.0
    %4305 = vmatpush2.msra.mxu0 0.0
    %4306 = vmatprep.subr.mxu0 0.0
    %4307 = vmatpush2.msra.mxu0 0.0
    %4308 = vmatprep.subr.mxu0 0.0
    %4309 = vmatpush2.msra.mxu0 0.0
    %4310 = vmatprep.subr.mxu0 0.0
    %4311 = vmatpush2.msra.mxu0 0.0
    %4312 = vmatprep.subr.mxu0 0.0
    %4313 = vmatpush2.msra.mxu0 0.0
    %4314 = vmatprep.subr.mxu0 0.0
    %4315 = vmatpush2.msra.mxu0 0.0
    %4316 = vmatprep.subr.mxu0 0.0
    %4317 = vmatpush2.msra.mxu0 0.0
    %4318 = vmatprep.subr.mxu0 0.0
    %4319 = vmatpush2.msra.mxu0 0.0
    %4320 = vmatprep.subr.mxu0 0.0
    %4321 = vmatpush2.msra.mxu0 0.0
    %4322 = vmatprep.mubr.f32.mxu0 0.0
    %4323 = vmatmul.mubr.f32.gmra.mxu0 %v4256
    %v4324 = vpop.f32.mrf.mxu0
    %v4325 = vadd.f32 0.0, %v4324
    %v4326 = vpop.f32.mrf.mxu0
    %4327 = vdwg.mxu0
    %v4328 = vsel %vm4255, %v4225, 0
    %4330 = vmatprep.subr.mxu0 0.0
    %4331 = vmatpush1.msra.mxu0 0.0
    %4332 = vmatprep.subr.mxu0 0.0
    %4333 = vmatpush1.msra.mxu0 0.0
    %4334 = vmatprep.subr.mxu0 0.0
    %4335 = vmatpush1.msra.mxu0 0.0
    %4336 = vmatprep.subr.mxu0 0.0
    %4337 = vmatpush1.msra.mxu0 0.0
    %4338 = vmatprep.subr.mxu0 0.0
    %4339 = vmatpush1.msra.mxu0 0.0
    %4340 = vmatprep.subr.mxu0 0.0
    %4341 = vmatpush1.msra.mxu0 0.0
    %4342 = vmatprep.subr.mxu0 0.0
    %4343 = vmatpush1.msra.mxu0 0.0
    %4344 = vmatprep.subr.mxu0 0.0
    %4345 = vmatpush1.msra.mxu0 0.0
    %4346 = vmatprep.subr.mxu0 0.0
    %4347 = vmatpush1.msra.mxu0 %v4243
    %4348 = vmatprep.subr.mxu0 0.0
    %4349 = vmatpush1.msra.mxu0 %v4242
    %4350 = vmatprep.subr.mxu0 0.0
    %4351 = vmatpush1.msra.mxu0 %v4241
    %4352 = vmatprep.subr.mxu0 0.0
    %4353 = vmatpush1.msra.mxu0 %v4240
    %4354 = vmatprep.subr.mxu0 0.0
    %4355 = vmatpush1.msra.mxu0 %v4239
    %4356 = vmatprep.subr.mxu0 0.0
    %4357 = vmatpush1.msra.mxu0 %v4238
    %4358 = vmatprep.subr.mxu0 0.0
    %4359 = vmatpush1.msra.mxu0 %v4237
    %4360 = vmatprep.subr.mxu0 0.0
    %4361 = vmatpush1.msra.mxu0 %v4236
    %4362 = vmatprep.subr.mxu0 0.0
    %4363 = vmatpush2.msra.mxu0 0.0
    %4364 = vmatprep.subr.mxu0 0.0
    %4365 = vmatpush2.msra.mxu0 0.0
    %4366 = vmatprep.subr.mxu0 0.0
    %4367 = vmatpush2.msra.mxu0 0.0
    %4368 = vmatprep.subr.mxu0 0.0
    %4369 = vmatpush2.msra.mxu0 0.0
    %4370 = vmatprep.subr.mxu0 0.0
    %4371 = vmatpush2.msra.mxu0 0.0
    %4372 = vmatprep.subr.mxu0 0.0
    %4373 = vmatpush2.msra.mxu0 0.0
    %4374 = vmatprep.subr.mxu0 0.0
    %4375 = vmatpush2.msra.mxu0 0.0
    %4376 = vmatprep.subr.mxu0 0.0
    %4377 = vmatpush2.msra.mxu0 0.0
    %4378 = vmatprep.subr.mxu0 0.0
    %4379 = vmatpush2.msra.mxu0 0.0
    %4380 = vmatprep.subr.mxu0 0.0
    %4381 = vmatpush2.msra.mxu0 0.0
    %4382 = vmatprep.subr.mxu0 0.0
    %4383 = vmatpush2.msra.mxu0 0.0
    %4384 = vmatprep.subr.mxu0 0.0
    %4385 = vmatpush2.msra.mxu0 0.0
    %4386 = vmatprep.subr.mxu0 0.0
    %4387 = vmatpush2.msra.mxu0 0.0
    %4388 = vmatprep.subr.mxu0 0.0
    %4389 = vmatpush2.msra.mxu0 0.0
    %4390 = vmatprep.subr.mxu0 0.0
    %4391 = vmatpush2.msra.mxu0 0.0
    %4392 = vmatprep.subr.mxu0 0.0
    %4393 = vmatpush2.msra.mxu0 0.0
    %4394 = vmatprep.mubr.f32.mxu0 0.0
    %4395 = vmatmul.mubr.f32.gmra.mxu0 %v4328
    %v4396 = vpop.f32.mrf.mxu0
    %v4397 = vadd.f32 %v4325, %v4396
    %v4398 = vpop.f32.mrf.mxu0
    %4399 = vdwg.mxu0
    %s4400 = scalar_lea.vmem [#allocation11], 128
    %v4401 = vld [vmem:[%s4400] sm:$0xff]
    %v4402 = vld [vmem:[%s4400 + $0x8] sm:$0xff]
    %v4403 = vld [vmem:[%s4400 + $0x10] sm:$0xff]
    %v4404 = vld [vmem:[%s4400 + $0x18] sm:$0xff]
    %v4405 = vld [vmem:[%s4400 + $0x20] sm:$0xff]
    %v4406 = vld [vmem:[%s4400 + $0x28] sm:$0xff]
    %v4407 = vld [vmem:[%s4400 + $0x30] sm:$0xff]
    %v4408 = vld [vmem:[%s4400 + $0x38] sm:$0xff]
    %v4409 = vrot.slane %v4225, 4
    %v4410 = vsel %vm4255, %v4409, 0
    %4412 = vmatprep.subr.mxu0 0.0
    %4413 = vmatpush1.msra.mxu0 0.0
    %4414 = vmatprep.subr.mxu0 0.0
    %4415 = vmatpush1.msra.mxu0 0.0
    %4416 = vmatprep.subr.mxu0 0.0
    %4417 = vmatpush1.msra.mxu0 0.0
    %4418 = vmatprep.subr.mxu0 0.0
    %4419 = vmatpush1.msra.mxu0 0.0
    %4420 = vmatprep.subr.mxu0 0.0
    %4421 = vmatpush1.msra.mxu0 0.0
    %4422 = vmatprep.subr.mxu0 0.0
    %4423 = vmatpush1.msra.mxu0 0.0
    %4424 = vmatprep.subr.mxu0 0.0
    %4425 = vmatpush1.msra.mxu0 0.0
    %4426 = vmatprep.subr.mxu0 0.0
    %4427 = vmatpush1.msra.mxu0 0.0
    %4428 = vmatprep.subr.mxu0 0.0
    %4429 = vmatpush1.msra.mxu0 %v4408
    %4430 = vmatprep.subr.mxu0 0.0
    %4431 = vmatpush1.msra.mxu0 %v4407
    %4432 = vmatprep.subr.mxu0 0.0
    %4433 = vmatpush1.msra.mxu0 %v4406
    %4434 = vmatprep.subr.mxu0 0.0
    %4435 = vmatpush1.msra.mxu0 %v4405
    %4436 = vmatprep.subr.mxu0 0.0
    %4437 = vmatpush1.msra.mxu0 %v4404
    %4438 = vmatprep.subr.mxu0 0.0
    %4439 = vmatpush1.msra.mxu0 %v4403
    %4440 = vmatprep.subr.mxu0 0.0
    %4441 = vmatpush1.msra.mxu0 %v4402
    %4442 = vmatprep.subr.mxu0 0.0
    %4443 = vmatpush1.msra.mxu0 %v4401
    %4444 = vmatprep.subr.mxu0 0.0
    %4445 = vmatpush2.msra.mxu0 0.0
    %4446 = vmatprep.subr.mxu0 0.0
    %4447 = vmatpush2.msra.mxu0 0.0
    %4448 = vmatprep.subr.mxu0 0.0
    %4449 = vmatpush2.msra.mxu0 0.0
    %4450 = vmatprep.subr.mxu0 0.0
    %4451 = vmatpush2.msra.mxu0 0.0
    %4452 = vmatprep.subr.mxu0 0.0
    %4453 = vmatpush2.msra.mxu0 0.0
    %4454 = vmatprep.subr.mxu0 0.0
    %4455 = vmatpush2.msra.mxu0 0.0
    %4456 = vmatprep.subr.mxu0 0.0
    %4457 = vmatpush2.msra.mxu0 0.0
    %4458 = vmatprep.subr.mxu0 0.0
    %4459 = vmatpush2.msra.mxu0 0.0
    %4460 = vmatprep.subr.mxu0 0.0
    %4461 = vmatpush2.msra.mxu0 0.0
    %4462 = vmatprep.subr.mxu0 0.0
    %4463 = vmatpush2.msra.mxu0 0.0
    %4464 = vmatprep.subr.mxu0 0.0
    %4465 = vmatpush2.msra.mxu0 0.0
    %4466 = vmatprep.subr.mxu0 0.0
    %4467 = vmatpush2.msra.mxu0 0.0
    %4468 = vmatprep.subr.mxu0 0.0
    %4469 = vmatpush2.msra.mxu0 0.0
    %4470 = vmatprep.subr.mxu0 0.0
    %4471 = vmatpush2.msra.mxu0 0.0
    %4472 = vmatprep.subr.mxu0 0.0
    %4473 = vmatpush2.msra.mxu0 0.0
    %4474 = vmatprep.subr.mxu0 0.0
    %4475 = vmatpush2.msra.mxu0 0.0
    %4476 = vmatprep.mubr.f32.mxu0 0.0
    %4477 = vmatmul.mubr.f32.gmra.mxu0 %v4410
    %v4478 = vpop.f32.mrf.mxu0
    %v4479 = vadd.f32 0.0, %v4478
    %v4480 = vpop.f32.mrf.mxu0
    %4481 = vdwg.mxu0
    %v4482 = vadd.f32 %v4397, %v4479
    %s4483 = scalar_lea.vmem [#allocation11], 192
    %v4484 = vld [vmem:[%s4483] sm:$0xff]
    %v4485 = vld [vmem:[%s4483 + $0x8] sm:$0xff]
    %v4486 = vld [vmem:[%s4483 + $0x10] sm:$0xff]
    %v4487 = vld [vmem:[%s4483 + $0x18] sm:$0xff]
    %v4488 = vld [vmem:[%s4483 + $0x20] sm:$0xff]
    %v4489 = vld [vmem:[%s4483 + $0x28] sm:$0xff]
    %v4490 = vld [vmem:[%s4483 + $0x30] sm:$0xff]
    %v4491 = vld [vmem:[%s4483 + $0x38] sm:$0xff]
    %v4492 = vrot.slane %v4225, 6
    %v4493 = vsel %vm4255, %v4492, 0
    %4495 = vmatprep.subr.mxu0 0.0
    %4496 = vmatpush1.msra.mxu0 0.0
    %4497 = vmatprep.subr.mxu0 0.0
    %4498 = vmatpush1.msra.mxu0 0.0
    %4499 = vmatprep.subr.mxu0 0.0
    %4500 = vmatpush1.msra.mxu0 0.0
    %4501 = vmatprep.subr.mxu0 0.0
    %4502 = vmatpush1.msra.mxu0 0.0
    %4503 = vmatprep.subr.mxu0 0.0
    %4504 = vmatpush1.msra.mxu0 0.0
    %4505 = vmatprep.subr.mxu0 0.0
    %4506 = vmatpush1.msra.mxu0 0.0
    %4507 = vmatprep.subr.mxu0 0.0
    %4508 = vmatpush1.msra.mxu0 0.0
    %4509 = vmatprep.subr.mxu0 0.0
    %4510 = vmatpush1.msra.mxu0 0.0
    %4511 = vmatprep.subr.mxu0 0.0
    %4512 = vmatpush1.msra.mxu0 %v4491
    %4513 = vmatprep.subr.mxu0 0.0
    %4514 = vmatpush1.msra.mxu0 %v4490
    %4515 = vmatprep.subr.mxu0 0.0
    %4516 = vmatpush1.msra.mxu0 %v4489
    %4517 = vmatprep.subr.mxu0 0.0
    %4518 = vmatpush1.msra.mxu0 %v4488
    %4519 = vmatprep.subr.mxu0 0.0
    %4520 = vmatpush1.msra.mxu0 %v4487
    %4521 = vmatprep.subr.mxu0 0.0
    %4522 = vmatpush1.msra.mxu0 %v4486
    %4523 = vmatprep.subr.mxu0 0.0
    %4524 = vmatpush1.msra.mxu0 %v4485
    %4525 = vmatprep.subr.mxu0 0.0
    %4526 = vmatpush1.msra.mxu0 %v4484
    %4527 = vmatprep.subr.mxu0 0.0
    %4528 = vmatpush2.msra.mxu0 0.0
    %4529 = vmatprep.subr.mxu0 0.0
    %4530 = vmatpush2.msra.mxu0 0.0
    %4531 = vmatprep.subr.mxu0 0.0
    %4532 = vmatpush2.msra.mxu0 0.0
    %4533 = vmatprep.subr.mxu0 0.0
    %4534 = vmatpush2.msra.mxu0 0.0
    %4535 = vmatprep.subr.mxu0 0.0
    %4536 = vmatpush2.msra.mxu0 0.0
    %4537 = vmatprep.subr.mxu0 0.0
    %4538 = vmatpush2.msra.mxu0 0.0
    %4539 = vmatprep.subr.mxu0 0.0
    %4540 = vmatpush2.msra.mxu0 0.0
    %4541 = vmatprep.subr.mxu0 0.0
    %4542 = vmatpush2.msra.mxu0 0.0
    %4543 = vmatprep.subr.mxu0 0.0
    %4544 = vmatpush2.msra.mxu0 0.0
    %4545 = vmatprep.subr.mxu0 0.0
    %4546 = vmatpush2.msra.mxu0 0.0
    %4547 = vmatprep.subr.mxu0 0.0
    %4548 = vmatpush2.msra.mxu0 0.0
    %4549 = vmatprep.subr.mxu0 0.0
    %4550 = vmatpush2.msra.mxu0 0.0
    %4551 = vmatprep.subr.mxu0 0.0
    %4552 = vmatpush2.msra.mxu0 0.0
    %4553 = vmatprep.subr.mxu0 0.0
    %4554 = vmatpush2.msra.mxu0 0.0
    %4555 = vmatprep.subr.mxu0 0.0
    %4556 = vmatpush2.msra.mxu0 0.0
    %4557 = vmatprep.subr.mxu0 0.0
    %4558 = vmatpush2.msra.mxu0 0.0
    %4559 = vmatprep.mubr.f32.mxu0 0.0
    %4560 = vmatmul.mubr.f32.gmra.mxu0 %v4493
    %v4561 = vpop.f32.mrf.mxu0
    %v4562 = vadd.f32 0.0, %v4561
    %v4563 = vpop.f32.mrf.mxu0
    %4564 = vdwg.mxu0
    %v4565 = vadd.f32 %v4482, %v4562
    %s4566 = scalar_lea.vmem [#allocation11], 256
    %v4567 = vld [vmem:[%s4566] sm:$0xff]
    %v4568 = vld [vmem:[%s4566 + $0x8] sm:$0xff]
    %v4569 = vld [vmem:[%s4566 + $0x10] sm:$0xff]
    %v4570 = vld [vmem:[%s4566 + $0x18] sm:$0xff]
    %v4571 = vld [vmem:[%s4566 + $0x20] sm:$0xff]
    %v4572 = vld [vmem:[%s4566 + $0x28] sm:$0xff]
    %v4573 = vld [vmem:[%s4566 + $0x30] sm:$0xff]
    %v4574 = vld [vmem:[%s4566 + $0x38] sm:$0xff]
    %v4576 = vsel %vm4255, %v4226, 0
    %4578 = vmatprep.subr.mxu0 0.0
    %4579 = vmatpush1.msra.mxu0 0.0
    %4580 = vmatprep.subr.mxu0 0.0
    %4581 = vmatpush1.msra.mxu0 0.0
    %4582 = vmatprep.subr.mxu0 0.0
    %4583 = vmatpush1.msra.mxu0 0.0
    %4584 = vmatprep.subr.mxu0 0.0
    %4585 = vmatpush1.msra.mxu0 0.0
    %4586 = vmatprep.subr.mxu0 0.0
    %4587 = vmatpush1.msra.mxu0 0.0
    %4588 = vmatprep.subr.mxu0 0.0
    %4589 = vmatpush1.msra.mxu0 0.0
    %4590 = vmatprep.subr.mxu0 0.0
    %4591 = vmatpush1.msra.mxu0 0.0
    %4592 = vmatprep.subr.mxu0 0.0
    %4593 = vmatpush1.msra.mxu0 0.0
    %4594 = vmatprep.subr.mxu0 0.0
    %4595 = vmatpush1.msra.mxu0 %v4574
    %4596 = vmatprep.subr.mxu0 0.0
    %4597 = vmatpush1.msra.mxu0 %v4573
    %4598 = vmatprep.subr.mxu0 0.0
    %4599 = vmatpush1.msra.mxu0 %v4572
    %4600 = vmatprep.subr.mxu0 0.0
    %4601 = vmatpush1.msra.mxu0 %v4571
    %4602 = vmatprep.subr.mxu0 0.0
    %4603 = vmatpush1.msra.mxu0 %v4570
    %4604 = vmatprep.subr.mxu0 0.0
    %4605 = vmatpush1.msra.mxu0 %v4569
    %4606 = vmatprep.subr.mxu0 0.0
    %4607 = vmatpush1.msra.mxu0 %v4568
    %4608 = vmatprep.subr.mxu0 0.0
    %4609 = vmatpush1.msra.mxu0 %v4567
    %4610 = vmatprep.subr.mxu0 0.0
    %4611 = vmatpush2.msra.mxu0 0.0
    %4612 = vmatprep.subr.mxu0 0.0
    %4613 = vmatpush2.msra.mxu0 0.0
    %4614 = vmatprep.subr.mxu0 0.0
    %4615 = vmatpush2.msra.mxu0 0.0
    %4616 = vmatprep.subr.mxu0 0.0
    %4617 = vmatpush2.msra.mxu0 0.0
    %4618 = vmatprep.subr.mxu0 0.0
    %4619 = vmatpush2.msra.mxu0 0.0
    %4620 = vmatprep.subr.mxu0 0.0
    %4621 = vmatpush2.msra.mxu0 0.0
    %4622 = vmatprep.subr.mxu0 0.0
    %4623 = vmatpush2.msra.mxu0 0.0
    %4624 = vmatprep.subr.mxu0 0.0
    %4625 = vmatpush2.msra.mxu0 0.0
    %4626 = vmatprep.subr.mxu0 0.0
    %4627 = vmatpush2.msra.mxu0 0.0
    %4628 = vmatprep.subr.mxu0 0.0
    %4629 = vmatpush2.msra.mxu0 0.0
    %4630 = vmatprep.subr.mxu0 0.0
    %4631 = vmatpush2.msra.mxu0 0.0
    %4632 = vmatprep.subr.mxu0 0.0
    %4633 = vmatpush2.msra.mxu0 0.0
    %4634 = vmatprep.subr.mxu0 0.0
    %4635 = vmatpush2.msra.mxu0 0.0
    %4636 = vmatprep.subr.mxu0 0.0
    %4637 = vmatpush2.msra.mxu0 0.0
    %4638 = vmatprep.subr.mxu0 0.0
    %4639 = vmatpush2.msra.mxu0 0.0
    %4640 = vmatprep.subr.mxu0 0.0
    %4641 = vmatpush2.msra.mxu0 0.0
    %4642 = vmatprep.mubr.f32.mxu0 0.0
    %4643 = vmatmul.mubr.f32.gmra.mxu0 %v4576
    %v4644 = vpop.f32.mrf.mxu0
    %v4645 = vadd.f32 0.0, %v4644
    %v4646 = vpop.f32.mrf.mxu0
    %4647 = vdwg.mxu0
    %v4648 = vadd.f32 %v4565, %v4645
    %s4649 = scalar_lea.vmem [#allocation11], 320
    %v4650 = vld [vmem:[%s4649] sm:$0xff]
    %v4651 = vld [vmem:[%s4649 + $0x8] sm:$0xff]
    %v4652 = vld [vmem:[%s4649 + $0x10] sm:$0xff]
    %v4653 = vld [vmem:[%s4649 + $0x18] sm:$0xff]
    %v4654 = vld [vmem:[%s4649 + $0x20] sm:$0xff]
    %v4655 = vld [vmem:[%s4649 + $0x28] sm:$0xff]
    %v4656 = vld [vmem:[%s4649 + $0x30] sm:$0xff]
    %v4657 = vld [vmem:[%s4649 + $0x38] sm:$0xff]
    %v4658 = vrot.slane %v4226, 2
    %v4659 = vsel %vm4255, %v4658, 0
    %4661 = vmatprep.subr.mxu0 0.0
    %4662 = vmatpush1.msra.mxu0 0.0
    %4663 = vmatprep.subr.mxu0 0.0
    %4664 = vmatpush1.msra.mxu0 0.0
    %4665 = vmatprep.subr.mxu0 0.0
    %4666 = vmatpush1.msra.mxu0 0.0
    %4667 = vmatprep.subr.mxu0 0.0
    %4668 = vmatpush1.msra.mxu0 0.0
    %4669 = vmatprep.subr.mxu0 0.0
    %4670 = vmatpush1.msra.mxu0 0.0
    %4671 = vmatprep.subr.mxu0 0.0
    %4672 = vmatpush1.msra.mxu0 0.0
    %4673 = vmatprep.subr.mxu0 0.0
    %4674 = vmatpush1.msra.mxu0 0.0
    %4675 = vmatprep.subr.mxu0 0.0
    %4676 = vmatpush1.msra.mxu0 0.0
    %4677 = vmatprep.subr.mxu0 0.0
    %4678 = vmatpush1.msra.mxu0 %v4657
    %4679 = vmatprep.subr.mxu0 0.0
    %4680 = vmatpush1.msra.mxu0 %v4656
    %4681 = vmatprep.subr.mxu0 0.0
    %4682 = vmatpush1.msra.mxu0 %v4655
    %4683 = vmatprep.subr.mxu0 0.0
    %4684 = vmatpush1.msra.mxu0 %v4654
    %4685 = vmatprep.subr.mxu0 0.0
    %4686 = vmatpush1.msra.mxu0 %v4653
    %4687 = vmatprep.subr.mxu0 0.0
    %4688 = vmatpush1.msra.mxu0 %v4652
    %4689 = vmatprep.subr.mxu0 0.0
    %4690 = vmatpush1.msra.mxu0 %v4651
    %4691 = vmatprep.subr.mxu0 0.0
    %4692 = vmatpush1.msra.mxu0 %v4650
    %4693 = vmatprep.subr.mxu0 0.0
    %4694 = vmatpush2.msra.mxu0 0.0
    %4695 = vmatprep.subr.mxu0 0.0
    %4696 = vmatpush2.msra.mxu0 0.0
    %4697 = vmatprep.subr.mxu0 0.0
    %4698 = vmatpush2.msra.mxu0 0.0
    %4699 = vmatprep.subr.mxu0 0.0
    %4700 = vmatpush2.msra.mxu0 0.0
    %4701 = vmatprep.subr.mxu0 0.0
    %4702 = vmatpush2.msra.mxu0 0.0
    %4703 = vmatprep.subr.mxu0 0.0
    %4704 = vmatpush2.msra.mxu0 0.0
    %4705 = vmatprep.subr.mxu0 0.0
    %4706 = vmatpush2.msra.mxu0 0.0
    %4707 = vmatprep.subr.mxu0 0.0
    %4708 = vmatpush2.msra.mxu0 0.0
    %4709 = vmatprep.subr.mxu0 0.0
    %4710 = vmatpush2.msra.mxu0 0.0
    %4711 = vmatprep.subr.mxu0 0.0
    %4712 = vmatpush2.msra.mxu0 0.0
    %4713 = vmatprep.subr.mxu0 0.0
    %4714 = vmatpush2.msra.mxu0 0.0
    %4715 = vmatprep.subr.mxu0 0.0
    %4716 = vmatpush2.msra.mxu0 0.0
    %4717 = vmatprep.subr.mxu0 0.0
    %4718 = vmatpush2.msra.mxu0 0.0
    %4719 = vmatprep.subr.mxu0 0.0
    %4720 = vmatpush2.msra.mxu0 0.0
    %4721 = vmatprep.subr.mxu0 0.0
    %4722 = vmatpush2.msra.mxu0 0.0
    %4723 = vmatprep.subr.mxu0 0.0
    %4724 = vmatpush2.msra.mxu0 0.0
    %4725 = vmatprep.mubr.f32.mxu0 0.0
    %4726 = vmatmul.mubr.f32.gmra.mxu0 %v4659
    %v4727 = vpop.f32.mrf.mxu0
    %v4728 = vadd.f32 0.0, %v4727
    %v4729 = vpop.f32.mrf.mxu0
    %4730 = vdwg.mxu0
    %v4731 = vadd.f32 %v4648, %v4728
    %s4732 = scalar_lea.vmem [#allocation11], 384
    %v4733 = vld [vmem:[%s4732] sm:$0xff]
    %v4734 = vld [vmem:[%s4732 + $0x8] sm:$0xff]
    %v4735 = vld [vmem:[%s4732 + $0x10] sm:$0xff]
    %v4736 = vld [vmem:[%s4732 + $0x18] sm:$0xff]
    %v4737 = vld [vmem:[%s4732 + $0x20] sm:$0xff]
    %v4738 = vld [vmem:[%s4732 + $0x28] sm:$0xff]
    %v4739 = vld [vmem:[%s4732 + $0x30] sm:$0xff]
    %v4740 = vld [vmem:[%s4732 + $0x38] sm:$0xff]
    %v4741 = vrot.slane %v4226, 4
    %v4742 = vsel %vm4255, %v4741, 0
    %4744 = vmatprep.subr.mxu0 0.0
    %4745 = vmatpush1.msra.mxu0 0.0
    %4746 = vmatprep.subr.mxu0 0.0
    %4747 = vmatpush1.msra.mxu0 0.0
    %4748 = vmatprep.subr.mxu0 0.0
    %4749 = vmatpush1.msra.mxu0 0.0
    %4750 = vmatprep.subr.mxu0 0.0
    %4751 = vmatpush1.msra.mxu0 0.0
    %4752 = vmatprep.subr.mxu0 0.0
    %4753 = vmatpush1.msra.mxu0 0.0
    %4754 = vmatprep.subr.mxu0 0.0
    %4755 = vmatpush1.msra.mxu0 0.0
    %4756 = vmatprep.subr.mxu0 0.0
    %4757 = vmatpush1.msra.mxu0 0.0
    %4758 = vmatprep.subr.mxu0 0.0
    %4759 = vmatpush1.msra.mxu0 0.0
    %4760 = vmatprep.subr.mxu0 0.0
    %4761 = vmatpush1.msra.mxu0 %v4740
    %4762 = vmatprep.subr.mxu0 0.0
    %4763 = vmatpush1.msra.mxu0 %v4739
    %4764 = vmatprep.subr.mxu0 0.0
    %4765 = vmatpush1.msra.mxu0 %v4738
    %4766 = vmatprep.subr.mxu0 0.0
    %4767 = vmatpush1.msra.mxu0 %v4737
    %4768 = vmatprep.subr.mxu0 0.0
    %4769 = vmatpush1.msra.mxu0 %v4736
    %4770 = vmatprep.subr.mxu0 0.0
    %4771 = vmatpush1.msra.mxu0 %v4735
    %4772 = vmatprep.subr.mxu0 0.0
    %4773 = vmatpush1.msra.mxu0 %v4734
    %4774 = vmatprep.subr.mxu0 0.0
    %4775 = vmatpush1.msra.mxu0 %v4733
    %4776 = vmatprep.subr.mxu0 0.0
    %4777 = vmatpush2.msra.mxu0 0.0
    %4778 = vmatprep.subr.mxu0 0.0
    %4779 = vmatpush2.msra.mxu0 0.0
    %4780 = vmatprep.subr.mxu0 0.0
    %4781 = vmatpush2.msra.mxu0 0.0
    %4782 = vmatprep.subr.mxu0 0.0
    %4783 = vmatpush2.msra.mxu0 0.0
    %4784 = vmatprep.subr.mxu0 0.0
    %4785 = vmatpush2.msra.mxu0 0.0
    %4786 = vmatprep.subr.mxu0 0.0
    %4787 = vmatpush2.msra.mxu0 0.0
    %4788 = vmatprep.subr.mxu0 0.0
    %4789 = vmatpush2.msra.mxu0 0.0
    %4790 = vmatprep.subr.mxu0 0.0
    %4791 = vmatpush2.msra.mxu0 0.0
    %4792 = vmatprep.subr.mxu0 0.0
    %4793 = vmatpush2.msra.mxu0 0.0
    %4794 = vmatprep.subr.mxu0 0.0
    %4795 = vmatpush2.msra.mxu0 0.0
    %4796 = vmatprep.subr.mxu0 0.0
    %4797 = vmatpush2.msra.mxu0 0.0
    %4798 = vmatprep.subr.mxu0 0.0
    %4799 = vmatpush2.msra.mxu0 0.0
    %4800 = vmatprep.subr.mxu0 0.0
    %4801 = vmatpush2.msra.mxu0 0.0
    %4802 = vmatprep.subr.mxu0 0.0
    %4803 = vmatpush2.msra.mxu0 0.0
    %4804 = vmatprep.subr.mxu0 0.0
    %4805 = vmatpush2.msra.mxu0 0.0
    %4806 = vmatprep.subr.mxu0 0.0
    %4807 = vmatpush2.msra.mxu0 0.0
    %4808 = vmatprep.mubr.f32.mxu0 0.0
    %4809 = vmatmul.mubr.f32.gmra.mxu0 %v4742
    %v4810 = vpop.f32.mrf.mxu0
    %v4811 = vadd.f32 0.0, %v4810
    %v4812 = vpop.f32.mrf.mxu0
    %4813 = vdwg.mxu0
    %v4814 = vadd.f32 %v4731, %v4811
    %s4815 = scalar_lea.vmem [#allocation11], 448
    %v4816 = vld [vmem:[%s4815] sm:$0xff]
    %v4817 = vld [vmem:[%s4815 + $0x8] sm:$0xff]
    %v4818 = vld [vmem:[%s4815 + $0x10] sm:$0xff]
    %v4819 = vld [vmem:[%s4815 + $0x18] sm:$0xff]
    %v4820 = vld [vmem:[%s4815 + $0x20] sm:$0xff]
    %v4821 = vld [vmem:[%s4815 + $0x28] sm:$0xff]
    %v4822 = vld [vmem:[%s4815 + $0x30] sm:$0xff]
    %v4823 = vld [vmem:[%s4815 + $0x38] sm:$0xff]
    %v4824 = vrot.slane %v4226, 6
    %v4825 = vsel %vm4255, %v4824, 0
    %4827 = vmatprep.subr.mxu0 0.0
    %4828 = vmatpush1.msra.mxu0 0.0
    %4829 = vmatprep.subr.mxu0 0.0
    %4830 = vmatpush1.msra.mxu0 0.0
    %4831 = vmatprep.subr.mxu0 0.0
    %4832 = vmatpush1.msra.mxu0 0.0
    %4833 = vmatprep.subr.mxu0 0.0
    %4834 = vmatpush1.msra.mxu0 0.0
    %4835 = vmatprep.subr.mxu0 0.0
    %4836 = vmatpush1.msra.mxu0 0.0
    %4837 = vmatprep.subr.mxu0 0.0
    %4838 = vmatpush1.msra.mxu0 0.0
    %4839 = vmatprep.subr.mxu0 0.0
    %4840 = vmatpush1.msra.mxu0 0.0
    %4841 = vmatprep.subr.mxu0 0.0
    %4842 = vmatpush1.msra.mxu0 0.0
    %4843 = vmatprep.subr.mxu0 0.0
    %4844 = vmatpush1.msra.mxu0 %v4823
    %4845 = vmatprep.subr.mxu0 0.0
    %4846 = vmatpush1.msra.mxu0 %v4822
    %4847 = vmatprep.subr.mxu0 0.0
    %4848 = vmatpush1.msra.mxu0 %v4821
    %4849 = vmatprep.subr.mxu0 0.0
    %4850 = vmatpush1.msra.mxu0 %v4820
    %4851 = vmatprep.subr.mxu0 0.0
    %4852 = vmatpush1.msra.mxu0 %v4819
    %4853 = vmatprep.subr.mxu0 0.0
    %4854 = vmatpush1.msra.mxu0 %v4818
    %4855 = vmatprep.subr.mxu0 0.0
    %4856 = vmatpush1.msra.mxu0 %v4817
    %4857 = vmatprep.subr.mxu0 0.0
    %4858 = vmatpush1.msra.mxu0 %v4816
    %4859 = vmatprep.subr.mxu0 0.0
    %4860 = vmatpush2.msra.mxu0 0.0
    %4861 = vmatprep.subr.mxu0 0.0
    %4862 = vmatpush2.msra.mxu0 0.0
    %4863 = vmatprep.subr.mxu0 0.0
    %4864 = vmatpush2.msra.mxu0 0.0
    %4865 = vmatprep.subr.mxu0 0.0
    %4866 = vmatpush2.msra.mxu0 0.0
    %4867 = vmatprep.subr.mxu0 0.0
    %4868 = vmatpush2.msra.mxu0 0.0
    %4869 = vmatprep.subr.mxu0 0.0
    %4870 = vmatpush2.msra.mxu0 0.0
    %4871 = vmatprep.subr.mxu0 0.0
    %4872 = vmatpush2.msra.mxu0 0.0
    %4873 = vmatprep.subr.mxu0 0.0
    %4874 = vmatpush2.msra.mxu0 0.0
    %4875 = vmatprep.subr.mxu0 0.0
    %4876 = vmatpush2.msra.mxu0 0.0
    %4877 = vmatprep.subr.mxu0 0.0
    %4878 = vmatpush2.msra.mxu0 0.0
    %4879 = vmatprep.subr.mxu0 0.0
    %4880 = vmatpush2.msra.mxu0 0.0
    %4881 = vmatprep.subr.mxu0 0.0
    %4882 = vmatpush2.msra.mxu0 0.0
    %4883 = vmatprep.subr.mxu0 0.0
    %4884 = vmatpush2.msra.mxu0 0.0
    %4885 = vmatprep.subr.mxu0 0.0
    %4886 = vmatpush2.msra.mxu0 0.0
    %4887 = vmatprep.subr.mxu0 0.0
    %4888 = vmatpush2.msra.mxu0 0.0
    %4889 = vmatprep.subr.mxu0 0.0
    %4890 = vmatpush2.msra.mxu0 0.0
    %4891 = vmatprep.mubr.f32.mxu0 0.0
    %4892 = vmatmul.mubr.f32.gmra.mxu0 %v4825
    %v4893 = vpop.f32.mrf.mxu0
    %v4894 = vadd.f32 0.0, %v4893
    %v4895 = vpop.f32.mrf.mxu0
    %4896 = vdwg.mxu0
    %v4897 = vadd.f32 %v4814, %v4894
    %s4898 = scalar_lea.vmem [#allocation11], 512
    %v4899 = vld [vmem:[%s4898] sm:$0xff]
    %v4900 = vld [vmem:[%s4898 + $0x8] sm:$0xff]
    %v4901 = vld [vmem:[%s4898 + $0x10] sm:$0xff]
    %v4902 = vld [vmem:[%s4898 + $0x18] sm:$0xff]
    %v4903 = vld [vmem:[%s4898 + $0x20] sm:$0xff]
    %v4904 = vld [vmem:[%s4898 + $0x28] sm:$0xff]
    %v4905 = vld [vmem:[%s4898 + $0x30] sm:$0xff]
    %v4906 = vld [vmem:[%s4898 + $0x38] sm:$0xff]
    %v4908 = vsel %vm4255, %v4227, 0
    %4910 = vmatprep.subr.mxu0 0.0
    %4911 = vmatpush1.msra.mxu0 0.0
    %4912 = vmatprep.subr.mxu0 0.0
    %4913 = vmatpush1.msra.mxu0 0.0
    %4914 = vmatprep.subr.mxu0 0.0
    %4915 = vmatpush1.msra.mxu0 0.0
    %4916 = vmatprep.subr.mxu0 0.0
    %4917 = vmatpush1.msra.mxu0 0.0
    %4918 = vmatprep.subr.mxu0 0.0
    %4919 = vmatpush1.msra.mxu0 0.0
    %4920 = vmatprep.subr.mxu0 0.0
    %4921 = vmatpush1.msra.mxu0 0.0
    %4922 = vmatprep.subr.mxu0 0.0
    %4923 = vmatpush1.msra.mxu0 0.0
    %4924 = vmatprep.subr.mxu0 0.0
    %4925 = vmatpush1.msra.mxu0 0.0
    %4926 = vmatprep.subr.mxu0 0.0
    %4927 = vmatpush1.msra.mxu0 %v4906
    %4928 = vmatprep.subr.mxu0 0.0
    %4929 = vmatpush1.msra.mxu0 %v4905
    %4930 = vmatprep.subr.mxu0 0.0
    %4931 = vmatpush1.msra.mxu0 %v4904
    %4932 = vmatprep.subr.mxu0 0.0
    %4933 = vmatpush1.msra.mxu0 %v4903
    %4934 = vmatprep.subr.mxu0 0.0
    %4935 = vmatpush1.msra.mxu0 %v4902
    %4936 = vmatprep.subr.mxu0 0.0
    %4937 = vmatpush1.msra.mxu0 %v4901
    %4938 = vmatprep.subr.mxu0 0.0
    %4939 = vmatpush1.msra.mxu0 %v4900
    %4940 = vmatprep.subr.mxu0 0.0
    %4941 = vmatpush1.msra.mxu0 %v4899
    %4942 = vmatprep.subr.mxu0 0.0
    %4943 = vmatpush2.msra.mxu0 0.0
    %4944 = vmatprep.subr.mxu0 0.0
    %4945 = vmatpush2.msra.mxu0 0.0
    %4946 = vmatprep.subr.mxu0 0.0
    %4947 = vmatpush2.msra.mxu0 0.0
    %4948 = vmatprep.subr.mxu0 0.0
    %4949 = vmatpush2.msra.mxu0 0.0
    %4950 = vmatprep.subr.mxu0 0.0
    %4951 = vmatpush2.msra.mxu0 0.0
    %4952 = vmatprep.subr.mxu0 0.0
    %4953 = vmatpush2.msra.mxu0 0.0
    %4954 = vmatprep.subr.mxu0 0.0
    %4955 = vmatpush2.msra.mxu0 0.0
    %4956 = vmatprep.subr.mxu0 0.0
    %4957 = vmatpush2.msra.mxu0 0.0
    %4958 = vmatprep.subr.mxu0 0.0
    %4959 = vmatpush2.msra.mxu0 0.0
    %4960 = vmatprep.subr.mxu0 0.0
    %4961 = vmatpush2.msra.mxu0 0.0
    %4962 = vmatprep.subr.mxu0 0.0
    %4963 = vmatpush2.msra.mxu0 0.0
    %4964 = vmatprep.subr.mxu0 0.0
    %4965 = vmatpush2.msra.mxu0 0.0
    %4966 = vmatprep.subr.mxu0 0.0
    %4967 = vmatpush2.msra.mxu0 0.0
    %4968 = vmatprep.subr.mxu0 0.0
    %4969 = vmatpush2.msra.mxu0 0.0
    %4970 = vmatprep.subr.mxu0 0.0
    %4971 = vmatpush2.msra.mxu0 0.0
    %4972 = vmatprep.subr.mxu0 0.0
    %4973 = vmatpush2.msra.mxu0 0.0
    %4974 = vmatprep.mubr.f32.mxu0 0.0
    %4975 = vmatmul.mubr.f32.gmra.mxu0 %v4908
    %v4976 = vpop.f32.mrf.mxu0
    %v4977 = vadd.f32 0.0, %v4976
    %v4978 = vpop.f32.mrf.mxu0
    %4979 = vdwg.mxu0
    %v4980 = vadd.f32 %v4897, %v4977
    %s4981 = scalar_lea.vmem [#allocation11], 576
    %v4982 = vld [vmem:[%s4981] sm:$0xff]
    %v4983 = vld [vmem:[%s4981 + $0x8] sm:$0xff]
    %v4984 = vld [vmem:[%s4981 + $0x10] sm:$0xff]
    %v4985 = vld [vmem:[%s4981 + $0x18] sm:$0xff]
    %v4986 = vld [vmem:[%s4981 + $0x20] sm:$0xff]
    %v4987 = vld [vmem:[%s4981 + $0x28] sm:$0xff]
    %v4988 = vld [vmem:[%s4981 + $0x30] sm:$0xff]
    %v4989 = vld [vmem:[%s4981 + $0x38] sm:$0xff]
    %v4990 = vrot.slane %v4227, 2
    %v4991 = vsel %vm4255, %v4990, 0
    %4993 = vmatprep.subr.mxu0 0.0
    %4994 = vmatpush1.msra.mxu0 0.0
    %4995 = vmatprep.subr.mxu0 0.0
    %4996 = vmatpush1.msra.mxu0 0.0
    %4997 = vmatprep.subr.mxu0 0.0
    %4998 = vmatpush1.msra.mxu0 0.0
    %4999 = vmatprep.subr.mxu0 0.0
    %5000 = vmatpush1.msra.mxu0 0.0
    %5001 = vmatprep.subr.mxu0 0.0
    %5002 = vmatpush1.msra.mxu0 0.0
    %5003 = vmatprep.subr.mxu0 0.0
    %5004 = vmatpush1.msra.mxu0 0.0
    %5005 = vmatprep.subr.mxu0 0.0
    %5006 = vmatpush1.msra.mxu0 0.0
    %5007 = vmatprep.subr.mxu0 0.0
    %5008 = vmatpush1.msra.mxu0 0.0
    %5009 = vmatprep.subr.mxu0 0.0
    %5010 = vmatpush1.msra.mxu0 %v4989
    %5011 = vmatprep.subr.mxu0 0.0
    %5012 = vmatpush1.msra.mxu0 %v4988
    %5013 = vmatprep.subr.mxu0 0.0
    %5014 = vmatpush1.msra.mxu0 %v4987
    %5015 = vmatprep.subr.mxu0 0.0
    %5016 = vmatpush1.msra.mxu0 %v4986
    %5017 = vmatprep.subr.mxu0 0.0
    %5018 = vmatpush1.msra.mxu0 %v4985
    %5019 = vmatprep.subr.mxu0 0.0
    %5020 = vmatpush1.msra.mxu0 %v4984
    %5021 = vmatprep.subr.mxu0 0.0
    %5022 = vmatpush1.msra.mxu0 %v4983
    %5023 = vmatprep.subr.mxu0 0.0
    %5024 = vmatpush1.msra.mxu0 %v4982
    %5025 = vmatprep.subr.mxu0 0.0
    %5026 = vmatpush2.msra.mxu0 0.0
    %5027 = vmatprep.subr.mxu0 0.0
    %5028 = vmatpush2.msra.mxu0 0.0
    %5029 = vmatprep.subr.mxu0 0.0
    %5030 = vmatpush2.msra.mxu0 0.0
    %5031 = vmatprep.subr.mxu0 0.0
    %5032 = vmatpush2.msra.mxu0 0.0
    %5033 = vmatprep.subr.mxu0 0.0
    %5034 = vmatpush2.msra.mxu0 0.0
    %5035 = vmatprep.subr.mxu0 0.0
    %5036 = vmatpush2.msra.mxu0 0.0
    %5037 = vmatprep.subr.mxu0 0.0
    %5038 = vmatpush2.msra.mxu0 0.0
    %5039 = vmatprep.subr.mxu0 0.0
    %5040 = vmatpush2.msra.mxu0 0.0
    %5041 = vmatprep.subr.mxu0 0.0
    %5042 = vmatpush2.msra.mxu0 0.0
    %5043 = vmatprep.subr.mxu0 0.0
    %5044 = vmatpush2.msra.mxu0 0.0
    %5045 = vmatprep.subr.mxu0 0.0
    %5046 = vmatpush2.msra.mxu0 0.0
    %5047 = vmatprep.subr.mxu0 0.0
    %5048 = vmatpush2.msra.mxu0 0.0
    %5049 = vmatprep.subr.mxu0 0.0
    %5050 = vmatpush2.msra.mxu0 0.0
    %5051 = vmatprep.subr.mxu0 0.0
    %5052 = vmatpush2.msra.mxu0 0.0
    %5053 = vmatprep.subr.mxu0 0.0
    %5054 = vmatpush2.msra.mxu0 0.0
    %5055 = vmatprep.subr.mxu0 0.0
    %5056 = vmatpush2.msra.mxu0 0.0
    %5057 = vmatprep.mubr.f32.mxu0 0.0
    %5058 = vmatmul.mubr.f32.gmra.mxu0 %v4991
    %v5059 = vpop.f32.mrf.mxu0
    %v5060 = vadd.f32 0.0, %v5059
    %v5061 = vpop.f32.mrf.mxu0
    %5062 = vdwg.mxu0
    %v5063 = vadd.f32 %v4980, %v5060
    %s5064 = scalar_lea.vmem [#allocation11], 640
    %v5065 = vld [vmem:[%s5064] sm:$0xff]
    %v5066 = vld [vmem:[%s5064 + $0x8] sm:$0xff]
    %v5067 = vld [vmem:[%s5064 + $0x10] sm:$0xff]
    %v5068 = vld [vmem:[%s5064 + $0x18] sm:$0xff]
    %v5069 = vld [vmem:[%s5064 + $0x20] sm:$0xff]
    %v5070 = vld [vmem:[%s5064 + $0x28] sm:$0xff]
    %v5071 = vld [vmem:[%s5064 + $0x30] sm:$0xff]
    %v5072 = vld [vmem:[%s5064 + $0x38] sm:$0xff]
    %v5073 = vrot.slane %v4227, 4
    %v5074 = vsel %vm4255, %v5073, 0
    %5076 = vmatprep.subr.mxu0 0.0
    %5077 = vmatpush1.msra.mxu0 0.0
    %5078 = vmatprep.subr.mxu0 0.0
    %5079 = vmatpush1.msra.mxu0 0.0
    %5080 = vmatprep.subr.mxu0 0.0
    %5081 = vmatpush1.msra.mxu0 0.0
    %5082 = vmatprep.subr.mxu0 0.0
    %5083 = vmatpush1.msra.mxu0 0.0
    %5084 = vmatprep.subr.mxu0 0.0
    %5085 = vmatpush1.msra.mxu0 0.0
    %5086 = vmatprep.subr.mxu0 0.0
    %5087 = vmatpush1.msra.mxu0 0.0
    %5088 = vmatprep.subr.mxu0 0.0
    %5089 = vmatpush1.msra.mxu0 0.0
    %5090 = vmatprep.subr.mxu0 0.0
    %5091 = vmatpush1.msra.mxu0 0.0
    %5092 = vmatprep.subr.mxu0 0.0
    %5093 = vmatpush1.msra.mxu0 %v5072
    %5094 = vmatprep.subr.mxu0 0.0
    %5095 = vmatpush1.msra.mxu0 %v5071
    %5096 = vmatprep.subr.mxu0 0.0
    %5097 = vmatpush1.msra.mxu0 %v5070
    %5098 = vmatprep.subr.mxu0 0.0
    %5099 = vmatpush1.msra.mxu0 %v5069
    %5100 = vmatprep.subr.mxu0 0.0
    %5101 = vmatpush1.msra.mxu0 %v5068
    %5102 = vmatprep.subr.mxu0 0.0
    %5103 = vmatpush1.msra.mxu0 %v5067
    %5104 = vmatprep.subr.mxu0 0.0
    %5105 = vmatpush1.msra.mxu0 %v5066
    %5106 = vmatprep.subr.mxu0 0.0
    %5107 = vmatpush1.msra.mxu0 %v5065
    %5108 = vmatprep.subr.mxu0 0.0
    %5109 = vmatpush2.msra.mxu0 0.0
    %5110 = vmatprep.subr.mxu0 0.0
    %5111 = vmatpush2.msra.mxu0 0.0
    %5112 = vmatprep.subr.mxu0 0.0
    %5113 = vmatpush2.msra.mxu0 0.0
    %5114 = vmatprep.subr.mxu0 0.0
    %5115 = vmatpush2.msra.mxu0 0.0
    %5116 = vmatprep.subr.mxu0 0.0
    %5117 = vmatpush2.msra.mxu0 0.0
    %5118 = vmatprep.subr.mxu0 0.0
    %5119 = vmatpush2.msra.mxu0 0.0
    %5120 = vmatprep.subr.mxu0 0.0
    %5121 = vmatpush2.msra.mxu0 0.0
    %5122 = vmatprep.subr.mxu0 0.0
    %5123 = vmatpush2.msra.mxu0 0.0
    %5124 = vmatprep.subr.mxu0 0.0
    %5125 = vmatpush2.msra.mxu0 0.0
    %5126 = vmatprep.subr.mxu0 0.0
    %5127 = vmatpush2.msra.mxu0 0.0
    %5128 = vmatprep.subr.mxu0 0.0
    %5129 = vmatpush2.msra.mxu0 0.0
    %5130 = vmatprep.subr.mxu0 0.0
    %5131 = vmatpush2.msra.mxu0 0.0
    %5132 = vmatprep.subr.mxu0 0.0
    %5133 = vmatpush2.msra.mxu0 0.0
    %5134 = vmatprep.subr.mxu0 0.0
    %5135 = vmatpush2.msra.mxu0 0.0
    %5136 = vmatprep.subr.mxu0 0.0
    %5137 = vmatpush2.msra.mxu0 0.0
    %5138 = vmatprep.subr.mxu0 0.0
    %5139 = vmatpush2.msra.mxu0 0.0
    %5140 = vmatprep.mubr.f32.mxu0 0.0
    %5141 = vmatmul.mubr.f32.gmra.mxu0 %v5074
    %v5142 = vpop.f32.mrf.mxu0
    %v5143 = vadd.f32 0.0, %v5142
    %v5144 = vpop.f32.mrf.mxu0
    %5145 = vdwg.mxu0
    %v5146 = vadd.f32 %v5063, %v5143
    %s5147 = scalar_lea.vmem [#allocation11], 704
    %v5148 = vld [vmem:[%s5147] sm:$0xff]
    %v5149 = vld [vmem:[%s5147 + $0x8] sm:$0xff]
    %v5150 = vld [vmem:[%s5147 + $0x10] sm:$0xff]
    %v5151 = vld [vmem:[%s5147 + $0x18] sm:$0xff]
    %v5152 = vld [vmem:[%s5147 + $0x20] sm:$0xff]
    %v5153 = vld [vmem:[%s5147 + $0x28] sm:$0xff]
    %v5154 = vld [vmem:[%s5147 + $0x30] sm:$0xff]
    %v5155 = vld [vmem:[%s5147 + $0x38] sm:$0xff]
    %v5156 = vrot.slane %v4227, 6
    %v5157 = vsel %vm4255, %v5156, 0
    %5159 = vmatprep.subr.mxu0 0.0
    %5160 = vmatpush1.msra.mxu0 0.0
    %5161 = vmatprep.subr.mxu0 0.0
    %5162 = vmatpush1.msra.mxu0 0.0
    %5163 = vmatprep.subr.mxu0 0.0
    %5164 = vmatpush1.msra.mxu0 0.0
    %5165 = vmatprep.subr.mxu0 0.0
    %5166 = vmatpush1.msra.mxu0 0.0
    %5167 = vmatprep.subr.mxu0 0.0
    %5168 = vmatpush1.msra.mxu0 0.0
    %5169 = vmatprep.subr.mxu0 0.0
    %5170 = vmatpush1.msra.mxu0 0.0
    %5171 = vmatprep.subr.mxu0 0.0
    %5172 = vmatpush1.msra.mxu0 0.0
    %5173 = vmatprep.subr.mxu0 0.0
    %5174 = vmatpush1.msra.mxu0 0.0
    %5175 = vmatprep.subr.mxu0 0.0
    %5176 = vmatpush1.msra.mxu0 %v5155
    %5177 = vmatprep.subr.mxu0 0.0
    %5178 = vmatpush1.msra.mxu0 %v5154
    %5179 = vmatprep.subr.mxu0 0.0
    %5180 = vmatpush1.msra.mxu0 %v5153
    %5181 = vmatprep.subr.mxu0 0.0
    %5182 = vmatpush1.msra.mxu0 %v5152
    %5183 = vmatprep.subr.mxu0 0.0
    %5184 = vmatpush1.msra.mxu0 %v5151
    %5185 = vmatprep.subr.mxu0 0.0
    %5186 = vmatpush1.msra.mxu0 %v5150
    %5187 = vmatprep.subr.mxu0 0.0
    %5188 = vmatpush1.msra.mxu0 %v5149
    %5189 = vmatprep.subr.mxu0 0.0
    %5190 = vmatpush1.msra.mxu0 %v5148
    %5191 = vmatprep.subr.mxu0 0.0
    %5192 = vmatpush2.msra.mxu0 0.0
    %5193 = vmatprep.subr.mxu0 0.0
    %5194 = vmatpush2.msra.mxu0 0.0
    %5195 = vmatprep.subr.mxu0 0.0
    %5196 = vmatpush2.msra.mxu0 0.0
    %5197 = vmatprep.subr.mxu0 0.0
    %5198 = vmatpush2.msra.mxu0 0.0
    %5199 = vmatprep.subr.mxu0 0.0
    %5200 = vmatpush2.msra.mxu0 0.0
    %5201 = vmatprep.subr.mxu0 0.0
    %5202 = vmatpush2.msra.mxu0 0.0
    %5203 = vmatprep.subr.mxu0 0.0
    %5204 = vmatpush2.msra.mxu0 0.0
    %5205 = vmatprep.subr.mxu0 0.0
    %5206 = vmatpush2.msra.mxu0 0.0
    %5207 = vmatprep.subr.mxu0 0.0
    %5208 = vmatpush2.msra.mxu0 0.0
    %5209 = vmatprep.subr.mxu0 0.0
    %5210 = vmatpush2.msra.mxu0 0.0
    %5211 = vmatprep.subr.mxu0 0.0
    %5212 = vmatpush2.msra.mxu0 0.0
    %5213 = vmatprep.subr.mxu0 0.0
    %5214 = vmatpush2.msra.mxu0 0.0
    %5215 = vmatprep.subr.mxu0 0.0
    %5216 = vmatpush2.msra.mxu0 0.0
    %5217 = vmatprep.subr.mxu0 0.0
    %5218 = vmatpush2.msra.mxu0 0.0
    %5219 = vmatprep.subr.mxu0 0.0
    %5220 = vmatpush2.msra.mxu0 0.0
    %5221 = vmatprep.subr.mxu0 0.0
    %5222 = vmatpush2.msra.mxu0 0.0
    %5223 = vmatprep.mubr.f32.mxu0 0.0
    %5224 = vmatmul.mubr.f32.gmra.mxu0 %v5157
    %v5225 = vpop.f32.mrf.mxu0
    %v5226 = vadd.f32 0.0, %v5225
    %v5227 = vpop.f32.mrf.mxu0
    %5228 = vdwg.mxu0
    %v5229 = vadd.f32 %v5146, %v5226
    %s5230 = scalar_lea.vmem [#allocation11], 768
    %v5231 = vld [vmem:[%s5230] sm:$0xff]
    %v5232 = vld [vmem:[%s5230 + $0x8] sm:$0xff]
    %v5233 = vld [vmem:[%s5230 + $0x10] sm:$0xff]
    %v5234 = vld [vmem:[%s5230 + $0x18] sm:$0xff]
    %v5235 = vld [vmem:[%s5230 + $0x20] sm:$0xff]
    %v5236 = vld [vmem:[%s5230 + $0x28] sm:$0xff]
    %v5237 = vld [vmem:[%s5230 + $0x30] sm:$0xff]
    %v5238 = vld [vmem:[%s5230 + $0x38] sm:$0xff]
    %v5240 = vsel %vm4255, %v4228, 0
    %5242 = vmatprep.subr.mxu0 0.0
    %5243 = vmatpush1.msra.mxu0 0.0
    %5244 = vmatprep.subr.mxu0 0.0
    %5245 = vmatpush1.msra.mxu0 0.0
    %5246 = vmatprep.subr.mxu0 0.0
    %5247 = vmatpush1.msra.mxu0 0.0
    %5248 = vmatprep.subr.mxu0 0.0
    %5249 = vmatpush1.msra.mxu0 0.0
    %5250 = vmatprep.subr.mxu0 0.0
    %5251 = vmatpush1.msra.mxu0 0.0
    %5252 = vmatprep.subr.mxu0 0.0
    %5253 = vmatpush1.msra.mxu0 0.0
    %5254 = vmatprep.subr.mxu0 0.0
    %5255 = vmatpush1.msra.mxu0 0.0
    %5256 = vmatprep.subr.mxu0 0.0
    %5257 = vmatpush1.msra.mxu0 0.0
    %5258 = vmatprep.subr.mxu0 0.0
    %5259 = vmatpush1.msra.mxu0 %v5238
    %5260 = vmatprep.subr.mxu0 0.0
    %5261 = vmatpush1.msra.mxu0 %v5237
    %5262 = vmatprep.subr.mxu0 0.0
    %5263 = vmatpush1.msra.mxu0 %v5236
    %5264 = vmatprep.subr.mxu0 0.0
    %5265 = vmatpush1.msra.mxu0 %v5235
    %5266 = vmatprep.subr.mxu0 0.0
    %5267 = vmatpush1.msra.mxu0 %v5234
    %5268 = vmatprep.subr.mxu0 0.0
    %5269 = vmatpush1.msra.mxu0 %v5233
    %5270 = vmatprep.subr.mxu0 0.0
    %5271 = vmatpush1.msra.mxu0 %v5232
    %5272 = vmatprep.subr.mxu0 0.0
    %5273 = vmatpush1.msra.mxu0 %v5231
    %5274 = vmatprep.subr.mxu0 0.0
    %5275 = vmatpush2.msra.mxu0 0.0
    %5276 = vmatprep.subr.mxu0 0.0
    %5277 = vmatpush2.msra.mxu0 0.0
    %5278 = vmatprep.subr.mxu0 0.0
    %5279 = vmatpush2.msra.mxu0 0.0
    %5280 = vmatprep.subr.mxu0 0.0
    %5281 = vmatpush2.msra.mxu0 0.0
    %5282 = vmatprep.subr.mxu0 0.0
    %5283 = vmatpush2.msra.mxu0 0.0
    %5284 = vmatprep.subr.mxu0 0.0
    %5285 = vmatpush2.msra.mxu0 0.0
    %5286 = vmatprep.subr.mxu0 0.0
    %5287 = vmatpush2.msra.mxu0 0.0
    %5288 = vmatprep.subr.mxu0 0.0
    %5289 = vmatpush2.msra.mxu0 0.0
    %5290 = vmatprep.subr.mxu0 0.0
    %5291 = vmatpush2.msra.mxu0 0.0
    %5292 = vmatprep.subr.mxu0 0.0
    %5293 = vmatpush2.msra.mxu0 0.0
    %5294 = vmatprep.subr.mxu0 0.0
    %5295 = vmatpush2.msra.mxu0 0.0
    %5296 = vmatprep.subr.mxu0 0.0
    %5297 = vmatpush2.msra.mxu0 0.0
    %5298 = vmatprep.subr.mxu0 0.0
    %5299 = vmatpush2.msra.mxu0 0.0
    %5300 = vmatprep.subr.mxu0 0.0
    %5301 = vmatpush2.msra.mxu0 0.0
    %5302 = vmatprep.subr.mxu0 0.0
    %5303 = vmatpush2.msra.mxu0 0.0
    %5304 = vmatprep.subr.mxu0 0.0
    %5305 = vmatpush2.msra.mxu0 0.0
    %5306 = vmatprep.mubr.f32.mxu0 0.0
    %5307 = vmatmul.mubr.f32.gmra.mxu0 %v5240
    %v5308 = vpop.f32.mrf.mxu0
    %v5309 = vadd.f32 0.0, %v5308
    %v5310 = vpop.f32.mrf.mxu0
    %5311 = vdwg.mxu0
    %v5312 = vadd.f32 %v5229, %v5309
    %s5313 = scalar_lea.vmem [#allocation11], 832
    %v5314 = vld [vmem:[%s5313] sm:$0xff]
    %v5315 = vld [vmem:[%s5313 + $0x8] sm:$0xff]
    %v5316 = vld [vmem:[%s5313 + $0x10] sm:$0xff]
    %v5317 = vld [vmem:[%s5313 + $0x18] sm:$0xff]
    %v5318 = vld [vmem:[%s5313 + $0x20] sm:$0xff]
    %v5319 = vld [vmem:[%s5313 + $0x28] sm:$0xff]
    %v5320 = vld [vmem:[%s5313 + $0x30] sm:$0xff]
    %v5321 = vld [vmem:[%s5313 + $0x38] sm:$0xff]
    %v5322 = vrot.slane %v4228, 2
    %v5323 = vsel %vm4255, %v5322, 0
    %5325 = vmatprep.subr.mxu0 0.0
    %5326 = vmatpush1.msra.mxu0 0.0
    %5327 = vmatprep.subr.mxu0 0.0
    %5328 = vmatpush1.msra.mxu0 0.0
    %5329 = vmatprep.subr.mxu0 0.0
    %5330 = vmatpush1.msra.mxu0 0.0
    %5331 = vmatprep.subr.mxu0 0.0
    %5332 = vmatpush1.msra.mxu0 0.0
    %5333 = vmatprep.subr.mxu0 0.0
    %5334 = vmatpush1.msra.mxu0 0.0
    %5335 = vmatprep.subr.mxu0 0.0
    %5336 = vmatpush1.msra.mxu0 0.0
    %5337 = vmatprep.subr.mxu0 0.0
    %5338 = vmatpush1.msra.mxu0 0.0
    %5339 = vmatprep.subr.mxu0 0.0
    %5340 = vmatpush1.msra.mxu0 0.0
    %5341 = vmatprep.subr.mxu0 0.0
    %5342 = vmatpush1.msra.mxu0 %v5321
    %5343 = vmatprep.subr.mxu0 0.0
    %5344 = vmatpush1.msra.mxu0 %v5320
    %5345 = vmatprep.subr.mxu0 0.0
    %5346 = vmatpush1.msra.mxu0 %v5319
    %5347 = vmatprep.subr.mxu0 0.0
    %5348 = vmatpush1.msra.mxu0 %v5318
    %5349 = vmatprep.subr.mxu0 0.0
    %5350 = vmatpush1.msra.mxu0 %v5317
    %5351 = vmatprep.subr.mxu0 0.0
    %5352 = vmatpush1.msra.mxu0 %v5316
    %5353 = vmatprep.subr.mxu0 0.0
    %5354 = vmatpush1.msra.mxu0 %v5315
    %5355 = vmatprep.subr.mxu0 0.0
    %5356 = vmatpush1.msra.mxu0 %v5314
    %5357 = vmatprep.subr.mxu0 0.0
    %5358 = vmatpush2.msra.mxu0 0.0
    %5359 = vmatprep.subr.mxu0 0.0
    %5360 = vmatpush2.msra.mxu0 0.0
    %5361 = vmatprep.subr.mxu0 0.0
    %5362 = vmatpush2.msra.mxu0 0.0
    %5363 = vmatprep.subr.mxu0 0.0
    %5364 = vmatpush2.msra.mxu0 0.0
    %5365 = vmatprep.subr.mxu0 0.0
    %5366 = vmatpush2.msra.mxu0 0.0
    %5367 = vmatprep.subr.mxu0 0.0
    %5368 = vmatpush2.msra.mxu0 0.0
    %5369 = vmatprep.subr.mxu0 0.0
    %5370 = vmatpush2.msra.mxu0 0.0
    %5371 = vmatprep.subr.mxu0 0.0
    %5372 = vmatpush2.msra.mxu0 0.0
    %5373 = vmatprep.subr.mxu0 0.0
    %5374 = vmatpush2.msra.mxu0 0.0
    %5375 = vmatprep.subr.mxu0 0.0
    %5376 = vmatpush2.msra.mxu0 0.0
    %5377 = vmatprep.subr.mxu0 0.0
    %5378 = vmatpush2.msra.mxu0 0.0
    %5379 = vmatprep.subr.mxu0 0.0
    %5380 = vmatpush2.msra.mxu0 0.0
    %5381 = vmatprep.subr.mxu0 0.0
    %5382 = vmatpush2.msra.mxu0 0.0
    %5383 = vmatprep.subr.mxu0 0.0
    %5384 = vmatpush2.msra.mxu0 0.0
    %5385 = vmatprep.subr.mxu0 0.0
    %5386 = vmatpush2.msra.mxu0 0.0
    %5387 = vmatprep.subr.mxu0 0.0
    %5388 = vmatpush2.msra.mxu0 0.0
    %5389 = vmatprep.mubr.f32.mxu0 0.0
    %5390 = vmatmul.mubr.f32.gmra.mxu0 %v5323
    %v5391 = vpop.f32.mrf.mxu0
    %v5392 = vadd.f32 0.0, %v5391
    %v5393 = vpop.f32.mrf.mxu0
    %5394 = vdwg.mxu0
    %v5395 = vadd.f32 %v5312, %v5392
    %s5396 = scalar_lea.vmem [#allocation11], 896
    %v5397 = vld [vmem:[%s5396] sm:$0xff]
    %v5398 = vld [vmem:[%s5396 + $0x8] sm:$0xff]
    %v5399 = vld [vmem:[%s5396 + $0x10] sm:$0xff]
    %v5400 = vld [vmem:[%s5396 + $0x18] sm:$0xff]
    %v5401 = vld [vmem:[%s5396 + $0x20] sm:$0xff]
    %v5402 = vld [vmem:[%s5396 + $0x28] sm:$0xff]
    %v5403 = vld [vmem:[%s5396 + $0x30] sm:$0xff]
    %v5404 = vld [vmem:[%s5396 + $0x38] sm:$0xff]
    %v5405 = vrot.slane %v4228, 4
    %v5406 = vsel %vm4255, %v5405, 0
    %5408 = vmatprep.subr.mxu0 0.0
    %5409 = vmatpush1.msra.mxu0 0.0
    %5410 = vmatprep.subr.mxu0 0.0
    %5411 = vmatpush1.msra.mxu0 0.0
    %5412 = vmatprep.subr.mxu0 0.0
    %5413 = vmatpush1.msra.mxu0 0.0
    %5414 = vmatprep.subr.mxu0 0.0
    %5415 = vmatpush1.msra.mxu0 0.0
    %5416 = vmatprep.subr.mxu0 0.0
    %5417 = vmatpush1.msra.mxu0 0.0
    %5418 = vmatprep.subr.mxu0 0.0
    %5419 = vmatpush1.msra.mxu0 0.0
    %5420 = vmatprep.subr.mxu0 0.0
    %5421 = vmatpush1.msra.mxu0 0.0
    %5422 = vmatprep.subr.mxu0 0.0
    %5423 = vmatpush1.msra.mxu0 0.0
    %5424 = vmatprep.subr.mxu0 0.0
    %5425 = vmatpush1.msra.mxu0 %v5404
    %5426 = vmatprep.subr.mxu0 0.0
    %5427 = vmatpush1.msra.mxu0 %v5403
    %5428 = vmatprep.subr.mxu0 0.0
    %5429 = vmatpush1.msra.mxu0 %v5402
    %5430 = vmatprep.subr.mxu0 0.0
    %5431 = vmatpush1.msra.mxu0 %v5401
    %5432 = vmatprep.subr.mxu0 0.0
    %5433 = vmatpush1.msra.mxu0 %v5400
    %5434 = vmatprep.subr.mxu0 0.0
    %5435 = vmatpush1.msra.mxu0 %v5399
    %5436 = vmatprep.subr.mxu0 0.0
    %5437 = vmatpush1.msra.mxu0 %v5398
    %5438 = vmatprep.subr.mxu0 0.0
    %5439 = vmatpush1.msra.mxu0 %v5397
    %5440 = vmatprep.subr.mxu0 0.0
    %5441 = vmatpush2.msra.mxu0 0.0
    %5442 = vmatprep.subr.mxu0 0.0
    %5443 = vmatpush2.msra.mxu0 0.0
    %5444 = vmatprep.subr.mxu0 0.0
    %5445 = vmatpush2.msra.mxu0 0.0
    %5446 = vmatprep.subr.mxu0 0.0
    %5447 = vmatpush2.msra.mxu0 0.0
    %5448 = vmatprep.subr.mxu0 0.0
    %5449 = vmatpush2.msra.mxu0 0.0
    %5450 = vmatprep.subr.mxu0 0.0
    %5451 = vmatpush2.msra.mxu0 0.0
    %5452 = vmatprep.subr.mxu0 0.0
    %5453 = vmatpush2.msra.mxu0 0.0
    %5454 = vmatprep.subr.mxu0 0.0
    %5455 = vmatpush2.msra.mxu0 0.0
    %5456 = vmatprep.subr.mxu0 0.0
    %5457 = vmatpush2.msra.mxu0 0.0
    %5458 = vmatprep.subr.mxu0 0.0
    %5459 = vmatpush2.msra.mxu0 0.0
    %5460 = vmatprep.subr.mxu0 0.0
    %5461 = vmatpush2.msra.mxu0 0.0
    %5462 = vmatprep.subr.mxu0 0.0
    %5463 = vmatpush2.msra.mxu0 0.0
    %5464 = vmatprep.subr.mxu0 0.0
    %5465 = vmatpush2.msra.mxu0 0.0
    %5466 = vmatprep.subr.mxu0 0.0
    %5467 = vmatpush2.msra.mxu0 0.0
    %5468 = vmatprep.subr.mxu0 0.0
    %5469 = vmatpush2.msra.mxu0 0.0
    %5470 = vmatprep.subr.mxu0 0.0
    %5471 = vmatpush2.msra.mxu0 0.0
    %5472 = vmatprep.mubr.f32.mxu0 0.0
    %5473 = vmatmul.mubr.f32.gmra.mxu0 %v5406
    %v5474 = vpop.f32.mrf.mxu0
    %v5475 = vadd.f32 0.0, %v5474
    %v5476 = vpop.f32.mrf.mxu0
    %5477 = vdwg.mxu0
    %v5478 = vadd.f32 %v5395, %v5475
    %s5479 = scalar_lea.vmem [#allocation11], 960
    %v5480 = vld [vmem:[%s5479] sm:$0xff]
    %v5481 = vld [vmem:[%s5479 + $0x8] sm:$0xff]
    %v5482 = vld [vmem:[%s5479 + $0x10] sm:$0xff]
    %v5483 = vld [vmem:[%s5479 + $0x18] sm:$0xff]
    %v5484 = vld [vmem:[%s5479 + $0x20] sm:$0xff]
    %v5485 = vld [vmem:[%s5479 + $0x28] sm:$0xff]
    %v5486 = vld [vmem:[%s5479 + $0x30] sm:$0xff]
    %v5487 = vld [vmem:[%s5479 + $0x38] sm:$0xff]
    %v5488 = vrot.slane %v4228, 6
    %v5489 = vsel %vm4255, %v5488, 0
    %5491 = vmatprep.subr.mxu0 0.0
    %5492 = vmatpush1.msra.mxu0 0.0
    %5493 = vmatprep.subr.mxu0 0.0
    %5494 = vmatpush1.msra.mxu0 0.0
    %5495 = vmatprep.subr.mxu0 0.0
    %5496 = vmatpush1.msra.mxu0 0.0
    %5497 = vmatprep.subr.mxu0 0.0
    %5498 = vmatpush1.msra.mxu0 0.0
    %5499 = vmatprep.subr.mxu0 0.0
    %5500 = vmatpush1.msra.mxu0 0.0
    %5501 = vmatprep.subr.mxu0 0.0
    %5502 = vmatpush1.msra.mxu0 0.0
    %5503 = vmatprep.subr.mxu0 0.0
    %5504 = vmatpush1.msra.mxu0 0.0
    %5505 = vmatprep.subr.mxu0 0.0
    %5506 = vmatpush1.msra.mxu0 0.0
    %5507 = vmatprep.subr.mxu0 0.0
    %5508 = vmatpush1.msra.mxu0 %v5487
    %5509 = vmatprep.subr.mxu0 0.0
    %5510 = vmatpush1.msra.mxu0 %v5486
    %5511 = vmatprep.subr.mxu0 0.0
    %5512 = vmatpush1.msra.mxu0 %v5485
    %5513 = vmatprep.subr.mxu0 0.0
    %5514 = vmatpush1.msra.mxu0 %v5484
    %5515 = vmatprep.subr.mxu0 0.0
    %5516 = vmatpush1.msra.mxu0 %v5483
    %5517 = vmatprep.subr.mxu0 0.0
    %5518 = vmatpush1.msra.mxu0 %v5482
    %5519 = vmatprep.subr.mxu0 0.0
    %5520 = vmatpush1.msra.mxu0 %v5481
    %5521 = vmatprep.subr.mxu0 0.0
    %5522 = vmatpush1.msra.mxu0 %v5480
    %5523 = vmatprep.subr.mxu0 0.0
    %5524 = vmatpush2.msra.mxu0 0.0
    %5525 = vmatprep.subr.mxu0 0.0
    %5526 = vmatpush2.msra.mxu0 0.0
    %5527 = vmatprep.subr.mxu0 0.0
    %5528 = vmatpush2.msra.mxu0 0.0
    %5529 = vmatprep.subr.mxu0 0.0
    %5530 = vmatpush2.msra.mxu0 0.0
    %5531 = vmatprep.subr.mxu0 0.0
    %5532 = vmatpush2.msra.mxu0 0.0
    %5533 = vmatprep.subr.mxu0 0.0
    %5534 = vmatpush2.msra.mxu0 0.0
    %5535 = vmatprep.subr.mxu0 0.0
    %5536 = vmatpush2.msra.mxu0 0.0
    %5537 = vmatprep.subr.mxu0 0.0
    %5538 = vmatpush2.msra.mxu0 0.0
    %5539 = vmatprep.subr.mxu0 0.0
    %5540 = vmatpush2.msra.mxu0 0.0
    %5541 = vmatprep.subr.mxu0 0.0
    %5542 = vmatpush2.msra.mxu0 0.0
    %5543 = vmatprep.subr.mxu0 0.0
    %5544 = vmatpush2.msra.mxu0 0.0
    %5545 = vmatprep.subr.mxu0 0.0
    %5546 = vmatpush2.msra.mxu0 0.0
    %5547 = vmatprep.subr.mxu0 0.0
    %5548 = vmatpush2.msra.mxu0 0.0
    %5549 = vmatprep.subr.mxu0 0.0
    %5550 = vmatpush2.msra.mxu0 0.0
    %5551 = vmatprep.subr.mxu0 0.0
    %5552 = vmatpush2.msra.mxu0 0.0
    %5553 = vmatprep.subr.mxu0 0.0
    %5554 = vmatpush2.msra.mxu0 0.0
    %5555 = vmatprep.mubr.f32.mxu0 0.0
    %5556 = vmatmul.mubr.f32.gmra.mxu0 %v5489
    %v5557 = vpop.f32.mrf.mxu0
    %v5558 = vadd.f32 0.0, %v5557
    %v5559 = vpop.f32.mrf.mxu0
    %5560 = vdwg.mxu0
    %v5561 = vadd.f32 %v5478, %v5558
    %s5562 = scalar_lea.vmem [#allocation11], 1024
    %v5563 = vld [vmem:[%s5562] sm:$0xff]
    %v5564 = vld [vmem:[%s5562 + $0x8] sm:$0xff]
    %v5565 = vld [vmem:[%s5562 + $0x10] sm:$0xff]
    %v5566 = vld [vmem:[%s5562 + $0x18] sm:$0xff]
    %v5567 = vld [vmem:[%s5562 + $0x20] sm:$0xff]
    %v5568 = vld [vmem:[%s5562 + $0x28] sm:$0xff]
    %v5569 = vld [vmem:[%s5562 + $0x30] sm:$0xff]
    %v5570 = vld [vmem:[%s5562 + $0x38] sm:$0xff]
    %v5572 = vsel %vm4255, %v4229, 0
    %5574 = vmatprep.subr.mxu0 0.0
    %5575 = vmatpush1.msra.mxu0 0.0
    %5576 = vmatprep.subr.mxu0 0.0
    %5577 = vmatpush1.msra.mxu0 0.0
    %5578 = vmatprep.subr.mxu0 0.0
    %5579 = vmatpush1.msra.mxu0 0.0
    %5580 = vmatprep.subr.mxu0 0.0
    %5581 = vmatpush1.msra.mxu0 0.0
    %5582 = vmatprep.subr.mxu0 0.0
    %5583 = vmatpush1.msra.mxu0 0.0
    %5584 = vmatprep.subr.mxu0 0.0
    %5585 = vmatpush1.msra.mxu0 0.0
    %5586 = vmatprep.subr.mxu0 0.0
    %5587 = vmatpush1.msra.mxu0 0.0
    %5588 = vmatprep.subr.mxu0 0.0
    %5589 = vmatpush1.msra.mxu0 0.0
    %5590 = vmatprep.subr.mxu0 0.0
    %5591 = vmatpush1.msra.mxu0 %v5570
    %5592 = vmatprep.subr.mxu0 0.0
    %5593 = vmatpush1.msra.mxu0 %v5569
    %5594 = vmatprep.subr.mxu0 0.0
    %5595 = vmatpush1.msra.mxu0 %v5568
    %5596 = vmatprep.subr.mxu0 0.0
    %5597 = vmatpush1.msra.mxu0 %v5567
    %5598 = vmatprep.subr.mxu0 0.0
    %5599 = vmatpush1.msra.mxu0 %v5566
    %5600 = vmatprep.subr.mxu0 0.0
    %5601 = vmatpush1.msra.mxu0 %v5565
    %5602 = vmatprep.subr.mxu0 0.0
    %5603 = vmatpush1.msra.mxu0 %v5564
    %5604 = vmatprep.subr.mxu0 0.0
    %5605 = vmatpush1.msra.mxu0 %v5563
    %5606 = vmatprep.subr.mxu0 0.0
    %5607 = vmatpush2.msra.mxu0 0.0
    %5608 = vmatprep.subr.mxu0 0.0
    %5609 = vmatpush2.msra.mxu0 0.0
    %5610 = vmatprep.subr.mxu0 0.0
    %5611 = vmatpush2.msra.mxu0 0.0
    %5612 = vmatprep.subr.mxu0 0.0
    %5613 = vmatpush2.msra.mxu0 0.0
    %5614 = vmatprep.subr.mxu0 0.0
    %5615 = vmatpush2.msra.mxu0 0.0
    %5616 = vmatprep.subr.mxu0 0.0
    %5617 = vmatpush2.msra.mxu0 0.0
    %5618 = vmatprep.subr.mxu0 0.0
    %5619 = vmatpush2.msra.mxu0 0.0
    %5620 = vmatprep.subr.mxu0 0.0
    %5621 = vmatpush2.msra.mxu0 0.0
    %5622 = vmatprep.subr.mxu0 0.0
    %5623 = vmatpush2.msra.mxu0 0.0
    %5624 = vmatprep.subr.mxu0 0.0
    %5625 = vmatpush2.msra.mxu0 0.0
    %5626 = vmatprep.subr.mxu0 0.0
    %5627 = vmatpush2.msra.mxu0 0.0
    %5628 = vmatprep.subr.mxu0 0.0
    %5629 = vmatpush2.msra.mxu0 0.0
    %5630 = vmatprep.subr.mxu0 0.0
    %5631 = vmatpush2.msra.mxu0 0.0
    %5632 = vmatprep.subr.mxu0 0.0
    %5633 = vmatpush2.msra.mxu0 0.0
    %5634 = vmatprep.subr.mxu0 0.0
    %5635 = vmatpush2.msra.mxu0 0.0
    %5636 = vmatprep.subr.mxu0 0.0
    %5637 = vmatpush2.msra.mxu0 0.0
    %5638 = vmatprep.mubr.f32.mxu0 0.0
    %5639 = vmatmul.mubr.f32.gmra.mxu0 %v5572
    %v5640 = vpop.f32.mrf.mxu0
    %v5641 = vadd.f32 0.0, %v5640
    %v5642 = vpop.f32.mrf.mxu0
    %5643 = vdwg.mxu0
    %v5644 = vadd.f32 %v5561, %v5641
    %s5645 = scalar_lea.vmem [#allocation11], 1088
    %v5646 = vld [vmem:[%s5645] sm:$0xff]
    %v5647 = vld [vmem:[%s5645 + $0x8] sm:$0xff]
    %v5648 = vld [vmem:[%s5645 + $0x10] sm:$0xff]
    %v5649 = vld [vmem:[%s5645 + $0x18] sm:$0xff]
    %v5650 = vld [vmem:[%s5645 + $0x20] sm:$0xff]
    %v5651 = vld [vmem:[%s5645 + $0x28] sm:$0xff]
    %v5652 = vld [vmem:[%s5645 + $0x30] sm:$0xff]
    %v5653 = vld [vmem:[%s5645 + $0x38] sm:$0xff]
    %v5654 = vrot.slane %v4229, 2
    %v5655 = vsel %vm4255, %v5654, 0
    %5657 = vmatprep.subr.mxu0 0.0
    %5658 = vmatpush1.msra.mxu0 0.0
    %5659 = vmatprep.subr.mxu0 0.0
    %5660 = vmatpush1.msra.mxu0 0.0
    %5661 = vmatprep.subr.mxu0 0.0
    %5662 = vmatpush1.msra.mxu0 0.0
    %5663 = vmatprep.subr.mxu0 0.0
    %5664 = vmatpush1.msra.mxu0 0.0
    %5665 = vmatprep.subr.mxu0 0.0
    %5666 = vmatpush1.msra.mxu0 0.0
    %5667 = vmatprep.subr.mxu0 0.0
    %5668 = vmatpush1.msra.mxu0 0.0
    %5669 = vmatprep.subr.mxu0 0.0
    %5670 = vmatpush1.msra.mxu0 0.0
    %5671 = vmatprep.subr.mxu0 0.0
    %5672 = vmatpush1.msra.mxu0 0.0
    %5673 = vmatprep.subr.mxu0 0.0
    %5674 = vmatpush1.msra.mxu0 %v5653
    %5675 = vmatprep.subr.mxu0 0.0
    %5676 = vmatpush1.msra.mxu0 %v5652
    %5677 = vmatprep.subr.mxu0 0.0
    %5678 = vmatpush1.msra.mxu0 %v5651
    %5679 = vmatprep.subr.mxu0 0.0
    %5680 = vmatpush1.msra.mxu0 %v5650
    %5681 = vmatprep.subr.mxu0 0.0
    %5682 = vmatpush1.msra.mxu0 %v5649
    %5683 = vmatprep.subr.mxu0 0.0
    %5684 = vmatpush1.msra.mxu0 %v5648
    %5685 = vmatprep.subr.mxu0 0.0
    %5686 = vmatpush1.msra.mxu0 %v5647
    %5687 = vmatprep.subr.mxu0 0.0
    %5688 = vmatpush1.msra.mxu0 %v5646
    %5689 = vmatprep.subr.mxu0 0.0
    %5690 = vmatpush2.msra.mxu0 0.0
    %5691 = vmatprep.subr.mxu0 0.0
    %5692 = vmatpush2.msra.mxu0 0.0
    %5693 = vmatprep.subr.mxu0 0.0
    %5694 = vmatpush2.msra.mxu0 0.0
    %5695 = vmatprep.subr.mxu0 0.0
    %5696 = vmatpush2.msra.mxu0 0.0
    %5697 = vmatprep.subr.mxu0 0.0
    %5698 = vmatpush2.msra.mxu0 0.0
    %5699 = vmatprep.subr.mxu0 0.0
    %5700 = vmatpush2.msra.mxu0 0.0
    %5701 = vmatprep.subr.mxu0 0.0
    %5702 = vmatpush2.msra.mxu0 0.0
    %5703 = vmatprep.subr.mxu0 0.0
    %5704 = vmatpush2.msra.mxu0 0.0
    %5705 = vmatprep.subr.mxu0 0.0
    %5706 = vmatpush2.msra.mxu0 0.0
    %5707 = vmatprep.subr.mxu0 0.0
    %5708 = vmatpush2.msra.mxu0 0.0
    %5709 = vmatprep.subr.mxu0 0.0
    %5710 = vmatpush2.msra.mxu0 0.0
    %5711 = vmatprep.subr.mxu0 0.0
    %5712 = vmatpush2.msra.mxu0 0.0
    %5713 = vmatprep.subr.mxu0 0.0
    %5714 = vmatpush2.msra.mxu0 0.0
    %5715 = vmatprep.subr.mxu0 0.0
    %5716 = vmatpush2.msra.mxu0 0.0
    %5717 = vmatprep.subr.mxu0 0.0
    %5718 = vmatpush2.msra.mxu0 0.0
    %5719 = vmatprep.subr.mxu0 0.0
    %5720 = vmatpush2.msra.mxu0 0.0
    %5721 = vmatprep.mubr.f32.mxu0 0.0
    %5722 = vmatmul.mubr.f32.gmra.mxu0 %v5655
    %v5723 = vpop.f32.mrf.mxu0
    %v5724 = vadd.f32 0.0, %v5723
    %v5725 = vpop.f32.mrf.mxu0
    %5726 = vdwg.mxu0
    %v5727 = vadd.f32 %v5644, %v5724
    %s5728 = scalar_lea.vmem [#allocation11], 1152
    %v5729 = vld [vmem:[%s5728] sm:$0xff]
    %v5730 = vld [vmem:[%s5728 + $0x8] sm:$0xff]
    %v5731 = vld [vmem:[%s5728 + $0x10] sm:$0xff]
    %v5732 = vld [vmem:[%s5728 + $0x18] sm:$0xff]
    %v5733 = vld [vmem:[%s5728 + $0x20] sm:$0xff]
    %v5734 = vld [vmem:[%s5728 + $0x28] sm:$0xff]
    %v5735 = vld [vmem:[%s5728 + $0x30] sm:$0xff]
    %v5736 = vld [vmem:[%s5728 + $0x38] sm:$0xff]
    %v5737 = vrot.slane %v4229, 4
    %v5738 = vsel %vm4255, %v5737, 0
    %5740 = vmatprep.subr.mxu0 0.0
    %5741 = vmatpush1.msra.mxu0 0.0
    %5742 = vmatprep.subr.mxu0 0.0
    %5743 = vmatpush1.msra.mxu0 0.0
    %5744 = vmatprep.subr.mxu0 0.0
    %5745 = vmatpush1.msra.mxu0 0.0
    %5746 = vmatprep.subr.mxu0 0.0
    %5747 = vmatpush1.msra.mxu0 0.0
    %5748 = vmatprep.subr.mxu0 0.0
    %5749 = vmatpush1.msra.mxu0 0.0
    %5750 = vmatprep.subr.mxu0 0.0
    %5751 = vmatpush1.msra.mxu0 0.0
    %5752 = vmatprep.subr.mxu0 0.0
    %5753 = vmatpush1.msra.mxu0 0.0
    %5754 = vmatprep.subr.mxu0 0.0
    %5755 = vmatpush1.msra.mxu0 0.0
    %5756 = vmatprep.subr.mxu0 0.0
    %5757 = vmatpush1.msra.mxu0 %v5736
    %5758 = vmatprep.subr.mxu0 0.0
    %5759 = vmatpush1.msra.mxu0 %v5735
    %5760 = vmatprep.subr.mxu0 0.0
    %5761 = vmatpush1.msra.mxu0 %v5734
    %5762 = vmatprep.subr.mxu0 0.0
    %5763 = vmatpush1.msra.mxu0 %v5733
    %5764 = vmatprep.subr.mxu0 0.0
    %5765 = vmatpush1.msra.mxu0 %v5732
    %5766 = vmatprep.subr.mxu0 0.0
    %5767 = vmatpush1.msra.mxu0 %v5731
    %5768 = vmatprep.subr.mxu0 0.0
    %5769 = vmatpush1.msra.mxu0 %v5730
    %5770 = vmatprep.subr.mxu0 0.0
    %5771 = vmatpush1.msra.mxu0 %v5729
    %5772 = vmatprep.subr.mxu0 0.0
    %5773 = vmatpush2.msra.mxu0 0.0
    %5774 = vmatprep.subr.mxu0 0.0
    %5775 = vmatpush2.msra.mxu0 0.0
    %5776 = vmatprep.subr.mxu0 0.0
    %5777 = vmatpush2.msra.mxu0 0.0
    %5778 = vmatprep.subr.mxu0 0.0
    %5779 = vmatpush2.msra.mxu0 0.0
    %5780 = vmatprep.subr.mxu0 0.0
    %5781 = vmatpush2.msra.mxu0 0.0
    %5782 = vmatprep.subr.mxu0 0.0
    %5783 = vmatpush2.msra.mxu0 0.0
    %5784 = vmatprep.subr.mxu0 0.0
    %5785 = vmatpush2.msra.mxu0 0.0
    %5786 = vmatprep.subr.mxu0 0.0
    %5787 = vmatpush2.msra.mxu0 0.0
    %5788 = vmatprep.subr.mxu0 0.0
    %5789 = vmatpush2.msra.mxu0 0.0
    %5790 = vmatprep.subr.mxu0 0.0
    %5791 = vmatpush2.msra.mxu0 0.0
    %5792 = vmatprep.subr.mxu0 0.0
    %5793 = vmatpush2.msra.mxu0 0.0
    %5794 = vmatprep.subr.mxu0 0.0
    %5795 = vmatpush2.msra.mxu0 0.0
    %5796 = vmatprep.subr.mxu0 0.0
    %5797 = vmatpush2.msra.mxu0 0.0
    %5798 = vmatprep.subr.mxu0 0.0
    %5799 = vmatpush2.msra.mxu0 0.0
    %5800 = vmatprep.subr.mxu0 0.0
    %5801 = vmatpush2.msra.mxu0 0.0
    %5802 = vmatprep.subr.mxu0 0.0
    %5803 = vmatpush2.msra.mxu0 0.0
    %5804 = vmatprep.mubr.f32.mxu0 0.0
    %5805 = vmatmul.mubr.f32.gmra.mxu0 %v5738
    %v5806 = vpop.f32.mrf.mxu0
    %v5807 = vadd.f32 0.0, %v5806
    %v5808 = vpop.f32.mrf.mxu0
    %5809 = vdwg.mxu0
    %v5810 = vadd.f32 %v5727, %v5807
    %s5811 = scalar_lea.vmem [#allocation11], 1216
    %v5812 = vld [vmem:[%s5811] sm:$0xff]
    %v5813 = vld [vmem:[%s5811 + $0x8] sm:$0xff]
    %v5814 = vld [vmem:[%s5811 + $0x10] sm:$0xff]
    %v5815 = vld [vmem:[%s5811 + $0x18] sm:$0xff]
    %v5816 = vld [vmem:[%s5811 + $0x20] sm:$0xff]
    %v5817 = vld [vmem:[%s5811 + $0x28] sm:$0xff]
    %v5818 = vld [vmem:[%s5811 + $0x30] sm:$0xff]
    %v5819 = vld [vmem:[%s5811 + $0x38] sm:$0xff]
    %v5820 = vrot.slane %v4229, 6
    %v5821 = vsel %vm4255, %v5820, 0
    %5823 = vmatprep.subr.mxu0 0.0
    %5824 = vmatpush1.msra.mxu0 0.0
    %5825 = vmatprep.subr.mxu0 0.0
    %5826 = vmatpush1.msra.mxu0 0.0
    %5827 = vmatprep.subr.mxu0 0.0
    %5828 = vmatpush1.msra.mxu0 0.0
    %5829 = vmatprep.subr.mxu0 0.0
    %5830 = vmatpush1.msra.mxu0 0.0
    %5831 = vmatprep.subr.mxu0 0.0
    %5832 = vmatpush1.msra.mxu0 0.0
    %5833 = vmatprep.subr.mxu0 0.0
    %5834 = vmatpush1.msra.mxu0 0.0
    %5835 = vmatprep.subr.mxu0 0.0
    %5836 = vmatpush1.msra.mxu0 0.0
    %5837 = vmatprep.subr.mxu0 0.0
    %5838 = vmatpush1.msra.mxu0 0.0
    %5839 = vmatprep.subr.mxu0 0.0
    %5840 = vmatpush1.msra.mxu0 %v5819
    %5841 = vmatprep.subr.mxu0 0.0
    %5842 = vmatpush1.msra.mxu0 %v5818
    %5843 = vmatprep.subr.mxu0 0.0
    %5844 = vmatpush1.msra.mxu0 %v5817
    %5845 = vmatprep.subr.mxu0 0.0
    %5846 = vmatpush1.msra.mxu0 %v5816
    %5847 = vmatprep.subr.mxu0 0.0
    %5848 = vmatpush1.msra.mxu0 %v5815
    %5849 = vmatprep.subr.mxu0 0.0
    %5850 = vmatpush1.msra.mxu0 %v5814
    %5851 = vmatprep.subr.mxu0 0.0
    %5852 = vmatpush1.msra.mxu0 %v5813
    %5853 = vmatprep.subr.mxu0 0.0
    %5854 = vmatpush1.msra.mxu0 %v5812
    %5855 = vmatprep.subr.mxu0 0.0
    %5856 = vmatpush2.msra.mxu0 0.0
    %5857 = vmatprep.subr.mxu0 0.0
    %5858 = vmatpush2.msra.mxu0 0.0
    %5859 = vmatprep.subr.mxu0 0.0
    %5860 = vmatpush2.msra.mxu0 0.0
    %5861 = vmatprep.subr.mxu0 0.0
    %5862 = vmatpush2.msra.mxu0 0.0
    %5863 = vmatprep.subr.mxu0 0.0
    %5864 = vmatpush2.msra.mxu0 0.0
    %5865 = vmatprep.subr.mxu0 0.0
    %5866 = vmatpush2.msra.mxu0 0.0
    %5867 = vmatprep.subr.mxu0 0.0
    %5868 = vmatpush2.msra.mxu0 0.0
    %5869 = vmatprep.subr.mxu0 0.0
    %5870 = vmatpush2.msra.mxu0 0.0
    %5871 = vmatprep.subr.mxu0 0.0
    %5872 = vmatpush2.msra.mxu0 0.0
    %5873 = vmatprep.subr.mxu0 0.0
    %5874 = vmatpush2.msra.mxu0 0.0
    %5875 = vmatprep.subr.mxu0 0.0
    %5876 = vmatpush2.msra.mxu0 0.0
    %5877 = vmatprep.subr.mxu0 0.0
    %5878 = vmatpush2.msra.mxu0 0.0
    %5879 = vmatprep.subr.mxu0 0.0
    %5880 = vmatpush2.msra.mxu0 0.0
    %5881 = vmatprep.subr.mxu0 0.0
    %5882 = vmatpush2.msra.mxu0 0.0
    %5883 = vmatprep.subr.mxu0 0.0
    %5884 = vmatpush2.msra.mxu0 0.0
    %5885 = vmatprep.subr.mxu0 0.0
    %5886 = vmatpush2.msra.mxu0 0.0
    %5887 = vmatprep.mubr.f32.mxu0 0.0
    %5888 = vmatmul.mubr.f32.gmra.mxu0 %v5821
    %v5889 = vpop.f32.mrf.mxu0
    %v5890 = vadd.f32 0.0, %v5889
    %v5891 = vpop.f32.mrf.mxu0
    %5892 = vdwg.mxu0
    %v5893 = vadd.f32 %v5810, %v5890
    %s5894 = scalar_lea.vmem [#allocation11], 1280
    %v5895 = vld [vmem:[%s5894] sm:$0xff]
    %v5896 = vld [vmem:[%s5894 + $0x8] sm:$0xff]
    %v5897 = vld [vmem:[%s5894 + $0x10] sm:$0xff]
    %v5898 = vld [vmem:[%s5894 + $0x18] sm:$0xff]
    %v5899 = vld [vmem:[%s5894 + $0x20] sm:$0xff]
    %v5900 = vld [vmem:[%s5894 + $0x28] sm:$0xff]
    %v5901 = vld [vmem:[%s5894 + $0x30] sm:$0xff]
    %v5902 = vld [vmem:[%s5894 + $0x38] sm:$0xff]
    %v5904 = vsel %vm4255, %v4230, 0
    %5906 = vmatprep.subr.mxu0 0.0
    %5907 = vmatpush1.msra.mxu0 0.0
    %5908 = vmatprep.subr.mxu0 0.0
    %5909 = vmatpush1.msra.mxu0 0.0
    %5910 = vmatprep.subr.mxu0 0.0
    %5911 = vmatpush1.msra.mxu0 0.0
    %5912 = vmatprep.subr.mxu0 0.0
    %5913 = vmatpush1.msra.mxu0 0.0
    %5914 = vmatprep.subr.mxu0 0.0
    %5915 = vmatpush1.msra.mxu0 0.0
    %5916 = vmatprep.subr.mxu0 0.0
    %5917 = vmatpush1.msra.mxu0 0.0
    %5918 = vmatprep.subr.mxu0 0.0
    %5919 = vmatpush1.msra.mxu0 0.0
    %5920 = vmatprep.subr.mxu0 0.0
    %5921 = vmatpush1.msra.mxu0 0.0
    %5922 = vmatprep.subr.mxu0 0.0
    %5923 = vmatpush1.msra.mxu0 %v5902
    %5924 = vmatprep.subr.mxu0 0.0
    %5925 = vmatpush1.msra.mxu0 %v5901
    %5926 = vmatprep.subr.mxu0 0.0
    %5927 = vmatpush1.msra.mxu0 %v5900
    %5928 = vmatprep.subr.mxu0 0.0
    %5929 = vmatpush1.msra.mxu0 %v5899
    %5930 = vmatprep.subr.mxu0 0.0
    %5931 = vmatpush1.msra.mxu0 %v5898
    %5932 = vmatprep.subr.mxu0 0.0
    %5933 = vmatpush1.msra.mxu0 %v5897
    %5934 = vmatprep.subr.mxu0 0.0
    %5935 = vmatpush1.msra.mxu0 %v5896
    %5936 = vmatprep.subr.mxu0 0.0
    %5937 = vmatpush1.msra.mxu0 %v5895
    %5938 = vmatprep.subr.mxu0 0.0
    %5939 = vmatpush2.msra.mxu0 0.0
    %5940 = vmatprep.subr.mxu0 0.0
    %5941 = vmatpush2.msra.mxu0 0.0
    %5942 = vmatprep.subr.mxu0 0.0
    %5943 = vmatpush2.msra.mxu0 0.0
    %5944 = vmatprep.subr.mxu0 0.0
    %5945 = vmatpush2.msra.mxu0 0.0
    %5946 = vmatprep.subr.mxu0 0.0
    %5947 = vmatpush2.msra.mxu0 0.0
    %5948 = vmatprep.subr.mxu0 0.0
    %5949 = vmatpush2.msra.mxu0 0.0
    %5950 = vmatprep.subr.mxu0 0.0
    %5951 = vmatpush2.msra.mxu0 0.0
    %5952 = vmatprep.subr.mxu0 0.0
    %5953 = vmatpush2.msra.mxu0 0.0
    %5954 = vmatprep.subr.mxu0 0.0
    %5955 = vmatpush2.msra.mxu0 0.0
    %5956 = vmatprep.subr.mxu0 0.0
    %5957 = vmatpush2.msra.mxu0 0.0
    %5958 = vmatprep.subr.mxu0 0.0
    %5959 = vmatpush2.msra.mxu0 0.0
    %5960 = vmatprep.subr.mxu0 0.0
    %5961 = vmatpush2.msra.mxu0 0.0
    %5962 = vmatprep.subr.mxu0 0.0
    %5963 = vmatpush2.msra.mxu0 0.0
    %5964 = vmatprep.subr.mxu0 0.0
    %5965 = vmatpush2.msra.mxu0 0.0
    %5966 = vmatprep.subr.mxu0 0.0
    %5967 = vmatpush2.msra.mxu0 0.0
    %5968 = vmatprep.subr.mxu0 0.0
    %5969 = vmatpush2.msra.mxu0 0.0
    %5970 = vmatprep.mubr.f32.mxu0 0.0
    %5971 = vmatmul.mubr.f32.gmra.mxu0 %v5904
    %v5972 = vpop.f32.mrf.mxu0
    %v5973 = vadd.f32 0.0, %v5972
    %v5974 = vpop.f32.mrf.mxu0
    %5975 = vdwg.mxu0
    %v5976 = vadd.f32 %v5893, %v5973
    %s5977 = scalar_lea.vmem [#allocation11], 1344
    %v5978 = vld [vmem:[%s5977] sm:$0xff]
    %v5979 = vld [vmem:[%s5977 + $0x8] sm:$0xff]
    %v5980 = vld [vmem:[%s5977 + $0x10] sm:$0xff]
    %v5981 = vld [vmem:[%s5977 + $0x18] sm:$0xff]
    %v5982 = vld [vmem:[%s5977 + $0x20] sm:$0xff]
    %v5983 = vld [vmem:[%s5977 + $0x28] sm:$0xff]
    %v5984 = vld [vmem:[%s5977 + $0x30] sm:$0xff]
    %v5985 = vld [vmem:[%s5977 + $0x38] sm:$0xff]
    %v5986 = vrot.slane %v4230, 2
    %v5987 = vsel %vm4255, %v5986, 0
    %5989 = vmatprep.subr.mxu0 0.0
    %5990 = vmatpush1.msra.mxu0 0.0
    %5991 = vmatprep.subr.mxu0 0.0
    %5992 = vmatpush1.msra.mxu0 0.0
    %5993 = vmatprep.subr.mxu0 0.0
    %5994 = vmatpush1.msra.mxu0 0.0
    %5995 = vmatprep.subr.mxu0 0.0
    %5996 = vmatpush1.msra.mxu0 0.0
    %5997 = vmatprep.subr.mxu0 0.0
    %5998 = vmatpush1.msra.mxu0 0.0
    %5999 = vmatprep.subr.mxu0 0.0
    %6000 = vmatpush1.msra.mxu0 0.0
    %6001 = vmatprep.subr.mxu0 0.0
    %6002 = vmatpush1.msra.mxu0 0.0
    %6003 = vmatprep.subr.mxu0 0.0
    %6004 = vmatpush1.msra.mxu0 0.0
    %6005 = vmatprep.subr.mxu0 0.0
    %6006 = vmatpush1.msra.mxu0 %v5985
    %6007 = vmatprep.subr.mxu0 0.0
    %6008 = vmatpush1.msra.mxu0 %v5984
    %6009 = vmatprep.subr.mxu0 0.0
    %6010 = vmatpush1.msra.mxu0 %v5983
    %6011 = vmatprep.subr.mxu0 0.0
    %6012 = vmatpush1.msra.mxu0 %v5982
    %6013 = vmatprep.subr.mxu0 0.0
    %6014 = vmatpush1.msra.mxu0 %v5981
    %6015 = vmatprep.subr.mxu0 0.0
    %6016 = vmatpush1.msra.mxu0 %v5980
    %6017 = vmatprep.subr.mxu0 0.0
    %6018 = vmatpush1.msra.mxu0 %v5979
    %6019 = vmatprep.subr.mxu0 0.0
    %6020 = vmatpush1.msra.mxu0 %v5978
    %6021 = vmatprep.subr.mxu0 0.0
    %6022 = vmatpush2.msra.mxu0 0.0
    %6023 = vmatprep.subr.mxu0 0.0
    %6024 = vmatpush2.msra.mxu0 0.0
    %6025 = vmatprep.subr.mxu0 0.0
    %6026 = vmatpush2.msra.mxu0 0.0
    %6027 = vmatprep.subr.mxu0 0.0
    %6028 = vmatpush2.msra.mxu0 0.0
    %6029 = vmatprep.subr.mxu0 0.0
    %6030 = vmatpush2.msra.mxu0 0.0
    %6031 = vmatprep.subr.mxu0 0.0
    %6032 = vmatpush2.msra.mxu0 0.0
    %6033 = vmatprep.subr.mxu0 0.0
    %6034 = vmatpush2.msra.mxu0 0.0
    %6035 = vmatprep.subr.mxu0 0.0
    %6036 = vmatpush2.msra.mxu0 0.0
    %6037 = vmatprep.subr.mxu0 0.0
    %6038 = vmatpush2.msra.mxu0 0.0
    %6039 = vmatprep.subr.mxu0 0.0
    %6040 = vmatpush2.msra.mxu0 0.0
    %6041 = vmatprep.subr.mxu0 0.0
    %6042 = vmatpush2.msra.mxu0 0.0
    %6043 = vmatprep.subr.mxu0 0.0
    %6044 = vmatpush2.msra.mxu0 0.0
    %6045 = vmatprep.subr.mxu0 0.0
    %6046 = vmatpush2.msra.mxu0 0.0
    %6047 = vmatprep.subr.mxu0 0.0
    %6048 = vmatpush2.msra.mxu0 0.0
    %6049 = vmatprep.subr.mxu0 0.0
    %6050 = vmatpush2.msra.mxu0 0.0
    %6051 = vmatprep.subr.mxu0 0.0
    %6052 = vmatpush2.msra.mxu0 0.0
    %6053 = vmatprep.mubr.f32.mxu0 0.0
    %6054 = vmatmul.mubr.f32.gmra.mxu0 %v5987
    %v6055 = vpop.f32.mrf.mxu0
    %v6056 = vadd.f32 0.0, %v6055
    %v6057 = vpop.f32.mrf.mxu0
    %6058 = vdwg.mxu0
    %v6059 = vadd.f32 %v5976, %v6056
    %s6060 = scalar_lea.vmem [#allocation11], 1408
    %v6061 = vld [vmem:[%s6060] sm:$0xff]
    %v6062 = vld [vmem:[%s6060 + $0x8] sm:$0xff]
    %v6063 = vld [vmem:[%s6060 + $0x10] sm:$0xff]
    %v6064 = vld [vmem:[%s6060 + $0x18] sm:$0xff]
    %v6065 = vld [vmem:[%s6060 + $0x20] sm:$0xff]
    %v6066 = vld [vmem:[%s6060 + $0x28] sm:$0xff]
    %v6067 = vld [vmem:[%s6060 + $0x30] sm:$0xff]
    %v6068 = vld [vmem:[%s6060 + $0x38] sm:$0xff]
    %v6069 = vrot.slane %v4230, 4
    %v6070 = vsel %vm4255, %v6069, 0
    %6072 = vmatprep.subr.mxu0 0.0
    %6073 = vmatpush1.msra.mxu0 0.0
    %6074 = vmatprep.subr.mxu0 0.0
    %6075 = vmatpush1.msra.mxu0 0.0
    %6076 = vmatprep.subr.mxu0 0.0
    %6077 = vmatpush1.msra.mxu0 0.0
    %6078 = vmatprep.subr.mxu0 0.0
    %6079 = vmatpush1.msra.mxu0 0.0
    %6080 = vmatprep.subr.mxu0 0.0
    %6081 = vmatpush1.msra.mxu0 0.0
    %6082 = vmatprep.subr.mxu0 0.0
    %6083 = vmatpush1.msra.mxu0 0.0
    %6084 = vmatprep.subr.mxu0 0.0
    %6085 = vmatpush1.msra.mxu0 0.0
    %6086 = vmatprep.subr.mxu0 0.0
    %6087 = vmatpush1.msra.mxu0 0.0
    %6088 = vmatprep.subr.mxu0 0.0
    %6089 = vmatpush1.msra.mxu0 %v6068
    %6090 = vmatprep.subr.mxu0 0.0
    %6091 = vmatpush1.msra.mxu0 %v6067
    %6092 = vmatprep.subr.mxu0 0.0
    %6093 = vmatpush1.msra.mxu0 %v6066
    %6094 = vmatprep.subr.mxu0 0.0
    %6095 = vmatpush1.msra.mxu0 %v6065
    %6096 = vmatprep.subr.mxu0 0.0
    %6097 = vmatpush1.msra.mxu0 %v6064
    %6098 = vmatprep.subr.mxu0 0.0
    %6099 = vmatpush1.msra.mxu0 %v6063
    %6100 = vmatprep.subr.mxu0 0.0
    %6101 = vmatpush1.msra.mxu0 %v6062
    %6102 = vmatprep.subr.mxu0 0.0
    %6103 = vmatpush1.msra.mxu0 %v6061
    %6104 = vmatprep.subr.mxu0 0.0
    %6105 = vmatpush2.msra.mxu0 0.0
    %6106 = vmatprep.subr.mxu0 0.0
    %6107 = vmatpush2.msra.mxu0 0.0
    %6108 = vmatprep.subr.mxu0 0.0
    %6109 = vmatpush2.msra.mxu0 0.0
    %6110 = vmatprep.subr.mxu0 0.0
    %6111 = vmatpush2.msra.mxu0 0.0
    %6112 = vmatprep.subr.mxu0 0.0
    %6113 = vmatpush2.msra.mxu0 0.0
    %6114 = vmatprep.subr.mxu0 0.0
    %6115 = vmatpush2.msra.mxu0 0.0
    %6116 = vmatprep.subr.mxu0 0.0
    %6117 = vmatpush2.msra.mxu0 0.0
    %6118 = vmatprep.subr.mxu0 0.0
    %6119 = vmatpush2.msra.mxu0 0.0
    %6120 = vmatprep.subr.mxu0 0.0
    %6121 = vmatpush2.msra.mxu0 0.0
    %6122 = vmatprep.subr.mxu0 0.0
    %6123 = vmatpush2.msra.mxu0 0.0
    %6124 = vmatprep.subr.mxu0 0.0
    %6125 = vmatpush2.msra.mxu0 0.0
    %6126 = vmatprep.subr.mxu0 0.0
    %6127 = vmatpush2.msra.mxu0 0.0
    %6128 = vmatprep.subr.mxu0 0.0
    %6129 = vmatpush2.msra.mxu0 0.0
    %6130 = vmatprep.subr.mxu0 0.0
    %6131 = vmatpush2.msra.mxu0 0.0
    %6132 = vmatprep.subr.mxu0 0.0
    %6133 = vmatpush2.msra.mxu0 0.0
    %6134 = vmatprep.subr.mxu0 0.0
    %6135 = vmatpush2.msra.mxu0 0.0
    %6136 = vmatprep.mubr.f32.mxu0 0.0
    %6137 = vmatmul.mubr.f32.gmra.mxu0 %v6070
    %v6138 = vpop.f32.mrf.mxu0
    %v6139 = vadd.f32 0.0, %v6138
    %v6140 = vpop.f32.mrf.mxu0
    %6141 = vdwg.mxu0
    %v6142 = vadd.f32 %v6059, %v6139
    %s6143 = scalar_lea.vmem [#allocation11], 1472
    %v6144 = vld [vmem:[%s6143] sm:$0xff]
    %v6145 = vld [vmem:[%s6143 + $0x8] sm:$0xff]
    %v6146 = vld [vmem:[%s6143 + $0x10] sm:$0xff]
    %v6147 = vld [vmem:[%s6143 + $0x18] sm:$0xff]
    %v6148 = vld [vmem:[%s6143 + $0x20] sm:$0xff]
    %v6149 = vld [vmem:[%s6143 + $0x28] sm:$0xff]
    %v6150 = vld [vmem:[%s6143 + $0x30] sm:$0xff]
    %v6151 = vld [vmem:[%s6143 + $0x38] sm:$0xff]
    %v6152 = vrot.slane %v4230, 6
    %v6153 = vsel %vm4255, %v6152, 0
    %6155 = vmatprep.subr.mxu0 0.0
    %6156 = vmatpush1.msra.mxu0 0.0
    %6157 = vmatprep.subr.mxu0 0.0
    %6158 = vmatpush1.msra.mxu0 0.0
    %6159 = vmatprep.subr.mxu0 0.0
    %6160 = vmatpush1.msra.mxu0 0.0
    %6161 = vmatprep.subr.mxu0 0.0
    %6162 = vmatpush1.msra.mxu0 0.0
    %6163 = vmatprep.subr.mxu0 0.0
    %6164 = vmatpush1.msra.mxu0 0.0
    %6165 = vmatprep.subr.mxu0 0.0
    %6166 = vmatpush1.msra.mxu0 0.0
    %6167 = vmatprep.subr.mxu0 0.0
    %6168 = vmatpush1.msra.mxu0 0.0
    %6169 = vmatprep.subr.mxu0 0.0
    %6170 = vmatpush1.msra.mxu0 0.0
    %6171 = vmatprep.subr.mxu0 0.0
    %6172 = vmatpush1.msra.mxu0 %v6151
    %6173 = vmatprep.subr.mxu0 0.0
    %6174 = vmatpush1.msra.mxu0 %v6150
    %6175 = vmatprep.subr.mxu0 0.0
    %6176 = vmatpush1.msra.mxu0 %v6149
    %6177 = vmatprep.subr.mxu0 0.0
    %6178 = vmatpush1.msra.mxu0 %v6148
    %6179 = vmatprep.subr.mxu0 0.0
    %6180 = vmatpush1.msra.mxu0 %v6147
    %6181 = vmatprep.subr.mxu0 0.0
    %6182 = vmatpush1.msra.mxu0 %v6146
    %6183 = vmatprep.subr.mxu0 0.0
    %6184 = vmatpush1.msra.mxu0 %v6145
    %6185 = vmatprep.subr.mxu0 0.0
    %6186 = vmatpush1.msra.mxu0 %v6144
    %6187 = vmatprep.subr.mxu0 0.0
    %6188 = vmatpush2.msra.mxu0 0.0
    %6189 = vmatprep.subr.mxu0 0.0
    %6190 = vmatpush2.msra.mxu0 0.0
    %6191 = vmatprep.subr.mxu0 0.0
    %6192 = vmatpush2.msra.mxu0 0.0
    %6193 = vmatprep.subr.mxu0 0.0
    %6194 = vmatpush2.msra.mxu0 0.0
    %6195 = vmatprep.subr.mxu0 0.0
    %6196 = vmatpush2.msra.mxu0 0.0
    %6197 = vmatprep.subr.mxu0 0.0
    %6198 = vmatpush2.msra.mxu0 0.0
    %6199 = vmatprep.subr.mxu0 0.0
    %6200 = vmatpush2.msra.mxu0 0.0
    %6201 = vmatprep.subr.mxu0 0.0
    %6202 = vmatpush2.msra.mxu0 0.0
    %6203 = vmatprep.subr.mxu0 0.0
    %6204 = vmatpush2.msra.mxu0 0.0
    %6205 = vmatprep.subr.mxu0 0.0
    %6206 = vmatpush2.msra.mxu0 0.0
    %6207 = vmatprep.subr.mxu0 0.0
    %6208 = vmatpush2.msra.mxu0 0.0
    %6209 = vmatprep.subr.mxu0 0.0
    %6210 = vmatpush2.msra.mxu0 0.0
    %6211 = vmatprep.subr.mxu0 0.0
    %6212 = vmatpush2.msra.mxu0 0.0
    %6213 = vmatprep.subr.mxu0 0.0
    %6214 = vmatpush2.msra.mxu0 0.0
    %6215 = vmatprep.subr.mxu0 0.0
    %6216 = vmatpush2.msra.mxu0 0.0
    %6217 = vmatprep.subr.mxu0 0.0
    %6218 = vmatpush2.msra.mxu0 0.0
    %6219 = vmatprep.mubr.f32.mxu0 0.0
    %6220 = vmatmul.mubr.f32.gmra.mxu0 %v6153
    %v6221 = vpop.f32.mrf.mxu0
    %v6222 = vadd.f32 0.0, %v6221
    %v6223 = vpop.f32.mrf.mxu0
    %6224 = vdwg.mxu0
    %v6225 = vadd.f32 %v6142, %v6222
    %s6226 = scalar_lea.vmem [#allocation11], 1536
    %v6227 = vld [vmem:[%s6226] sm:$0xff]
    %v6228 = vld [vmem:[%s6226 + $0x8] sm:$0xff]
    %v6229 = vld [vmem:[%s6226 + $0x10] sm:$0xff]
    %v6230 = vld [vmem:[%s6226 + $0x18] sm:$0xff]
    %v6231 = vld [vmem:[%s6226 + $0x20] sm:$0xff]
    %v6232 = vld [vmem:[%s6226 + $0x28] sm:$0xff]
    %v6233 = vld [vmem:[%s6226 + $0x30] sm:$0xff]
    %v6234 = vld [vmem:[%s6226 + $0x38] sm:$0xff]
    %v6236 = vsel %vm4255, %v4231, 0
    %6238 = vmatprep.subr.mxu0 0.0
    %6239 = vmatpush1.msra.mxu0 0.0
    %6240 = vmatprep.subr.mxu0 0.0
    %6241 = vmatpush1.msra.mxu0 0.0
    %6242 = vmatprep.subr.mxu0 0.0
    %6243 = vmatpush1.msra.mxu0 0.0
    %6244 = vmatprep.subr.mxu0 0.0
    %6245 = vmatpush1.msra.mxu0 0.0
    %6246 = vmatprep.subr.mxu0 0.0
    %6247 = vmatpush1.msra.mxu0 0.0
    %6248 = vmatprep.subr.mxu0 0.0
    %6249 = vmatpush1.msra.mxu0 0.0
    %6250 = vmatprep.subr.mxu0 0.0
    %6251 = vmatpush1.msra.mxu0 0.0
    %6252 = vmatprep.subr.mxu0 0.0
    %6253 = vmatpush1.msra.mxu0 0.0
    %6254 = vmatprep.subr.mxu0 0.0
    %6255 = vmatpush1.msra.mxu0 %v6234
    %6256 = vmatprep.subr.mxu0 0.0
    %6257 = vmatpush1.msra.mxu0 %v6233
    %6258 = vmatprep.subr.mxu0 0.0
    %6259 = vmatpush1.msra.mxu0 %v6232
    %6260 = vmatprep.subr.mxu0 0.0
    %6261 = vmatpush1.msra.mxu0 %v6231
    %6262 = vmatprep.subr.mxu0 0.0
    %6263 = vmatpush1.msra.mxu0 %v6230
    %6264 = vmatprep.subr.mxu0 0.0
    %6265 = vmatpush1.msra.mxu0 %v6229
    %6266 = vmatprep.subr.mxu0 0.0
    %6267 = vmatpush1.msra.mxu0 %v6228
    %6268 = vmatprep.subr.mxu0 0.0
    %6269 = vmatpush1.msra.mxu0 %v6227
    %6270 = vmatprep.subr.mxu0 0.0
    %6271 = vmatpush2.msra.mxu0 0.0
    %6272 = vmatprep.subr.mxu0 0.0
    %6273 = vmatpush2.msra.mxu0 0.0
    %6274 = vmatprep.subr.mxu0 0.0
    %6275 = vmatpush2.msra.mxu0 0.0
    %6276 = vmatprep.subr.mxu0 0.0
    %6277 = vmatpush2.msra.mxu0 0.0
    %6278 = vmatprep.subr.mxu0 0.0
    %6279 = vmatpush2.msra.mxu0 0.0
    %6280 = vmatprep.subr.mxu0 0.0
    %6281 = vmatpush2.msra.mxu0 0.0
    %6282 = vmatprep.subr.mxu0 0.0
    %6283 = vmatpush2.msra.mxu0 0.0
    %6284 = vmatprep.subr.mxu0 0.0
    %6285 = vmatpush2.msra.mxu0 0.0
    %6286 = vmatprep.subr.mxu0 0.0
    %6287 = vmatpush2.msra.mxu0 0.0
    %6288 = vmatprep.subr.mxu0 0.0
    %6289 = vmatpush2.msra.mxu0 0.0
    %6290 = vmatprep.subr.mxu0 0.0
    %6291 = vmatpush2.msra.mxu0 0.0
    %6292 = vmatprep.subr.mxu0 0.0
    %6293 = vmatpush2.msra.mxu0 0.0
    %6294 = vmatprep.subr.mxu0 0.0
    %6295 = vmatpush2.msra.mxu0 0.0
    %6296 = vmatprep.subr.mxu0 0.0
    %6297 = vmatpush2.msra.mxu0 0.0
    %6298 = vmatprep.subr.mxu0 0.0
    %6299 = vmatpush2.msra.mxu0 0.0
    %6300 = vmatprep.subr.mxu0 0.0
    %6301 = vmatpush2.msra.mxu0 0.0
    %6302 = vmatprep.mubr.f32.mxu0 0.0
    %6303 = vmatmul.mubr.f32.gmra.mxu0 %v6236
    %v6304 = vpop.f32.mrf.mxu0
    %v6305 = vadd.f32 0.0, %v6304
    %v6306 = vpop.f32.mrf.mxu0
    %6307 = vdwg.mxu0
    %v6308 = vadd.f32 %v6225, %v6305
    %s6309 = scalar_lea.vmem [#allocation11], 1600
    %v6310 = vld [vmem:[%s6309] sm:$0xff]
    %v6311 = vld [vmem:[%s6309 + $0x8] sm:$0xff]
    %v6312 = vld [vmem:[%s6309 + $0x10] sm:$0xff]
    %v6313 = vld [vmem:[%s6309 + $0x18] sm:$0xff]
    %v6314 = vld [vmem:[%s6309 + $0x20] sm:$0xff]
    %v6315 = vld [vmem:[%s6309 + $0x28] sm:$0xff]
    %v6316 = vld [vmem:[%s6309 + $0x30] sm:$0xff]
    %v6317 = vld [vmem:[%s6309 + $0x38] sm:$0xff]
    %v6318 = vrot.slane %v4231, 2
    %v6319 = vsel %vm4255, %v6318, 0
    %6321 = vmatprep.subr.mxu0 0.0
    %6322 = vmatpush1.msra.mxu0 0.0
    %6323 = vmatprep.subr.mxu0 0.0
    %6324 = vmatpush1.msra.mxu0 0.0
    %6325 = vmatprep.subr.mxu0 0.0
    %6326 = vmatpush1.msra.mxu0 0.0
    %6327 = vmatprep.subr.mxu0 0.0
    %6328 = vmatpush1.msra.mxu0 0.0
    %6329 = vmatprep.subr.mxu0 0.0
    %6330 = vmatpush1.msra.mxu0 0.0
    %6331 = vmatprep.subr.mxu0 0.0
    %6332 = vmatpush1.msra.mxu0 0.0
    %6333 = vmatprep.subr.mxu0 0.0
    %6334 = vmatpush1.msra.mxu0 0.0
    %6335 = vmatprep.subr.mxu0 0.0
    %6336 = vmatpush1.msra.mxu0 0.0
    %6337 = vmatprep.subr.mxu0 0.0
    %6338 = vmatpush1.msra.mxu0 %v6317
    %6339 = vmatprep.subr.mxu0 0.0
    %6340 = vmatpush1.msra.mxu0 %v6316
    %6341 = vmatprep.subr.mxu0 0.0
    %6342 = vmatpush1.msra.mxu0 %v6315
    %6343 = vmatprep.subr.mxu0 0.0
    %6344 = vmatpush1.msra.mxu0 %v6314
    %6345 = vmatprep.subr.mxu0 0.0
    %6346 = vmatpush1.msra.mxu0 %v6313
    %6347 = vmatprep.subr.mxu0 0.0
    %6348 = vmatpush1.msra.mxu0 %v6312
    %6349 = vmatprep.subr.mxu0 0.0
    %6350 = vmatpush1.msra.mxu0 %v6311
    %6351 = vmatprep.subr.mxu0 0.0
    %6352 = vmatpush1.msra.mxu0 %v6310
    %6353 = vmatprep.subr.mxu0 0.0
    %6354 = vmatpush2.msra.mxu0 0.0
    %6355 = vmatprep.subr.mxu0 0.0
    %6356 = vmatpush2.msra.mxu0 0.0
    %6357 = vmatprep.subr.mxu0 0.0
    %6358 = vmatpush2.msra.mxu0 0.0
    %6359 = vmatprep.subr.mxu0 0.0
    %6360 = vmatpush2.msra.mxu0 0.0
    %6361 = vmatprep.subr.mxu0 0.0
    %6362 = vmatpush2.msra.mxu0 0.0
    %6363 = vmatprep.subr.mxu0 0.0
    %6364 = vmatpush2.msra.mxu0 0.0
    %6365 = vmatprep.subr.mxu0 0.0
    %6366 = vmatpush2.msra.mxu0 0.0
    %6367 = vmatprep.subr.mxu0 0.0
    %6368 = vmatpush2.msra.mxu0 0.0
    %6369 = vmatprep.subr.mxu0 0.0
    %6370 = vmatpush2.msra.mxu0 0.0
    %6371 = vmatprep.subr.mxu0 0.0
    %6372 = vmatpush2.msra.mxu0 0.0
    %6373 = vmatprep.subr.mxu0 0.0
    %6374 = vmatpush2.msra.mxu0 0.0
    %6375 = vmatprep.subr.mxu0 0.0
    %6376 = vmatpush2.msra.mxu0 0.0
    %6377 = vmatprep.subr.mxu0 0.0
    %6378 = vmatpush2.msra.mxu0 0.0
    %6379 = vmatprep.subr.mxu0 0.0
    %6380 = vmatpush2.msra.mxu0 0.0
    %6381 = vmatprep.subr.mxu0 0.0
    %6382 = vmatpush2.msra.mxu0 0.0
    %6383 = vmatprep.subr.mxu0 0.0
    %6384 = vmatpush2.msra.mxu0 0.0
    %6385 = vmatprep.mubr.f32.mxu0 0.0
    %6386 = vmatmul.mubr.f32.gmra.mxu0 %v6319
    %v6387 = vpop.f32.mrf.mxu0
    %v6388 = vadd.f32 0.0, %v6387
    %v6389 = vpop.f32.mrf.mxu0
    %6390 = vdwg.mxu0
    %v6391 = vadd.f32 %v6308, %v6388
    %s6392 = scalar_lea.vmem [#allocation11], 1664
    %v6393 = vld [vmem:[%s6392] sm:$0xff]
    %v6394 = vld [vmem:[%s6392 + $0x8] sm:$0xff]
    %v6395 = vld [vmem:[%s6392 + $0x10] sm:$0xff]
    %v6396 = vld [vmem:[%s6392 + $0x18] sm:$0xff]
    %v6397 = vld [vmem:[%s6392 + $0x20] sm:$0xff]
    %v6398 = vld [vmem:[%s6392 + $0x28] sm:$0xff]
    %v6399 = vld [vmem:[%s6392 + $0x30] sm:$0xff]
    %v6400 = vld [vmem:[%s6392 + $0x38] sm:$0xff]
    %v6401 = vrot.slane %v4231, 4
    %v6402 = vsel %vm4255, %v6401, 0
    %6404 = vmatprep.subr.mxu0 0.0
    %6405 = vmatpush1.msra.mxu0 0.0
    %6406 = vmatprep.subr.mxu0 0.0
    %6407 = vmatpush1.msra.mxu0 0.0
    %6408 = vmatprep.subr.mxu0 0.0
    %6409 = vmatpush1.msra.mxu0 0.0
    %6410 = vmatprep.subr.mxu0 0.0
    %6411 = vmatpush1.msra.mxu0 0.0
    %6412 = vmatprep.subr.mxu0 0.0
    %6413 = vmatpush1.msra.mxu0 0.0
    %6414 = vmatprep.subr.mxu0 0.0
    %6415 = vmatpush1.msra.mxu0 0.0
    %6416 = vmatprep.subr.mxu0 0.0
    %6417 = vmatpush1.msra.mxu0 0.0
    %6418 = vmatprep.subr.mxu0 0.0
    %6419 = vmatpush1.msra.mxu0 0.0
    %6420 = vmatprep.subr.mxu0 0.0
    %6421 = vmatpush1.msra.mxu0 %v6400
    %6422 = vmatprep.subr.mxu0 0.0
    %6423 = vmatpush1.msra.mxu0 %v6399
    %6424 = vmatprep.subr.mxu0 0.0
    %6425 = vmatpush1.msra.mxu0 %v6398
    %6426 = vmatprep.subr.mxu0 0.0
    %6427 = vmatpush1.msra.mxu0 %v6397
    %6428 = vmatprep.subr.mxu0 0.0
    %6429 = vmatpush1.msra.mxu0 %v6396
    %6430 = vmatprep.subr.mxu0 0.0
    %6431 = vmatpush1.msra.mxu0 %v6395
    %6432 = vmatprep.subr.mxu0 0.0
    %6433 = vmatpush1.msra.mxu0 %v6394
    %6434 = vmatprep.subr.mxu0 0.0
    %6435 = vmatpush1.msra.mxu0 %v6393
    %6436 = vmatprep.subr.mxu0 0.0
    %6437 = vmatpush2.msra.mxu0 0.0
    %6438 = vmatprep.subr.mxu0 0.0
    %6439 = vmatpush2.msra.mxu0 0.0
    %6440 = vmatprep.subr.mxu0 0.0
    %6441 = vmatpush2.msra.mxu0 0.0
    %6442 = vmatprep.subr.mxu0 0.0
    %6443 = vmatpush2.msra.mxu0 0.0
    %6444 = vmatprep.subr.mxu0 0.0
    %6445 = vmatpush2.msra.mxu0 0.0
    %6446 = vmatprep.subr.mxu0 0.0
    %6447 = vmatpush2.msra.mxu0 0.0
    %6448 = vmatprep.subr.mxu0 0.0
    %6449 = vmatpush2.msra.mxu0 0.0
    %6450 = vmatprep.subr.mxu0 0.0
    %6451 = vmatpush2.msra.mxu0 0.0
    %6452 = vmatprep.subr.mxu0 0.0
    %6453 = vmatpush2.msra.mxu0 0.0
    %6454 = vmatprep.subr.mxu0 0.0
    %6455 = vmatpush2.msra.mxu0 0.0
    %6456 = vmatprep.subr.mxu0 0.0
    %6457 = vmatpush2.msra.mxu0 0.0
    %6458 = vmatprep.subr.mxu0 0.0
    %6459 = vmatpush2.msra.mxu0 0.0
    %6460 = vmatprep.subr.mxu0 0.0
    %6461 = vmatpush2.msra.mxu0 0.0
    %6462 = vmatprep.subr.mxu0 0.0
    %6463 = vmatpush2.msra.mxu0 0.0
    %6464 = vmatprep.subr.mxu0 0.0
    %6465 = vmatpush2.msra.mxu0 0.0
    %6466 = vmatprep.subr.mxu0 0.0
    %6467 = vmatpush2.msra.mxu0 0.0
    %6468 = vmatprep.mubr.f32.mxu0 0.0
    %6469 = vmatmul.mubr.f32.gmra.mxu0 %v6402
    %v6470 = vpop.f32.mrf.mxu0
    %v6471 = vadd.f32 0.0, %v6470
    %v6472 = vpop.f32.mrf.mxu0
    %6473 = vdwg.mxu0
    %v6474 = vadd.f32 %v6391, %v6471
    %s6475 = scalar_lea.vmem [#allocation11], 1728
    %v6476 = vld [vmem:[%s6475] sm:$0xff]
    %v6477 = vld [vmem:[%s6475 + $0x8] sm:$0xff]
    %v6478 = vld [vmem:[%s6475 + $0x10] sm:$0xff]
    %v6479 = vld [vmem:[%s6475 + $0x18] sm:$0xff]
    %v6480 = vld [vmem:[%s6475 + $0x20] sm:$0xff]
    %v6481 = vld [vmem:[%s6475 + $0x28] sm:$0xff]
    %v6482 = vld [vmem:[%s6475 + $0x30] sm:$0xff]
    %v6483 = vld [vmem:[%s6475 + $0x38] sm:$0xff]
    %v6484 = vrot.slane %v4231, 6
    %v6485 = vsel %vm4255, %v6484, 0
    %6487 = vmatprep.subr.mxu0 0.0
    %6488 = vmatpush1.msra.mxu0 0.0
    %6489 = vmatprep.subr.mxu0 0.0
    %6490 = vmatpush1.msra.mxu0 0.0
    %6491 = vmatprep.subr.mxu0 0.0
    %6492 = vmatpush1.msra.mxu0 0.0
    %6493 = vmatprep.subr.mxu0 0.0
    %6494 = vmatpush1.msra.mxu0 0.0
    %6495 = vmatprep.subr.mxu0 0.0
    %6496 = vmatpush1.msra.mxu0 0.0
    %6497 = vmatprep.subr.mxu0 0.0
    %6498 = vmatpush1.msra.mxu0 0.0
    %6499 = vmatprep.subr.mxu0 0.0
    %6500 = vmatpush1.msra.mxu0 0.0
    %6501 = vmatprep.subr.mxu0 0.0
    %6502 = vmatpush1.msra.mxu0 0.0
    %6503 = vmatprep.subr.mxu0 0.0
    %6504 = vmatpush1.msra.mxu0 %v6483
    %6505 = vmatprep.subr.mxu0 0.0
    %6506 = vmatpush1.msra.mxu0 %v6482
    %6507 = vmatprep.subr.mxu0 0.0
    %6508 = vmatpush1.msra.mxu0 %v6481
    %6509 = vmatprep.subr.mxu0 0.0
    %6510 = vmatpush1.msra.mxu0 %v6480
    %6511 = vmatprep.subr.mxu0 0.0
    %6512 = vmatpush1.msra.mxu0 %v6479
    %6513 = vmatprep.subr.mxu0 0.0
    %6514 = vmatpush1.msra.mxu0 %v6478
    %6515 = vmatprep.subr.mxu0 0.0
    %6516 = vmatpush1.msra.mxu0 %v6477
    %6517 = vmatprep.subr.mxu0 0.0
    %6518 = vmatpush1.msra.mxu0 %v6476
    %6519 = vmatprep.subr.mxu0 0.0
    %6520 = vmatpush2.msra.mxu0 0.0
    %6521 = vmatprep.subr.mxu0 0.0
    %6522 = vmatpush2.msra.mxu0 0.0
    %6523 = vmatprep.subr.mxu0 0.0
    %6524 = vmatpush2.msra.mxu0 0.0
    %6525 = vmatprep.subr.mxu0 0.0
    %6526 = vmatpush2.msra.mxu0 0.0
    %6527 = vmatprep.subr.mxu0 0.0
    %6528 = vmatpush2.msra.mxu0 0.0
    %6529 = vmatprep.subr.mxu0 0.0
    %6530 = vmatpush2.msra.mxu0 0.0
    %6531 = vmatprep.subr.mxu0 0.0
    %6532 = vmatpush2.msra.mxu0 0.0
    %6533 = vmatprep.subr.mxu0 0.0
    %6534 = vmatpush2.msra.mxu0 0.0
    %6535 = vmatprep.subr.mxu0 0.0
    %6536 = vmatpush2.msra.mxu0 0.0
    %6537 = vmatprep.subr.mxu0 0.0
    %6538 = vmatpush2.msra.mxu0 0.0
    %6539 = vmatprep.subr.mxu0 0.0
    %6540 = vmatpush2.msra.mxu0 0.0
    %6541 = vmatprep.subr.mxu0 0.0
    %6542 = vmatpush2.msra.mxu0 0.0
    %6543 = vmatprep.subr.mxu0 0.0
    %6544 = vmatpush2.msra.mxu0 0.0
    %6545 = vmatprep.subr.mxu0 0.0
    %6546 = vmatpush2.msra.mxu0 0.0
    %6547 = vmatprep.subr.mxu0 0.0
    %6548 = vmatpush2.msra.mxu0 0.0
    %6549 = vmatprep.subr.mxu0 0.0
    %6550 = vmatpush2.msra.mxu0 0.0
    %6551 = vmatprep.mubr.f32.mxu0 0.0
    %6552 = vmatmul.mubr.f32.gmra.mxu0 %v6485
    %v6553 = vpop.f32.mrf.mxu0
    %v6554 = vadd.f32 0.0, %v6553
    %v6555 = vpop.f32.mrf.mxu0
    %6556 = vdwg.mxu0
    %v6557 = vadd.f32 %v6474, %v6554
    %s6558 = scalar_lea.vmem [#allocation11], 1792
    %v6559 = vld [vmem:[%s6558] sm:$0xff]
    %v6560 = vld [vmem:[%s6558 + $0x8] sm:$0xff]
    %v6561 = vld [vmem:[%s6558 + $0x10] sm:$0xff]
    %v6562 = vld [vmem:[%s6558 + $0x18] sm:$0xff]
    %v6563 = vld [vmem:[%s6558 + $0x20] sm:$0xff]
    %v6564 = vld [vmem:[%s6558 + $0x28] sm:$0xff]
    %v6565 = vld [vmem:[%s6558 + $0x30] sm:$0xff]
    %v6566 = vld [vmem:[%s6558 + $0x38] sm:$0xff]
    %v6568 = vsel %vm4255, %v4232, 0
    %6570 = vmatprep.subr.mxu0 0.0
    %6571 = vmatpush1.msra.mxu0 0.0
    %6572 = vmatprep.subr.mxu0 0.0
    %6573 = vmatpush1.msra.mxu0 0.0
    %6574 = vmatprep.subr.mxu0 0.0
    %6575 = vmatpush1.msra.mxu0 0.0
    %6576 = vmatprep.subr.mxu0 0.0
    %6577 = vmatpush1.msra.mxu0 0.0
    %6578 = vmatprep.subr.mxu0 0.0
    %6579 = vmatpush1.msra.mxu0 0.0
    %6580 = vmatprep.subr.mxu0 0.0
    %6581 = vmatpush1.msra.mxu0 0.0
    %6582 = vmatprep.subr.mxu0 0.0
    %6583 = vmatpush1.msra.mxu0 0.0
    %6584 = vmatprep.subr.mxu0 0.0
    %6585 = vmatpush1.msra.mxu0 0.0
    %6586 = vmatprep.subr.mxu0 0.0
    %6587 = vmatpush1.msra.mxu0 %v6566
    %6588 = vmatprep.subr.mxu0 0.0
    %6589 = vmatpush1.msra.mxu0 %v6565
    %6590 = vmatprep.subr.mxu0 0.0
    %6591 = vmatpush1.msra.mxu0 %v6564
    %6592 = vmatprep.subr.mxu0 0.0
    %6593 = vmatpush1.msra.mxu0 %v6563
    %6594 = vmatprep.subr.mxu0 0.0
    %6595 = vmatpush1.msra.mxu0 %v6562
    %6596 = vmatprep.subr.mxu0 0.0
    %6597 = vmatpush1.msra.mxu0 %v6561
    %6598 = vmatprep.subr.mxu0 0.0
    %6599 = vmatpush1.msra.mxu0 %v6560
    %6600 = vmatprep.subr.mxu0 0.0
    %6601 = vmatpush1.msra.mxu0 %v6559
    %6602 = vmatprep.subr.mxu0 0.0
    %6603 = vmatpush2.msra.mxu0 0.0
    %6604 = vmatprep.subr.mxu0 0.0
    %6605 = vmatpush2.msra.mxu0 0.0
    %6606 = vmatprep.subr.mxu0 0.0
    %6607 = vmatpush2.msra.mxu0 0.0
    %6608 = vmatprep.subr.mxu0 0.0
    %6609 = vmatpush2.msra.mxu0 0.0
    %6610 = vmatprep.subr.mxu0 0.0
    %6611 = vmatpush2.msra.mxu0 0.0
    %6612 = vmatprep.subr.mxu0 0.0
    %6613 = vmatpush2.msra.mxu0 0.0
    %6614 = vmatprep.subr.mxu0 0.0
    %6615 = vmatpush2.msra.mxu0 0.0
    %6616 = vmatprep.subr.mxu0 0.0
    %6617 = vmatpush2.msra.mxu0 0.0
    %6618 = vmatprep.subr.mxu0 0.0
    %6619 = vmatpush2.msra.mxu0 0.0
    %6620 = vmatprep.subr.mxu0 0.0
    %6621 = vmatpush2.msra.mxu0 0.0
    %6622 = vmatprep.subr.mxu0 0.0
    %6623 = vmatpush2.msra.mxu0 0.0
    %6624 = vmatprep.subr.mxu0 0.0
    %6625 = vmatpush2.msra.mxu0 0.0
    %6626 = vmatprep.subr.mxu0 0.0
    %6627 = vmatpush2.msra.mxu0 0.0
    %6628 = vmatprep.subr.mxu0 0.0
    %6629 = vmatpush2.msra.mxu0 0.0
    %6630 = vmatprep.subr.mxu0 0.0
    %6631 = vmatpush2.msra.mxu0 0.0
    %6632 = vmatprep.subr.mxu0 0.0
    %6633 = vmatpush2.msra.mxu0 0.0
    %6634 = vmatprep.mubr.f32.mxu0 0.0
    %6635 = vmatmul.mubr.f32.gmra.mxu0 %v6568
    %v6636 = vpop.f32.mrf.mxu0
    %v6637 = vadd.f32 0.0, %v6636
    %v6638 = vpop.f32.mrf.mxu0
    %6639 = vdwg.mxu0
    %v6640 = vadd.f32 %v6557, %v6637
    %s6641 = scalar_lea.vmem [#allocation11], 1856
    %v6642 = vld [vmem:[%s6641] sm:$0xff]
    %v6643 = vld [vmem:[%s6641 + $0x8] sm:$0xff]
    %v6644 = vld [vmem:[%s6641 + $0x10] sm:$0xff]
    %v6645 = vld [vmem:[%s6641 + $0x18] sm:$0xff]
    %v6646 = vld [vmem:[%s6641 + $0x20] sm:$0xff]
    %v6647 = vld [vmem:[%s6641 + $0x28] sm:$0xff]
    %v6648 = vld [vmem:[%s6641 + $0x30] sm:$0xff]
    %v6649 = vld [vmem:[%s6641 + $0x38] sm:$0xff]
    %v6650 = vrot.slane %v4232, 2
    %v6651 = vsel %vm4255, %v6650, 0
    %6653 = vmatprep.subr.mxu0 0.0
    %6654 = vmatpush1.msra.mxu0 0.0
    %6655 = vmatprep.subr.mxu0 0.0
    %6656 = vmatpush1.msra.mxu0 0.0
    %6657 = vmatprep.subr.mxu0 0.0
    %6658 = vmatpush1.msra.mxu0 0.0
    %6659 = vmatprep.subr.mxu0 0.0
    %6660 = vmatpush1.msra.mxu0 0.0
    %6661 = vmatprep.subr.mxu0 0.0
    %6662 = vmatpush1.msra.mxu0 0.0
    %6663 = vmatprep.subr.mxu0 0.0
    %6664 = vmatpush1.msra.mxu0 0.0
    %6665 = vmatprep.subr.mxu0 0.0
    %6666 = vmatpush1.msra.mxu0 0.0
    %6667 = vmatprep.subr.mxu0 0.0
    %6668 = vmatpush1.msra.mxu0 0.0
    %6669 = vmatprep.subr.mxu0 0.0
    %6670 = vmatpush1.msra.mxu0 %v6649
    %6671 = vmatprep.subr.mxu0 0.0
    %6672 = vmatpush1.msra.mxu0 %v6648
    %6673 = vmatprep.subr.mxu0 0.0
    %6674 = vmatpush1.msra.mxu0 %v6647
    %6675 = vmatprep.subr.mxu0 0.0
    %6676 = vmatpush1.msra.mxu0 %v6646
    %6677 = vmatprep.subr.mxu0 0.0
    %6678 = vmatpush1.msra.mxu0 %v6645
    %6679 = vmatprep.subr.mxu0 0.0
    %6680 = vmatpush1.msra.mxu0 %v6644
    %6681 = vmatprep.subr.mxu0 0.0
    %6682 = vmatpush1.msra.mxu0 %v6643
    %6683 = vmatprep.subr.mxu0 0.0
    %6684 = vmatpush1.msra.mxu0 %v6642
    %6685 = vmatprep.subr.mxu0 0.0
    %6686 = vmatpush2.msra.mxu0 0.0
    %6687 = vmatprep.subr.mxu0 0.0
    %6688 = vmatpush2.msra.mxu0 0.0
    %6689 = vmatprep.subr.mxu0 0.0
    %6690 = vmatpush2.msra.mxu0 0.0
    %6691 = vmatprep.subr.mxu0 0.0
    %6692 = vmatpush2.msra.mxu0 0.0
    %6693 = vmatprep.subr.mxu0 0.0
    %6694 = vmatpush2.msra.mxu0 0.0
    %6695 = vmatprep.subr.mxu0 0.0
    %6696 = vmatpush2.msra.mxu0 0.0
    %6697 = vmatprep.subr.mxu0 0.0
    %6698 = vmatpush2.msra.mxu0 0.0
    %6699 = vmatprep.subr.mxu0 0.0
    %6700 = vmatpush2.msra.mxu0 0.0
    %6701 = vmatprep.subr.mxu0 0.0
    %6702 = vmatpush2.msra.mxu0 0.0
    %6703 = vmatprep.subr.mxu0 0.0
    %6704 = vmatpush2.msra.mxu0 0.0
    %6705 = vmatprep.subr.mxu0 0.0
    %6706 = vmatpush2.msra.mxu0 0.0
    %6707 = vmatprep.subr.mxu0 0.0
    %6708 = vmatpush2.msra.mxu0 0.0
    %6709 = vmatprep.subr.mxu0 0.0
    %6710 = vmatpush2.msra.mxu0 0.0
    %6711 = vmatprep.subr.mxu0 0.0
    %6712 = vmatpush2.msra.mxu0 0.0
    %6713 = vmatprep.subr.mxu0 0.0
    %6714 = vmatpush2.msra.mxu0 0.0
    %6715 = vmatprep.subr.mxu0 0.0
    %6716 = vmatpush2.msra.mxu0 0.0
    %6717 = vmatprep.mubr.f32.mxu0 0.0
    %6718 = vmatmul.mubr.f32.gmra.mxu0 %v6651
    %v6719 = vpop.f32.mrf.mxu0
    %v6720 = vadd.f32 0.0, %v6719
    %v6721 = vpop.f32.mrf.mxu0
    %6722 = vdwg.mxu0
    %v6723 = vadd.f32 %v6640, %v6720
    %s6724 = scalar_lea.vmem [#allocation11], 1920
    %v6725 = vld [vmem:[%s6724] sm:$0xff]
    %v6726 = vld [vmem:[%s6724 + $0x8] sm:$0xff]
    %v6727 = vld [vmem:[%s6724 + $0x10] sm:$0xff]
    %v6728 = vld [vmem:[%s6724 + $0x18] sm:$0xff]
    %v6729 = vld [vmem:[%s6724 + $0x20] sm:$0xff]
    %v6730 = vld [vmem:[%s6724 + $0x28] sm:$0xff]
    %v6731 = vld [vmem:[%s6724 + $0x30] sm:$0xff]
    %v6732 = vld [vmem:[%s6724 + $0x38] sm:$0xff]
    %v6733 = vrot.slane %v4232, 4
    %v6734 = vsel %vm4255, %v6733, 0
    %6736 = vmatprep.subr.mxu0 0.0
    %6737 = vmatpush1.msra.mxu0 0.0
    %6738 = vmatprep.subr.mxu0 0.0
    %6739 = vmatpush1.msra.mxu0 0.0
    %6740 = vmatprep.subr.mxu0 0.0
    %6741 = vmatpush1.msra.mxu0 0.0
    %6742 = vmatprep.subr.mxu0 0.0
    %6743 = vmatpush1.msra.mxu0 0.0
    %6744 = vmatprep.subr.mxu0 0.0
    %6745 = vmatpush1.msra.mxu0 0.0
    %6746 = vmatprep.subr.mxu0 0.0
    %6747 = vmatpush1.msra.mxu0 0.0
    %6748 = vmatprep.subr.mxu0 0.0
    %6749 = vmatpush1.msra.mxu0 0.0
    %6750 = vmatprep.subr.mxu0 0.0
    %6751 = vmatpush1.msra.mxu0 0.0
    %6752 = vmatprep.subr.mxu0 0.0
    %6753 = vmatpush1.msra.mxu0 %v6732
    %6754 = vmatprep.subr.mxu0 0.0
    %6755 = vmatpush1.msra.mxu0 %v6731
    %6756 = vmatprep.subr.mxu0 0.0
    %6757 = vmatpush1.msra.mxu0 %v6730
    %6758 = vmatprep.subr.mxu0 0.0
    %6759 = vmatpush1.msra.mxu0 %v6729
    %6760 = vmatprep.subr.mxu0 0.0
    %6761 = vmatpush1.msra.mxu0 %v6728
    %6762 = vmatprep.subr.mxu0 0.0
    %6763 = vmatpush1.msra.mxu0 %v6727
    %6764 = vmatprep.subr.mxu0 0.0
    %6765 = vmatpush1.msra.mxu0 %v6726
    %6766 = vmatprep.subr.mxu0 0.0
    %6767 = vmatpush1.msra.mxu0 %v6725
    %6768 = vmatprep.subr.mxu0 0.0
    %6769 = vmatpush2.msra.mxu0 0.0
    %6770 = vmatprep.subr.mxu0 0.0
    %6771 = vmatpush2.msra.mxu0 0.0
    %6772 = vmatprep.subr.mxu0 0.0
    %6773 = vmatpush2.msra.mxu0 0.0
    %6774 = vmatprep.subr.mxu0 0.0
    %6775 = vmatpush2.msra.mxu0 0.0
    %6776 = vmatprep.subr.mxu0 0.0
    %6777 = vmatpush2.msra.mxu0 0.0
    %6778 = vmatprep.subr.mxu0 0.0
    %6779 = vmatpush2.msra.mxu0 0.0
    %6780 = vmatprep.subr.mxu0 0.0
    %6781 = vmatpush2.msra.mxu0 0.0
    %6782 = vmatprep.subr.mxu0 0.0
    %6783 = vmatpush2.msra.mxu0 0.0
    %6784 = vmatprep.subr.mxu0 0.0
    %6785 = vmatpush2.msra.mxu0 0.0
    %6786 = vmatprep.subr.mxu0 0.0
    %6787 = vmatpush2.msra.mxu0 0.0
    %6788 = vmatprep.subr.mxu0 0.0
    %6789 = vmatpush2.msra.mxu0 0.0
    %6790 = vmatprep.subr.mxu0 0.0
    %6791 = vmatpush2.msra.mxu0 0.0
    %6792 = vmatprep.subr.mxu0 0.0
    %6793 = vmatpush2.msra.mxu0 0.0
    %6794 = vmatprep.subr.mxu0 0.0
    %6795 = vmatpush2.msra.mxu0 0.0
    %6796 = vmatprep.subr.mxu0 0.0
    %6797 = vmatpush2.msra.mxu0 0.0
    %6798 = vmatprep.subr.mxu0 0.0
    %6799 = vmatpush2.msra.mxu0 0.0
    %6800 = vmatprep.mubr.f32.mxu0 0.0
    %6801 = vmatmul.mubr.f32.gmra.mxu0 %v6734
    %v6802 = vpop.f32.mrf.mxu0
    %v6803 = vadd.f32 0.0, %v6802
    %v6804 = vpop.f32.mrf.mxu0
    %6805 = vdwg.mxu0
    %v6806 = vadd.f32 %v6723, %v6803
    %s6807 = scalar_lea.vmem [#allocation11], 1984
    %v6808 = vld [vmem:[%s6807] sm:$0xff]
    %v6809 = vld [vmem:[%s6807 + $0x8] sm:$0xff]
    %v6810 = vld [vmem:[%s6807 + $0x10] sm:$0xff]
    %v6811 = vld [vmem:[%s6807 + $0x18] sm:$0xff]
    %v6812 = vld [vmem:[%s6807 + $0x20] sm:$0xff]
    %v6813 = vld [vmem:[%s6807 + $0x28] sm:$0xff]
    %v6814 = vld [vmem:[%s6807 + $0x30] sm:$0xff]
    %v6815 = vld [vmem:[%s6807 + $0x38] sm:$0xff]
    %v6816 = vrot.slane %v4232, 6
    %v6817 = vsel %vm4255, %v6816, 0
    %6819 = vmatprep.subr.mxu0 0.0
    %6820 = vmatpush1.msra.mxu0 0.0
    %6821 = vmatprep.subr.mxu0 0.0
    %6822 = vmatpush1.msra.mxu0 0.0
    %6823 = vmatprep.subr.mxu0 0.0
    %6824 = vmatpush1.msra.mxu0 0.0
    %6825 = vmatprep.subr.mxu0 0.0
    %6826 = vmatpush1.msra.mxu0 0.0
    %6827 = vmatprep.subr.mxu0 0.0
    %6828 = vmatpush1.msra.mxu0 0.0
    %6829 = vmatprep.subr.mxu0 0.0
    %6830 = vmatpush1.msra.mxu0 0.0
    %6831 = vmatprep.subr.mxu0 0.0
    %6832 = vmatpush1.msra.mxu0 0.0
    %6833 = vmatprep.subr.mxu0 0.0
    %6834 = vmatpush1.msra.mxu0 0.0
    %6835 = vmatprep.subr.mxu0 0.0
    %6836 = vmatpush1.msra.mxu0 %v6815
    %6837 = vmatprep.subr.mxu0 0.0
    %6838 = vmatpush1.msra.mxu0 %v6814
    %6839 = vmatprep.subr.mxu0 0.0
    %6840 = vmatpush1.msra.mxu0 %v6813
    %6841 = vmatprep.subr.mxu0 0.0
    %6842 = vmatpush1.msra.mxu0 %v6812
    %6843 = vmatprep.subr.mxu0 0.0
    %6844 = vmatpush1.msra.mxu0 %v6811
    %6845 = vmatprep.subr.mxu0 0.0
    %6846 = vmatpush1.msra.mxu0 %v6810
    %6847 = vmatprep.subr.mxu0 0.0
    %6848 = vmatpush1.msra.mxu0 %v6809
    %6849 = vmatprep.subr.mxu0 0.0
    %6850 = vmatpush1.msra.mxu0 %v6808
    %6851 = vmatprep.subr.mxu0 0.0
    %6852 = vmatpush2.msra.mxu0 0.0
    %6853 = vmatprep.subr.mxu0 0.0
    %6854 = vmatpush2.msra.mxu0 0.0
    %6855 = vmatprep.subr.mxu0 0.0
    %6856 = vmatpush2.msra.mxu0 0.0
    %6857 = vmatprep.subr.mxu0 0.0
    %6858 = vmatpush2.msra.mxu0 0.0
    %6859 = vmatprep.subr.mxu0 0.0
    %6860 = vmatpush2.msra.mxu0 0.0
    %6861 = vmatprep.subr.mxu0 0.0
    %6862 = vmatpush2.msra.mxu0 0.0
    %6863 = vmatprep.subr.mxu0 0.0
    %6864 = vmatpush2.msra.mxu0 0.0
    %6865 = vmatprep.subr.mxu0 0.0
    %6866 = vmatpush2.msra.mxu0 0.0
    %6867 = vmatprep.subr.mxu0 0.0
    %6868 = vmatpush2.msra.mxu0 0.0
    %6869 = vmatprep.subr.mxu0 0.0
    %6870 = vmatpush2.msra.mxu0 0.0
    %6871 = vmatprep.subr.mxu0 0.0
    %6872 = vmatpush2.msra.mxu0 0.0
    %6873 = vmatprep.subr.mxu0 0.0
    %6874 = vmatpush2.msra.mxu0 0.0
    %6875 = vmatprep.subr.mxu0 0.0
    %6876 = vmatpush2.msra.mxu0 0.0
    %6877 = vmatprep.subr.mxu0 0.0
    %6878 = vmatpush2.msra.mxu0 0.0
    %6879 = vmatprep.subr.mxu0 0.0
    %6880 = vmatpush2.msra.mxu0 0.0
    %6881 = vmatprep.subr.mxu0 0.0
    %6882 = vmatpush2.msra.mxu0 0.0
    %6883 = vmatprep.mubr.f32.mxu0 0.0
    %6884 = vmatmul.mubr.f32.gmra.mxu0 %v6817
    %v6885 = vpop.f32.mrf.mxu0
    %v6886 = vadd.f32 0.0, %v6885
    %v6887 = vpop.f32.mrf.mxu0
    %6888 = vdwg.mxu0
    %v6889 = vadd.f32 %v6806, %v6886
    %s6890 = scalar_lea.vmem [#allocation11], 2048
    %v6891 = vld [vmem:[%s6890] sm:$0xff]
    %v6892 = vld [vmem:[%s6890 + $0x8] sm:$0xff]
    %v6893 = vld [vmem:[%s6890 + $0x10] sm:$0xff]
    %v6894 = vld [vmem:[%s6890 + $0x18] sm:$0xff]
    %v6895 = vld [vmem:[%s6890 + $0x20] sm:$0xff]
    %v6896 = vld [vmem:[%s6890 + $0x28] sm:$0xff]
    %v6897 = vld [vmem:[%s6890 + $0x30] sm:$0xff]
    %v6898 = vld [vmem:[%s6890 + $0x38] sm:$0xff]
    %v6900 = vsel %vm4255, %v4233, 0
    %6902 = vmatprep.subr.mxu0 0.0
    %6903 = vmatpush1.msra.mxu0 0.0
    %6904 = vmatprep.subr.mxu0 0.0
    %6905 = vmatpush1.msra.mxu0 0.0
    %6906 = vmatprep.subr.mxu0 0.0
    %6907 = vmatpush1.msra.mxu0 0.0
    %6908 = vmatprep.subr.mxu0 0.0
    %6909 = vmatpush1.msra.mxu0 0.0
    %6910 = vmatprep.subr.mxu0 0.0
    %6911 = vmatpush1.msra.mxu0 0.0
    %6912 = vmatprep.subr.mxu0 0.0
    %6913 = vmatpush1.msra.mxu0 0.0
    %6914 = vmatprep.subr.mxu0 0.0
    %6915 = vmatpush1.msra.mxu0 0.0
    %6916 = vmatprep.subr.mxu0 0.0
    %6917 = vmatpush1.msra.mxu0 0.0
    %6918 = vmatprep.subr.mxu0 0.0
    %6919 = vmatpush1.msra.mxu0 %v6898
    %6920 = vmatprep.subr.mxu0 0.0
    %6921 = vmatpush1.msra.mxu0 %v6897
    %6922 = vmatprep.subr.mxu0 0.0
    %6923 = vmatpush1.msra.mxu0 %v6896
    %6924 = vmatprep.subr.mxu0 0.0
    %6925 = vmatpush1.msra.mxu0 %v6895
    %6926 = vmatprep.subr.mxu0 0.0
    %6927 = vmatpush1.msra.mxu0 %v6894
    %6928 = vmatprep.subr.mxu0 0.0
    %6929 = vmatpush1.msra.mxu0 %v6893
    %6930 = vmatprep.subr.mxu0 0.0
    %6931 = vmatpush1.msra.mxu0 %v6892
    %6932 = vmatprep.subr.mxu0 0.0
    %6933 = vmatpush1.msra.mxu0 %v6891
    %6934 = vmatprep.subr.mxu0 0.0
    %6935 = vmatpush2.msra.mxu0 0.0
    %6936 = vmatprep.subr.mxu0 0.0
    %6937 = vmatpush2.msra.mxu0 0.0
    %6938 = vmatprep.subr.mxu0 0.0
    %6939 = vmatpush2.msra.mxu0 0.0
    %6940 = vmatprep.subr.mxu0 0.0
    %6941 = vmatpush2.msra.mxu0 0.0
    %6942 = vmatprep.subr.mxu0 0.0
    %6943 = vmatpush2.msra.mxu0 0.0
    %6944 = vmatprep.subr.mxu0 0.0
    %6945 = vmatpush2.msra.mxu0 0.0
    %6946 = vmatprep.subr.mxu0 0.0
    %6947 = vmatpush2.msra.mxu0 0.0
    %6948 = vmatprep.subr.mxu0 0.0
    %6949 = vmatpush2.msra.mxu0 0.0
    %6950 = vmatprep.subr.mxu0 0.0
    %6951 = vmatpush2.msra.mxu0 0.0
    %6952 = vmatprep.subr.mxu0 0.0
    %6953 = vmatpush2.msra.mxu0 0.0
    %6954 = vmatprep.subr.mxu0 0.0
    %6955 = vmatpush2.msra.mxu0 0.0
    %6956 = vmatprep.subr.mxu0 0.0
    %6957 = vmatpush2.msra.mxu0 0.0
    %6958 = vmatprep.subr.mxu0 0.0
    %6959 = vmatpush2.msra.mxu0 0.0
    %6960 = vmatprep.subr.mxu0 0.0
    %6961 = vmatpush2.msra.mxu0 0.0
    %6962 = vmatprep.subr.mxu0 0.0
    %6963 = vmatpush2.msra.mxu0 0.0
    %6964 = vmatprep.subr.mxu0 0.0
    %6965 = vmatpush2.msra.mxu0 0.0
    %6966 = vmatprep.mubr.f32.mxu0 0.0
    %6967 = vmatmul.mubr.f32.gmra.mxu0 %v6900
    %v6968 = vpop.f32.mrf.mxu0
    %v6969 = vadd.f32 0.0, %v6968
    %v6970 = vpop.f32.mrf.mxu0
    %6971 = vdwg.mxu0
    %v6972 = vadd.f32 %v6889, %v6969
    %s6973 = scalar_lea.vmem [#allocation11], 2112
    %v6974 = vld [vmem:[%s6973] sm:$0xff]
    %v6975 = vld [vmem:[%s6973 + $0x8] sm:$0xff]
    %v6976 = vld [vmem:[%s6973 + $0x10] sm:$0xff]
    %v6977 = vld [vmem:[%s6973 + $0x18] sm:$0xff]
    %v6978 = vld [vmem:[%s6973 + $0x20] sm:$0xff]
    %v6979 = vld [vmem:[%s6973 + $0x28] sm:$0xff]
    %v6980 = vld [vmem:[%s6973 + $0x30] sm:$0xff]
    %v6981 = vld [vmem:[%s6973 + $0x38] sm:$0xff]
    %v6982 = vrot.slane %v4233, 2
    %v6983 = vsel %vm4255, %v6982, 0
    %6985 = vmatprep.subr.mxu0 0.0
    %6986 = vmatpush1.msra.mxu0 0.0
    %6987 = vmatprep.subr.mxu0 0.0
    %6988 = vmatpush1.msra.mxu0 0.0
    %6989 = vmatprep.subr.mxu0 0.0
    %6990 = vmatpush1.msra.mxu0 0.0
    %6991 = vmatprep.subr.mxu0 0.0
    %6992 = vmatpush1.msra.mxu0 0.0
    %6993 = vmatprep.subr.mxu0 0.0
    %6994 = vmatpush1.msra.mxu0 0.0
    %6995 = vmatprep.subr.mxu0 0.0
    %6996 = vmatpush1.msra.mxu0 0.0
    %6997 = vmatprep.subr.mxu0 0.0
    %6998 = vmatpush1.msra.mxu0 0.0
    %6999 = vmatprep.subr.mxu0 0.0
    %7000 = vmatpush1.msra.mxu0 0.0
    %7001 = vmatprep.subr.mxu0 0.0
    %7002 = vmatpush1.msra.mxu0 %v6981
    %7003 = vmatprep.subr.mxu0 0.0
    %7004 = vmatpush1.msra.mxu0 %v6980
    %7005 = vmatprep.subr.mxu0 0.0
    %7006 = vmatpush1.msra.mxu0 %v6979
    %7007 = vmatprep.subr.mxu0 0.0
    %7008 = vmatpush1.msra.mxu0 %v6978
    %7009 = vmatprep.subr.mxu0 0.0
    %7010 = vmatpush1.msra.mxu0 %v6977
    %7011 = vmatprep.subr.mxu0 0.0
    %7012 = vmatpush1.msra.mxu0 %v6976
    %7013 = vmatprep.subr.mxu0 0.0
    %7014 = vmatpush1.msra.mxu0 %v6975
    %7015 = vmatprep.subr.mxu0 0.0
    %7016 = vmatpush1.msra.mxu0 %v6974
    %7017 = vmatprep.subr.mxu0 0.0
    %7018 = vmatpush2.msra.mxu0 0.0
    %7019 = vmatprep.subr.mxu0 0.0
    %7020 = vmatpush2.msra.mxu0 0.0
    %7021 = vmatprep.subr.mxu0 0.0
    %7022 = vmatpush2.msra.mxu0 0.0
    %7023 = vmatprep.subr.mxu0 0.0
    %7024 = vmatpush2.msra.mxu0 0.0
    %7025 = vmatprep.subr.mxu0 0.0
    %7026 = vmatpush2.msra.mxu0 0.0
    %7027 = vmatprep.subr.mxu0 0.0
    %7028 = vmatpush2.msra.mxu0 0.0
    %7029 = vmatprep.subr.mxu0 0.0
    %7030 = vmatpush2.msra.mxu0 0.0
    %7031 = vmatprep.subr.mxu0 0.0
    %7032 = vmatpush2.msra.mxu0 0.0
    %7033 = vmatprep.subr.mxu0 0.0
    %7034 = vmatpush2.msra.mxu0 0.0
    %7035 = vmatprep.subr.mxu0 0.0
    %7036 = vmatpush2.msra.mxu0 0.0
    %7037 = vmatprep.subr.mxu0 0.0
    %7038 = vmatpush2.msra.mxu0 0.0
    %7039 = vmatprep.subr.mxu0 0.0
    %7040 = vmatpush2.msra.mxu0 0.0
    %7041 = vmatprep.subr.mxu0 0.0
    %7042 = vmatpush2.msra.mxu0 0.0
    %7043 = vmatprep.subr.mxu0 0.0
    %7044 = vmatpush2.msra.mxu0 0.0
    %7045 = vmatprep.subr.mxu0 0.0
    %7046 = vmatpush2.msra.mxu0 0.0
    %7047 = vmatprep.subr.mxu0 0.0
    %7048 = vmatpush2.msra.mxu0 0.0
    %7049 = vmatprep.mubr.f32.mxu0 0.0
    %7050 = vmatmul.mubr.f32.gmra.mxu0 %v6983
    %v7051 = vpop.f32.mrf.mxu0
    %v7052 = vadd.f32 0.0, %v7051
    %v7053 = vpop.f32.mrf.mxu0
    %7054 = vdwg.mxu0
    %v7055 = vadd.f32 %v6972, %v7052
    %s7056 = scalar_lea.vmem [#allocation11], 2176
    %v7057 = vld [vmem:[%s7056] sm:$0xff]
    %v7058 = vld [vmem:[%s7056 + $0x8] sm:$0xff]
    %v7059 = vld [vmem:[%s7056 + $0x10] sm:$0xff]
    %v7060 = vld [vmem:[%s7056 + $0x18] sm:$0xff]
    %v7061 = vld [vmem:[%s7056 + $0x20] sm:$0xff]
    %v7062 = vld [vmem:[%s7056 + $0x28] sm:$0xff]
    %v7063 = vld [vmem:[%s7056 + $0x30] sm:$0xff]
    %v7064 = vld [vmem:[%s7056 + $0x38] sm:$0xff]
    %v7065 = vrot.slane %v4233, 4
    %v7066 = vsel %vm4255, %v7065, 0
    %7068 = vmatprep.subr.mxu0 0.0
    %7069 = vmatpush1.msra.mxu0 0.0
    %7070 = vmatprep.subr.mxu0 0.0
    %7071 = vmatpush1.msra.mxu0 0.0
    %7072 = vmatprep.subr.mxu0 0.0
    %7073 = vmatpush1.msra.mxu0 0.0
    %7074 = vmatprep.subr.mxu0 0.0
    %7075 = vmatpush1.msra.mxu0 0.0
    %7076 = vmatprep.subr.mxu0 0.0
    %7077 = vmatpush1.msra.mxu0 0.0
    %7078 = vmatprep.subr.mxu0 0.0
    %7079 = vmatpush1.msra.mxu0 0.0
    %7080 = vmatprep.subr.mxu0 0.0
    %7081 = vmatpush1.msra.mxu0 0.0
    %7082 = vmatprep.subr.mxu0 0.0
    %7083 = vmatpush1.msra.mxu0 0.0
    %7084 = vmatprep.subr.mxu0 0.0
    %7085 = vmatpush1.msra.mxu0 %v7064
    %7086 = vmatprep.subr.mxu0 0.0
    %7087 = vmatpush1.msra.mxu0 %v7063
    %7088 = vmatprep.subr.mxu0 0.0
    %7089 = vmatpush1.msra.mxu0 %v7062
    %7090 = vmatprep.subr.mxu0 0.0
    %7091 = vmatpush1.msra.mxu0 %v7061
    %7092 = vmatprep.subr.mxu0 0.0
    %7093 = vmatpush1.msra.mxu0 %v7060
    %7094 = vmatprep.subr.mxu0 0.0
    %7095 = vmatpush1.msra.mxu0 %v7059
    %7096 = vmatprep.subr.mxu0 0.0
    %7097 = vmatpush1.msra.mxu0 %v7058
    %7098 = vmatprep.subr.mxu0 0.0
    %7099 = vmatpush1.msra.mxu0 %v7057
    %7100 = vmatprep.subr.mxu0 0.0
    %7101 = vmatpush2.msra.mxu0 0.0
    %7102 = vmatprep.subr.mxu0 0.0
    %7103 = vmatpush2.msra.mxu0 0.0
    %7104 = vmatprep.subr.mxu0 0.0
    %7105 = vmatpush2.msra.mxu0 0.0
    %7106 = vmatprep.subr.mxu0 0.0
    %7107 = vmatpush2.msra.mxu0 0.0
    %7108 = vmatprep.subr.mxu0 0.0
    %7109 = vmatpush2.msra.mxu0 0.0
    %7110 = vmatprep.subr.mxu0 0.0
    %7111 = vmatpush2.msra.mxu0 0.0
    %7112 = vmatprep.subr.mxu0 0.0
    %7113 = vmatpush2.msra.mxu0 0.0
    %7114 = vmatprep.subr.mxu0 0.0
    %7115 = vmatpush2.msra.mxu0 0.0
    %7116 = vmatprep.subr.mxu0 0.0
    %7117 = vmatpush2.msra.mxu0 0.0
    %7118 = vmatprep.subr.mxu0 0.0
    %7119 = vmatpush2.msra.mxu0 0.0
    %7120 = vmatprep.subr.mxu0 0.0
    %7121 = vmatpush2.msra.mxu0 0.0
    %7122 = vmatprep.subr.mxu0 0.0
    %7123 = vmatpush2.msra.mxu0 0.0
    %7124 = vmatprep.subr.mxu0 0.0
    %7125 = vmatpush2.msra.mxu0 0.0
    %7126 = vmatprep.subr.mxu0 0.0
    %7127 = vmatpush2.msra.mxu0 0.0
    %7128 = vmatprep.subr.mxu0 0.0
    %7129 = vmatpush2.msra.mxu0 0.0
    %7130 = vmatprep.subr.mxu0 0.0
    %7131 = vmatpush2.msra.mxu0 0.0
    %7132 = vmatprep.mubr.f32.mxu0 0.0
    %7133 = vmatmul.mubr.f32.gmra.mxu0 %v7066
    %v7134 = vpop.f32.mrf.mxu0
    %v7135 = vadd.f32 0.0, %v7134
    %v7136 = vpop.f32.mrf.mxu0
    %7137 = vdwg.mxu0
    %v7138 = vadd.f32 %v7055, %v7135
    %s7139 = scalar_lea.vmem [#allocation11], 2240
    %v7140 = vld [vmem:[%s7139] sm:$0xff]
    %v7141 = vld [vmem:[%s7139 + $0x8] sm:$0xff]
    %v7142 = vld [vmem:[%s7139 + $0x10] sm:$0xff]
    %v7143 = vld [vmem:[%s7139 + $0x18] sm:$0xff]
    %v7144 = vld [vmem:[%s7139 + $0x20] sm:$0xff]
    %v7145 = vld [vmem:[%s7139 + $0x28] sm:$0xff]
    %v7146 = vld [vmem:[%s7139 + $0x30] sm:$0xff]
    %v7147 = vld [vmem:[%s7139 + $0x38] sm:$0xff]
    %v7148 = vrot.slane %v4233, 6
    %v7149 = vsel %vm4255, %v7148, 0
    %7151 = vmatprep.subr.mxu0 0.0
    %7152 = vmatpush1.msra.mxu0 0.0
    %7153 = vmatprep.subr.mxu0 0.0
    %7154 = vmatpush1.msra.mxu0 0.0
    %7155 = vmatprep.subr.mxu0 0.0
    %7156 = vmatpush1.msra.mxu0 0.0
    %7157 = vmatprep.subr.mxu0 0.0
    %7158 = vmatpush1.msra.mxu0 0.0
    %7159 = vmatprep.subr.mxu0 0.0
    %7160 = vmatpush1.msra.mxu0 0.0
    %7161 = vmatprep.subr.mxu0 0.0
    %7162 = vmatpush1.msra.mxu0 0.0
    %7163 = vmatprep.subr.mxu0 0.0
    %7164 = vmatpush1.msra.mxu0 0.0
    %7165 = vmatprep.subr.mxu0 0.0
    %7166 = vmatpush1.msra.mxu0 0.0
    %7167 = vmatprep.subr.mxu0 0.0
    %7168 = vmatpush1.msra.mxu0 %v7147
    %7169 = vmatprep.subr.mxu0 0.0
    %7170 = vmatpush1.msra.mxu0 %v7146
    %7171 = vmatprep.subr.mxu0 0.0
    %7172 = vmatpush1.msra.mxu0 %v7145
    %7173 = vmatprep.subr.mxu0 0.0
    %7174 = vmatpush1.msra.mxu0 %v7144
    %7175 = vmatprep.subr.mxu0 0.0
    %7176 = vmatpush1.msra.mxu0 %v7143
    %7177 = vmatprep.subr.mxu0 0.0
    %7178 = vmatpush1.msra.mxu0 %v7142
    %7179 = vmatprep.subr.mxu0 0.0
    %7180 = vmatpush1.msra.mxu0 %v7141
    %7181 = vmatprep.subr.mxu0 0.0
    %7182 = vmatpush1.msra.mxu0 %v7140
    %7183 = vmatprep.subr.mxu0 0.0
    %7184 = vmatpush2.msra.mxu0 0.0
    %7185 = vmatprep.subr.mxu0 0.0
    %7186 = vmatpush2.msra.mxu0 0.0
    %7187 = vmatprep.subr.mxu0 0.0
    %7188 = vmatpush2.msra.mxu0 0.0
    %7189 = vmatprep.subr.mxu0 0.0
    %7190 = vmatpush2.msra.mxu0 0.0
    %7191 = vmatprep.subr.mxu0 0.0
    %7192 = vmatpush2.msra.mxu0 0.0
    %7193 = vmatprep.subr.mxu0 0.0
    %7194 = vmatpush2.msra.mxu0 0.0
    %7195 = vmatprep.subr.mxu0 0.0
    %7196 = vmatpush2.msra.mxu0 0.0
    %7197 = vmatprep.subr.mxu0 0.0
    %7198 = vmatpush2.msra.mxu0 0.0
    %7199 = vmatprep.subr.mxu0 0.0
    %7200 = vmatpush2.msra.mxu0 0.0
    %7201 = vmatprep.subr.mxu0 0.0
    %7202 = vmatpush2.msra.mxu0 0.0
    %7203 = vmatprep.subr.mxu0 0.0
    %7204 = vmatpush2.msra.mxu0 0.0
    %7205 = vmatprep.subr.mxu0 0.0
    %7206 = vmatpush2.msra.mxu0 0.0
    %7207 = vmatprep.subr.mxu0 0.0
    %7208 = vmatpush2.msra.mxu0 0.0
    %7209 = vmatprep.subr.mxu0 0.0
    %7210 = vmatpush2.msra.mxu0 0.0
    %7211 = vmatprep.subr.mxu0 0.0
    %7212 = vmatpush2.msra.mxu0 0.0
    %7213 = vmatprep.subr.mxu0 0.0
    %7214 = vmatpush2.msra.mxu0 0.0
    %7215 = vmatprep.mubr.f32.mxu0 0.0
    %7216 = vmatmul.mubr.f32.gmra.mxu0 %v7149
    %v7217 = vpop.f32.mrf.mxu0
    %v7218 = vadd.f32 0.0, %v7217
    %v7219 = vpop.f32.mrf.mxu0
    %7220 = vdwg.mxu0
    %v7221 = vadd.f32 %v7138, %v7218
    %s7222 = scalar_lea.vmem [#allocation11], 2304
    %v7223 = vld [vmem:[%s7222] sm:$0xff]
    %v7224 = vld [vmem:[%s7222 + $0x8] sm:$0xff]
    %v7225 = vld [vmem:[%s7222 + $0x10] sm:$0xff]
    %v7226 = vld [vmem:[%s7222 + $0x18] sm:$0xff]
    %v7227 = vld [vmem:[%s7222 + $0x20] sm:$0xff]
    %v7228 = vld [vmem:[%s7222 + $0x28] sm:$0xff]
    %v7229 = vld [vmem:[%s7222 + $0x30] sm:$0xff]
    %v7230 = vld [vmem:[%s7222 + $0x38] sm:$0xff]
    %v7232 = vsel %vm4255, %v4234, 0
    %7234 = vmatprep.subr.mxu0 0.0
    %7235 = vmatpush1.msra.mxu0 0.0
    %7236 = vmatprep.subr.mxu0 0.0
    %7237 = vmatpush1.msra.mxu0 0.0
    %7238 = vmatprep.subr.mxu0 0.0
    %7239 = vmatpush1.msra.mxu0 0.0
    %7240 = vmatprep.subr.mxu0 0.0
    %7241 = vmatpush1.msra.mxu0 0.0
    %7242 = vmatprep.subr.mxu0 0.0
    %7243 = vmatpush1.msra.mxu0 0.0
    %7244 = vmatprep.subr.mxu0 0.0
    %7245 = vmatpush1.msra.mxu0 0.0
    %7246 = vmatprep.subr.mxu0 0.0
    %7247 = vmatpush1.msra.mxu0 0.0
    %7248 = vmatprep.subr.mxu0 0.0
    %7249 = vmatpush1.msra.mxu0 0.0
    %7250 = vmatprep.subr.mxu0 0.0
    %7251 = vmatpush1.msra.mxu0 %v7230
    %7252 = vmatprep.subr.mxu0 0.0
    %7253 = vmatpush1.msra.mxu0 %v7229
    %7254 = vmatprep.subr.mxu0 0.0
    %7255 = vmatpush1.msra.mxu0 %v7228
    %7256 = vmatprep.subr.mxu0 0.0
    %7257 = vmatpush1.msra.mxu0 %v7227
    %7258 = vmatprep.subr.mxu0 0.0
    %7259 = vmatpush1.msra.mxu0 %v7226
    %7260 = vmatprep.subr.mxu0 0.0
    %7261 = vmatpush1.msra.mxu0 %v7225
    %7262 = vmatprep.subr.mxu0 0.0
    %7263 = vmatpush1.msra.mxu0 %v7224
    %7264 = vmatprep.subr.mxu0 0.0
    %7265 = vmatpush1.msra.mxu0 %v7223
    %7266 = vmatprep.subr.mxu0 0.0
    %7267 = vmatpush2.msra.mxu0 0.0
    %7268 = vmatprep.subr.mxu0 0.0
    %7269 = vmatpush2.msra.mxu0 0.0
    %7270 = vmatprep.subr.mxu0 0.0
    %7271 = vmatpush2.msra.mxu0 0.0
    %7272 = vmatprep.subr.mxu0 0.0
    %7273 = vmatpush2.msra.mxu0 0.0
    %7274 = vmatprep.subr.mxu0 0.0
    %7275 = vmatpush2.msra.mxu0 0.0
    %7276 = vmatprep.subr.mxu0 0.0
    %7277 = vmatpush2.msra.mxu0 0.0
    %7278 = vmatprep.subr.mxu0 0.0
    %7279 = vmatpush2.msra.mxu0 0.0
    %7280 = vmatprep.subr.mxu0 0.0
    %7281 = vmatpush2.msra.mxu0 0.0
    %7282 = vmatprep.subr.mxu0 0.0
    %7283 = vmatpush2.msra.mxu0 0.0
    %7284 = vmatprep.subr.mxu0 0.0
    %7285 = vmatpush2.msra.mxu0 0.0
    %7286 = vmatprep.subr.mxu0 0.0
    %7287 = vmatpush2.msra.mxu0 0.0
    %7288 = vmatprep.subr.mxu0 0.0
    %7289 = vmatpush2.msra.mxu0 0.0
    %7290 = vmatprep.subr.mxu0 0.0
    %7291 = vmatpush2.msra.mxu0 0.0
    %7292 = vmatprep.subr.mxu0 0.0
    %7293 = vmatpush2.msra.mxu0 0.0
    %7294 = vmatprep.subr.mxu0 0.0
    %7295 = vmatpush2.msra.mxu0 0.0
    %7296 = vmatprep.subr.mxu0 0.0
    %7297 = vmatpush2.msra.mxu0 0.0
    %7298 = vmatprep.mubr.f32.mxu0 0.0
    %7299 = vmatmul.mubr.f32.gmra.mxu0 %v7232
    %v7300 = vpop.f32.mrf.mxu0
    %v7301 = vadd.f32 0.0, %v7300
    %v7302 = vpop.f32.mrf.mxu0
    %7303 = vdwg.mxu0
    %v7304 = vadd.f32 %v7221, %v7301
    %s7305 = scalar_lea.vmem [#allocation11], 2368
    %v7306 = vld [vmem:[%s7305] sm:$0xff]
    %v7307 = vld [vmem:[%s7305 + $0x8] sm:$0xff]
    %v7308 = vld [vmem:[%s7305 + $0x10] sm:$0xff]
    %v7309 = vld [vmem:[%s7305 + $0x18] sm:$0xff]
    %v7310 = vld [vmem:[%s7305 + $0x20] sm:$0xff]
    %v7311 = vld [vmem:[%s7305 + $0x28] sm:$0xff]
    %v7312 = vld [vmem:[%s7305 + $0x30] sm:$0xff]
    %v7313 = vld [vmem:[%s7305 + $0x38] sm:$0xff]
    %v7314 = vrot.slane %v4234, 2
    %v7315 = vsel %vm4255, %v7314, 0
    %7317 = vmatprep.subr.mxu0 0.0
    %7318 = vmatpush1.msra.mxu0 0.0
    %7319 = vmatprep.subr.mxu0 0.0
    %7320 = vmatpush1.msra.mxu0 0.0
    %7321 = vmatprep.subr.mxu0 0.0
    %7322 = vmatpush1.msra.mxu0 0.0
    %7323 = vmatprep.subr.mxu0 0.0
    %7324 = vmatpush1.msra.mxu0 0.0
    %7325 = vmatprep.subr.mxu0 0.0
    %7326 = vmatpush1.msra.mxu0 0.0
    %7327 = vmatprep.subr.mxu0 0.0
    %7328 = vmatpush1.msra.mxu0 0.0
    %7329 = vmatprep.subr.mxu0 0.0
    %7330 = vmatpush1.msra.mxu0 0.0
    %7331 = vmatprep.subr.mxu0 0.0
    %7332 = vmatpush1.msra.mxu0 0.0
    %7333 = vmatprep.subr.mxu0 0.0
    %7334 = vmatpush1.msra.mxu0 %v7313
    %7335 = vmatprep.subr.mxu0 0.0
    %7336 = vmatpush1.msra.mxu0 %v7312
    %7337 = vmatprep.subr.mxu0 0.0
    %7338 = vmatpush1.msra.mxu0 %v7311
    %7339 = vmatprep.subr.mxu0 0.0
    %7340 = vmatpush1.msra.mxu0 %v7310
    %7341 = vmatprep.subr.mxu0 0.0
    %7342 = vmatpush1.msra.mxu0 %v7309
    %7343 = vmatprep.subr.mxu0 0.0
    %7344 = vmatpush1.msra.mxu0 %v7308
    %7345 = vmatprep.subr.mxu0 0.0
    %7346 = vmatpush1.msra.mxu0 %v7307
    %7347 = vmatprep.subr.mxu0 0.0
    %7348 = vmatpush1.msra.mxu0 %v7306
    %7349 = vmatprep.subr.mxu0 0.0
    %7350 = vmatpush2.msra.mxu0 0.0
    %7351 = vmatprep.subr.mxu0 0.0
    %7352 = vmatpush2.msra.mxu0 0.0
    %7353 = vmatprep.subr.mxu0 0.0
    %7354 = vmatpush2.msra.mxu0 0.0
    %7355 = vmatprep.subr.mxu0 0.0
    %7356 = vmatpush2.msra.mxu0 0.0
    %7357 = vmatprep.subr.mxu0 0.0
    %7358 = vmatpush2.msra.mxu0 0.0
    %7359 = vmatprep.subr.mxu0 0.0
    %7360 = vmatpush2.msra.mxu0 0.0
    %7361 = vmatprep.subr.mxu0 0.0
    %7362 = vmatpush2.msra.mxu0 0.0
    %7363 = vmatprep.subr.mxu0 0.0
    %7364 = vmatpush2.msra.mxu0 0.0
    %7365 = vmatprep.subr.mxu0 0.0
    %7366 = vmatpush2.msra.mxu0 0.0
    %7367 = vmatprep.subr.mxu0 0.0
    %7368 = vmatpush2.msra.mxu0 0.0
    %7369 = vmatprep.subr.mxu0 0.0
    %7370 = vmatpush2.msra.mxu0 0.0
    %7371 = vmatprep.subr.mxu0 0.0
    %7372 = vmatpush2.msra.mxu0 0.0
    %7373 = vmatprep.subr.mxu0 0.0
    %7374 = vmatpush2.msra.mxu0 0.0
    %7375 = vmatprep.subr.mxu0 0.0
    %7376 = vmatpush2.msra.mxu0 0.0
    %7377 = vmatprep.subr.mxu0 0.0
    %7378 = vmatpush2.msra.mxu0 0.0
    %7379 = vmatprep.subr.mxu0 0.0
    %7380 = vmatpush2.msra.mxu0 0.0
    %7381 = vmatprep.mubr.f32.mxu0 0.0
    %7382 = vmatmul.mubr.f32.gmra.mxu0 %v7315
    %v7383 = vpop.f32.mrf.mxu0
    %v7384 = vadd.f32 0.0, %v7383
    %v7385 = vpop.f32.mrf.mxu0
    %7386 = vdwg.mxu0
    %v7387 = vadd.f32 %v7304, %v7384
    %s7388 = scalar_lea.vmem [#allocation11], 2432
    %v7389 = vld [vmem:[%s7388] sm:$0xff]
    %v7390 = vld [vmem:[%s7388 + $0x8] sm:$0xff]
    %v7391 = vld [vmem:[%s7388 + $0x10] sm:$0xff]
    %v7392 = vld [vmem:[%s7388 + $0x18] sm:$0xff]
    %v7393 = vld [vmem:[%s7388 + $0x20] sm:$0xff]
    %v7394 = vld [vmem:[%s7388 + $0x28] sm:$0xff]
    %v7395 = vld [vmem:[%s7388 + $0x30] sm:$0xff]
    %v7396 = vld [vmem:[%s7388 + $0x38] sm:$0xff]
    %v7397 = vrot.slane %v4234, 4
    %v7398 = vsel %vm4255, %v7397, 0
    %7400 = vmatprep.subr.mxu0 0.0
    %7401 = vmatpush1.msra.mxu0 0.0
    %7402 = vmatprep.subr.mxu0 0.0
    %7403 = vmatpush1.msra.mxu0 0.0
    %7404 = vmatprep.subr.mxu0 0.0
    %7405 = vmatpush1.msra.mxu0 0.0
    %7406 = vmatprep.subr.mxu0 0.0
    %7407 = vmatpush1.msra.mxu0 0.0
    %7408 = vmatprep.subr.mxu0 0.0
    %7409 = vmatpush1.msra.mxu0 0.0
    %7410 = vmatprep.subr.mxu0 0.0
    %7411 = vmatpush1.msra.mxu0 0.0
    %7412 = vmatprep.subr.mxu0 0.0
    %7413 = vmatpush1.msra.mxu0 0.0
    %7414 = vmatprep.subr.mxu0 0.0
    %7415 = vmatpush1.msra.mxu0 0.0
    %7416 = vmatprep.subr.mxu0 0.0
    %7417 = vmatpush1.msra.mxu0 %v7396
    %7418 = vmatprep.subr.mxu0 0.0
    %7419 = vmatpush1.msra.mxu0 %v7395
    %7420 = vmatprep.subr.mxu0 0.0
    %7421 = vmatpush1.msra.mxu0 %v7394
    %7422 = vmatprep.subr.mxu0 0.0
    %7423 = vmatpush1.msra.mxu0 %v7393
    %7424 = vmatprep.subr.mxu0 0.0
    %7425 = vmatpush1.msra.mxu0 %v7392
    %7426 = vmatprep.subr.mxu0 0.0
    %7427 = vmatpush1.msra.mxu0 %v7391
    %7428 = vmatprep.subr.mxu0 0.0
    %7429 = vmatpush1.msra.mxu0 %v7390
    %7430 = vmatprep.subr.mxu0 0.0
    %7431 = vmatpush1.msra.mxu0 %v7389
    %7432 = vmatprep.subr.mxu0 0.0
    %7433 = vmatpush2.msra.mxu0 0.0
    %7434 = vmatprep.subr.mxu0 0.0
    %7435 = vmatpush2.msra.mxu0 0.0
    %7436 = vmatprep.subr.mxu0 0.0
    %7437 = vmatpush2.msra.mxu0 0.0
    %7438 = vmatprep.subr.mxu0 0.0
    %7439 = vmatpush2.msra.mxu0 0.0
    %7440 = vmatprep.subr.mxu0 0.0
    %7441 = vmatpush2.msra.mxu0 0.0
    %7442 = vmatprep.subr.mxu0 0.0
    %7443 = vmatpush2.msra.mxu0 0.0
    %7444 = vmatprep.subr.mxu0 0.0
    %7445 = vmatpush2.msra.mxu0 0.0
    %7446 = vmatprep.subr.mxu0 0.0
    %7447 = vmatpush2.msra.mxu0 0.0
    %7448 = vmatprep.subr.mxu0 0.0
    %7449 = vmatpush2.msra.mxu0 0.0
    %7450 = vmatprep.subr.mxu0 0.0
    %7451 = vmatpush2.msra.mxu0 0.0
    %7452 = vmatprep.subr.mxu0 0.0
    %7453 = vmatpush2.msra.mxu0 0.0
    %7454 = vmatprep.subr.mxu0 0.0
    %7455 = vmatpush2.msra.mxu0 0.0
    %7456 = vmatprep.subr.mxu0 0.0
    %7457 = vmatpush2.msra.mxu0 0.0
    %7458 = vmatprep.subr.mxu0 0.0
    %7459 = vmatpush2.msra.mxu0 0.0
    %7460 = vmatprep.subr.mxu0 0.0
    %7461 = vmatpush2.msra.mxu0 0.0
    %7462 = vmatprep.subr.mxu0 0.0
    %7463 = vmatpush2.msra.mxu0 0.0
    %7464 = vmatprep.mubr.f32.mxu0 0.0
    %7465 = vmatmul.mubr.f32.gmra.mxu0 %v7398
    %v7466 = vpop.f32.mrf.mxu0
    %v7467 = vadd.f32 0.0, %v7466
    %v7468 = vpop.f32.mrf.mxu0
    %7469 = vdwg.mxu0
    %v7470 = vadd.f32 %v7387, %v7467
    %s7471 = scalar_lea.vmem [#allocation11], 2496
    %v7472 = vld [vmem:[%s7471] sm:$0xff]
    %v7473 = vld [vmem:[%s7471 + $0x8] sm:$0xff]
    %v7474 = vld [vmem:[%s7471 + $0x10] sm:$0xff]
    %v7475 = vld [vmem:[%s7471 + $0x18] sm:$0xff]
    %v7476 = vld [vmem:[%s7471 + $0x20] sm:$0xff]
    %v7477 = vld [vmem:[%s7471 + $0x28] sm:$0xff]
    %v7478 = vld [vmem:[%s7471 + $0x30] sm:$0xff]
    %v7479 = vld [vmem:[%s7471 + $0x38] sm:$0xff]
    %v7480 = vrot.slane %v4234, 6
    %v7481 = vsel %vm4255, %v7480, 0
    %7483 = vmatprep.subr.mxu0 0.0
    %7484 = vmatpush1.msra.mxu0 0.0
    %7485 = vmatprep.subr.mxu0 0.0
    %7486 = vmatpush1.msra.mxu0 0.0
    %7487 = vmatprep.subr.mxu0 0.0
    %7488 = vmatpush1.msra.mxu0 0.0
    %7489 = vmatprep.subr.mxu0 0.0
    %7490 = vmatpush1.msra.mxu0 0.0
    %7491 = vmatprep.subr.mxu0 0.0
    %7492 = vmatpush1.msra.mxu0 0.0
    %7493 = vmatprep.subr.mxu0 0.0
    %7494 = vmatpush1.msra.mxu0 0.0
    %7495 = vmatprep.subr.mxu0 0.0
    %7496 = vmatpush1.msra.mxu0 0.0
    %7497 = vmatprep.subr.mxu0 0.0
    %7498 = vmatpush1.msra.mxu0 0.0
    %7499 = vmatprep.subr.mxu0 0.0
    %7500 = vmatpush1.msra.mxu0 %v7479
    %7501 = vmatprep.subr.mxu0 0.0
    %7502 = vmatpush1.msra.mxu0 %v7478
    %7503 = vmatprep.subr.mxu0 0.0
    %7504 = vmatpush1.msra.mxu0 %v7477
    %7505 = vmatprep.subr.mxu0 0.0
    %7506 = vmatpush1.msra.mxu0 %v7476
    %7507 = vmatprep.subr.mxu0 0.0
    %7508 = vmatpush1.msra.mxu0 %v7475
    %7509 = vmatprep.subr.mxu0 0.0
    %7510 = vmatpush1.msra.mxu0 %v7474
    %7511 = vmatprep.subr.mxu0 0.0
    %7512 = vmatpush1.msra.mxu0 %v7473
    %7513 = vmatprep.subr.mxu0 0.0
    %7514 = vmatpush1.msra.mxu0 %v7472
    %7515 = vmatprep.subr.mxu0 0.0
    %7516 = vmatpush2.msra.mxu0 0.0
    %7517 = vmatprep.subr.mxu0 0.0
    %7518 = vmatpush2.msra.mxu0 0.0
    %7519 = vmatprep.subr.mxu0 0.0
    %7520 = vmatpush2.msra.mxu0 0.0
    %7521 = vmatprep.subr.mxu0 0.0
    %7522 = vmatpush2.msra.mxu0 0.0
    %7523 = vmatprep.subr.mxu0 0.0
    %7524 = vmatpush2.msra.mxu0 0.0
    %7525 = vmatprep.subr.mxu0 0.0
    %7526 = vmatpush2.msra.mxu0 0.0
    %7527 = vmatprep.subr.mxu0 0.0
    %7528 = vmatpush2.msra.mxu0 0.0
    %7529 = vmatprep.subr.mxu0 0.0
    %7530 = vmatpush2.msra.mxu0 0.0
    %7531 = vmatprep.subr.mxu0 0.0
    %7532 = vmatpush2.msra.mxu0 0.0
    %7533 = vmatprep.subr.mxu0 0.0
    %7534 = vmatpush2.msra.mxu0 0.0
    %7535 = vmatprep.subr.mxu0 0.0
    %7536 = vmatpush2.msra.mxu0 0.0
    %7537 = vmatprep.subr.mxu0 0.0
    %7538 = vmatpush2.msra.mxu0 0.0
    %7539 = vmatprep.subr.mxu0 0.0
    %7540 = vmatpush2.msra.mxu0 0.0
    %7541 = vmatprep.subr.mxu0 0.0
    %7542 = vmatpush2.msra.mxu0 0.0
    %7543 = vmatprep.subr.mxu0 0.0
    %7544 = vmatpush2.msra.mxu0 0.0
    %7545 = vmatprep.subr.mxu0 0.0
    %7546 = vmatpush2.msra.mxu0 0.0
    %7547 = vmatprep.mubr.f32.mxu0 0.0
    %7548 = vmatmul.mubr.f32.gmra.mxu0 %v7481
    %v7549 = vpop.f32.mrf.mxu0
    %v7550 = vadd.f32 0.0, %v7549
    %v7551 = vpop.f32.mrf.mxu0
    %7552 = vdwg.mxu0
    %v7553 = vadd.f32 %v7470, %v7550
    %s7554 = scalar_lea.vmem [#allocation11], 2560
    %v7555 = vld [vmem:[%s7554] sm:$0xff]
    %v7556 = vld [vmem:[%s7554 + $0x8] sm:$0xff]
    %v7557 = vld [vmem:[%s7554 + $0x10] sm:$0xff]
    %v7558 = vld [vmem:[%s7554 + $0x18] sm:$0xff]
    %v7559 = vld [vmem:[%s7554 + $0x20] sm:$0xff]
    %v7560 = vld [vmem:[%s7554 + $0x28] sm:$0xff]
    %v7561 = vld [vmem:[%s7554 + $0x30] sm:$0xff]
    %v7562 = vld [vmem:[%s7554 + $0x38] sm:$0xff]
    %v7564 = vsel %vm4255, %v4235, 0
    %7566 = vmatprep.subr.mxu0 0.0
    %7567 = vmatpush1.msra.mxu0 0.0
    %7568 = vmatprep.subr.mxu0 0.0
    %7569 = vmatpush1.msra.mxu0 0.0
    %7570 = vmatprep.subr.mxu0 0.0
    %7571 = vmatpush1.msra.mxu0 0.0
    %7572 = vmatprep.subr.mxu0 0.0
    %7573 = vmatpush1.msra.mxu0 0.0
    %7574 = vmatprep.subr.mxu0 0.0
    %7575 = vmatpush1.msra.mxu0 0.0
    %7576 = vmatprep.subr.mxu0 0.0
    %7577 = vmatpush1.msra.mxu0 0.0
    %7578 = vmatprep.subr.mxu0 0.0
    %7579 = vmatpush1.msra.mxu0 0.0
    %7580 = vmatprep.subr.mxu0 0.0
    %7581 = vmatpush1.msra.mxu0 0.0
    %7582 = vmatprep.subr.mxu0 0.0
    %7583 = vmatpush1.msra.mxu0 %v7562
    %7584 = vmatprep.subr.mxu0 0.0
    %7585 = vmatpush1.msra.mxu0 %v7561
    %7586 = vmatprep.subr.mxu0 0.0
    %7587 = vmatpush1.msra.mxu0 %v7560
    %7588 = vmatprep.subr.mxu0 0.0
    %7589 = vmatpush1.msra.mxu0 %v7559
    %7590 = vmatprep.subr.mxu0 0.0
    %7591 = vmatpush1.msra.mxu0 %v7558
    %7592 = vmatprep.subr.mxu0 0.0
    %7593 = vmatpush1.msra.mxu0 %v7557
    %7594 = vmatprep.subr.mxu0 0.0
    %7595 = vmatpush1.msra.mxu0 %v7556
    %7596 = vmatprep.subr.mxu0 0.0
    %7597 = vmatpush1.msra.mxu0 %v7555
    %7598 = vmatprep.subr.mxu0 0.0
    %7599 = vmatpush2.msra.mxu0 0.0
    %7600 = vmatprep.subr.mxu0 0.0
    %7601 = vmatpush2.msra.mxu0 0.0
    %7602 = vmatprep.subr.mxu0 0.0
    %7603 = vmatpush2.msra.mxu0 0.0
    %7604 = vmatprep.subr.mxu0 0.0
    %7605 = vmatpush2.msra.mxu0 0.0
    %7606 = vmatprep.subr.mxu0 0.0
    %7607 = vmatpush2.msra.mxu0 0.0
    %7608 = vmatprep.subr.mxu0 0.0
    %7609 = vmatpush2.msra.mxu0 0.0
    %7610 = vmatprep.subr.mxu0 0.0
    %7611 = vmatpush2.msra.mxu0 0.0
    %7612 = vmatprep.subr.mxu0 0.0
    %7613 = vmatpush2.msra.mxu0 0.0
    %7614 = vmatprep.subr.mxu0 0.0
    %7615 = vmatpush2.msra.mxu0 0.0
    %7616 = vmatprep.subr.mxu0 0.0
    %7617 = vmatpush2.msra.mxu0 0.0
    %7618 = vmatprep.subr.mxu0 0.0
    %7619 = vmatpush2.msra.mxu0 0.0
    %7620 = vmatprep.subr.mxu0 0.0
    %7621 = vmatpush2.msra.mxu0 0.0
    %7622 = vmatprep.subr.mxu0 0.0
    %7623 = vmatpush2.msra.mxu0 0.0
    %7624 = vmatprep.subr.mxu0 0.0
    %7625 = vmatpush2.msra.mxu0 0.0
    %7626 = vmatprep.subr.mxu0 0.0
    %7627 = vmatpush2.msra.mxu0 0.0
    %7628 = vmatprep.subr.mxu0 0.0
    %7629 = vmatpush2.msra.mxu0 0.0
    %7630 = vmatprep.mubr.f32.mxu0 0.0
    %7631 = vmatmul.mubr.f32.gmra.mxu0 %v7564
    %v7632 = vpop.f32.mrf.mxu0
    %v7633 = vadd.f32 0.0, %v7632
    %v7634 = vpop.f32.mrf.mxu0
    %7635 = vdwg.mxu0
    %v7636 = vadd.f32 %v7553, %v7633
    %s7637 = scalar_lea.vmem [#allocation11], 2624
    %v7638 = vld [vmem:[%s7637] sm:$0xff]
    %v7639 = vld [vmem:[%s7637 + $0x8] sm:$0xff]
    %v7640 = vld [vmem:[%s7637 + $0x10] sm:$0xff]
    %v7641 = vld [vmem:[%s7637 + $0x18] sm:$0xff]
    %v7642 = vld [vmem:[%s7637 + $0x20] sm:$0xff]
    %v7643 = vld [vmem:[%s7637 + $0x28] sm:$0xff]
    %v7644 = vld [vmem:[%s7637 + $0x30] sm:$0xff]
    %v7645 = vld [vmem:[%s7637 + $0x38] sm:$0xff]
    %v7646 = vrot.slane %v4235, 2
    %v7647 = vsel %vm4255, %v7646, 0
    %7649 = vmatprep.subr.mxu0 0.0
    %7650 = vmatpush1.msra.mxu0 0.0
    %7651 = vmatprep.subr.mxu0 0.0
    %7652 = vmatpush1.msra.mxu0 0.0
    %7653 = vmatprep.subr.mxu0 0.0
    %7654 = vmatpush1.msra.mxu0 0.0
    %7655 = vmatprep.subr.mxu0 0.0
    %7656 = vmatpush1.msra.mxu0 0.0
    %7657 = vmatprep.subr.mxu0 0.0
    %7658 = vmatpush1.msra.mxu0 0.0
    %7659 = vmatprep.subr.mxu0 0.0
    %7660 = vmatpush1.msra.mxu0 0.0
    %7661 = vmatprep.subr.mxu0 0.0
    %7662 = vmatpush1.msra.mxu0 0.0
    %7663 = vmatprep.subr.mxu0 0.0
    %7664 = vmatpush1.msra.mxu0 0.0
    %7665 = vmatprep.subr.mxu0 0.0
    %7666 = vmatpush1.msra.mxu0 %v7645
    %7667 = vmatprep.subr.mxu0 0.0
    %7668 = vmatpush1.msra.mxu0 %v7644
    %7669 = vmatprep.subr.mxu0 0.0
    %7670 = vmatpush1.msra.mxu0 %v7643
    %7671 = vmatprep.subr.mxu0 0.0
    %7672 = vmatpush1.msra.mxu0 %v7642
    %7673 = vmatprep.subr.mxu0 0.0
    %7674 = vmatpush1.msra.mxu0 %v7641
    %7675 = vmatprep.subr.mxu0 0.0
    %7676 = vmatpush1.msra.mxu0 %v7640
    %7677 = vmatprep.subr.mxu0 0.0
    %7678 = vmatpush1.msra.mxu0 %v7639
    %7679 = vmatprep.subr.mxu0 0.0
    %7680 = vmatpush1.msra.mxu0 %v7638
    %7681 = vmatprep.subr.mxu0 0.0
    %7682 = vmatpush2.msra.mxu0 0.0
    %7683 = vmatprep.subr.mxu0 0.0
    %7684 = vmatpush2.msra.mxu0 0.0
    %7685 = vmatprep.subr.mxu0 0.0
    %7686 = vmatpush2.msra.mxu0 0.0
    %7687 = vmatprep.subr.mxu0 0.0
    %7688 = vmatpush2.msra.mxu0 0.0
    %7689 = vmatprep.subr.mxu0 0.0
    %7690 = vmatpush2.msra.mxu0 0.0
    %7691 = vmatprep.subr.mxu0 0.0
    %7692 = vmatpush2.msra.mxu0 0.0
    %7693 = vmatprep.subr.mxu0 0.0
    %7694 = vmatpush2.msra.mxu0 0.0
    %7695 = vmatprep.subr.mxu0 0.0
    %7696 = vmatpush2.msra.mxu0 0.0
    %7697 = vmatprep.subr.mxu0 0.0
    %7698 = vmatpush2.msra.mxu0 0.0
    %7699 = vmatprep.subr.mxu0 0.0
    %7700 = vmatpush2.msra.mxu0 0.0
    %7701 = vmatprep.subr.mxu0 0.0
    %7702 = vmatpush2.msra.mxu0 0.0
    %7703 = vmatprep.subr.mxu0 0.0
    %7704 = vmatpush2.msra.mxu0 0.0
    %7705 = vmatprep.subr.mxu0 0.0
    %7706 = vmatpush2.msra.mxu0 0.0
    %7707 = vmatprep.subr.mxu0 0.0
    %7708 = vmatpush2.msra.mxu0 0.0
    %7709 = vmatprep.subr.mxu0 0.0
    %7710 = vmatpush2.msra.mxu0 0.0
    %7711 = vmatprep.subr.mxu0 0.0
    %7712 = vmatpush2.msra.mxu0 0.0
    %7713 = vmatprep.mubr.f32.mxu0 0.0
    %7714 = vmatmul.mubr.f32.gmra.mxu0 %v7647
    %v7715 = vpop.f32.mrf.mxu0
    %v7716 = vadd.f32 0.0, %v7715
    %v7717 = vpop.f32.mrf.mxu0
    %7718 = vdwg.mxu0
    %v7719 = vadd.f32 %v7636, %v7716
    %v7720 = vld [vmem:[#allocation13] sm:$0x1]
    %v7722 = vlaneseq
    %v7723 = vshrl.u32 %v7722, 7
    %v7724 = vsub.s32 0, %v7723
    %v7725 = vrot.slane %v7720, %v7724
    %v7727 = vadd.f32 %v7719, %v7725
    %v7728 = vmax.f32 %v7727, 0.0
    %v7729 = vld [vmem:[%s8] sm:$0xff]
    %v7730 = vld [vmem:[%s8 + $0x8] sm:$0xff]
    %v7731 = vld [vmem:[%s8 + $0x10] sm:$0xff]
    %v7732 = vld [vmem:[%s8 + $0x18] sm:$0xff]
    %v7733 = vld [vmem:[%s8 + $0x20] sm:$0xff]
    %v7734 = vld [vmem:[%s8 + $0x28] sm:$0xff]
    %v7735 = vld [vmem:[%s8 + $0x30] sm:$0xff]
    %v7736 = vld [vmem:[%s8 + $0x38] sm:$0xff]
    %v7737 = vld [vmem:[%s8 + $0x40] sm:$0xff]
    %v7738 = vld [vmem:[%s8 + $0x48] sm:$0xff]
    %v7739 = vld [vmem:[%s8 + $0x50] sm:$0xff]
    %v7740 = vld [vmem:[%s8 + $0x58] sm:$0xff]
    %v7741 = vld [vmem:[%s8 + $0x60] sm:$0xff]
    %v7742 = vld [vmem:[%s8 + $0x68] sm:$0xff]
    %v7743 = vld [vmem:[%s8 + $0x70] sm:$0xff]
    %v7744 = vld [vmem:[%s8 + $0x78] sm:$0xff]
    %v7745 = vld [vmem:[#allocation14] sm:$0x1]
    %v7747 = vlaneseq
    %v7748 = vshrl.u32 %v7747, 7
    %v7749 = vsub.s32 0, %v7748
    %v7750 = vrot.slane %v7745, %v7749
    %7752 = vmatprep.subr.mxu0 0.0
    %7753 = vmatpush1.msra.mxu0 %v7744
    %7754 = vmatprep.subr.mxu0 0.0
    %7755 = vmatpush1.msra.mxu0 %v7743
    %7756 = vmatprep.subr.mxu0 0.0
    %7757 = vmatpush1.msra.mxu0 %v7742
    %7758 = vmatprep.subr.mxu0 0.0
    %7759 = vmatpush1.msra.mxu0 %v7741
    %7760 = vmatprep.subr.mxu0 0.0
    %7761 = vmatpush1.msra.mxu0 %v7740
    %7762 = vmatprep.subr.mxu0 0.0
    %7763 = vmatpush1.msra.mxu0 %v7739
    %7764 = vmatprep.subr.mxu0 0.0
    %7765 = vmatpush1.msra.mxu0 %v7738
    %7766 = vmatprep.subr.mxu0 0.0
    %7767 = vmatpush1.msra.mxu0 %v7737
    %7768 = vmatprep.subr.mxu0 0.0
    %7769 = vmatpush1.msra.mxu0 %v7736
    %7770 = vmatprep.subr.mxu0 0.0
    %7771 = vmatpush1.msra.mxu0 %v7735
    %7772 = vmatprep.subr.mxu0 0.0
    %7773 = vmatpush1.msra.mxu0 %v7734
    %7774 = vmatprep.subr.mxu0 0.0
    %7775 = vmatpush1.msra.mxu0 %v7733
    %7776 = vmatprep.subr.mxu0 0.0
    %7777 = vmatpush1.msra.mxu0 %v7732
    %7778 = vmatprep.subr.mxu0 0.0
    %7779 = vmatpush1.msra.mxu0 %v7731
    %7780 = vmatprep.subr.mxu0 0.0
    %7781 = vmatpush1.msra.mxu0 %v7730
    %7782 = vmatprep.subr.mxu0 0.0
    %7783 = vmatpush1.msra.mxu0 %v7729
    %7784 = vmatprep.subr.mxu0 0.0
    %7785 = vmatpush2.msra.mxu0 0.0
    %7786 = vmatprep.subr.mxu0 0.0
    %7787 = vmatpush2.msra.mxu0 0.0
    %7788 = vmatprep.subr.mxu0 0.0
    %7789 = vmatpush2.msra.mxu0 0.0
    %7790 = vmatprep.subr.mxu0 0.0
    %7791 = vmatpush2.msra.mxu0 0.0
    %7792 = vmatprep.subr.mxu0 0.0
    %7793 = vmatpush2.msra.mxu0 0.0
    %7794 = vmatprep.subr.mxu0 0.0
    %7795 = vmatpush2.msra.mxu0 0.0
    %7796 = vmatprep.subr.mxu0 0.0
    %7797 = vmatpush2.msra.mxu0 0.0
    %7798 = vmatprep.subr.mxu0 0.0
    %7799 = vmatpush2.msra.mxu0 0.0
    %7800 = vmatprep.subr.mxu0 0.0
    %7801 = vmatpush2.msra.mxu0 0.0
    %7802 = vmatprep.subr.mxu0 0.0
    %7803 = vmatpush2.msra.mxu0 0.0
    %7804 = vmatprep.subr.mxu0 0.0
    %7805 = vmatpush2.msra.mxu0 0.0
    %7806 = vmatprep.subr.mxu0 0.0
    %7807 = vmatpush2.msra.mxu0 0.0
    %7808 = vmatprep.subr.mxu0 0.0
    %7809 = vmatpush2.msra.mxu0 0.0
    %7810 = vmatprep.subr.mxu0 0.0
    %7811 = vmatpush2.msra.mxu0 0.0
    %7812 = vmatprep.subr.mxu0 0.0
    %7813 = vmatpush2.msra.mxu0 0.0
    %7814 = vmatprep.subr.mxu0 0.0
    %7815 = vmatpush2.msra.mxu0 0.0
    %7816 = vmatprep.mubr.f32.mxu0 0.0
    %7817 = vmatmul.mubr.f32.gmra.mxu0 %v7728
    %v7818 = vpop.f32.mrf.mxu0
    %v7819 = vadd.f32 %v7750, %v7818
    %v7820 = vpop.f32.mrf.mxu0
    %7821 = vdwg.mxu0
    %v7822 = vmax.f32 %v7819, 0.0
    %v7823 = vld [vmem:[%s10] sm:$0xff]
    %v7824 = vld [vmem:[%s10 + $0x8] sm:$0xff]
    %v7825 = vld [vmem:[%s10 + $0x10] sm:$0xff]
    %v7826 = vld [vmem:[%s10 + $0x18] sm:$0xff]
    %v7827 = vld [vmem:[%s10 + $0x20] sm:$0xff]
    %v7828 = vld [vmem:[%s10 + $0x28] sm:$0xff]
    %v7829 = vld [vmem:[%s10 + $0x30] sm:$0xff]
    %v7830 = vld [vmem:[%s10 + $0x38] sm:$0xff]
    %v7831 = vld [vmem:[#allocation16] sm:$0x1]
    %v7833 = vlaneseq
    %v7834 = vshrl.u32 %v7833, 7
    %v7835 = vsub.s32 0, %v7834
    %v7836 = vrot.slane %v7831, %v7835
    %v7839 = vsel %vm4255, %v7822, 0
    %7841 = vmatprep.subr.mxu0 0.0
    %7842 = vmatpush1.msra.mxu0 0.0
    %7843 = vmatprep.subr.mxu0 0.0
    %7844 = vmatpush1.msra.mxu0 0.0
    %7845 = vmatprep.subr.mxu0 0.0
    %7846 = vmatpush1.msra.mxu0 0.0
    %7847 = vmatprep.subr.mxu0 0.0
    %7848 = vmatpush1.msra.mxu0 0.0
    %7849 = vmatprep.subr.mxu0 0.0
    %7850 = vmatpush1.msra.mxu0 0.0
    %7851 = vmatprep.subr.mxu0 0.0
    %7852 = vmatpush1.msra.mxu0 0.0
    %7853 = vmatprep.subr.mxu0 0.0
    %7854 = vmatpush1.msra.mxu0 0.0
    %7855 = vmatprep.subr.mxu0 0.0
    %7856 = vmatpush1.msra.mxu0 0.0
    %7857 = vmatprep.subr.mxu0 0.0
    %7858 = vmatpush1.msra.mxu0 %v7830
    %7859 = vmatprep.subr.mxu0 0.0
    %7860 = vmatpush1.msra.mxu0 %v7829
    %7861 = vmatprep.subr.mxu0 0.0
    %7862 = vmatpush1.msra.mxu0 %v7828
    %7863 = vmatprep.subr.mxu0 0.0
    %7864 = vmatpush1.msra.mxu0 %v7827
    %7865 = vmatprep.subr.mxu0 0.0
    %7866 = vmatpush1.msra.mxu0 %v7826
    %7867 = vmatprep.subr.mxu0 0.0
    %7868 = vmatpush1.msra.mxu0 %v7825
    %7869 = vmatprep.subr.mxu0 0.0
    %7870 = vmatpush1.msra.mxu0 %v7824
    %7871 = vmatprep.subr.mxu0 0.0
    %7872 = vmatpush1.msra.mxu0 %v7823
    %7873 = vmatprep.subr.mxu0 0.0
    %7874 = vmatpush2.msra.mxu0 0.0
    %7875 = vmatprep.subr.mxu0 0.0
    %7876 = vmatpush2.msra.mxu0 0.0
    %7877 = vmatprep.subr.mxu0 0.0
    %7878 = vmatpush2.msra.mxu0 0.0
    %7879 = vmatprep.subr.mxu0 0.0
    %7880 = vmatpush2.msra.mxu0 0.0
    %7881 = vmatprep.subr.mxu0 0.0
    %7882 = vmatpush2.msra.mxu0 0.0
    %7883 = vmatprep.subr.mxu0 0.0
    %7884 = vmatpush2.msra.mxu0 0.0
    %7885 = vmatprep.subr.mxu0 0.0
    %7886 = vmatpush2.msra.mxu0 0.0
    %7887 = vmatprep.subr.mxu0 0.0
    %7888 = vmatpush2.msra.mxu0 0.0
    %7889 = vmatprep.subr.mxu0 0.0
    %7890 = vmatpush2.msra.mxu0 0.0
    %7891 = vmatprep.subr.mxu0 0.0
    %7892 = vmatpush2.msra.mxu0 0.0
    %7893 = vmatprep.subr.mxu0 0.0
    %7894 = vmatpush2.msra.mxu0 0.0
    %7895 = vmatprep.subr.mxu0 0.0
    %7896 = vmatpush2.msra.mxu0 0.0
    %7897 = vmatprep.subr.mxu0 0.0
    %7898 = vmatpush2.msra.mxu0 0.0
    %7899 = vmatprep.subr.mxu0 0.0
    %7900 = vmatpush2.msra.mxu0 0.0
    %7901 = vmatprep.subr.mxu0 0.0
    %7902 = vmatpush2.msra.mxu0 0.0
    %7903 = vmatprep.subr.mxu0 0.0
    %7904 = vmatpush2.msra.mxu0 0.0
    %7905 = vmatprep.mubr.f32.mxu0 0.0
    %7906 = vmatmul.mubr.f32.gmra.mxu0 %v7839
    %v7907 = vpop.f32.mrf.mxu0
    %v7908 = vadd.f32 %v7836, %v7907
    %v7909 = vpop.f32.mrf.mxu0
    %7910 = vdwg.mxu0
    %vm7911 = vcmask 50176
    %7912 = vst.msk [vmem:[#allocation17] sm:$0x3] %vm7911, %v7908
    // Predicated region
    $region86: #{connect4_cnn_forward.1} parent=1 // pred_check
      _
    $region87: #{connect4_cnn_forward.1} parent=1 // pred_check_branch
      %7914 = sbr.rel (0) target = $region89
    $region88: #{connect4_cnn_forward.1} parent=1 // pred_region
      %s7916 = ssub.s32 32, 32
      %7917 = vsyncadd [#allocation4], %s7916
      %s7919 = sshll.u32 [#allocation17], 4
      %s7920 = int_to_ptr.vmem [resolvable:$true] %s7919
      %7922 = dma.vmem_to_hbm [thread:$0]  %s7920, 32, %s12, [#allocation4]
    $region89: #{connect4_cnn_forward.1} parent=1 // pred_fallthru
      _
    // Predicated region
    $region90: #{connect4_cnn_forward.1} parent=1 // pred_check
      _
    $region91: #{connect4_cnn_forward.1} parent=1 // pred_check_branch
      %7924 = sbr.rel (0) target = $region93
    $region92: #{connect4_cnn_forward.1} parent=1 // pred_region
      %7925 = dma.done [#allocation4], 32
    $region93: #{connect4_cnn_forward.1} parent=1 // pred_fallthru
      _
    %7926 = vsyncpa [#allocation3], 1
    %7927 = vsyncpa [#allocation6], 1
    %7928 = vsyncpa [#allocation9], 1
    %7929 = vsyncpa [#allocation12], 1
    %7930 = vsyncpa [#allocation15], 1
    %7931 = vsyncpa [#allocation4], 1

</llo_original>
